<compile_context>
chip_gen: v5e
topology: v5e:2x2
jax: 0.10.0
libtpu: 0.0.40
codegen_flags: <defaults>
</compile_context>

<pallas_src>
import math
from functools import partial

import jax
import jax.numpy as jnp
from jax import lax
from jax.experimental import pallas as pl
from jax.experimental.pallas import tpu as pltpu


MASK_VALUE = -1e30  # large finite negative (robust vs. -inf NaN corner cases)


# ---------------------------------------------------------------------------
# Tiled linear kernel:  out = x @ w + b,  grid = (M/tm, N/tn, K/tk)
# bf16 operands on the MXU, f32 accumulation in VMEM scratch.
# ---------------------------------------------------------------------------
def _linear_kernel(x_ref, w_ref, b_ref, o_ref, acc_ref):
    @pl.when(pl.program_id(2) == 0)
    def _():
        acc_ref[...] = jnp.zeros_like(acc_ref)

    acc_ref[...] += jnp.dot(x_ref[...], w_ref[...],
                            preferred_element_type=jnp.float32)

    @pl.when(pl.program_id(2) == pl.num_programs(2) - 1)
    def _():
        o_ref[...] = (acc_ref[...] + b_ref[...]).astype(o_ref.dtype)


def _linear(x2d, w, b, out_dtype, *, tm=256, tn=256, tk=256):
    M, K = x2d.shape
    K2, N = w.shape
    assert K == K2
    tm, tn, tk = min(tm, M), min(tn, N), min(tk, K)
    assert M % tm == 0 and N % tn == 0 and K % tk == 0

    return pl.pallas_call(
        _linear_kernel,
        out_shape=jax.ShapeDtypeStruct((M, N), out_dtype),
        grid_spec=pltpu.PrefetchScalarGridSpec(
            num_scalar_prefetch=0,
            grid=(M // tm, N // tn, K // tk),
            in_specs=[
                pl.BlockSpec((tm, tk), lambda i, j, k: (i, k)),
                pl.BlockSpec((tk, tn), lambda i, j, k: (k, j)),
                pl.BlockSpec((1, tn), lambda i, j, k: (0, j)),
            ],
            out_specs=pl.BlockSpec((tm, tn), lambda i, j, k: (i, j)),
            scratch_shapes=[pltpu.VMEM((tm, tn), jnp.float32)],
        ),
        compiler_params=pltpu.CompilerParams(
            dimension_semantics=("parallel", "parallel", "arbitrary")),
    )(x2d, w, b)


# ---------------------------------------------------------------------------
# Flash-attention forward kernel.
# grid = (B, H, T/block_q, T/block_kv); kv axis is the (arbitrary) reduction.
# q/k/v blocks are (1, tile, head_dim) slices of the fused qkv activation.
# ---------------------------------------------------------------------------
def _flash_attn_kernel(q_ref, k_ref, v_ref, o_ref, m_sc, l_sc, acc_sc,
                       *, block_q, block_kv, head_dim, sm_scale):
    qi = pl.program_id(2)
    ki = pl.program_id(3)

    @pl.when(ki == 0)
    def _():
        m_sc[...] = jnp.full((block_q, 1), MASK_VALUE, jnp.float32)
        l_sc[...] = jnp.zeros((block_q, 1), jnp.float32)
        acc_sc[...] = jnp.zeros((block_q, head_dim), jnp.float32)

    q_start = qi * block_q
    kv_start = ki * block_kv

    def _accumulate(apply_mask):
        q = q_ref[0]                                     # (bq, hd)  bf16
        k = k_ref[0]                                     # (bkv, hd) bf16
        # QK^T without materializing a transpose (contract last dims).
        s = lax.dot_general(q, k, (((1,), (1,)), ((), ())),
                            preferred_element_type=jnp.float32)   # (bq, bkv) f32
        s = s * sm_scale
        if apply_mask:
            row = q_start + lax.broadcasted_iota(jnp.int32, (block_q, block_kv), 0)
            col = kv_start + lax.broadcasted_iota(jnp.int32, (block_q, block_kv), 1)
            s = jnp.where(col <= row, s, MASK_VALUE)

        m_prev = m_sc[...]
        m_new = jnp.maximum(m_prev, jnp.max(s, axis=-1, keepdims=True))
        alpha = jnp.exp(m_prev - m_new)
        p = jnp.exp(s - m_new)

        l_sc[...] = alpha * l_sc[...] + jnp.sum(p, axis=-1, keepdims=True)
        acc_sc[...] = alpha * acc_sc[...] + jnp.dot(
            p.astype(v_ref.dtype), v_ref[0], preferred_element_type=jnp.float32)
        m_sc[...] = m_new

    # Tiles straddling the causal diagonal: apply the mask.
    @pl.when(jnp.logical_and(kv_start < q_start + block_q,
                             kv_start + block_kv > q_start + 1))
    def _():
        _accumulate(apply_mask=True)

    # Fully visible tiles (entirely below the diagonal): skip mask VPU work.
    @pl.when(kv_start + block_kv <= q_start + 1)
    def _():
        _accumulate(apply_mask=False)

    # Fully masked tiles (above the diagonal) are skipped entirely.

    @pl.when(ki == pl.num_programs(3) - 1)
    def _():
        # TODO(synk): dropout on attention weights not implemented
        # (eval-mode / dropout=0.0 semantics).
        o_ref[0] = (acc_sc[...] *
                    pl.reciprocal(l_sc[...], approx=True)).astype(o_ref.dtype)


def multi_head_attention(x, wq, wk, wv, wo, bo, *, num_heads,
                         block_q=256, block_kv=256):
    B, T, d_in = x.shape
    d_out = wq.shape[1]
    head_dim = d_out // num_heads
    assert num_heads * head_dim == d_out
    # Lane-aligned per-head tiles (128-lane vregs / MXU).
    # TODO(synk): head_dim not a multiple of 128 would need lane padding.
    assert head_dim % 128 == 0, "head_dim must be a multiple of 128 for this kernel"

    block_q = min(block_q, T)
    block_kv = min(block_kv, T)
    assert T % block_q == 0 and T % block_kv == 0

    orig_dtype = x.dtype
    cdt = jnp.bfloat16  # MXU operand dtype; all accumulation/softmax math is f32

    # Fused Q|K|V weights (no qkv bias, matching qkv_bias=False).
    wqkv = jnp.concatenate([wq, wk, wv], axis=1).astype(cdt)   # (d_in, 3*d_out)

    # ---- fused QKV projection ------------------------------------------------
    x2d = x.reshape(B * T, d_in).astype(cdt)
    zero_bias = jnp.zeros((1, 3 * d_out), jnp.float32)
    qkv = _linear(x2d, wqkv, zero_bias, cdt).reshape(B, T, 3 * d_out)

    # ---- flash attention -----------------------------------------------------
    H, hd = num_heads, head_dim
    grid = (B, H, T // block_q, T // block_kv)
    kernel = partial(_flash_attn_kernel, block_q=block_q, block_kv=block_kv,
                     head_dim=hd, sm_scale=1.0 / math.sqrt(hd))

    # q columns = heads [0, H); k columns = heads [H, 2H); v columns = [2H, 3H)
    # (in units of head_dim-wide blocks inside the fused qkv activation).
    ctx = pl.pallas_call(
        kernel,
        out_shape=jax.ShapeDtypeStruct((B, T, d_out), cdt),
        grid_spec=pltpu.PrefetchScalarGridSpec(
            num_scalar_prefetch=0,
            grid=grid,
            in_specs=[
                pl.BlockSpec((1, block_q, hd),
                             lambda b, h, qi, ki: (b, qi, h)),
                pl.BlockSpec((1, block_kv, hd),
                             lambda b, h, qi, ki: (b, ki, H + h)),
                pl.BlockSpec((1, block_kv, hd),
                             lambda b, h, qi, ki: (b, ki, 2 * H + h)),
            ],
            out_specs=pl.BlockSpec((1, block_q, hd),
                                   lambda b, h, qi, ki: (b, qi, h)),
            scratch_shapes=[
                pltpu.VMEM((block_q, 1), jnp.float32),    # running max
                pltpu.VMEM((block_q, 1), jnp.float32),    # running sum
                pltpu.VMEM((block_q, hd), jnp.float32),   # output accumulator
            ],
        ),
        compiler_params=pltpu.CompilerParams(
            dimension_semantics=("parallel", "parallel", "parallel", "arbitrary")),
    )(qkv, qkv, qkv)

    # ---- output projection ---------------------------------------------------
    out = _linear(ctx.reshape(B * T, d_out), wo.astype(cdt),
                  bo.reshape(1, d_out).astype(jnp.float32), orig_dtype)
    return out.reshape(B, T, d_out)


def mha_reference(x, wq, wk, wv, wo, bo, *, num_heads):
    """Pure-JAX f32 reference mirroring the PyTorch forward (eval mode)."""
    B, T, d_in = x.shape
    d_out = wq.shape[1]
    hd = d_out // num_heads
    q = (x @ wq).reshape(B, T, num_heads, hd).transpose(0, 2, 1, 3)
    k = (x @ wk).reshape(B, T, num_heads, hd).transpose(0, 2, 1, 3)
    v = (x @ wv).reshape(B, T, num_heads, hd).transpose(0, 2, 1, 3)
    scores = jnp.einsum("bhqd,bhkd->bhqk", q, k) / math.sqrt(hd)
    mask = jnp.triu(jnp.ones((T, T), dtype=bool), k=1)
    scores = jnp.where(mask[None, None], -jnp.inf, scores)
    w = jax.nn.softmax(scores, axis=-1)
    ctx = jnp.einsum("bhqk,bhkd->bhqd", w, v).transpose(0, 2, 1, 3).reshape(B, T, d_out)
    return ctx @ wo + bo


if __name__ == "__main__":
    # Small shapes consistent with the module's forward (d_in != d_out, head_dim = 128).
    B, T = 2, 256
    d_in, d_out = 512, 256
    num_heads = 2

    key = jax.random.PRNGKey(0)
    kx, kq, kk, kv, ko, kb = jax.random.split(key, 6)

    x = jax.random.normal(kx, (B, T, d_in), dtype=jnp.float32)
    wq = jax.random.normal(kq, (d_in, d_out), dtype=jnp.float32) * 0.05
    wk = jax.random.normal(kk, (d_in, d_out), dtype=jnp.float32) * 0.05
    wv = jax.random.normal(kv, (d_in, d_out), dtype=jnp.float32) * 0.05
    wo = jax.random.normal(ko, (d_out, d_out), dtype=jnp.float32) * 0.05
    bo = jax.random.normal(kb, (d_out,), dtype=jnp.float32) * 0.05

    # block_q = block_kv = 128 on T = 256 exercises all three kv-tile paths
    # (masked diagonal, fully visible, fully skipped).
    mha = jax.jit(partial(multi_head_attention, num_heads=num_heads,
                          block_q=128, block_kv=128))
    out = jax.block_until_ready(mha(x, wq, wk, wv, wo, bo))

    ref = mha_reference(x, wq, wk, wv, wo, bo, num_heads=num_heads)
    assert out.shape == (B, T, d_out)
    max_err = float(jnp.max(jnp.abs(out - ref)))
    # bf16 MXU operands (f32 accumulation) -> loosened tolerance vs f32 reference.
    assert jnp.allclose(out, ref, atol=5e-2, rtol=5e-2), f"mismatch: max|err|={max_err}"

    print("KERNEL_OK")
</pallas_src>

<mosaic_0001>
module attributes {stable_mosaic.version = 11 : i64} {
  func.func @_linear_kernel(%arg0: i32, %arg1: i32, %arg2: i32, %arg3: memref<256x256xbf16, #tpu.memory_space<vmem>>, %arg4: memref<256x256xbf16, #tpu.memory_space<vmem>>, %arg5: memref<1x256xf32, #tpu.memory_space<vmem>>, %arg6: memref<256x256xbf16, #tpu.memory_space<vmem>>, %arg7: memref<256x256xf32, #tpu.memory_space<vmem>>) attributes {dimension_semantics = [#tpu.dimension_semantics<parallel>, #tpu.dimension_semantics<parallel>, #tpu.dimension_semantics<arbitrary>], iteration_bounds = array<i64: 2, 3, 2>, scalar_prefetch = 0 : i64, scratch_operands = 1 : i64, tpu.core_type = #tpu.core_type<tc>, window_params = [{transform_indices = @transform_0, window_bounds = array<i64: 256, 256>}, {transform_indices = @transform_1, window_bounds = array<i64: 256, 256>}, {transform_indices = @transform_2, window_bounds = array<i64: 1, 256>}, {transform_indices = @transform_3, window_bounds = array<i64: 256, 256>}]} {
    %c0_i32 = arith.constant 0 : i32
    %0 = arith.cmpi eq, %arg2, %c0_i32 : i32
    %1 = arith.extui %0 : i1 to i32
    %c0_i32_0 = arith.constant 0 : i32
    %2 = arith.cmpi ne, %1, %c0_i32_0 : i32
    scf.if %2 {
      %cst_9 = arith.constant 0.000000e+00 : f32
      %12 = vector.broadcast %cst_9 : f32 to vector<256x256xf32>
      %c0_10 = arith.constant 0 : index
      %c0_11 = arith.constant 0 : index
      %13 = vector.load %arg7[%c0_10, %c0_11] : memref<256x256xf32, #tpu.memory_space<vmem>>, vector<256x256xf32>
      tpu.vector_store %arg7[%c0_10, %c0_11], %12 {strides = array<i32>} : memref<256x256xf32, #tpu.memory_space<vmem>>, vector<256x256xf32>,
    } else {
    }
    %c0 = arith.constant 0 : index
    %c0_1 = arith.constant 0 : index
    %3 = vector.load %arg7[%c0, %c0_1] : memref<256x256xf32, #tpu.memory_space<vmem>>, vector<256x256xf32>
    %c0_2 = arith.constant 0 : index
    %c0_3 = arith.constant 0 : index
    %4 = vector.load %arg3[%c0_2, %c0_3] : memref<256x256xbf16, #tpu.memory_space<vmem>>, vector<256x256xbf16>
    %c0_4 = arith.constant 0 : index
    %c0_5 = arith.constant 0 : index
    %5 = vector.load %arg4[%c0_4, %c0_5] : memref<256x256xbf16, #tpu.memory_space<vmem>>, vector<256x256xbf16>
    %cst = arith.constant dense<0.000000e+00> : vector<256x256xf32>
    %6 = tpu.matmul %4, %5, %cst {dimension_numbers = #tpu.dot_dimension_numbers<[1], [0], [0], [1], [0, 0, 1, 1], [], []>} : vector<256x256xbf16>, vector<256x256xbf16>, vector<256x256xf32> -> vector<256x256xf32>
    %7 = arith.addf %3, %6 : vector<256x256xf32>
    %c0_6 = arith.constant 0 : index
    %c0_7 = arith.constant 0 : index
    %8 = vector.load %arg7[%c0_6, %c0_7] : memref<256x256xf32, #tpu.memory_space<vmem>>, vector<256x256xf32>
    tpu.vector_store %arg7[%c0_6, %c0_7], %7 {strides = array<i32>} : memref<256x256xf32, #tpu.memory_space<vmem>>, vector<256x256xf32>,
    %c1_i32 = arith.constant 1 : i32
    %9 = arith.cmpi eq, %arg2, %c1_i32 : i32
    %10 = arith.extui %9 : i1 to i32
    %c0_i32_8 = arith.constant 0 : i32
    %11 = arith.cmpi ne, %10, %c0_i32_8 : i32
    scf.if %11 {
      %c0_9 = arith.constant 0 : index
      %c0_10 = arith.constant 0 : index
      %12 = vector.load %arg7[%c0_9, %c0_10] : memref<256x256xf32, #tpu.memory_space<vmem>>, vector<256x256xf32>
      %c0_11 = arith.constant 0 : index
      %c0_12 = arith.constant 0 : index
      %13 = vector.load %arg5[%c0_11, %c0_12] : memref<1x256xf32, #tpu.memory_space<vmem>>, vector<1x256xf32>
      %14 = vector.broadcast %13 : vector<1x256xf32> to vector<256x256xf32>
      %15 = arith.addf %12, %14 : vector<256x256xf32>
      %16 = arith.truncf %15 : vector<256x256xf32> to vector<256x256xbf16>
      %c0_13 = arith.constant 0 : index
      %c0_14 = arith.constant 0 : index
      %17 = vector.load %arg6[%c0_13, %c0_14] : memref<256x256xbf16, #tpu.memory_space<vmem>>, vector<256x256xbf16>
      tpu.vector_store %arg6[%c0_13, %c0_14], %16 {strides = array<i32>} : memref<256x256xbf16, #tpu.memory_space<vmem>>, vector<256x256xbf16>,
    } else {
    }
    return
  }
  func.func @transform_0(%arg0: i32, %arg1: i32, %arg2: i32) -> (i32, i32) {
    %c0_i32 = arith.constant 0 : i32
    return %arg0, %arg2 : i32, i32
  }
  func.func @transform_1(%arg0: i32, %arg1: i32, %arg2: i32) -> (i32, i32) {
    %c0_i32 = arith.constant 0 : i32
    return %arg2, %arg1 : i32, i32
  }
  func.func @transform_2(%arg0: i32, %arg1: i32, %arg2: i32) -> (i32, i32) {
    %c0_i32 = arith.constant 0 : i32
    %c0_i32_0 = arith.constant 0 : i32
    return %c0_i32, %arg1 : i32, i32
  }
  func.func @transform_3(%arg0: i32, %arg1: i32, %arg2: i32) -> (i32, i32) {
    %c0_i32 = arith.constant 0 : i32
    return %arg0, %arg1 : i32, i32
  }
}

module attributes {stable_mosaic.version = 11 : i64} {
  func.func @_flash_attn_kernel(%arg0: i32, %arg1: i32, %arg2: i32, %arg3: i32, %arg4: memref<1x128x128xbf16, #tpu.memory_space<vmem>>, %arg5: memref<1x128x128xbf16, #tpu.memory_space<vmem>>, %arg6: memref<1x128x128xbf16, #tpu.memory_space<vmem>>, %arg7: memref<1x128x128xbf16, #tpu.memory_space<vmem>>, %arg8: memref<128x1xf32, #tpu.memory_space<vmem>>, %arg9: memref<128x1xf32, #tpu.memory_space<vmem>>, %arg10: memref<128x128xf32, #tpu.memory_space<vmem>>) attributes {dimension_semantics = [#tpu.dimension_semantics<parallel>, #tpu.dimension_semantics<parallel>, #tpu.dimension_semantics<parallel>, #tpu.dimension_semantics<arbitrary>], iteration_bounds = array<i64: 2, 2, 2, 2>, scalar_prefetch = 0 : i64, scratch_operands = 3 : i64, tpu.core_type = #tpu.core_type<tc>, window_params = [{transform_indices = @transform_0, window_bounds = array<i64: 1, 128, 128>}, {transform_indices = @transform_1, window_bounds = array<i64: 1, 128, 128>}, {transform_indices = @transform_2, window_bounds = array<i64: 1, 128, 128>}, {transform_indices = @transform_3, window_bounds = array<i64: 1, 128, 128>}]} {
    %c0_i32 = arith.constant 0 : i32
    %0 = arith.cmpi eq, %arg3, %c0_i32 : i32
    %1 = arith.extui %0 : i1 to i32
    %c0_i32_0 = arith.constant 0 : i32
    %2 = arith.cmpi ne, %1, %c0_i32_0 : i32
    scf.if %2 {
      %cst = arith.constant -1.000000e+30 : f32
      %21 = vector.broadcast %cst : f32 to vector<128x1xf32>
      %c0 = arith.constant 0 : index
      %c0_10 = arith.constant 0 : index
      %22 = vector.load %arg8[%c0, %c0_10] : memref<128x1xf32, #tpu.memory_space<vmem>>, vector<128x1xf32>
      tpu.vector_store %arg8[%c0, %c0_10], %21 {strides = array<i32>} : memref<128x1xf32, #tpu.memory_space<vmem>>, vector<128x1xf32>,
      %cst_11 = arith.constant 0.000000e+00 : f32
      %23 = vector.broadcast %cst_11 : f32 to vector<128x1xf32>
      %c0_12 = arith.constant 0 : index
      %c0_13 = arith.constant 0 : index
      %24 = vector.load %arg9[%c0_12, %c0_13] : memref<128x1xf32, #tpu.memory_space<vmem>>, vector<128x1xf32>
      tpu.vector_store %arg9[%c0_12, %c0_13], %23 {strides = array<i32>} : memref<128x1xf32, #tpu.memory_space<vmem>>, vector<128x1xf32>,
      %cst_14 = arith.constant 0.000000e+00 : f32
      %25 = vector.broadcast %cst_14 : f32 to vector<128x128xf32>
      %c0_15 = arith.constant 0 : index
      %c0_16 = arith.constant 0 : index
      %26 = vector.load %arg10[%c0_15, %c0_16] : memref<128x128xf32, #tpu.memory_space<vmem>>, vector<128x128xf32>
      tpu.vector_store %arg10[%c0_15, %c0_16], %25 {strides = array<i32>} : memref<128x128xf32, #tpu.memory_space<vmem>>, vector<128x128xf32>,
    } else {
    }
    %c128_i32 = arith.constant 128 : i32
    %3 = arith.muli %arg2, %c128_i32 : i32
    %c128_i32_1 = arith.constant 128 : i32
    %4 = arith.muli %arg3, %c128_i32_1 : i32
    %c128_i32_2 = arith.constant 128 : i32
    %5 = arith.addi %3, %c128_i32_2 : i32
    %6 = arith.cmpi slt, %4, %5 : i32
    %c128_i32_3 = arith.constant 128 : i32
    %7 = arith.addi %4, %c128_i32_3 : i32
    %c1_i32 = arith.constant 1 : i32
    %8 = arith.addi %3, %c1_i32 : i32
    %9 = arith.cmpi sgt, %7, %8 : i32
    %10 = arith.andi %6, %9 : i1
    %11 = arith.extui %10 : i1 to i32
    %c0_i32_4 = arith.constant 0 : i32
    %12 = arith.cmpi ne, %11, %c0_i32_4 : i32
    scf.if %12 {
      %c0 = arith.constant 0 : index
      %c0_10 = arith.constant 0 : index
      %c0_11 = arith.constant 0 : index
      %21 = vector.load %arg4[%c0, %c0_10, %c0_11] : memref<1x128x128xbf16, #tpu.memory_space<vmem>>, vector<1x128x128xbf16>
      %22 = vector.shape_cast %21 : vector<1x128x128xbf16> to vector<128x128xbf16>
      %c0_12 = arith.constant 0 : index
      %c0_13 = arith.constant 0 : index
      %c0_14 = arith.constant 0 : index
      %23 = vector.load %arg5[%c0_12, %c0_13, %c0_14] : memref<1x128x128xbf16, #tpu.memory_space<vmem>>, vector<1x128x128xbf16>
      %24 = vector.shape_cast %23 : vector<1x128x128xbf16> to vector<128x128xbf16>
      %cst = arith.constant dense<0.000000e+00> : vector<128x128xf32>
      %25 = tpu.matmul %22, %24, %cst {dimension_numbers = #tpu.dot_dimension_numbers<[1], [1], [0], [0], [0, 0, 1, 0], [], []>} : vector<128x128xbf16>, vector<128x128xbf16>, vector<128x128xf32> -> vector<128x128xf32>
      %cst_15 = arith.constant 0.0883883461 : f32
      %26 = vector.broadcast %cst_15 : f32 to vector<128x128xf32>
      %27 = arith.mulf %25, %26 : vector<128x128xf32>
      %28 = tpu.iota {dimensions = array<i32: 0>} : vector<128x128xi32>
      %29 = vector.broadcast %3 : i32 to vector<128x128xi32>
      %30 = arith.addi %29, %28 : vector<128x128xi32>
      %31 = tpu.iota {dimensions = array<i32: 1>} : vector<128x128xi32>
      %32 = vector.broadcast %4 : i32 to vector<128x128xi32>
      %33 = arith.addi %32, %31 : vector<128x128xi32>
      %34 = arith.cmpi sle, %33, %30 : vector<128x128xi32>
      %cst_16 = arith.constant -1.000000e+30 : f32
      %35 = vector.broadcast %cst_16 : f32 to vector<128x128xf32>
      %36 = arith.select %34, %27, %35 : vector<128x128xi1>, vector<128x128xf32>
      %c0_17 = arith.constant 0 : index
      %c0_18 = arith.constant 0 : index
      %37 = vector.load %arg8[%c0_17, %c0_18] : memref<128x1xf32, #tpu.memory_space<vmem>>, vector<128x1xf32>
      %cst_19 = arith.constant dense<0xFF800000> : vector<128xf32>
      %38 = vector.multi_reduction <maximumf>, %36, %cst_19 [1] : vector<128x128xf32> to vector<128xf32>
      %39 = vector.shape_cast %38 : vector<128xf32> to vector<128x1xf32>
      %40 = arith.maximumf %37, %39 : vector<128x1xf32>
      %41 = arith.subf %37, %40 : vector<128x1xf32>
      %42 = math.exp %41 : vector<128x1xf32>
      %43 = vector.broadcast %40 : vector<128x1xf32> to vector<128x128xf32>
      %44 = arith.subf %36, %43 : vector<128x128xf32>
      %45 = math.exp %44 : vector<128x128xf32>
      %c0_20 = arith.constant 0 : index
      %c0_21 = arith.constant 0 : index
      %46 = vector.load %arg9[%c0_20, %c0_21] : memref<128x1xf32, #tpu.memory_space<vmem>>, vector<128x1xf32>
      %47 = arith.mulf %42, %46 : vector<128x1xf32>
      %cst_22 = arith.constant dense<0.000000e+00> : vector<128xf32>
      %48 = vector.multi_reduction <add>, %45, %cst_22 [1] : vector<128x128xf32> to vector<128xf32>
      %49 = vector.shape_cast %48 : vector<128xf32> to vector<128x1xf32>
      %50 = arith.addf %47, %49 : vector<128x1xf32>
      %c0_23 = arith.constant 0 : index
      %c0_24 = arith.constant 0 : index
      %51 = vector.load %arg9[%c0_23, %c0_24] : memref<128x1xf32, #tpu.memory_space<vmem>>, vector<128x1xf32>
      tpu.vector_store %arg9[%c0_23, %c0_24], %50 {strides = array<i32>} : memref<128x1xf32, #tpu.memory_space<vmem>>, vector<128x1xf32>,
      %c0_25 = arith.constant 0 : index
      %c0_26 = arith.constant 0 : index
      %52 = vector.load %arg10[%c0_25, %c0_26] : memref<128x128xf32, #tpu.memory_space<vmem>>, vector<128x128xf32>
      %53 = vector.broadcast %42 : vector<128x1xf32> to vector<128x128xf32>
      %54 = arith.mulf %53, %52 : vector<128x128xf32>
      %55 = arith.truncf %45 : vector<128x128xf32> to vector<128x128xbf16>
      %c0_27 = arith.constant 0 : index
      %c0_28 = arith.constant 0 : index
      %c0_29 = arith.constant 0 : index
      %56 = vector.load %arg6[%c0_27, %c0_28, %c0_29] : memref<1x128x128xbf16, #tpu.memory_space<vmem>>, vector<1x128x128xbf16>
      %57 = vector.shape_cast %56 : vector<1x128x128xbf16> to vector<128x128xbf16>
      %cst_30 = arith.constant dense<0.000000e+00> : vector<128x128xf32>
      %58 = tpu.matmul %55, %57, %cst_30 {dimension_numbers = #tpu.dot_dimension_numbers<[1], [0], [0], [1], [0, 0, 1, 1], [], []>} : vector<128x128xbf16>, vector<128x128xbf16>, vector<128x128xf32> -> vector<128x128xf32>
      %59 = arith.addf %54, %58 : vector<128x128xf32>
      %c0_31 = arith.constant 0 : index
      %c0_32 = arith.constant 0 : index
      %60 = vector.load %arg10[%c0_31, %c0_32] : memref<128x128xf32, #tpu.memory_space<vmem>>, vector<128x128xf32>
      tpu.vector_store %arg10[%c0_31, %c0_32], %59 {strides = array<i32>} : memref<128x128xf32, #tpu.memory_space<vmem>>, vector<128x128xf32>,
      %c0_33 = arith.constant 0 : index
      %c0_34 = arith.constant 0 : index
      %61 = vector.load %arg8[%c0_33, %c0_34] : memref<128x1xf32, #tpu.memory_space<vmem>>, vector<128x1xf32>
      tpu.vector_store %arg8[%c0_33, %c0_34], %40 {strides = array<i32>} : memref<128x1xf32, #tpu.memory_space<vmem>>, vector<128x1xf32>,
    } else {
    }
    %c128_i32_5 = arith.constant 128 : i32
    %13 = arith.addi %4, %c128_i32_5 : i32
    %c1_i32_6 = arith.constant 1 : i32
    %14 = arith.addi %3, %c1_i32_6 : i32
    %15 = arith.cmpi sle, %13, %14 : i32
    %16 = arith.extui %15 : i1 to i32
    %c0_i32_7 = arith.constant 0 : i32
    %17 = arith.cmpi ne, %16, %c0_i32_7 : i32
    scf.if %17 {
      %c0 = arith.constant 0 : index
      %c0_10 = arith.constant 0 : index
      %c0_11 = arith.constant 0 : index
      %21 = vector.load %arg4[%c0, %c0_10, %c0_11] : memref<1x128x128xbf16, #tpu.memory_space<vmem>>, vector<1x128x128xbf16>
      %22 = vector.shape_cast %21 : vector<1x128x128xbf16> to vector<128x128xbf16>
      %c0_12 = arith.constant 0 : index
      %c0_13 = arith.constant 0 : index
      %c0_14 = arith.constant 0 : index
      %23 = vector.load %arg5[%c0_12, %c0_13, %c0_14] : memref<1x128x128xbf16, #tpu.memory_space<vmem>>, vector<1x128x128xbf16>
      %24 = vector.shape_cast %23 : vector<1x128x128xbf16> to vector<128x128xbf16>
      %cst = arith.constant dense<0.000000e+00> : vector<128x128xf32>
      %25 = tpu.matmul %22, %24, %cst {dimension_numbers = #tpu.dot_dimension_numbers<[1], [1], [0], [0], [0, 0, 1, 0], [], []>} : vector<128x128xbf16>, vector<128x128xbf16>, vector<128x128xf32> -> vector<128x128xf32>
      %cst_15 = arith.constant 0.0883883461 : f32
      %26 = vector.broadcast %cst_15 : f32 to vector<128x128xf32>
      %27 = arith.mulf %25, %26 : vector<128x128xf32>
      %c0_16 = arith.constant 0 : index
      %c0_17 = arith.constant 0 : index
      %28 = vector.load %arg8[%c0_16, %c0_17] : memref<128x1xf32, #tpu.memory_space<vmem>>, vector<128x1xf32>
      %cst_18 = arith.constant dense<0xFF800000> : vector<128xf32>
      %29 = vector.multi_reduction <maximumf>, %27, %cst_18 [1] : vector<128x128xf32> to vector<128xf32>
      %30 = vector.shape_cast %29 : vector<128xf32> to vector<128x1xf32>
      %31 = arith.maximumf %28, %30 : vector<128x1xf32>
      %32 = arith.subf %28, %31 : vector<128x1xf32>
      %33 = math.exp %32 : vector<128x1xf32>
      %34 = vector.broadcast %31 : vector<128x1xf32> to vector<128x128xf32>
      %35 = arith.subf %27, %34 : vector<128x128xf32>
      %36 = math.exp %35 : vector<128x128xf32>
      %c0_19 = arith.constant 0 : index
      %c0_20 = arith.constant 0 : index
      %37 = vector.load %arg9[%c0_19, %c0_20] : memref<128x1xf32, #tpu.memory_space<vmem>>, vector<128x1xf32>
      %38 = arith.mulf %33, %37 : vector<128x1xf32>
      %cst_21 = arith.constant dense<0.000000e+00> : vector<128xf32>
      %39 = vector.multi_reduction <add>, %36, %cst_21 [1] : vector<128x128xf32> to vector<128xf32>
      %40 = vector.shape_cast %39 : vector<128xf32> to vector<128x1xf32>
      %41 = arith.addf %38, %40 : vector<128x1xf32>
      %c0_22 = arith.constant 0 : index
      %c0_23 = arith.constant 0 : index
      %42 = vector.load %arg9[%c0_22, %c0_23] : memref<128x1xf32, #tpu.memory_space<vmem>>, vector<128x1xf32>
      tpu.vector_store %arg9[%c0_22, %c0_23], %41 {strides = array<i32>} : memref<128x1xf32, #tpu.memory_space<vmem>>, vector<128x1xf32>,
      %c0_24 = arith.constant 0 : index
      %c0_25 = arith.constant 0 : index
      %43 = vector.load %arg10[%c0_24, %c0_25] : memref<128x128xf32, #tpu.memory_space<vmem>>, vector<128x128xf32>
      %44 = vector.broadcast %33 : vector<128x1xf32> to vector<128x128xf32>
      %45 = arith.mulf %44, %43 : vector<128x128xf32>
      %46 = arith.truncf %36 : vector<128x128xf32> to vector<128x128xbf16>
      %c0_26 = arith.constant 0 : index
      %c0_27 = arith.constant 0 : index
      %c0_28 = arith.constant 0 : index
      %47 = vector.load %arg6[%c0_26, %c0_27, %c0_28] : memref<1x128x128xbf16, #tpu.memory_space<vmem>>, vector<1x128x128xbf16>
      %48 = vector.shape_cast %47 : vector<1x128x128xbf16> to vector<128x128xbf16>
      %cst_29 = arith.constant dense<0.000000e+00> : vector<128x128xf32>
      %49 = tpu.matmul %46, %48, %cst_29 {dimension_numbers = #tpu.dot_dimension_numbers<[1], [0], [0], [1], [0, 0, 1, 1], [], []>} : vector<128x128xbf16>, vector<128x128xbf16>, vector<128x128xf32> -> vector<128x128xf32>
      %50 = arith.addf %45, %49 : vector<128x128xf32>
      %c0_30 = arith.constant 0 : index
      %c0_31 = arith.constant 0 : index
      %51 = vector.load %arg10[%c0_30, %c0_31] : memref<128x128xf32, #tpu.memory_space<vmem>>, vector<128x128xf32>
      tpu.vector_store %arg10[%c0_30, %c0_31], %50 {strides = array<i32>} : memref<128x128xf32, #tpu.memory_space<vmem>>, vector<128x128xf32>,
      %c0_32 = arith.constant 0 : index
      %c0_33 = arith.constant 0 : index
      %52 = vector.load %arg8[%c0_32, %c0_33] : memref<128x1xf32, #tpu.memory_space<vmem>>, vector<128x1xf32>
      tpu.vector_store %arg8[%c0_32, %c0_33], %31 {strides = array<i32>} : memref<128x1xf32, #tpu.memory_space<vmem>>, vector<128x1xf32>,
    } else {
    }
    %c1_i32_8 = arith.constant 1 : i32
    %18 = arith.cmpi eq, %arg3, %c1_i32_8 : i32
    %19 = arith.extui %18 : i1 to i32
    %c0_i32_9 = arith.constant 0 : i32
    %20 = arith.cmpi ne, %19, %c0_i32_9 : i32
    scf.if %20 {
      %c0 = arith.constant 0 : index
      %c0_10 = arith.constant 0 : index
      %21 = vector.load %arg10[%c0, %c0_10] : memref<128x128xf32, #tpu.memory_space<vmem>>, vector<128x128xf32>
      %c0_11 = arith.constant 0 : index
      %c0_12 = arith.constant 0 : index
      %22 = vector.load %arg9[%c0_11, %c0_12] : memref<128x1xf32, #tpu.memory_space<vmem>>, vector<128x1xf32>
      %23 = tpu.reciprocal %22 {approx = true} : vector<128x1xf32> -> vector<128x1xf32>
      %24 = vector.broadcast %23 : vector<128x1xf32> to vector<128x128xf32>
      %25 = arith.mulf %21, %24 : vector<128x128xf32>
      %26 = arith.truncf %25 : vector<128x128xf32> to vector<128x128xbf16>
      %c0_13 = arith.constant 0 : index
      %c0_14 = arith.constant 0 : index
      %c0_15 = arith.constant 0 : index
      %27 = vector.load %arg7[%c0_13, %c0_14, %c0_15] : memref<1x128x128xbf16, #tpu.memory_space<vmem>>, vector<1x128x128xbf16>
      %28 = vector.shape_cast %27 : vector<1x128x128xbf16> to vector<128x128xbf16>
      %29 = vector.shape_cast %26 : vector<128x128xbf16> to vector<1x128x128xbf16>
      tpu.vector_store %arg7[%c0_13, %c0_14, %c0_15], %29 {strides = array<i32>} : memref<1x128x128xbf16, #tpu.memory_space<vmem>>, vector<1x128x128xbf16>,
    } else {
    }
    return
  }
  func.func @transform_0(%arg0: i32, %arg1: i32, %arg2: i32, %arg3: i32) -> (i32, i32, i32) {
    %c0_i32 = arith.constant 0 : i32
    return %arg0, %arg2, %arg1 : i32, i32, i32
  }
  func.func @transform_1(%arg0: i32, %arg1: i32, %arg2: i32, %arg3: i32) -> (i32, i32, i32) {
    %c2_i32 = arith.constant 2 : i32
    %0 = arith.addi %c2_i32, %arg1 : i32
    %c0_i32 = arith.constant 0 : i32
    return %arg0, %arg3, %0 : i32, i32, i32
  }
  func.func @transform_2(%arg0: i32, %arg1: i32, %arg2: i32, %arg3: i32) -> (i32, i32, i32) {
    %c4_i32 = arith.constant 4 : i32
    %0 = arith.addi %c4_i32, %arg1 : i32
    %c0_i32 = arith.constant 0 : i32
    return %arg0, %arg3, %0 : i32, i32, i32
  }
  func.func @transform_3(%arg0: i32, %arg1: i32, %arg2: i32, %arg3: i32) -> (i32, i32, i32) {
    %c0_i32 = arith.constant 0 : i32
    return %arg0, %arg2, %arg1 : i32, i32, i32
  }
}

module attributes {stable_mosaic.version = 11 : i64} {
  func.func @_linear_kernel(%arg0: i32, %arg1: i32, %arg2: i32, %arg3: memref<256x256xbf16, #tpu.memory_space<vmem>>, %arg4: memref<256x256xbf16, #tpu.memory_space<vmem>>, %arg5: memref<1x256xf32, #tpu.memory_space<vmem>>, %arg6: memref<256x256xf32, #tpu.memory_space<vmem>>, %arg7: memref<256x256xf32, #tpu.memory_space<vmem>>) attributes {dimension_semantics = [#tpu.dimension_semantics<parallel>, #tpu.dimension_semantics<parallel>, #tpu.dimension_semantics<arbitrary>], iteration_bounds = array<i64: 2, 1, 1>, scalar_prefetch = 0 : i64, scratch_operands = 1 : i64, tpu.core_type = #tpu.core_type<tc>, window_params = [{transform_indices = @transform_0, window_bounds = array<i64: 256, 256>}, {transform_indices = @transform_1, window_bounds = array<i64: 256, 256>}, {transform_indices = @transform_2, window_bounds = array<i64: 1, 256>}, {transform_indices = @transform_3, window_bounds = array<i64: 256, 256>}]} {
    %c0_i32 = arith.constant 0 : i32
    %0 = arith.cmpi eq, %arg2, %c0_i32 : i32
    %1 = arith.extui %0 : i1 to i32
    %c0_i32_0 = arith.constant 0 : i32
    %2 = arith.cmpi ne, %1, %c0_i32_0 : i32
    scf.if %2 {
      %cst_10 = arith.constant 0.000000e+00 : f32
      %12 = vector.broadcast %cst_10 : f32 to vector<256x256xf32>
      %c0_11 = arith.constant 0 : index
      %c0_12 = arith.constant 0 : index
      %13 = vector.load %arg7[%c0_11, %c0_12] : memref<256x256xf32, #tpu.memory_space<vmem>>, vector<256x256xf32>
      tpu.vector_store %arg7[%c0_11, %c0_12], %12 {strides = array<i32>} : memref<256x256xf32, #tpu.memory_space<vmem>>, vector<256x256xf32>,
    } else {
    }
    %c0 = arith.constant 0 : index
    %c0_1 = arith.constant 0 : index
    %3 = vector.load %arg7[%c0, %c0_1] : memref<256x256xf32, #tpu.memory_space<vmem>>, vector<256x256xf32>
    %c0_2 = arith.constant 0 : index
    %c0_3 = arith.constant 0 : index
    %4 = vector.load %arg3[%c0_2, %c0_3] : memref<256x256xbf16, #tpu.memory_space<vmem>>, vector<256x256xbf16>
    %c0_4 = arith.constant 0 : index
    %c0_5 = arith.constant 0 : index
    %5 = vector.load %arg4[%c0_4, %c0_5] : memref<256x256xbf16, #tpu.memory_space<vmem>>, vector<256x256xbf16>
    %cst = arith.constant dense<0.000000e+00> : vector<256x256xf32>
    %6 = tpu.matmul %4, %5, %cst {dimension_numbers = #tpu.dot_dimension_numbers<[1], [0], [0], [1], [0, 0, 1, 1], [], []>} : vector<256x256xbf16>, vector<256x256xbf16>, vector<256x256xf32> -> vector<256x256xf32>
    %7 = arith.addf %3, %6 : vector<256x256xf32>
    %c0_6 = arith.constant 0 : index
    %c0_7 = arith.constant 0 : index
    %8 = vector.load %arg7[%c0_6, %c0_7] : memref<256x256xf32, #tpu.memory_space<vmem>>, vector<256x256xf32>
    tpu.vector_store %arg7[%c0_6, %c0_7], %7 {strides = array<i32>} : memref<256x256xf32, #tpu.memory_space<vmem>>, vector<256x256xf32>,
    %c0_i32_8 = arith.constant 0 : i32
    %9 = arith.cmpi eq, %arg2, %c0_i32_8 : i32
    %10 = arith.extui %9 : i1 to i32
    %c0_i32_9 = arith.constant 0 : i32
    %11 = arith.cmpi ne, %10, %c0_i32_9 : i32
    scf.if %11 {
      %c0_10 = arith.constant 0 : index
      %c0_11 = arith.constant 0 : index
      %12 = vector.load %arg7[%c0_10, %c0_11] : memref<256x256xf32, #tpu.memory_space<vmem>>, vector<256x256xf32>
      %c0_12 = arith.constant 0 : index
      %c0_13 = arith.constant 0 : index
      %13 = vector.load %arg5[%c0_12, %c0_13] : memref<1x256xf32, #tpu.memory_space<vmem>>, vector<1x256xf32>
      %14 = vector.broadcast %13 : vector<1x256xf32> to vector<256x256xf32>
      %15 = arith.addf %12, %14 : vector<256x256xf32>
      %c0_14 = arith.constant 0 : index
      %c0_15 = arith.constant 0 : index
      %16 = vector.load %arg6[%c0_14, %c0_15] : memref<256x256xf32, #tpu.memory_space<vmem>>, vector<256x256xf32>
      tpu.vector_store %arg6[%c0_14, %c0_15], %15 {strides = array<i32>} : memref<256x256xf32, #tpu.memory_space<vmem>>, vector<256x256xf32>,
    } else {
    }
    return
  }
  func.func @transform_0(%arg0: i32, %arg1: i32, %arg2: i32) -> (i32, i32) {
    %c0_i32 = arith.constant 0 : i32
    return %arg0, %arg2 : i32, i32
  }
  func.func @transform_1(%arg0: i32, %arg1: i32, %arg2: i32) -> (i32, i32) {
    %c0_i32 = arith.constant 0 : i32
    return %arg2, %arg1 : i32, i32
  }
  func.func @transform_2(%arg0: i32, %arg1: i32, %arg2: i32) -> (i32, i32) {
    %c0_i32 = arith.constant 0 : i32
    %c0_i32_0 = arith.constant 0 : i32
    return %c0_i32, %arg1 : i32, i32
  }
  func.func @transform_3(%arg0: i32, %arg1: i32, %arg2: i32) -> (i32, i32) {
    %c0_i32 = arith.constant 0 : i32
    return %arg0, %arg1 : i32, i32
  }
}

</mosaic_0001>

<llo_original>
// kernel: multi_head_attention.3
$region0: #{multi_head_attention.3}
  #allocation0 [shape = 'u32[]', space=smem, size = 0x4, offset = 0x4, fixed_abs, tag = 'smem constant byte address 0x4 - core index']
  #allocation1 [shape = 'u32[72,128]{1,0:T(1,128)}', space=vmem, size = 0x9000, scoped, tag = 'internal scratch']
  #allocation2 [shape = 'f32[256,256]{1,0:T(8,128)}', space=vmem, size = 0x40000, scoped, tag = 'scratch operand']
  %s0 = inlined_call_operand.vmem [shape: bf16[512,512], index: 0, kind: input, shape index: {}]
  %s1 = inlined_call_operand.vmem [shape: bf16[512,768], index: 1, kind: input, shape index: {}]
  %s2 = inlined_call_operand.vmem [shape: f32[1,768], index: 2, kind: input, shape index: {}]
  %s3 = inlined_call_operand.vmem [shape: bf16[512,768], index: 3, kind: output, shape index: {}]
  %s4 = sld [smem:[#allocation0]]
  $region163: #{multi_head_attention.3} parent=0
    _
  %s6 = ssub.s32 1, %s4
  %s7 = scalar_select 0, %s6, %s4
  $region1: #{multi_head_attention.3} parent=0
    #allocation3 [shape = 'u8[262144]{0}', space=vmem, size = 0x40000, scoped, tag = 'input window, operand 0']
    #allocation4 [shape = 'u8[262144]{0}', space=vmem, size = 0x40000, scoped, tag = 'input window, operand 1']
    #allocation5 [shape = 'u8[262144]{0}', space=vmem, size = 0x40000, scoped, tag = 'output window, operand 0']
    loop: start=0, step=1, limit=14
    $region2: #{multi_head_attention.3} parent=1 // loop_pre_header
      _
    $region3: #{multi_head_attention.3} parent=1 // loop_header
      %s9 = sphi 0, %s13
      %p10 = scmp.ge.s32.totalorder %s9, 14
      %s16 = sphi 0, %s35
      %s17 = sphi 0, %s31
      %s18 = sphi 0, %s27
      %s19 = sphi 0, %s16
      %s20 = sphi 0, %s17
      %s21 = sphi 0, %s18
      %s22 = sphi 0, %s19
      %s23 = sphi 0, %s20
      %s24 = sphi 0, %s21
      %s40 = sphi 0, %s42
      %s43 = sphi 0, %s40
      %s44 = sphi 0, %s43
      %s60 = sphi 0, %s44
      %s68 = sphi 0, %s70
      %s71 = sphi 0, %s68
      %s72 = sphi 0, %s71
      %s88 = sphi 0, %s72
      %s94 = sphi 0, %s96
      %s97 = sphi 0, %s94
      %s98 = sphi 0, %s97
      %s114 = sphi 0, %s98
      %s122 = sphi 0, %s124
      %s125 = sphi 0, %s122
      %s126 = sphi 0, %s125
      %s142 = sphi 0, %s126
    $region4: #{multi_head_attention.3} parent=1 // loop_header_branch
      %12 = sbr.rel (%p10) target = $region8
    $region5: #{multi_head_attention.3} parent=1 // loop_body
      %s14 = ssub.s32 %s9, 1
      %s15 = ssub.s32 %s9, 2
      %s25 = sadd.s32 1, %s18
      %p26 = scmp.ge.s32.totalorder %s25, 2
      %s27 = scalar_select %p26, 0, %s25
      %s28 = sadd.s32 1, %s17
      %s29 = scalar_select %p26, %s28, %s17
      %p30 = scmp.ge.s32.totalorder %s29, 3
      %s31 = scalar_select %p30, 0, %s29
      %s32 = sadd.s32 1, %s16
      %s33 = scalar_select %p30, %s32, %s16
      %p34 = scmp.ge.s32.totalorder %s33, 2
      %s35 = scalar_select %p34, 0, %s33
      %s36 = ssub.s32 %s16, %s35
      %s37 = ssub.s32 %s18, %s27
      %s38 = sor.u32 %s36, %s37
      %p39 = scmp.eq.s32.totalorder %s38, 0
      %s41 = sadd.s32 %s40, 1
      %s42 = scalar_select %p39, %s40, %s41
      %p45 = pneg %p39
      %p46 = scmp.eq.s32.totalorder %s9, 11
      %p47 = por %p45, %p46
      %p48 = scmp.ne.s32.totalorder %s40, %s43
      %p49 = scmp.eq.s32.totalorder %s9, 0
      %p50 = por %p48, %p49
      %p51 = scmp.ne.s32.totalorder %s40, %s43
      %p52 = scmp.eq.s32.totalorder %s14, 11
      %p53 = por %p51, %p52
      %p54 = scmp.ne.s32.totalorder %s43, %s44
      %p55 = scmp.eq.s32.totalorder %s14, 0
      %p56 = por %p54, %p55
      %p57 = scmp.ne.s32.totalorder %s43, %s44
      %p58 = scmp.eq.s32.totalorder %s15, 11
      %p59 = por %p57, %p58
      %p61 = scmp.ne.s32.totalorder %s44, %s60
      %p62 = scmp.eq.s32.totalorder %s15, 0
      %p63 = por %p61, %p62
      %s64 = ssub.s32 %s18, %s27
      %s65 = ssub.s32 %s17, %s31
      %s66 = sor.u32 %s64, %s65
      %p67 = scmp.eq.s32.totalorder %s66, 0
      %s69 = sadd.s32 %s68, 1
      %s70 = scalar_select %p67, %s68, %s69
      %p73 = pneg %p67
      %p74 = scmp.eq.s32.totalorder %s9, 11
      %p75 = por %p73, %p74
      %p76 = scmp.ne.s32.totalorder %s68, %s71
      %p77 = scmp.eq.s32.totalorder %s9, 0
      %p78 = por %p76, %p77
      %p79 = scmp.ne.s32.totalorder %s68, %s71
      %p80 = scmp.eq.s32.totalorder %s14, 11
      %p81 = por %p79, %p80
      %p82 = scmp.ne.s32.totalorder %s71, %s72
      %p83 = scmp.eq.s32.totalorder %s14, 0
      %p84 = por %p82, %p83
      %p85 = scmp.ne.s32.totalorder %s71, %s72
      %p86 = scmp.eq.s32.totalorder %s15, 11
      %p87 = por %p85, %p86
      %p89 = scmp.ne.s32.totalorder %s72, %s88
      %p90 = scmp.eq.s32.totalorder %s15, 0
      %p91 = por %p89, %p90
      %s92 = ssub.s32 %s17, %s31
      %p93 = scmp.eq.s32.totalorder %s92, 0
      %s95 = sadd.s32 %s94, 1
      %s96 = scalar_select %p93, %s94, %s95
      %p99 = pneg %p93
      %p100 = scmp.eq.s32.totalorder %s9, 11
      %p101 = por %p99, %p100
      %p102 = scmp.ne.s32.totalorder %s94, %s97
      %p103 = scmp.eq.s32.totalorder %s9, 0
      %p104 = por %p102, %p103
      %p105 = scmp.ne.s32.totalorder %s94, %s97
      %p106 = scmp.eq.s32.totalorder %s14, 11
      %p107 = por %p105, %p106
      %p108 = scmp.ne.s32.totalorder %s97, %s98
      %p109 = scmp.eq.s32.totalorder %s14, 0
      %p110 = por %p108, %p109
      %p111 = scmp.ne.s32.totalorder %s97, %s98
      %p112 = scmp.eq.s32.totalorder %s15, 11
      %p113 = por %p111, %p112
      %p115 = scmp.ne.s32.totalorder %s98, %s114
      %p116 = scmp.eq.s32.totalorder %s15, 0
      %p117 = por %p115, %p116
      %s118 = ssub.s32 %s16, %s35
      %s119 = ssub.s32 %s17, %s31
      %s120 = sor.u32 %s118, %s119
      %p121 = scmp.eq.s32.totalorder %s120, 0
      %s123 = sadd.s32 %s122, 1
      %s124 = scalar_select %p121, %s122, %s123
      %p127 = pneg %p121
      %p128 = scmp.eq.s32.totalorder %s9, 11
      %p129 = por %p127, %p128
      %p130 = scmp.ne.s32.totalorder %s122, %s125
      %p131 = scmp.eq.s32.totalorder %s9, 0
      %p132 = por %p130, %p131
      %p133 = scmp.ne.s32.totalorder %s122, %s125
      %p134 = scmp.eq.s32.totalorder %s14, 11
      %p135 = por %p133, %p134
      %p136 = scmp.ne.s32.totalorder %s125, %s126
      %p137 = scmp.eq.s32.totalorder %s14, 0
      %p138 = por %p136, %p137
      %p139 = scmp.ne.s32.totalorder %s125, %s126
      %p140 = scmp.eq.s32.totalorder %s15, 11
      %p141 = por %p139, %p140
      %p143 = scmp.ne.s32.totalorder %s126, %s142
      %p144 = scmp.eq.s32.totalorder %s15, 0
      %p145 = por %p143, %p144
      %p146 = scmp.le.s32.totalorder 1, %s9
      %p147 = scmp.lt.s32.totalorder %s9, 13
      %p148 = pnand %p146, %p147
      %p149 = pneg %p148
      // Predicated region
      $region9: #{multi_head_attention.3} parent=5 // pred_check
        _
      $region10: #{multi_head_attention.3} parent=5 // pred_check_branch
        %151 = sbr.rel (%p148) target = $region12
      $region11: #{multi_head_attention.3} parent=5 // pred_region
        %s152 = ssub.s32 %s9, 1
      $region12: #{multi_head_attention.3} parent=5 // pred_fallthru
        _
      %p153 = scmp.lt.s32.totalorder %s9, 12
      // Predicated region
      $region13: #{multi_head_attention.3} parent=5 // pred_check
        %p154 = pneg %p153
      $region14: #{multi_head_attention.3} parent=5 // pred_check_branch
        %156 = sbr.rel (%p154) target = $region16
      $region15: #{multi_head_attention.3} parent=5 // pred_region
        // Predicated region
        $region17: #{multi_head_attention.3} parent=15 // pred_check
          %p157 = pneg %p50
        $region18: #{multi_head_attention.3} parent=15 // pred_check_branch
          %159 = sbr.rel (%p157) target = $region20
        $region19: #{multi_head_attention.3} parent=15 // pred_region
          %s160 = sand.u32 %s40, 1
          %s161 = sand.u32 %s40, 1
          %s162 = smul.addr %s161, 256
          %s163 = scalar_lea.vmem [#allocation3], %s162
          %s164 = smul.u32 32, %s16
          %s165 = smul.u32 2, %s18
          %s166 = smul.addr %s164, 4
          %s167 = sadd.s32 %s165, %s166
          %s168 = smul.addr %s167, 4
          %s169 = scalar_lea.vmem %s0, %s168
          // Predicated region
          $region21: #{multi_head_attention.3} parent=19 // pred_check
            _
          $region22: #{multi_head_attention.3} parent=19 // pred_check_branch
            %171 = sbr.rel (0) target = $region24
          $region23: #{multi_head_attention.3} parent=19 // pred_region
            // Predicated region
            $region25: #{multi_head_attention.3} parent=23 // pred_check
              _
            $region26: #{multi_head_attention.3} parent=23 // pred_check_branch
              %173 = sbr.rel (0) target = $region28
            $region27: #{multi_head_attention.3} parent=23 // pred_region
              // Predicated region
              $region40: #{multi_head_attention.3} parent=27 // pred_check
                _
              $region41: #{multi_head_attention.3} parent=27 // pred_check_branch
                %251 = sbr.rel (0) target = $region43
              $region42: #{multi_head_attention.3} parent=27 // pred_region
                loop: start=0, step=1, limit=1
                $region44: #{multi_head_attention.3} parent=42 // loop_pre_header
                  _
                $region45: #{multi_head_attention.3} parent=42 // loop_header
                  %s253 = sphi 0, %s257
                  %p254 = scmp.ge.s32.totalorder %s253, 1
                  %s258 = sphi %s169, %s169
                  %s259 = sphi %s163, %s163
                $region46: #{multi_head_attention.3} parent=42 // loop_header_branch
                  %256 = sbr.rel (%p254) target = $region50
                $region47: #{multi_head_attention.3} parent=42 // loop_body
                  %v260 = vld [vmem:[%s258] sm:$0xff]
                  %261 = vst [vmem:[%s259] sm:$0xff] %v260
                  %v262 = vld [vmem:[%s258 + $0x10] sm:$0xff]
                  %263 = vst [vmem:[%s259 + $0x8] sm:$0xff] %v262
                  %v264 = vld [vmem:[%s258 + $0x20] sm:$0xff]
                  %265 = vst [vmem:[%s259 + $0x10] sm:$0xff] %v264
                  %v266 = vld [vmem:[%s258 + $0x30] sm:$0xff]
                  %267 = vst [vmem:[%s259 + $0x18] sm:$0xff] %v266
                  %v268 = vld [vmem:[%s258 + $0x40] sm:$0xff]
                  %269 = vst [vmem:[%s259 + $0x20] sm:$0xff] %v268
                  %v270 = vld [vmem:[%s258 + $0x50] sm:$0xff]
                  %271 = vst [vmem:[%s259 + $0x28] sm:$0xff] %v270
                  %v272 = vld [vmem:[%s258 + $0x60] sm:$0xff]
                  %273 = vst [vmem:[%s259 + $0x30] sm:$0xff] %v272
                  %v274 = vld [vmem:[%s258 + $0x70] sm:$0xff]
                  %275 = vst [vmem:[%s259 + $0x38] sm:$0xff] %v274
                  %v276 = vld [vmem:[%s258 + $0x80] sm:$0xff]
                  %277 = vst [vmem:[%s259 + $0x40] sm:$0xff] %v276
                  %v278 = vld [vmem:[%s258 + $0x90] sm:$0xff]
                  %279 = vst [vmem:[%s259 + $0x48] sm:$0xff] %v278
                  %v280 = vld [vmem:[%s258 + $0xa0] sm:$0xff]
                  %281 = vst [vmem:[%s259 + $0x50] sm:$0xff] %v280
                  %v282 = vld [vmem:[%s258 + $0xb0] sm:$0xff]
                  %283 = vst [vmem:[%s259 + $0x58] sm:$0xff] %v282
                  %v284 = vld [vmem:[%s258 + $0xc0] sm:$0xff]
                  %285 = vst [vmem:[%s259 + $0x60] sm:$0xff] %v284
                  %v286 = vld [vmem:[%s258 + $0xd0] sm:$0xff]
                  %287 = vst [vmem:[%s259 + $0x68] sm:$0xff] %v286
                  %v288 = vld [vmem:[%s258 + $0xe0] sm:$0xff]
                  %289 = vst [vmem:[%s259 + $0x70] sm:$0xff] %v288
                  %v290 = vld [vmem:[%s258 + $0xf0] sm:$0xff]
                  %291 = vst [vmem:[%s259 + $0x78] sm:$0xff] %v290
                  %v292 = vld [vmem:[%s258 + $0x100] sm:$0xff]
                  %293 = vst [vmem:[%s259 + $0x80] sm:$0xff] %v292
                  %v294 = vld [vmem:[%s258 + $0x110] sm:$0xff]
                  %295 = vst [vmem:[%s259 + $0x88] sm:$0xff] %v294
                  %v296 = vld [vmem:[%s258 + $0x120] sm:$0xff]
                  %297 = vst [vmem:[%s259 + $0x90] sm:$0xff] %v296
                  %v298 = vld [vmem:[%s258 + $0x130] sm:$0xff]
                  %299 = vst [vmem:[%s259 + $0x98] sm:$0xff] %v298
                  %v300 = vld [vmem:[%s258 + $0x140] sm:$0xff]
                  %301 = vst [vmem:[%s259 + $0xa0] sm:$0xff] %v300
                  %v302 = vld [vmem:[%s258 + $0x150] sm:$0xff]
                  %303 = vst [vmem:[%s259 + $0xa8] sm:$0xff] %v302
                  %v304 = vld [vmem:[%s258 + $0x160] sm:$0xff]
                  %305 = vst [vmem:[%s259 + $0xb0] sm:$0xff] %v304
                  %v306 = vld [vmem:[%s258 + $0x170] sm:$0xff]
                  %307 = vst [vmem:[%s259 + $0xb8] sm:$0xff] %v306
                  %v308 = vld [vmem:[%s258 + $0x180] sm:$0xff]
                  %309 = vst [vmem:[%s259 + $0xc0] sm:$0xff] %v308
                  %v310 = vld [vmem:[%s258 + $0x190] sm:$0xff]
                  %311 = vst [vmem:[%s259 + $0xc8] sm:$0xff] %v310
                  %v312 = vld [vmem:[%s258 + $0x1a0] sm:$0xff]
                  %313 = vst [vmem:[%s259 + $0xd0] sm:$0xff] %v312
                  %v314 = vld [vmem:[%s258 + $0x1b0] sm:$0xff]
                  %315 = vst [vmem:[%s259 + $0xd8] sm:$0xff] %v314
                  %v316 = vld [vmem:[%s258 + $0x1c0] sm:$0xff]
                  %317 = vst [vmem:[%s259 + $0xe0] sm:$0xff] %v316
                  %v318 = vld [vmem:[%s258 + $0x1d0] sm:$0xff]
                  %319 = vst [vmem:[%s259 + $0xe8] sm:$0xff] %v318
                  %v320 = vld [vmem:[%s258 + $0x1e0] sm:$0xff]
                  %321 = vst [vmem:[%s259 + $0xf0] sm:$0xff] %v320
                  %v322 = vld [vmem:[%s258 + $0x1f0] sm:$0xff]
                  %323 = vst [vmem:[%s259 + $0xf8] sm:$0xff] %v322
                $region48: #{multi_head_attention.3} parent=42 // loop_footer
                  %s257 = sadd.s32 1, %s253
                $region49: #{multi_head_attention.3} parent=42 // loop_footer_branch
                  %252 = sbr.rel target = $region45
                $region50: #{multi_head_attention.3} parent=42 // loop_exit
                  _
              $region43: #{multi_head_attention.3} parent=27 // pred_fallthru
                _
              // Predicated region
              $region51: #{multi_head_attention.3} parent=27 // pred_check
                _
              $region52: #{multi_head_attention.3} parent=27 // pred_check_branch
                %325 = sbr.rel target = $region54
              $region53: #{multi_head_attention.3} parent=27 // pred_region
                _
              $region54: #{multi_head_attention.3} parent=27 // pred_fallthru
                _
            $region28: #{multi_head_attention.3} parent=23 // pred_fallthru
              _
            // Predicated region
            $region29: #{multi_head_attention.3} parent=23 // pred_check
              _
            $region30: #{multi_head_attention.3} parent=23 // pred_check_branch
              %175 = sbr.rel target = $region32
            $region31: #{multi_head_attention.3} parent=23 // pred_region
              %s177 = ssub.s32 256, 1
              loop: start=0, step=1, limit=1
              $region33: #{multi_head_attention.3} parent=31 // loop_pre_header
                _
              $region34: #{multi_head_attention.3} parent=31 // loop_header
                %s179 = sphi 0, %s183
                %p180 = scmp.ge.s32.totalorder %s179, 1
                %s184 = sphi %s169, %s169
                %s185 = sphi %s163, %s163
              $region35: #{multi_head_attention.3} parent=31 // loop_header_branch
                %182 = sbr.rel (%p180) target = $region39
              $region36: #{multi_head_attention.3} parent=31 // loop_body
                %v186 = vld [vmem:[%s184] sm:%s177]
                %187 = vst [vmem:[%s185] sm:%s177] %v186
                %v188 = vld [vmem:[%s184 + $0x10] sm:%s177]
                %189 = vst [vmem:[%s185 + $0x8] sm:%s177] %v188
                %v190 = vld [vmem:[%s184 + $0x20] sm:%s177]
                %191 = vst [vmem:[%s185 + $0x10] sm:%s177] %v190
                %v192 = vld [vmem:[%s184 + $0x30] sm:%s177]
                %193 = vst [vmem:[%s185 + $0x18] sm:%s177] %v192
                %v194 = vld [vmem:[%s184 + $0x40] sm:%s177]
                %195 = vst [vmem:[%s185 + $0x20] sm:%s177] %v194
                %v196 = vld [vmem:[%s184 + $0x50] sm:%s177]
                %197 = vst [vmem:[%s185 + $0x28] sm:%s177] %v196
                %v198 = vld [vmem:[%s184 + $0x60] sm:%s177]
                %199 = vst [vmem:[%s185 + $0x30] sm:%s177] %v198
                %v200 = vld [vmem:[%s184 + $0x70] sm:%s177]
                %201 = vst [vmem:[%s185 + $0x38] sm:%s177] %v200
                %v202 = vld [vmem:[%s184 + $0x80] sm:%s177]
                %203 = vst [vmem:[%s185 + $0x40] sm:%s177] %v202
                %v204 = vld [vmem:[%s184 + $0x90] sm:%s177]
                %205 = vst [vmem:[%s185 + $0x48] sm:%s177] %v204
                %v206 = vld [vmem:[%s184 + $0xa0] sm:%s177]
                %207 = vst [vmem:[%s185 + $0x50] sm:%s177] %v206
                %v208 = vld [vmem:[%s184 + $0xb0] sm:%s177]
                %209 = vst [vmem:[%s185 + $0x58] sm:%s177] %v208
                %v210 = vld [vmem:[%s184 + $0xc0] sm:%s177]
                %211 = vst [vmem:[%s185 + $0x60] sm:%s177] %v210
                %v212 = vld [vmem:[%s184 + $0xd0] sm:%s177]
                %213 = vst [vmem:[%s185 + $0x68] sm:%s177] %v212
                %v214 = vld [vmem:[%s184 + $0xe0] sm:%s177]
                %215 = vst [vmem:[%s185 + $0x70] sm:%s177] %v214
                %v216 = vld [vmem:[%s184 + $0xf0] sm:%s177]
                %217 = vst [vmem:[%s185 + $0x78] sm:%s177] %v216
                %v218 = vld [vmem:[%s184 + $0x100] sm:%s177]
                %219 = vst [vmem:[%s185 + $0x80] sm:%s177] %v218
                %v220 = vld [vmem:[%s184 + $0x110] sm:%s177]
                %221 = vst [vmem:[%s185 + $0x88] sm:%s177] %v220
                %v222 = vld [vmem:[%s184 + $0x120] sm:%s177]
                %223 = vst [vmem:[%s185 + $0x90] sm:%s177] %v222
                %v224 = vld [vmem:[%s184 + $0x130] sm:%s177]
                %225 = vst [vmem:[%s185 + $0x98] sm:%s177] %v224
                %v226 = vld [vmem:[%s184 + $0x140] sm:%s177]
                %227 = vst [vmem:[%s185 + $0xa0] sm:%s177] %v226
                %v228 = vld [vmem:[%s184 + $0x150] sm:%s177]
                %229 = vst [vmem:[%s185 + $0xa8] sm:%s177] %v228
                %v230 = vld [vmem:[%s184 + $0x160] sm:%s177]
                %231 = vst [vmem:[%s185 + $0xb0] sm:%s177] %v230
                %v232 = vld [vmem:[%s184 + $0x170] sm:%s177]
                %233 = vst [vmem:[%s185 + $0xb8] sm:%s177] %v232
                %v234 = vld [vmem:[%s184 + $0x180] sm:%s177]
                %235 = vst [vmem:[%s185 + $0xc0] sm:%s177] %v234
                %v236 = vld [vmem:[%s184 + $0x190] sm:%s177]
                %237 = vst [vmem:[%s185 + $0xc8] sm:%s177] %v236
                %v238 = vld [vmem:[%s184 + $0x1a0] sm:%s177]
                %239 = vst [vmem:[%s185 + $0xd0] sm:%s177] %v238
                %v240 = vld [vmem:[%s184 + $0x1b0] sm:%s177]
                %241 = vst [vmem:[%s185 + $0xd8] sm:%s177] %v240
                %v242 = vld [vmem:[%s184 + $0x1c0] sm:%s177]
                %243 = vst [vmem:[%s185 + $0xe0] sm:%s177] %v242
                %v244 = vld [vmem:[%s184 + $0x1d0] sm:%s177]
                %245 = vst [vmem:[%s185 + $0xe8] sm:%s177] %v244
                %v246 = vld [vmem:[%s184 + $0x1e0] sm:%s177]
                %247 = vst [vmem:[%s185 + $0xf0] sm:%s177] %v246
                %v248 = vld [vmem:[%s184 + $0x1f0] sm:%s177]
                %249 = vst [vmem:[%s185 + $0xf8] sm:%s177] %v248
              $region37: #{multi_head_attention.3} parent=31 // loop_footer
                %s183 = sadd.s32 1, %s179
              $region38: #{multi_head_attention.3} parent=31 // loop_footer_branch
                %178 = sbr.rel target = $region34
              $region39: #{multi_head_attention.3} parent=31 // loop_exit
                _
            $region32: #{multi_head_attention.3} parent=23 // pred_fallthru
              _
          $region24: #{multi_head_attention.3} parent=19 // pred_fallthru
            _
          %326 = vnop
        $region20: #{multi_head_attention.3} parent=15 // pred_fallthru
          _
        // Predicated region
        $region55: #{multi_head_attention.3} parent=15 // pred_check
          %p327 = pneg %p78
        $region56: #{multi_head_attention.3} parent=15 // pred_check_branch
          %329 = sbr.rel (%p327) target = $region58
        $region57: #{multi_head_attention.3} parent=15 // pred_region
          %s330 = sand.u32 %s68, 1
          %s331 = sand.u32 %s68, 1
          %s332 = smul.addr %s331, 256
          %s333 = scalar_lea.vmem [#allocation4], %s332
          %s334 = smul.u32 32, %s18
          %s335 = smul.u32 2, %s17
          %s336 = smul.addr %s334, 6
          %s337 = sadd.s32 %s335, %s336
          %s338 = smul.addr %s337, 4
          %s339 = scalar_lea.vmem %s1, %s338
          // Predicated region
          $region59: #{multi_head_attention.3} parent=57 // pred_check
            _
          $region60: #{multi_head_attention.3} parent=57 // pred_check_branch
            %341 = sbr.rel (0) target = $region62
          $region61: #{multi_head_attention.3} parent=57 // pred_region
            // Predicated region
            $region63: #{multi_head_attention.3} parent=61 // pred_check
              _
            $region64: #{multi_head_attention.3} parent=61 // pred_check_branch
              %343 = sbr.rel (0) target = $region66
            $region65: #{multi_head_attention.3} parent=61 // pred_region
              // Predicated region
              $region78: #{multi_head_attention.3} parent=65 // pred_check
                _
              $region79: #{multi_head_attention.3} parent=65 // pred_check_branch
                %421 = sbr.rel (0) target = $region81
              $region80: #{multi_head_attention.3} parent=65 // pred_region
                loop: start=0, step=1, limit=1
                $region82: #{multi_head_attention.3} parent=80 // loop_pre_header
                  _
                $region83: #{multi_head_attention.3} parent=80 // loop_header
                  %s423 = sphi 0, %s427
                  %p424 = scmp.ge.s32.totalorder %s423, 1
                  %s428 = sphi %s339, %s339
                  %s429 = sphi %s333, %s333
                $region84: #{multi_head_attention.3} parent=80 // loop_header_branch
                  %426 = sbr.rel (%p424) target = $region88
                $region85: #{multi_head_attention.3} parent=80 // loop_body
                  %v430 = vld [vmem:[%s428] sm:$0xff]
                  %431 = vst [vmem:[%s429] sm:$0xff] %v430
                  %v432 = vld [vmem:[%s428 + $0x18] sm:$0xff]
                  %433 = vst [vmem:[%s429 + $0x8] sm:$0xff] %v432
                  %v434 = vld [vmem:[%s428 + $0x30] sm:$0xff]
                  %435 = vst [vmem:[%s429 + $0x10] sm:$0xff] %v434
                  %v436 = vld [vmem:[%s428 + $0x48] sm:$0xff]
                  %437 = vst [vmem:[%s429 + $0x18] sm:$0xff] %v436
                  %v438 = vld [vmem:[%s428 + $0x60] sm:$0xff]
                  %439 = vst [vmem:[%s429 + $0x20] sm:$0xff] %v438
                  %v440 = vld [vmem:[%s428 + $0x78] sm:$0xff]
                  %441 = vst [vmem:[%s429 + $0x28] sm:$0xff] %v440
                  %v442 = vld [vmem:[%s428 + $0x90] sm:$0xff]
                  %443 = vst [vmem:[%s429 + $0x30] sm:$0xff] %v442
                  %v444 = vld [vmem:[%s428 + $0xa8] sm:$0xff]
                  %445 = vst [vmem:[%s429 + $0x38] sm:$0xff] %v444
                  %v446 = vld [vmem:[%s428 + $0xc0] sm:$0xff]
                  %447 = vst [vmem:[%s429 + $0x40] sm:$0xff] %v446
                  %v448 = vld [vmem:[%s428 + $0xd8] sm:$0xff]
                  %449 = vst [vmem:[%s429 + $0x48] sm:$0xff] %v448
                  %v450 = vld [vmem:[%s428 + $0xf0] sm:$0xff]
                  %451 = vst [vmem:[%s429 + $0x50] sm:$0xff] %v450
                  %v452 = vld [vmem:[%s428 + $0x108] sm:$0xff]
                  %453 = vst [vmem:[%s429 + $0x58] sm:$0xff] %v452
                  %v454 = vld [vmem:[%s428 + $0x120] sm:$0xff]
                  %455 = vst [vmem:[%s429 + $0x60] sm:$0xff] %v454
                  %v456 = vld [vmem:[%s428 + $0x138] sm:$0xff]
                  %457 = vst [vmem:[%s429 + $0x68] sm:$0xff] %v456
                  %v458 = vld [vmem:[%s428 + $0x150] sm:$0xff]
                  %459 = vst [vmem:[%s429 + $0x70] sm:$0xff] %v458
                  %v460 = vld [vmem:[%s428 + $0x168] sm:$0xff]
                  %461 = vst [vmem:[%s429 + $0x78] sm:$0xff] %v460
                  %v462 = vld [vmem:[%s428 + $0x180] sm:$0xff]
                  %463 = vst [vmem:[%s429 + $0x80] sm:$0xff] %v462
                  %v464 = vld [vmem:[%s428 + $0x198] sm:$0xff]
                  %465 = vst [vmem:[%s429 + $0x88] sm:$0xff] %v464
                  %v466 = vld [vmem:[%s428 + $0x1b0] sm:$0xff]
                  %467 = vst [vmem:[%s429 + $0x90] sm:$0xff] %v466
                  %v468 = vld [vmem:[%s428 + $0x1c8] sm:$0xff]
                  %469 = vst [vmem:[%s429 + $0x98] sm:$0xff] %v468
                  %v470 = vld [vmem:[%s428 + $0x1e0] sm:$0xff]
                  %471 = vst [vmem:[%s429 + $0xa0] sm:$0xff] %v470
                  %v472 = vld [vmem:[%s428 + $0x1f8] sm:$0xff]
                  %473 = vst [vmem:[%s429 + $0xa8] sm:$0xff] %v472
                  %v474 = vld [vmem:[%s428 + $0x210] sm:$0xff]
                  %475 = vst [vmem:[%s429 + $0xb0] sm:$0xff] %v474
                  %v476 = vld [vmem:[%s428 + $0x228] sm:$0xff]
                  %477 = vst [vmem:[%s429 + $0xb8] sm:$0xff] %v476
                  %v478 = vld [vmem:[%s428 + $0x240] sm:$0xff]
                  %479 = vst [vmem:[%s429 + $0xc0] sm:$0xff] %v478
                  %v480 = vld [vmem:[%s428 + $0x258] sm:$0xff]
                  %481 = vst [vmem:[%s429 + $0xc8] sm:$0xff] %v480
                  %v482 = vld [vmem:[%s428 + $0x270] sm:$0xff]
                  %483 = vst [vmem:[%s429 + $0xd0] sm:$0xff] %v482
                  %v484 = vld [vmem:[%s428 + $0x288] sm:$0xff]
                  %485 = vst [vmem:[%s429 + $0xd8] sm:$0xff] %v484
                  %v486 = vld [vmem:[%s428 + $0x2a0] sm:$0xff]
                  %487 = vst [vmem:[%s429 + $0xe0] sm:$0xff] %v486
                  %v488 = vld [vmem:[%s428 + $0x2b8] sm:$0xff]
                  %489 = vst [vmem:[%s429 + $0xe8] sm:$0xff] %v488
                  %v490 = vld [vmem:[%s428 + $0x2d0] sm:$0xff]
                  %491 = vst [vmem:[%s429 + $0xf0] sm:$0xff] %v490
                  %v492 = vld [vmem:[%s428 + $0x2e8] sm:$0xff]
                  %493 = vst [vmem:[%s429 + $0xf8] sm:$0xff] %v492
                $region86: #{multi_head_attention.3} parent=80 // loop_footer
                  %s427 = sadd.s32 1, %s423
                $region87: #{multi_head_attention.3} parent=80 // loop_footer_branch
                  %422 = sbr.rel target = $region83
                $region88: #{multi_head_attention.3} parent=80 // loop_exit
                  _
              $region81: #{multi_head_attention.3} parent=65 // pred_fallthru
                _
              // Predicated region
              $region89: #{multi_head_attention.3} parent=65 // pred_check
                _
              $region90: #{multi_head_attention.3} parent=65 // pred_check_branch
                %495 = sbr.rel target = $region92
              $region91: #{multi_head_attention.3} parent=65 // pred_region
                _
              $region92: #{multi_head_attention.3} parent=65 // pred_fallthru
                _
            $region66: #{multi_head_attention.3} parent=61 // pred_fallthru
              _
            // Predicated region
            $region67: #{multi_head_attention.3} parent=61 // pred_check
              _
            $region68: #{multi_head_attention.3} parent=61 // pred_check_branch
              %345 = sbr.rel target = $region70
            $region69: #{multi_head_attention.3} parent=61 // pred_region
              %s347 = ssub.s32 256, 1
              loop: start=0, step=1, limit=1
              $region71: #{multi_head_attention.3} parent=69 // loop_pre_header
                _
              $region72: #{multi_head_attention.3} parent=69 // loop_header
                %s349 = sphi 0, %s353
                %p350 = scmp.ge.s32.totalorder %s349, 1
                %s354 = sphi %s339, %s339
                %s355 = sphi %s333, %s333
              $region73: #{multi_head_attention.3} parent=69 // loop_header_branch
                %352 = sbr.rel (%p350) target = $region77
              $region74: #{multi_head_attention.3} parent=69 // loop_body
                %v356 = vld [vmem:[%s354] sm:%s347]
                %357 = vst [vmem:[%s355] sm:%s347] %v356
                %v358 = vld [vmem:[%s354 + $0x18] sm:%s347]
                %359 = vst [vmem:[%s355 + $0x8] sm:%s347] %v358
                %v360 = vld [vmem:[%s354 + $0x30] sm:%s347]
                %361 = vst [vmem:[%s355 + $0x10] sm:%s347] %v360
                %v362 = vld [vmem:[%s354 + $0x48] sm:%s347]
                %363 = vst [vmem:[%s355 + $0x18] sm:%s347] %v362
                %v364 = vld [vmem:[%s354 + $0x60] sm:%s347]
                %365 = vst [vmem:[%s355 + $0x20] sm:%s347] %v364
                %v366 = vld [vmem:[%s354 + $0x78] sm:%s347]
                %367 = vst [vmem:[%s355 + $0x28] sm:%s347] %v366
                %v368 = vld [vmem:[%s354 + $0x90] sm:%s347]
                %369 = vst [vmem:[%s355 + $0x30] sm:%s347] %v368
                %v370 = vld [vmem:[%s354 + $0xa8] sm:%s347]
                %371 = vst [vmem:[%s355 + $0x38] sm:%s347] %v370
                %v372 = vld [vmem:[%s354 + $0xc0] sm:%s347]
                %373 = vst [vmem:[%s355 + $0x40] sm:%s347] %v372
                %v374 = vld [vmem:[%s354 + $0xd8] sm:%s347]
                %375 = vst [vmem:[%s355 + $0x48] sm:%s347] %v374
                %v376 = vld [vmem:[%s354 + $0xf0] sm:%s347]
                %377 = vst [vmem:[%s355 + $0x50] sm:%s347] %v376
                %v378 = vld [vmem:[%s354 + $0x108] sm:%s347]
                %379 = vst [vmem:[%s355 + $0x58] sm:%s347] %v378
                %v380 = vld [vmem:[%s354 + $0x120] sm:%s347]
                %381 = vst [vmem:[%s355 + $0x60] sm:%s347] %v380
                %v382 = vld [vmem:[%s354 + $0x138] sm:%s347]
                %383 = vst [vmem:[%s355 + $0x68] sm:%s347] %v382
                %v384 = vld [vmem:[%s354 + $0x150] sm:%s347]
                %385 = vst [vmem:[%s355 + $0x70] sm:%s347] %v384
                %v386 = vld [vmem:[%s354 + $0x168] sm:%s347]
                %387 = vst [vmem:[%s355 + $0x78] sm:%s347] %v386
                %v388 = vld [vmem:[%s354 + $0x180] sm:%s347]
                %389 = vst [vmem:[%s355 + $0x80] sm:%s347] %v388
                %v390 = vld [vmem:[%s354 + $0x198] sm:%s347]
                %391 = vst [vmem:[%s355 + $0x88] sm:%s347] %v390
                %v392 = vld [vmem:[%s354 + $0x1b0] sm:%s347]
                %393 = vst [vmem:[%s355 + $0x90] sm:%s347] %v392
                %v394 = vld [vmem:[%s354 + $0x1c8] sm:%s347]
                %395 = vst [vmem:[%s355 + $0x98] sm:%s347] %v394
                %v396 = vld [vmem:[%s354 + $0x1e0] sm:%s347]
                %397 = vst [vmem:[%s355 + $0xa0] sm:%s347] %v396
                %v398 = vld [vmem:[%s354 + $0x1f8] sm:%s347]
                %399 = vst [vmem:[%s355 + $0xa8] sm:%s347] %v398
                %v400 = vld [vmem:[%s354 + $0x210] sm:%s347]
                %401 = vst [vmem:[%s355 + $0xb0] sm:%s347] %v400
                %v402 = vld [vmem:[%s354 + $0x228] sm:%s347]
                %403 = vst [vmem:[%s355 + $0xb8] sm:%s347] %v402
                %v404 = vld [vmem:[%s354 + $0x240] sm:%s347]
                %405 = vst [vmem:[%s355 + $0xc0] sm:%s347] %v404
                %v406 = vld [vmem:[%s354 + $0x258] sm:%s347]
                %407 = vst [vmem:[%s355 + $0xc8] sm:%s347] %v406
                %v408 = vld [vmem:[%s354 + $0x270] sm:%s347]
                %409 = vst [vmem:[%s355 + $0xd0] sm:%s347] %v408
                %v410 = vld [vmem:[%s354 + $0x288] sm:%s347]
                %411 = vst [vmem:[%s355 + $0xd8] sm:%s347] %v410
                %v412 = vld [vmem:[%s354 + $0x2a0] sm:%s347]
                %413 = vst [vmem:[%s355 + $0xe0] sm:%s347] %v412
                %v414 = vld [vmem:[%s354 + $0x2b8] sm:%s347]
                %415 = vst [vmem:[%s355 + $0xe8] sm:%s347] %v414
                %v416 = vld [vmem:[%s354 + $0x2d0] sm:%s347]
                %417 = vst [vmem:[%s355 + $0xf0] sm:%s347] %v416
                %v418 = vld [vmem:[%s354 + $0x2e8] sm:%s347]
                %419 = vst [vmem:[%s355 + $0xf8] sm:%s347] %v418
              $region75: #{multi_head_attention.3} parent=69 // loop_footer
                %s353 = sadd.s32 1, %s349
              $region76: #{multi_head_attention.3} parent=69 // loop_footer_branch
                %348 = sbr.rel target = $region72
              $region77: #{multi_head_attention.3} parent=69 // loop_exit
                _
            $region70: #{multi_head_attention.3} parent=61 // pred_fallthru
              _
          $region62: #{multi_head_attention.3} parent=57 // pred_fallthru
            _
          %496 = vnop
        $region58: #{multi_head_attention.3} parent=15 // pred_fallthru
          _
        // Predicated region
        $region93: #{multi_head_attention.3} parent=15 // pred_check
          %p497 = pneg %p104
        $region94: #{multi_head_attention.3} parent=15 // pred_check_branch
          %499 = sbr.rel (%p497) target = $region96
        $region95: #{multi_head_attention.3} parent=15 // pred_region
          %s500 = smul.u32 2, %s17
          %p501 = scmp.lt.s32.totalorder %s500, 5
          %s502 = scalar_select %p501, %s500, 5
          %s503 = scalar_lea.vmem %s2, %s502
          %s504 = smul.u32 2, %s17
        $region96: #{multi_head_attention.3} parent=15 // pred_fallthru
          _
      $region16: #{multi_head_attention.3} parent=5 // pred_fallthru
        _
      %p505 = scmp.le.s32.totalorder 1, %s9
      %p506 = scmp.lt.s32.totalorder %s9, 13
      %p507 = pnand %p505, %p506
      %p508 = pneg %p507
      // Predicated region
      $region97: #{multi_head_attention.3} parent=5 // pred_check
        _
      $region98: #{multi_head_attention.3} parent=5 // pred_check_branch
        %510 = sbr.rel (%p507) target = $region100
      $region99: #{multi_head_attention.3} parent=5 // pred_region
        %s511 = ssub.s32 %s9, 1
        %s512 = sand.u32 %s43, 1
        %s513 = sand.u32 %s43, 1
        %s514 = smul.addr %s513, 256
        %s515 = scalar_lea.vmem [#allocation3], %s514
        // Predicated region
        $region101: #{multi_head_attention.3} parent=99 // pred_check
          %p516 = pneg %p56
        $region102: #{multi_head_attention.3} parent=99 // pred_check_branch
          %518 = sbr.rel (%p516) target = $region104
        $region103: #{multi_head_attention.3} parent=99 // pred_region
          _
        $region104: #{multi_head_attention.3} parent=99 // pred_fallthru
          _
        %s519 = sand.u32 %s71, 1
        %s520 = sand.u32 %s71, 1
        %s521 = smul.addr %s520, 256
        %s522 = scalar_lea.vmem [#allocation4], %s521
        // Predicated region
        $region105: #{multi_head_attention.3} parent=99 // pred_check
          %p523 = pneg %p84
        $region106: #{multi_head_attention.3} parent=99 // pred_check_branch
          %525 = sbr.rel (%p523) target = $region108
        $region107: #{multi_head_attention.3} parent=99 // pred_region
          _
        $region108: #{multi_head_attention.3} parent=99 // pred_fallthru
          _
        %s526 = sand.u32 %s43, 1
        %s527 = sand.u32 %s43, 1
        %s528 = smul.addr %s527, 256
        %s529 = scalar_lea.vmem [#allocation3], %s528
        %p530 = pneg %p56
        %p531 = pneg %p53
        %s532 = sand.u32 %s71, 1
        %s533 = sand.u32 %s71, 1
        %s534 = smul.addr %s533, 256
        %s535 = scalar_lea.vmem [#allocation4], %s534
        %p536 = pneg %p84
        %p537 = pneg %p81
        %s538 = smul.u32 2, %s20
        %p539 = scmp.lt.s32.totalorder %s538, 5
        %s540 = scalar_select %p539, %s538, 5
        %s541 = scalar_lea.vmem %s2, %s540
        %p542 = pneg %p110
        %p543 = pneg %p107
        %p544 = pneg %p138
        %p545 = pneg %p135
        %s546 = sand.u32 %s125, 1
        %s547 = sand.u32 %s125, 1
        %s548 = smul.addr %s547, 256
        %s549 = scalar_lea.vmem [#allocation5], %s548
        %s550 = smul.u32 32, %s19
        %s551 = smul.u32 2, %s21
        %s552 = smul.u32 32, %s21
        %s553 = smul.u32 2, %s20
        %s554 = smul.u32 2, %s20
        %p555 = scmp.lt.s32.totalorder %s554, 5
        %s556 = scalar_select %p555, %s554, 5
        %s557 = scalar_lea.vmem %s2, %s556
        %s558 = smul.u32 2, %s20
        %s559 = smul.u32 32, %s19
        %s560 = smul.u32 2, %s20
        %p561 = scmp.eq.s32.totalorder %s21, 0
        // Predicated region
        $region109: #{multi_head_attention.3} parent=99 // pred_check
          %p562 = pneg %p561
        $region110: #{multi_head_attention.3} parent=99 // pred_check_branch
          %564 = sbr.rel (%p562) target = $region112
        $region111: #{multi_head_attention.3} parent=99 // pred_region
          %565 = vst [vmem:[#allocation2] sm:$0xff] 0.0
          %566 = vst [vmem:[#allocation2 + $0x8] sm:$0xff] 0.0
          %567 = vst [vmem:[#allocation2 + $0x10] sm:$0xff] 0.0
          %568 = vst [vmem:[#allocation2 + $0x18] sm:$0xff] 0.0
          %569 = vst [vmem:[#allocation2 + $0x20] sm:$0xff] 0.0
          %570 = vst [vmem:[#allocation2 + $0x28] sm:$0xff] 0.0
          %571 = vst [vmem:[#allocation2 + $0x30] sm:$0xff] 0.0
          %572 = vst [vmem:[#allocation2 + $0x38] sm:$0xff] 0.0
          %573 = vst [vmem:[#allocation2 + $0x40] sm:$0xff] 0.0
          %574 = vst [vmem:[#allocation2 + $0x48] sm:$0xff] 0.0
          %575 = vst [vmem:[#allocation2 + $0x50] sm:$0xff] 0.0
          %576 = vst [vmem:[#allocation2 + $0x58] sm:$0xff] 0.0
          %577 = vst [vmem:[#allocation2 + $0x60] sm:$0xff] 0.0
          %578 = vst [vmem:[#allocation2 + $0x68] sm:$0xff] 0.0
          %579 = vst [vmem:[#allocation2 + $0x70] sm:$0xff] 0.0
          %580 = vst [vmem:[#allocation2 + $0x78] sm:$0xff] 0.0
          %581 = vst [vmem:[#allocation2 + $0x80] sm:$0xff] 0.0
          %582 = vst [vmem:[#allocation2 + $0x88] sm:$0xff] 0.0
          %583 = vst [vmem:[#allocation2 + $0x90] sm:$0xff] 0.0
          %584 = vst [vmem:[#allocation2 + $0x98] sm:$0xff] 0.0
          %585 = vst [vmem:[#allocation2 + $0xa0] sm:$0xff] 0.0
          %586 = vst [vmem:[#allocation2 + $0xa8] sm:$0xff] 0.0
          %587 = vst [vmem:[#allocation2 + $0xb0] sm:$0xff] 0.0
          %588 = vst [vmem:[#allocation2 + $0xb8] sm:$0xff] 0.0
          %589 = vst [vmem:[#allocation2 + $0xc0] sm:$0xff] 0.0
          %590 = vst [vmem:[#allocation2 + $0xc8] sm:$0xff] 0.0
          %591 = vst [vmem:[#allocation2 + $0xd0] sm:$0xff] 0.0
          %592 = vst [vmem:[#allocation2 + $0xd8] sm:$0xff] 0.0
          %593 = vst [vmem:[#allocation2 + $0xe0] sm:$0xff] 0.0
          %594 = vst [vmem:[#allocation2 + $0xe8] sm:$0xff] 0.0
          %595 = vst [vmem:[#allocation2 + $0xf0] sm:$0xff] 0.0
          %596 = vst [vmem:[#allocation2 + $0xf8] sm:$0xff] 0.0
          %597 = vst [vmem:[#allocation2 + $0x100] sm:$0xff] 0.0
          %598 = vst [vmem:[#allocation2 + $0x108] sm:$0xff] 0.0
          %599 = vst [vmem:[#allocation2 + $0x110] sm:$0xff] 0.0
          %600 = vst [vmem:[#allocation2 + $0x118] sm:$0xff] 0.0
          %601 = vst [vmem:[#allocation2 + $0x120] sm:$0xff] 0.0
          %602 = vst [vmem:[#allocation2 + $0x128] sm:$0xff] 0.0
          %603 = vst [vmem:[#allocation2 + $0x130] sm:$0xff] 0.0
          %604 = vst [vmem:[#allocation2 + $0x138] sm:$0xff] 0.0
          %605 = vst [vmem:[#allocation2 + $0x140] sm:$0xff] 0.0
          %606 = vst [vmem:[#allocation2 + $0x148] sm:$0xff] 0.0
          %607 = vst [vmem:[#allocation2 + $0x150] sm:$0xff] 0.0
          %608 = vst [vmem:[#allocation2 + $0x158] sm:$0xff] 0.0
          %609 = vst [vmem:[#allocation2 + $0x160] sm:$0xff] 0.0
          %610 = vst [vmem:[#allocation2 + $0x168] sm:$0xff] 0.0
          %611 = vst [vmem:[#allocation2 + $0x170] sm:$0xff] 0.0
          %612 = vst [vmem:[#allocation2 + $0x178] sm:$0xff] 0.0
          %613 = vst [vmem:[#allocation2 + $0x180] sm:$0xff] 0.0
          %614 = vst [vmem:[#allocation2 + $0x188] sm:$0xff] 0.0
          %615 = vst [vmem:[#allocation2 + $0x190] sm:$0xff] 0.0
          %616 = vst [vmem:[#allocation2 + $0x198] sm:$0xff] 0.0
          %617 = vst [vmem:[#allocation2 + $0x1a0] sm:$0xff] 0.0
          %618 = vst [vmem:[#allocation2 + $0x1a8] sm:$0xff] 0.0
          %619 = vst [vmem:[#allocation2 + $0x1b0] sm:$0xff] 0.0
          %620 = vst [vmem:[#allocation2 + $0x1b8] sm:$0xff] 0.0
          %621 = vst [vmem:[#allocation2 + $0x1c0] sm:$0xff] 0.0
          %622 = vst [vmem:[#allocation2 + $0x1c8] sm:$0xff] 0.0
          %623 = vst [vmem:[#allocation2 + $0x1d0] sm:$0xff] 0.0
          %624 = vst [vmem:[#allocation2 + $0x1d8] sm:$0xff] 0.0
          %625 = vst [vmem:[#allocation2 + $0x1e0] sm:$0xff] 0.0
          %626 = vst [vmem:[#allocation2 + $0x1e8] sm:$0xff] 0.0
          %627 = vst [vmem:[#allocation2 + $0x1f0] sm:$0xff] 0.0
          %628 = vst [vmem:[#allocation2 + $0x1f8] sm:$0xff] 0.0
        $region112: #{multi_head_attention.3} parent=99 // pred_fallthru
          _
        %v629 = vld [vmem:[#allocation2] sm:$0xff]
        %v630 = vld [vmem:[#allocation2 + $0x8] sm:$0xff]
        %v631 = vld [vmem:[#allocation2 + $0x10] sm:$0xff]
        %v632 = vld [vmem:[#allocation2 + $0x18] sm:$0xff]
        %v633 = vld [vmem:[#allocation2 + $0x20] sm:$0xff]
        %v634 = vld [vmem:[#allocation2 + $0x28] sm:$0xff]
        %v635 = vld [vmem:[#allocation2 + $0x30] sm:$0xff]
        %v636 = vld [vmem:[#allocation2 + $0x38] sm:$0xff]
        %v637 = vld [vmem:[#allocation2 + $0x40] sm:$0xff]
        %v638 = vld [vmem:[#allocation2 + $0x48] sm:$0xff]
        %v639 = vld [vmem:[#allocation2 + $0x50] sm:$0xff]
        %v640 = vld [vmem:[#allocation2 + $0x58] sm:$0xff]
        %v641 = vld [vmem:[#allocation2 + $0x60] sm:$0xff]
        %v642 = vld [vmem:[#allocation2 + $0x68] sm:$0xff]
        %v643 = vld [vmem:[#allocation2 + $0x70] sm:$0xff]
        %v644 = vld [vmem:[#allocation2 + $0x78] sm:$0xff]
        %v645 = vld [vmem:[#allocation2 + $0x80] sm:$0xff]
        %v646 = vld [vmem:[#allocation2 + $0x88] sm:$0xff]
        %v647 = vld [vmem:[#allocation2 + $0x90] sm:$0xff]
        %v648 = vld [vmem:[#allocation2 + $0x98] sm:$0xff]
        %v649 = vld [vmem:[#allocation2 + $0xa0] sm:$0xff]
        %v650 = vld [vmem:[#allocation2 + $0xa8] sm:$0xff]
        %v651 = vld [vmem:[#allocation2 + $0xb0] sm:$0xff]
        %v652 = vld [vmem:[#allocation2 + $0xb8] sm:$0xff]
        %v653 = vld [vmem:[#allocation2 + $0xc0] sm:$0xff]
        %v654 = vld [vmem:[#allocation2 + $0xc8] sm:$0xff]
        %v655 = vld [vmem:[#allocation2 + $0xd0] sm:$0xff]
        %v656 = vld [vmem:[#allocation2 + $0xd8] sm:$0xff]
        %v657 = vld [vmem:[#allocation2 + $0xe0] sm:$0xff]
        %v658 = vld [vmem:[#allocation2 + $0xe8] sm:$0xff]
        %v659 = vld [vmem:[#allocation2 + $0xf0] sm:$0xff]
        %v660 = vld [vmem:[#allocation2 + $0xf8] sm:$0xff]
        %v661 = vld [vmem:[#allocation2 + $0x100] sm:$0xff]
        %v662 = vld [vmem:[#allocation2 + $0x108] sm:$0xff]
        %v663 = vld [vmem:[#allocation2 + $0x110] sm:$0xff]
        %v664 = vld [vmem:[#allocation2 + $0x118] sm:$0xff]
        %v665 = vld [vmem:[#allocation2 + $0x120] sm:$0xff]
        %v666 = vld [vmem:[#allocation2 + $0x128] sm:$0xff]
        %v667 = vld [vmem:[#allocation2 + $0x130] sm:$0xff]
        %v668 = vld [vmem:[#allocation2 + $0x138] sm:$0xff]
        %v669 = vld [vmem:[#allocation2 + $0x140] sm:$0xff]
        %v670 = vld [vmem:[#allocation2 + $0x148] sm:$0xff]
        %v671 = vld [vmem:[#allocation2 + $0x150] sm:$0xff]
        %v672 = vld [vmem:[#allocation2 + $0x158] sm:$0xff]
        %v673 = vld [vmem:[#allocation2 + $0x160] sm:$0xff]
        %v674 = vld [vmem:[#allocation2 + $0x168] sm:$0xff]
        %v675 = vld [vmem:[#allocation2 + $0x170] sm:$0xff]
        %v676 = vld [vmem:[#allocation2 + $0x178] sm:$0xff]
        %v677 = vld [vmem:[#allocation2 + $0x180] sm:$0xff]
        %v678 = vld [vmem:[#allocation2 + $0x188] sm:$0xff]
        %v679 = vld [vmem:[#allocation2 + $0x190] sm:$0xff]
        %v680 = vld [vmem:[#allocation2 + $0x198] sm:$0xff]
        %v681 = vld [vmem:[#allocation2 + $0x1a0] sm:$0xff]
        %v682 = vld [vmem:[#allocation2 + $0x1a8] sm:$0xff]
        %v683 = vld [vmem:[#allocation2 + $0x1b0] sm:$0xff]
        %v684 = vld [vmem:[#allocation2 + $0x1b8] sm:$0xff]
        %v685 = vld [vmem:[#allocation2 + $0x1c0] sm:$0xff]
        %v686 = vld [vmem:[#allocation2 + $0x1c8] sm:$0xff]
        %v687 = vld [vmem:[#allocation2 + $0x1d0] sm:$0xff]
        %v688 = vld [vmem:[#allocation2 + $0x1d8] sm:$0xff]
        %v689 = vld [vmem:[#allocation2 + $0x1e0] sm:$0xff]
        %v690 = vld [vmem:[#allocation2 + $0x1e8] sm:$0xff]
        %v691 = vld [vmem:[#allocation2 + $0x1f0] sm:$0xff]
        %v692 = vld [vmem:[#allocation2 + $0x1f8] sm:$0xff]
        %v693 = vld [vmem:[%s515] sm:$0xff]
        %v694 = vld [vmem:[%s515 + $0x8] sm:$0xff]
        %v695 = vld [vmem:[%s515 + $0x10] sm:$0xff]
        %v696 = vld [vmem:[%s515 + $0x18] sm:$0xff]
        %v697 = vld [vmem:[%s515 + $0x20] sm:$0xff]
        %v698 = vld [vmem:[%s515 + $0x28] sm:$0xff]
        %v699 = vld [vmem:[%s515 + $0x30] sm:$0xff]
        %v700 = vld [vmem:[%s515 + $0x38] sm:$0xff]
        %v701 = vld [vmem:[%s515 + $0x40] sm:$0xff]
        %v702 = vld [vmem:[%s515 + $0x48] sm:$0xff]
        %v703 = vld [vmem:[%s515 + $0x50] sm:$0xff]
        %v704 = vld [vmem:[%s515 + $0x58] sm:$0xff]
        %v705 = vld [vmem:[%s515 + $0x60] sm:$0xff]
        %v706 = vld [vmem:[%s515 + $0x68] sm:$0xff]
        %v707 = vld [vmem:[%s515 + $0x70] sm:$0xff]
        %v708 = vld [vmem:[%s515 + $0x78] sm:$0xff]
        %v709 = vld [vmem:[%s515 + $0x80] sm:$0xff]
        %v710 = vld [vmem:[%s515 + $0x88] sm:$0xff]
        %v711 = vld [vmem:[%s515 + $0x90] sm:$0xff]
        %v712 = vld [vmem:[%s515 + $0x98] sm:$0xff]
        %v713 = vld [vmem:[%s515 + $0xa0] sm:$0xff]
        %v714 = vld [vmem:[%s515 + $0xa8] sm:$0xff]
        %v715 = vld [vmem:[%s515 + $0xb0] sm:$0xff]
        %v716 = vld [vmem:[%s515 + $0xb8] sm:$0xff]
        %v717 = vld [vmem:[%s515 + $0xc0] sm:$0xff]
        %v718 = vld [vmem:[%s515 + $0xc8] sm:$0xff]
        %v719 = vld [vmem:[%s515 + $0xd0] sm:$0xff]
        %v720 = vld [vmem:[%s515 + $0xd8] sm:$0xff]
        %v721 = vld [vmem:[%s515 + $0xe0] sm:$0xff]
        %v722 = vld [vmem:[%s515 + $0xe8] sm:$0xff]
        %v723 = vld [vmem:[%s515 + $0xf0] sm:$0xff]
        %v724 = vld [vmem:[%s515 + $0xf8] sm:$0xff]
        %v725 = vld [vmem:[%s522] sm:$0xff]
        %v726 = vld [vmem:[%s522 + $0x8] sm:$0xff]
        %v727 = vld [vmem:[%s522 + $0x10] sm:$0xff]
        %v728 = vld [vmem:[%s522 + $0x18] sm:$0xff]
        %v729 = vld [vmem:[%s522 + $0x20] sm:$0xff]
        %v730 = vld [vmem:[%s522 + $0x28] sm:$0xff]
        %v731 = vld [vmem:[%s522 + $0x30] sm:$0xff]
        %v732 = vld [vmem:[%s522 + $0x38] sm:$0xff]
        %v733 = vld [vmem:[%s522 + $0x40] sm:$0xff]
        %v734 = vld [vmem:[%s522 + $0x48] sm:$0xff]
        %v735 = vld [vmem:[%s522 + $0x50] sm:$0xff]
        %v736 = vld [vmem:[%s522 + $0x58] sm:$0xff]
        %v737 = vld [vmem:[%s522 + $0x60] sm:$0xff]
        %v738 = vld [vmem:[%s522 + $0x68] sm:$0xff]
        %v739 = vld [vmem:[%s522 + $0x70] sm:$0xff]
        %v740 = vld [vmem:[%s522 + $0x78] sm:$0xff]
        %v741 = vld [vmem:[%s522 + $0x80] sm:$0xff]
        %v742 = vld [vmem:[%s522 + $0x88] sm:$0xff]
        %v743 = vld [vmem:[%s522 + $0x90] sm:$0xff]
        %v744 = vld [vmem:[%s522 + $0x98] sm:$0xff]
        %v745 = vld [vmem:[%s522 + $0xa0] sm:$0xff]
        %v746 = vld [vmem:[%s522 + $0xa8] sm:$0xff]
        %v747 = vld [vmem:[%s522 + $0xb0] sm:$0xff]
        %v748 = vld [vmem:[%s522 + $0xb8] sm:$0xff]
        %v749 = vld [vmem:[%s522 + $0xc0] sm:$0xff]
        %v750 = vld [vmem:[%s522 + $0xc8] sm:$0xff]
        %v751 = vld [vmem:[%s522 + $0xd0] sm:$0xff]
        %v752 = vld [vmem:[%s522 + $0xd8] sm:$0xff]
        %v753 = vld [vmem:[%s522 + $0xe0] sm:$0xff]
        %v754 = vld [vmem:[%s522 + $0xe8] sm:$0xff]
        %v755 = vld [vmem:[%s522 + $0xf0] sm:$0xff]
        %v756 = vld [vmem:[%s522 + $0xf8] sm:$0xff]
        %v789 = vunpack.c.l.b16 %v693
        %v790 = vunpack.c.h.b16 %v693
        %v791 = vunpack.c.l.b16 %v694
        %v792 = vunpack.c.h.b16 %v694
        %v793 = vunpack.c.l.b16 %v695
        %v794 = vunpack.c.h.b16 %v695
        %v795 = vunpack.c.l.b16 %v696
        %v796 = vunpack.c.h.b16 %v696
        %v797 = vunpack.c.l.b16 %v697
        %v798 = vunpack.c.h.b16 %v697
        %v799 = vunpack.c.l.b16 %v698
        %v800 = vunpack.c.h.b16 %v698
        %v801 = vunpack.c.l.b16 %v699
        %v802 = vunpack.c.h.b16 %v699
        %v803 = vunpack.c.l.b16 %v700
        %v804 = vunpack.c.h.b16 %v700
        %v805 = vunpack.c.l.b16 %v701
        %v806 = vunpack.c.h.b16 %v701
        %v807 = vunpack.c.l.b16 %v702
        %v808 = vunpack.c.h.b16 %v702
        %v809 = vunpack.c.l.b16 %v703
        %v810 = vunpack.c.h.b16 %v703
        %v811 = vunpack.c.l.b16 %v704
        %v812 = vunpack.c.h.b16 %v704
        %v813 = vunpack.c.l.b16 %v705
        %v814 = vunpack.c.h.b16 %v705
        %v815 = vunpack.c.l.b16 %v706
        %v816 = vunpack.c.h.b16 %v706
        %v817 = vunpack.c.l.b16 %v707
        %v818 = vunpack.c.h.b16 %v707
        %v819 = vunpack.c.l.b16 %v708
        %v820 = vunpack.c.h.b16 %v708
        %v821 = vunpack.c.l.b16 %v709
        %v822 = vunpack.c.h.b16 %v709
        %v823 = vunpack.c.l.b16 %v710
        %v824 = vunpack.c.h.b16 %v710
        %v825 = vunpack.c.l.b16 %v711
        %v826 = vunpack.c.h.b16 %v711
        %v827 = vunpack.c.l.b16 %v712
        %v828 = vunpack.c.h.b16 %v712
        %v829 = vunpack.c.l.b16 %v713
        %v830 = vunpack.c.h.b16 %v713
        %v831 = vunpack.c.l.b16 %v714
        %v832 = vunpack.c.h.b16 %v714
        %v833 = vunpack.c.l.b16 %v715
        %v834 = vunpack.c.h.b16 %v715
        %v835 = vunpack.c.l.b16 %v716
        %v836 = vunpack.c.h.b16 %v716
        %v837 = vunpack.c.l.b16 %v717
        %v838 = vunpack.c.h.b16 %v717
        %v839 = vunpack.c.l.b16 %v718
        %v840 = vunpack.c.h.b16 %v718
        %v841 = vunpack.c.l.b16 %v719
        %v842 = vunpack.c.h.b16 %v719
        %v843 = vunpack.c.l.b16 %v720
        %v844 = vunpack.c.h.b16 %v720
        %v845 = vunpack.c.l.b16 %v721
        %v846 = vunpack.c.h.b16 %v721
        %v847 = vunpack.c.l.b16 %v722
        %v848 = vunpack.c.h.b16 %v722
        %v849 = vunpack.c.l.b16 %v723
        %v850 = vunpack.c.h.b16 %v723
        %v851 = vunpack.c.l.b16 %v724
        %v852 = vunpack.c.h.b16 %v724
        %v853 = vpack.c.b16 %v791, %v789
        %v854 = vpack.c.b16 %v792, %v790
        %v855 = vpack.c.b16 %v795, %v793
        %v856 = vpack.c.b16 %v796, %v794
        %v857 = vpack.c.b16 %v799, %v797
        %v858 = vpack.c.b16 %v800, %v798
        %v859 = vpack.c.b16 %v803, %v801
        %v860 = vpack.c.b16 %v804, %v802
        %v861 = vpack.c.b16 %v807, %v805
        %v862 = vpack.c.b16 %v808, %v806
        %v863 = vpack.c.b16 %v811, %v809
        %v864 = vpack.c.b16 %v812, %v810
        %v865 = vpack.c.b16 %v815, %v813
        %v866 = vpack.c.b16 %v816, %v814
        %v867 = vpack.c.b16 %v819, %v817
        %v868 = vpack.c.b16 %v820, %v818
        %v869 = vpack.c.b16 %v823, %v821
        %v870 = vpack.c.b16 %v824, %v822
        %v871 = vpack.c.b16 %v827, %v825
        %v872 = vpack.c.b16 %v828, %v826
        %v873 = vpack.c.b16 %v831, %v829
        %v874 = vpack.c.b16 %v832, %v830
        %v875 = vpack.c.b16 %v835, %v833
        %v876 = vpack.c.b16 %v836, %v834
        %v877 = vpack.c.b16 %v839, %v837
        %v878 = vpack.c.b16 %v840, %v838
        %v879 = vpack.c.b16 %v843, %v841
        %v880 = vpack.c.b16 %v844, %v842
        %v881 = vpack.c.b16 %v847, %v845
        %v882 = vpack.c.b16 %v848, %v846
        %v883 = vpack.c.b16 %v851, %v849
        %v884 = vpack.c.b16 %v852, %v850
        %v949 = vunpack.c.l.b16 %v725
        %v950 = vunpack.c.h.b16 %v725
        %v951 = vunpack.c.l.b16 %v726
        %v952 = vunpack.c.h.b16 %v726
        %v953 = vunpack.c.l.b16 %v727
        %v954 = vunpack.c.h.b16 %v727
        %v955 = vunpack.c.l.b16 %v728
        %v956 = vunpack.c.h.b16 %v728
        %v957 = vunpack.c.l.b16 %v729
        %v958 = vunpack.c.h.b16 %v729
        %v959 = vunpack.c.l.b16 %v730
        %v960 = vunpack.c.h.b16 %v730
        %v961 = vunpack.c.l.b16 %v731
        %v962 = vunpack.c.h.b16 %v731
        %v963 = vunpack.c.l.b16 %v732
        %v964 = vunpack.c.h.b16 %v732
        %v965 = vunpack.c.l.b16 %v733
        %v966 = vunpack.c.h.b16 %v733
        %v967 = vunpack.c.l.b16 %v734
        %v968 = vunpack.c.h.b16 %v734
        %v969 = vunpack.c.l.b16 %v735
        %v970 = vunpack.c.h.b16 %v735
        %v971 = vunpack.c.l.b16 %v736
        %v972 = vunpack.c.h.b16 %v736
        %v973 = vunpack.c.l.b16 %v737
        %v974 = vunpack.c.h.b16 %v737
        %v975 = vunpack.c.l.b16 %v738
        %v976 = vunpack.c.h.b16 %v738
        %v977 = vunpack.c.l.b16 %v739
        %v978 = vunpack.c.h.b16 %v739
        %v979 = vunpack.c.l.b16 %v740
        %v980 = vunpack.c.h.b16 %v740
        %v981 = vunpack.c.l.b16 %v741
        %v982 = vunpack.c.h.b16 %v741
        %v983 = vunpack.c.l.b16 %v742
        %v984 = vunpack.c.h.b16 %v742
        %v985 = vunpack.c.l.b16 %v743
        %v986 = vunpack.c.h.b16 %v743
        %v987 = vunpack.c.l.b16 %v744
        %v988 = vunpack.c.h.b16 %v744
        %v989 = vunpack.c.l.b16 %v745
        %v990 = vunpack.c.h.b16 %v745
        %v991 = vunpack.c.l.b16 %v746
        %v992 = vunpack.c.h.b16 %v746
        %v993 = vunpack.c.l.b16 %v747
        %v994 = vunpack.c.h.b16 %v747
        %v995 = vunpack.c.l.b16 %v748
        %v996 = vunpack.c.h.b16 %v748
        %v997 = vunpack.c.l.b16 %v749
        %v998 = vunpack.c.h.b16 %v749
        %v999 = vunpack.c.l.b16 %v750
        %v1000 = vunpack.c.h.b16 %v750
        %v1001 = vunpack.c.l.b16 %v751
        %v1002 = vunpack.c.h.b16 %v751
        %v1003 = vunpack.c.l.b16 %v752
        %v1004 = vunpack.c.h.b16 %v752
        %v1005 = vunpack.c.l.b16 %v753
        %v1006 = vunpack.c.h.b16 %v753
        %v1007 = vunpack.c.l.b16 %v754
        %v1008 = vunpack.c.h.b16 %v754
        %v1009 = vunpack.c.l.b16 %v755
        %v1010 = vunpack.c.h.b16 %v755
        %v1011 = vunpack.c.l.b16 %v756
        %v1012 = vunpack.c.h.b16 %v756
        %v1013 = vpack.c.b16 %v951, %v949
        %v1014 = vpack.c.b16 %v952, %v950
        %v1015 = vpack.c.b16 %v955, %v953
        %v1016 = vpack.c.b16 %v956, %v954
        %v1017 = vpack.c.b16 %v959, %v957
        %v1018 = vpack.c.b16 %v960, %v958
        %v1019 = vpack.c.b16 %v963, %v961
        %v1020 = vpack.c.b16 %v964, %v962
        %v1021 = vpack.c.b16 %v967, %v965
        %v1022 = vpack.c.b16 %v968, %v966
        %v1023 = vpack.c.b16 %v971, %v969
        %v1024 = vpack.c.b16 %v972, %v970
        %v1025 = vpack.c.b16 %v975, %v973
        %v1026 = vpack.c.b16 %v976, %v974
        %v1027 = vpack.c.b16 %v979, %v977
        %v1028 = vpack.c.b16 %v980, %v978
        %v1029 = vpack.c.b16 %v983, %v981
        %v1030 = vpack.c.b16 %v984, %v982
        %v1031 = vpack.c.b16 %v987, %v985
        %v1032 = vpack.c.b16 %v988, %v986
        %v1033 = vpack.c.b16 %v991, %v989
        %v1034 = vpack.c.b16 %v992, %v990
        %v1035 = vpack.c.b16 %v995, %v993
        %v1036 = vpack.c.b16 %v996, %v994
        %v1037 = vpack.c.b16 %v999, %v997
        %v1038 = vpack.c.b16 %v1000, %v998
        %v1039 = vpack.c.b16 %v1003, %v1001
        %v1040 = vpack.c.b16 %v1004, %v1002
        %v1041 = vpack.c.b16 %v1007, %v1005
        %v1042 = vpack.c.b16 %v1008, %v1006
        %v1043 = vpack.c.b16 %v1011, %v1009
        %v1044 = vpack.c.b16 %v1012, %v1010
        %1077 = vmatpush.bf16.msra.mxu0 %v1027
        %1078 = vmatpush.bf16.msra.mxu0 %v1025
        %1079 = vmatpush.bf16.msra.mxu0 %v1023
        %1080 = vmatpush.bf16.msra.mxu0 %v1021
        %1081 = vmatpush.bf16.msra.mxu0 %v1019
        %1082 = vmatpush.bf16.msra.mxu0 %v1017
        %1083 = vmatpush.bf16.msra.mxu0 %v1015
        %1084 = vmatpush.bf16.msra.mxu0 %v1013
        %1085 = vmatmul.bf16.gmra.mxu0 %v853
        %v1086 = vpop.f32.mrf.mxu0
        %v1087 = vadd.f32 0.0, %v1086
        %v1088 = vpop.f32.mrf.mxu0
        %v1089 = vadd.f32 0.0, %v1088
        %1090 = vmatmul.bf16.gmra.mxu0 %v855
        %v1091 = vpop.f32.mrf.mxu0
        %v1092 = vadd.f32 0.0, %v1091
        %v1093 = vpop.f32.mrf.mxu0
        %v1094 = vadd.f32 0.0, %v1093
        %1095 = vmatmul.bf16.gmra.mxu0 %v857
        %v1096 = vpop.f32.mrf.mxu0
        %v1097 = vadd.f32 0.0, %v1096
        %v1098 = vpop.f32.mrf.mxu0
        %v1099 = vadd.f32 0.0, %v1098
        %1100 = vmatmul.bf16.gmra.mxu0 %v859
        %v1101 = vpop.f32.mrf.mxu0
        %v1102 = vadd.f32 0.0, %v1101
        %v1103 = vpop.f32.mrf.mxu0
        %v1104 = vadd.f32 0.0, %v1103
        %1105 = vmatmul.bf16.gmra.mxu0 %v861
        %v1106 = vpop.f32.mrf.mxu0
        %v1107 = vadd.f32 0.0, %v1106
        %v1108 = vpop.f32.mrf.mxu0
        %v1109 = vadd.f32 0.0, %v1108
        %1110 = vmatmul.bf16.gmra.mxu0 %v863
        %v1111 = vpop.f32.mrf.mxu0
        %v1112 = vadd.f32 0.0, %v1111
        %v1113 = vpop.f32.mrf.mxu0
        %v1114 = vadd.f32 0.0, %v1113
        %1115 = vmatmul.bf16.gmra.mxu0 %v865
        %v1116 = vpop.f32.mrf.mxu0
        %v1117 = vadd.f32 0.0, %v1116
        %v1118 = vpop.f32.mrf.mxu0
        %v1119 = vadd.f32 0.0, %v1118
        %1120 = vmatmul.bf16.gmra.mxu0 %v867
        %v1121 = vpop.f32.mrf.mxu0
        %v1122 = vadd.f32 0.0, %v1121
        %v1123 = vpop.f32.mrf.mxu0
        %v1124 = vadd.f32 0.0, %v1123
        %1125 = vmatmul.bf16.gmra.mxu0 %v869
        %v1126 = vpop.f32.mrf.mxu0
        %v1127 = vadd.f32 0.0, %v1126
        %v1128 = vpop.f32.mrf.mxu0
        %v1129 = vadd.f32 0.0, %v1128
        %1130 = vmatmul.bf16.gmra.mxu0 %v871
        %v1131 = vpop.f32.mrf.mxu0
        %v1132 = vadd.f32 0.0, %v1131
        %v1133 = vpop.f32.mrf.mxu0
        %v1134 = vadd.f32 0.0, %v1133
        %1135 = vmatmul.bf16.gmra.mxu0 %v873
        %v1136 = vpop.f32.mrf.mxu0
        %v1137 = vadd.f32 0.0, %v1136
        %v1138 = vpop.f32.mrf.mxu0
        %v1139 = vadd.f32 0.0, %v1138
        %1140 = vmatmul.bf16.gmra.mxu0 %v875
        %v1141 = vpop.f32.mrf.mxu0
        %v1142 = vadd.f32 0.0, %v1141
        %v1143 = vpop.f32.mrf.mxu0
        %v1144 = vadd.f32 0.0, %v1143
        %1145 = vmatmul.bf16.gmra.mxu0 %v877
        %v1146 = vpop.f32.mrf.mxu0
        %v1147 = vadd.f32 0.0, %v1146
        %v1148 = vpop.f32.mrf.mxu0
        %v1149 = vadd.f32 0.0, %v1148
        %1150 = vmatmul.bf16.gmra.mxu0 %v879
        %v1151 = vpop.f32.mrf.mxu0
        %v1152 = vadd.f32 0.0, %v1151
        %v1153 = vpop.f32.mrf.mxu0
        %v1154 = vadd.f32 0.0, %v1153
        %1155 = vmatmul.bf16.gmra.mxu0 %v881
        %v1156 = vpop.f32.mrf.mxu0
        %v1157 = vadd.f32 0.0, %v1156
        %v1158 = vpop.f32.mrf.mxu0
        %v1159 = vadd.f32 0.0, %v1158
        %1160 = vmatmul.bf16.gmra.mxu0 %v883
        %v1161 = vpop.f32.mrf.mxu0
        %v1162 = vadd.f32 0.0, %v1161
        %v1163 = vpop.f32.mrf.mxu0
        %v1164 = vadd.f32 0.0, %v1163
        %1165 = vdwg.mxu0
        %1166 = vmatpush.bf16.msra.mxu0 %v1043
        %1167 = vmatpush.bf16.msra.mxu0 %v1041
        %1168 = vmatpush.bf16.msra.mxu0 %v1039
        %1169 = vmatpush.bf16.msra.mxu0 %v1037
        %1170 = vmatpush.bf16.msra.mxu0 %v1035
        %1171 = vmatpush.bf16.msra.mxu0 %v1033
        %1172 = vmatpush.bf16.msra.mxu0 %v1031
        %1173 = vmatpush.bf16.msra.mxu0 %v1029
        %1174 = vmatmul.bf16.gmra.mxu0 %v854
        %v1175 = vpop.f32.mrf.mxu0
        %v1176 = vadd.f32 %v1087, %v1175
        %v1177 = vpop.f32.mrf.mxu0
        %v1178 = vadd.f32 %v1089, %v1177
        %1179 = vmatmul.bf16.gmra.mxu0 %v856
        %v1180 = vpop.f32.mrf.mxu0
        %v1181 = vadd.f32 %v1092, %v1180
        %v1182 = vpop.f32.mrf.mxu0
        %v1183 = vadd.f32 %v1094, %v1182
        %1184 = vmatmul.bf16.gmra.mxu0 %v858
        %v1185 = vpop.f32.mrf.mxu0
        %v1186 = vadd.f32 %v1097, %v1185
        %v1187 = vpop.f32.mrf.mxu0
        %v1188 = vadd.f32 %v1099, %v1187
        %1189 = vmatmul.bf16.gmra.mxu0 %v860
        %v1190 = vpop.f32.mrf.mxu0
        %v1191 = vadd.f32 %v1102, %v1190
        %v1192 = vpop.f32.mrf.mxu0
        %v1193 = vadd.f32 %v1104, %v1192
        %1194 = vmatmul.bf16.gmra.mxu0 %v862
        %v1195 = vpop.f32.mrf.mxu0
        %v1196 = vadd.f32 %v1107, %v1195
        %v1197 = vpop.f32.mrf.mxu0
        %v1198 = vadd.f32 %v1109, %v1197
        %1199 = vmatmul.bf16.gmra.mxu0 %v864
        %v1200 = vpop.f32.mrf.mxu0
        %v1201 = vadd.f32 %v1112, %v1200
        %v1202 = vpop.f32.mrf.mxu0
        %v1203 = vadd.f32 %v1114, %v1202
        %1204 = vmatmul.bf16.gmra.mxu0 %v866
        %v1205 = vpop.f32.mrf.mxu0
        %v1206 = vadd.f32 %v1117, %v1205
        %v1207 = vpop.f32.mrf.mxu0
        %v1208 = vadd.f32 %v1119, %v1207
        %1209 = vmatmul.bf16.gmra.mxu0 %v868
        %v1210 = vpop.f32.mrf.mxu0
        %v1211 = vadd.f32 %v1122, %v1210
        %v1212 = vpop.f32.mrf.mxu0
        %v1213 = vadd.f32 %v1124, %v1212
        %1214 = vmatmul.bf16.gmra.mxu0 %v870
        %v1215 = vpop.f32.mrf.mxu0
        %v1216 = vadd.f32 %v1127, %v1215
        %v1217 = vpop.f32.mrf.mxu0
        %v1218 = vadd.f32 %v1129, %v1217
        %1219 = vmatmul.bf16.gmra.mxu0 %v872
        %v1220 = vpop.f32.mrf.mxu0
        %v1221 = vadd.f32 %v1132, %v1220
        %v1222 = vpop.f32.mrf.mxu0
        %v1223 = vadd.f32 %v1134, %v1222
        %1224 = vmatmul.bf16.gmra.mxu0 %v874
        %v1225 = vpop.f32.mrf.mxu0
        %v1226 = vadd.f32 %v1137, %v1225
        %v1227 = vpop.f32.mrf.mxu0
        %v1228 = vadd.f32 %v1139, %v1227
        %1229 = vmatmul.bf16.gmra.mxu0 %v876
        %v1230 = vpop.f32.mrf.mxu0
        %v1231 = vadd.f32 %v1142, %v1230
        %v1232 = vpop.f32.mrf.mxu0
        %v1233 = vadd.f32 %v1144, %v1232
        %1234 = vmatmul.bf16.gmra.mxu0 %v878
        %v1235 = vpop.f32.mrf.mxu0
        %v1236 = vadd.f32 %v1147, %v1235
        %v1237 = vpop.f32.mrf.mxu0
        %v1238 = vadd.f32 %v1149, %v1237
        %1239 = vmatmul.bf16.gmra.mxu0 %v880
        %v1240 = vpop.f32.mrf.mxu0
        %v1241 = vadd.f32 %v1152, %v1240
        %v1242 = vpop.f32.mrf.mxu0
        %v1243 = vadd.f32 %v1154, %v1242
        %1244 = vmatmul.bf16.gmra.mxu0 %v882
        %v1245 = vpop.f32.mrf.mxu0
        %v1246 = vadd.f32 %v1157, %v1245
        %v1247 = vpop.f32.mrf.mxu0
        %v1248 = vadd.f32 %v1159, %v1247
        %1249 = vmatmul.bf16.gmra.mxu0 %v884
        %v1250 = vpop.f32.mrf.mxu0
        %v1251 = vadd.f32 %v1162, %v1250
        %v1252 = vpop.f32.mrf.mxu0
        %v1253 = vadd.f32 %v1164, %v1252
        %1254 = vdwg.mxu0
        %1255 = vmatpush.bf16.msra.mxu0 %v1028
        %1256 = vmatpush.bf16.msra.mxu0 %v1026
        %1257 = vmatpush.bf16.msra.mxu0 %v1024
        %1258 = vmatpush.bf16.msra.mxu0 %v1022
        %1259 = vmatpush.bf16.msra.mxu0 %v1020
        %1260 = vmatpush.bf16.msra.mxu0 %v1018
        %1261 = vmatpush.bf16.msra.mxu0 %v1016
        %1262 = vmatpush.bf16.msra.mxu0 %v1014
        %1263 = vmatmul.bf16.gmra.mxu0 %v853
        %v1264 = vpop.f32.mrf.mxu0
        %v1265 = vadd.f32 0.0, %v1264
        %v1266 = vpop.f32.mrf.mxu0
        %v1267 = vadd.f32 0.0, %v1266
        %1268 = vmatmul.bf16.gmra.mxu0 %v855
        %v1269 = vpop.f32.mrf.mxu0
        %v1270 = vadd.f32 0.0, %v1269
        %v1271 = vpop.f32.mrf.mxu0
        %v1272 = vadd.f32 0.0, %v1271
        %1273 = vmatmul.bf16.gmra.mxu0 %v857
        %v1274 = vpop.f32.mrf.mxu0
        %v1275 = vadd.f32 0.0, %v1274
        %v1276 = vpop.f32.mrf.mxu0
        %v1277 = vadd.f32 0.0, %v1276
        %1278 = vmatmul.bf16.gmra.mxu0 %v859
        %v1279 = vpop.f32.mrf.mxu0
        %v1280 = vadd.f32 0.0, %v1279
        %v1281 = vpop.f32.mrf.mxu0
        %v1282 = vadd.f32 0.0, %v1281
        %1283 = vmatmul.bf16.gmra.mxu0 %v861
        %v1284 = vpop.f32.mrf.mxu0
        %v1285 = vadd.f32 0.0, %v1284
        %v1286 = vpop.f32.mrf.mxu0
        %v1287 = vadd.f32 0.0, %v1286
        %1288 = vmatmul.bf16.gmra.mxu0 %v863
        %v1289 = vpop.f32.mrf.mxu0
        %v1290 = vadd.f32 0.0, %v1289
        %v1291 = vpop.f32.mrf.mxu0
        %v1292 = vadd.f32 0.0, %v1291
        %1293 = vmatmul.bf16.gmra.mxu0 %v865
        %v1294 = vpop.f32.mrf.mxu0
        %v1295 = vadd.f32 0.0, %v1294
        %v1296 = vpop.f32.mrf.mxu0
        %v1297 = vadd.f32 0.0, %v1296
        %1298 = vmatmul.bf16.gmra.mxu0 %v867
        %v1299 = vpop.f32.mrf.mxu0
        %v1300 = vadd.f32 0.0, %v1299
        %v1301 = vpop.f32.mrf.mxu0
        %v1302 = vadd.f32 0.0, %v1301
        %1303 = vmatmul.bf16.gmra.mxu0 %v869
        %v1304 = vpop.f32.mrf.mxu0
        %v1305 = vadd.f32 0.0, %v1304
        %v1306 = vpop.f32.mrf.mxu0
        %v1307 = vadd.f32 0.0, %v1306
        %1308 = vmatmul.bf16.gmra.mxu0 %v871
        %v1309 = vpop.f32.mrf.mxu0
        %v1310 = vadd.f32 0.0, %v1309
        %v1311 = vpop.f32.mrf.mxu0
        %v1312 = vadd.f32 0.0, %v1311
        %1313 = vmatmul.bf16.gmra.mxu0 %v873
        %v1314 = vpop.f32.mrf.mxu0
        %v1315 = vadd.f32 0.0, %v1314
        %v1316 = vpop.f32.mrf.mxu0
        %v1317 = vadd.f32 0.0, %v1316
        %1318 = vmatmul.bf16.gmra.mxu0 %v875
        %v1319 = vpop.f32.mrf.mxu0
        %v1320 = vadd.f32 0.0, %v1319
        %v1321 = vpop.f32.mrf.mxu0
        %v1322 = vadd.f32 0.0, %v1321
        %1323 = vmatmul.bf16.gmra.mxu0 %v877
        %v1324 = vpop.f32.mrf.mxu0
        %v1325 = vadd.f32 0.0, %v1324
        %v1326 = vpop.f32.mrf.mxu0
        %v1327 = vadd.f32 0.0, %v1326
        %1328 = vmatmul.bf16.gmra.mxu0 %v879
        %v1329 = vpop.f32.mrf.mxu0
        %v1330 = vadd.f32 0.0, %v1329
        %v1331 = vpop.f32.mrf.mxu0
        %v1332 = vadd.f32 0.0, %v1331
        %1333 = vmatmul.bf16.gmra.mxu0 %v881
        %v1334 = vpop.f32.mrf.mxu0
        %v1335 = vadd.f32 0.0, %v1334
        %v1336 = vpop.f32.mrf.mxu0
        %v1337 = vadd.f32 0.0, %v1336
        %1338 = vmatmul.bf16.gmra.mxu0 %v883
        %v1339 = vpop.f32.mrf.mxu0
        %v1340 = vadd.f32 0.0, %v1339
        %v1341 = vpop.f32.mrf.mxu0
        %v1342 = vadd.f32 0.0, %v1341
        %1343 = vdwg.mxu0
        %1344 = vmatpush.bf16.msra.mxu0 %v1044
        %1345 = vmatpush.bf16.msra.mxu0 %v1042
        %1346 = vmatpush.bf16.msra.mxu0 %v1040
        %1347 = vmatpush.bf16.msra.mxu0 %v1038
        %1348 = vmatpush.bf16.msra.mxu0 %v1036
        %1349 = vmatpush.bf16.msra.mxu0 %v1034
        %1350 = vmatpush.bf16.msra.mxu0 %v1032
        %1351 = vmatpush.bf16.msra.mxu0 %v1030
        %1352 = vmatmul.bf16.gmra.mxu0 %v854
        %v1353 = vpop.f32.mrf.mxu0
        %v1354 = vadd.f32 %v1265, %v1353
        %v1355 = vpop.f32.mrf.mxu0
        %v1356 = vadd.f32 %v1267, %v1355
        %1357 = vmatmul.bf16.gmra.mxu0 %v856
        %v1358 = vpop.f32.mrf.mxu0
        %v1359 = vadd.f32 %v1270, %v1358
        %v1360 = vpop.f32.mrf.mxu0
        %v1361 = vadd.f32 %v1272, %v1360
        %1362 = vmatmul.bf16.gmra.mxu0 %v858
        %v1363 = vpop.f32.mrf.mxu0
        %v1364 = vadd.f32 %v1275, %v1363
        %v1365 = vpop.f32.mrf.mxu0
        %v1366 = vadd.f32 %v1277, %v1365
        %1367 = vmatmul.bf16.gmra.mxu0 %v860
        %v1368 = vpop.f32.mrf.mxu0
        %v1369 = vadd.f32 %v1280, %v1368
        %v1370 = vpop.f32.mrf.mxu0
        %v1371 = vadd.f32 %v1282, %v1370
        %1372 = vmatmul.bf16.gmra.mxu0 %v862
        %v1373 = vpop.f32.mrf.mxu0
        %v1374 = vadd.f32 %v1285, %v1373
        %v1375 = vpop.f32.mrf.mxu0
        %v1376 = vadd.f32 %v1287, %v1375
        %1377 = vmatmul.bf16.gmra.mxu0 %v864
        %v1378 = vpop.f32.mrf.mxu0
        %v1379 = vadd.f32 %v1290, %v1378
        %v1380 = vpop.f32.mrf.mxu0
        %v1381 = vadd.f32 %v1292, %v1380
        %1382 = vmatmul.bf16.gmra.mxu0 %v866
        %v1383 = vpop.f32.mrf.mxu0
        %v1384 = vadd.f32 %v1295, %v1383
        %v1385 = vpop.f32.mrf.mxu0
        %v1386 = vadd.f32 %v1297, %v1385
        %1387 = vmatmul.bf16.gmra.mxu0 %v868
        %v1388 = vpop.f32.mrf.mxu0
        %v1389 = vadd.f32 %v1300, %v1388
        %v1390 = vpop.f32.mrf.mxu0
        %v1391 = vadd.f32 %v1302, %v1390
        %1392 = vmatmul.bf16.gmra.mxu0 %v870
        %v1393 = vpop.f32.mrf.mxu0
        %v1394 = vadd.f32 %v1305, %v1393
        %v1395 = vpop.f32.mrf.mxu0
        %v1396 = vadd.f32 %v1307, %v1395
        %1397 = vmatmul.bf16.gmra.mxu0 %v872
        %v1398 = vpop.f32.mrf.mxu0
        %v1399 = vadd.f32 %v1310, %v1398
        %v1400 = vpop.f32.mrf.mxu0
        %v1401 = vadd.f32 %v1312, %v1400
        %1402 = vmatmul.bf16.gmra.mxu0 %v874
        %v1403 = vpop.f32.mrf.mxu0
        %v1404 = vadd.f32 %v1315, %v1403
        %v1405 = vpop.f32.mrf.mxu0
        %v1406 = vadd.f32 %v1317, %v1405
        %1407 = vmatmul.bf16.gmra.mxu0 %v876
        %v1408 = vpop.f32.mrf.mxu0
        %v1409 = vadd.f32 %v1320, %v1408
        %v1410 = vpop.f32.mrf.mxu0
        %v1411 = vadd.f32 %v1322, %v1410
        %1412 = vmatmul.bf16.gmra.mxu0 %v878
        %v1413 = vpop.f32.mrf.mxu0
        %v1414 = vadd.f32 %v1325, %v1413
        %v1415 = vpop.f32.mrf.mxu0
        %v1416 = vadd.f32 %v1327, %v1415
        %1417 = vmatmul.bf16.gmra.mxu0 %v880
        %v1418 = vpop.f32.mrf.mxu0
        %v1419 = vadd.f32 %v1330, %v1418
        %v1420 = vpop.f32.mrf.mxu0
        %v1421 = vadd.f32 %v1332, %v1420
        %1422 = vmatmul.bf16.gmra.mxu0 %v882
        %v1423 = vpop.f32.mrf.mxu0
        %v1424 = vadd.f32 %v1335, %v1423
        %v1425 = vpop.f32.mrf.mxu0
        %v1426 = vadd.f32 %v1337, %v1425
        %1427 = vmatmul.bf16.gmra.mxu0 %v884
        %v1428 = vpop.f32.mrf.mxu0
        %v1429 = vadd.f32 %v1340, %v1428
        %v1430 = vpop.f32.mrf.mxu0
        %v1431 = vadd.f32 %v1342, %v1430
        %1432 = vdwg.mxu0
        %v1433 = vadd.f32 %v629, %v1176
        %v1434 = vadd.f32 %v630, %v1354
        %v1435 = vadd.f32 %v631, %v1178
        %v1436 = vadd.f32 %v632, %v1356
        %v1437 = vadd.f32 %v633, %v1181
        %v1438 = vadd.f32 %v634, %v1359
        %v1439 = vadd.f32 %v635, %v1183
        %v1440 = vadd.f32 %v636, %v1361
        %v1441 = vadd.f32 %v637, %v1186
        %v1442 = vadd.f32 %v638, %v1364
        %v1443 = vadd.f32 %v639, %v1188
        %v1444 = vadd.f32 %v640, %v1366
        %v1445 = vadd.f32 %v641, %v1191
        %v1446 = vadd.f32 %v642, %v1369
        %v1447 = vadd.f32 %v643, %v1193
        %v1448 = vadd.f32 %v644, %v1371
        %v1449 = vadd.f32 %v645, %v1196
        %v1450 = vadd.f32 %v646, %v1374
        %v1451 = vadd.f32 %v647, %v1198
        %v1452 = vadd.f32 %v648, %v1376
        %v1453 = vadd.f32 %v649, %v1201
        %v1454 = vadd.f32 %v650, %v1379
        %v1455 = vadd.f32 %v651, %v1203
        %v1456 = vadd.f32 %v652, %v1381
        %v1457 = vadd.f32 %v653, %v1206
        %v1458 = vadd.f32 %v654, %v1384
        %v1459 = vadd.f32 %v655, %v1208
        %v1460 = vadd.f32 %v656, %v1386
        %v1461 = vadd.f32 %v657, %v1211
        %v1462 = vadd.f32 %v658, %v1389
        %v1463 = vadd.f32 %v659, %v1213
        %v1464 = vadd.f32 %v660, %v1391
        %v1465 = vadd.f32 %v661, %v1216
        %v1466 = vadd.f32 %v662, %v1394
        %v1467 = vadd.f32 %v663, %v1218
        %v1468 = vadd.f32 %v664, %v1396
        %v1469 = vadd.f32 %v665, %v1221
        %v1470 = vadd.f32 %v666, %v1399
        %v1471 = vadd.f32 %v667, %v1223
        %v1472 = vadd.f32 %v668, %v1401
        %v1473 = vadd.f32 %v669, %v1226
        %v1474 = vadd.f32 %v670, %v1404
        %v1475 = vadd.f32 %v671, %v1228
        %v1476 = vadd.f32 %v672, %v1406
        %v1477 = vadd.f32 %v673, %v1231
        %v1478 = vadd.f32 %v674, %v1409
        %v1479 = vadd.f32 %v675, %v1233
        %v1480 = vadd.f32 %v676, %v1411
        %v1481 = vadd.f32 %v677, %v1236
        %v1482 = vadd.f32 %v678, %v1414
        %v1483 = vadd.f32 %v679, %v1238
        %v1484 = vadd.f32 %v680, %v1416
        %v1485 = vadd.f32 %v681, %v1241
        %v1486 = vadd.f32 %v682, %v1419
        %v1487 = vadd.f32 %v683, %v1243
        %v1488 = vadd.f32 %v684, %v1421
        %v1489 = vadd.f32 %v685, %v1246
        %v1490 = vadd.f32 %v686, %v1424
        %v1491 = vadd.f32 %v687, %v1248
        %v1492 = vadd.f32 %v688, %v1426
        %v1493 = vadd.f32 %v689, %v1251
        %v1494 = vadd.f32 %v690, %v1429
        %v1495 = vadd.f32 %v691, %v1253
        %v1496 = vadd.f32 %v692, %v1431
        %1497 = vst [vmem:[#allocation2] sm:$0xff] %v1433
        %1498 = vst [vmem:[#allocation2 + $0x8] sm:$0xff] %v1434
        %1499 = vst [vmem:[#allocation2 + $0x10] sm:$0xff] %v1435
        %1500 = vst [vmem:[#allocation2 + $0x18] sm:$0xff] %v1436
        %1501 = vst [vmem:[#allocation2 + $0x20] sm:$0xff] %v1437
        %1502 = vst [vmem:[#allocation2 + $0x28] sm:$0xff] %v1438
        %1503 = vst [vmem:[#allocation2 + $0x30] sm:$0xff] %v1439
        %1504 = vst [vmem:[#allocation2 + $0x38] sm:$0xff] %v1440
        %1505 = vst [vmem:[#allocation2 + $0x40] sm:$0xff] %v1441
        %1506 = vst [vmem:[#allocation2 + $0x48] sm:$0xff] %v1442
        %1507 = vst [vmem:[#allocation2 + $0x50] sm:$0xff] %v1443
        %1508 = vst [vmem:[#allocation2 + $0x58] sm:$0xff] %v1444
        %1509 = vst [vmem:[#allocation2 + $0x60] sm:$0xff] %v1445
        %1510 = vst [vmem:[#allocation2 + $0x68] sm:$0xff] %v1446
        %1511 = vst [vmem:[#allocation2 + $0x70] sm:$0xff] %v1447
        %1512 = vst [vmem:[#allocation2 + $0x78] sm:$0xff] %v1448
        %1513 = vst [vmem:[#allocation2 + $0x80] sm:$0xff] %v1449
        %1514 = vst [vmem:[#allocation2 + $0x88] sm:$0xff] %v1450
        %1515 = vst [vmem:[#allocation2 + $0x90] sm:$0xff] %v1451
        %1516 = vst [vmem:[#allocation2 + $0x98] sm:$0xff] %v1452
        %1517 = vst [vmem:[#allocation2 + $0xa0] sm:$0xff] %v1453
        %1518 = vst [vmem:[#allocation2 + $0xa8] sm:$0xff] %v1454
        %1519 = vst [vmem:[#allocation2 + $0xb0] sm:$0xff] %v1455
        %1520 = vst [vmem:[#allocation2 + $0xb8] sm:$0xff] %v1456
        %1521 = vst [vmem:[#allocation2 + $0xc0] sm:$0xff] %v1457
        %1522 = vst [vmem:[#allocation2 + $0xc8] sm:$0xff] %v1458
        %1523 = vst [vmem:[#allocation2 + $0xd0] sm:$0xff] %v1459
        %1524 = vst [vmem:[#allocation2 + $0xd8] sm:$0xff] %v1460
        %1525 = vst [vmem:[#allocation2 + $0xe0] sm:$0xff] %v1461
        %1526 = vst [vmem:[#allocation2 + $0xe8] sm:$0xff] %v1462
        %1527 = vst [vmem:[#allocation2 + $0xf0] sm:$0xff] %v1463
        %1528 = vst [vmem:[#allocation2 + $0xf8] sm:$0xff] %v1464
        %1529 = vst [vmem:[#allocation2 + $0x100] sm:$0xff] %v1465
        %1530 = vst [vmem:[#allocation2 + $0x108] sm:$0xff] %v1466
        %1531 = vst [vmem:[#allocation2 + $0x110] sm:$0xff] %v1467
        %1532 = vst [vmem:[#allocation2 + $0x118] sm:$0xff] %v1468
        %1533 = vst [vmem:[#allocation2 + $0x120] sm:$0xff] %v1469
        %1534 = vst [vmem:[#allocation2 + $0x128] sm:$0xff] %v1470
        %1535 = vst [vmem:[#allocation2 + $0x130] sm:$0xff] %v1471
        %1536 = vst [vmem:[#allocation2 + $0x138] sm:$0xff] %v1472
        %1537 = vst [vmem:[#allocation2 + $0x140] sm:$0xff] %v1473
        %1538 = vst [vmem:[#allocation2 + $0x148] sm:$0xff] %v1474
        %1539 = vst [vmem:[#allocation2 + $0x150] sm:$0xff] %v1475
        %1540 = vst [vmem:[#allocation2 + $0x158] sm:$0xff] %v1476
        %1541 = vst [vmem:[#allocation2 + $0x160] sm:$0xff] %v1477
        %1542 = vst [vmem:[#allocation2 + $0x168] sm:$0xff] %v1478
        %1543 = vst [vmem:[#allocation2 + $0x170] sm:$0xff] %v1479
        %1544 = vst [vmem:[#allocation2 + $0x178] sm:$0xff] %v1480
        %1545 = vst [vmem:[#allocation2 + $0x180] sm:$0xff] %v1481
        %1546 = vst [vmem:[#allocation2 + $0x188] sm:$0xff] %v1482
        %1547 = vst [vmem:[#allocation2 + $0x190] sm:$0xff] %v1483
        %1548 = vst [vmem:[#allocation2 + $0x198] sm:$0xff] %v1484
        %1549 = vst [vmem:[#allocation2 + $0x1a0] sm:$0xff] %v1485
        %1550 = vst [vmem:[#allocation2 + $0x1a8] sm:$0xff] %v1486
        %1551 = vst [vmem:[#allocation2 + $0x1b0] sm:$0xff] %v1487
        %1552 = vst [vmem:[#allocation2 + $0x1b8] sm:$0xff] %v1488
        %1553 = vst [vmem:[#allocation2 + $0x1c0] sm:$0xff] %v1489
        %1554 = vst [vmem:[#allocation2 + $0x1c8] sm:$0xff] %v1490
        %1555 = vst [vmem:[#allocation2 + $0x1d0] sm:$0xff] %v1491
        %1556 = vst [vmem:[#allocation2 + $0x1d8] sm:$0xff] %v1492
        %1557 = vst [vmem:[#allocation2 + $0x1e0] sm:$0xff] %v1493
        %1558 = vst [vmem:[#allocation2 + $0x1e8] sm:$0xff] %v1494
        %1559 = vst [vmem:[#allocation2 + $0x1f0] sm:$0xff] %v1495
        %1560 = vst [vmem:[#allocation2 + $0x1f8] sm:$0xff] %v1496
        %p1561 = scmp.eq.s32.totalorder %s21, 1
        // Predicated region
        $region113: #{multi_head_attention.3} parent=99 // pred_check
          %p1562 = pneg %p1561
        $region114: #{multi_head_attention.3} parent=99 // pred_check_branch
          %1564 = sbr.rel (%p1562) target = $region116
        $region115: #{multi_head_attention.3} parent=99 // pred_region
          %v1565 = vld [vmem:[#allocation2] sm:$0xff]
          %v1566 = vld [vmem:[#allocation2 + $0x8] sm:$0xff]
          %v1567 = vld [vmem:[#allocation2 + $0x10] sm:$0xff]
          %v1568 = vld [vmem:[#allocation2 + $0x18] sm:$0xff]
          %v1569 = vld [vmem:[#allocation2 + $0x20] sm:$0xff]
          %v1570 = vld [vmem:[#allocation2 + $0x28] sm:$0xff]
          %v1571 = vld [vmem:[#allocation2 + $0x30] sm:$0xff]
          %v1572 = vld [vmem:[#allocation2 + $0x38] sm:$0xff]
          %v1573 = vld [vmem:[#allocation2 + $0x40] sm:$0xff]
          %v1574 = vld [vmem:[#allocation2 + $0x48] sm:$0xff]
          %v1575 = vld [vmem:[#allocation2 + $0x50] sm:$0xff]
          %v1576 = vld [vmem:[#allocation2 + $0x58] sm:$0xff]
          %v1577 = vld [vmem:[#allocation2 + $0x60] sm:$0xff]
          %v1578 = vld [vmem:[#allocation2 + $0x68] sm:$0xff]
          %v1579 = vld [vmem:[#allocation2 + $0x70] sm:$0xff]
          %v1580 = vld [vmem:[#allocation2 + $0x78] sm:$0xff]
          %v1581 = vld [vmem:[#allocation2 + $0x80] sm:$0xff]
          %v1582 = vld [vmem:[#allocation2 + $0x88] sm:$0xff]
          %v1583 = vld [vmem:[#allocation2 + $0x90] sm:$0xff]
          %v1584 = vld [vmem:[#allocation2 + $0x98] sm:$0xff]
          %v1585 = vld [vmem:[#allocation2 + $0xa0] sm:$0xff]
          %v1586 = vld [vmem:[#allocation2 + $0xa8] sm:$0xff]
          %v1587 = vld [vmem:[#allocation2 + $0xb0] sm:$0xff]
          %v1588 = vld [vmem:[#allocation2 + $0xb8] sm:$0xff]
          %v1589 = vld [vmem:[#allocation2 + $0xc0] sm:$0xff]
          %v1590 = vld [vmem:[#allocation2 + $0xc8] sm:$0xff]
          %v1591 = vld [vmem:[#allocation2 + $0xd0] sm:$0xff]
          %v1592 = vld [vmem:[#allocation2 + $0xd8] sm:$0xff]
          %v1593 = vld [vmem:[#allocation2 + $0xe0] sm:$0xff]
          %v1594 = vld [vmem:[#allocation2 + $0xe8] sm:$0xff]
          %v1595 = vld [vmem:[#allocation2 + $0xf0] sm:$0xff]
          %v1596 = vld [vmem:[#allocation2 + $0xf8] sm:$0xff]
          %v1597 = vld [vmem:[#allocation2 + $0x100] sm:$0xff]
          %v1598 = vld [vmem:[#allocation2 + $0x108] sm:$0xff]
          %v1599 = vld [vmem:[#allocation2 + $0x110] sm:$0xff]
          %v1600 = vld [vmem:[#allocation2 + $0x118] sm:$0xff]
          %v1601 = vld [vmem:[#allocation2 + $0x120] sm:$0xff]
          %v1602 = vld [vmem:[#allocation2 + $0x128] sm:$0xff]
          %v1603 = vld [vmem:[#allocation2 + $0x130] sm:$0xff]
          %v1604 = vld [vmem:[#allocation2 + $0x138] sm:$0xff]
          %v1605 = vld [vmem:[#allocation2 + $0x140] sm:$0xff]
          %v1606 = vld [vmem:[#allocation2 + $0x148] sm:$0xff]
          %v1607 = vld [vmem:[#allocation2 + $0x150] sm:$0xff]
          %v1608 = vld [vmem:[#allocation2 + $0x158] sm:$0xff]
          %v1609 = vld [vmem:[#allocation2 + $0x160] sm:$0xff]
          %v1610 = vld [vmem:[#allocation2 + $0x168] sm:$0xff]
          %v1611 = vld [vmem:[#allocation2 + $0x170] sm:$0xff]
          %v1612 = vld [vmem:[#allocation2 + $0x178] sm:$0xff]
          %v1613 = vld [vmem:[#allocation2 + $0x180] sm:$0xff]
          %v1614 = vld [vmem:[#allocation2 + $0x188] sm:$0xff]
          %v1615 = vld [vmem:[#allocation2 + $0x190] sm:$0xff]
          %v1616 = vld [vmem:[#allocation2 + $0x198] sm:$0xff]
          %v1617 = vld [vmem:[#allocation2 + $0x1a0] sm:$0xff]
          %v1618 = vld [vmem:[#allocation2 + $0x1a8] sm:$0xff]
          %v1619 = vld [vmem:[#allocation2 + $0x1b0] sm:$0xff]
          %v1620 = vld [vmem:[#allocation2 + $0x1b8] sm:$0xff]
          %v1621 = vld [vmem:[#allocation2 + $0x1c0] sm:$0xff]
          %v1622 = vld [vmem:[#allocation2 + $0x1c8] sm:$0xff]
          %v1623 = vld [vmem:[#allocation2 + $0x1d0] sm:$0xff]
          %v1624 = vld [vmem:[#allocation2 + $0x1d8] sm:$0xff]
          %v1625 = vld [vmem:[#allocation2 + $0x1e0] sm:$0xff]
          %v1626 = vld [vmem:[#allocation2 + $0x1e8] sm:$0xff]
          %v1627 = vld [vmem:[#allocation2 + $0x1f0] sm:$0xff]
          %v1628 = vld [vmem:[#allocation2 + $0x1f8] sm:$0xff]
          %v1629 = vld [vmem:[%s557] sm:$0x3]
          %v1631 = vperm.slane %v1629, 0
          %v1632 = vperm.slane %v1629, 1
          %v1635 = vadd.f32 %v1565, %v1631
          %v1636 = vadd.f32 %v1566, %v1632
          %v1637 = vadd.f32 %v1567, %v1631
          %v1638 = vadd.f32 %v1568, %v1632
          %v1639 = vadd.f32 %v1569, %v1631
          %v1640 = vadd.f32 %v1570, %v1632
          %v1641 = vadd.f32 %v1571, %v1631
          %v1642 = vadd.f32 %v1572, %v1632
          %v1643 = vadd.f32 %v1573, %v1631
          %v1644 = vadd.f32 %v1574, %v1632
          %v1645 = vadd.f32 %v1575, %v1631
          %v1646 = vadd.f32 %v1576, %v1632
          %v1647 = vadd.f32 %v1577, %v1631
          %v1648 = vadd.f32 %v1578, %v1632
          %v1649 = vadd.f32 %v1579, %v1631
          %v1650 = vadd.f32 %v1580, %v1632
          %v1651 = vadd.f32 %v1581, %v1631
          %v1652 = vadd.f32 %v1582, %v1632
          %v1653 = vadd.f32 %v1583, %v1631
          %v1654 = vadd.f32 %v1584, %v1632
          %v1655 = vadd.f32 %v1585, %v1631
          %v1656 = vadd.f32 %v1586, %v1632
          %v1657 = vadd.f32 %v1587, %v1631
          %v1658 = vadd.f32 %v1588, %v1632
          %v1659 = vadd.f32 %v1589, %v1631
          %v1660 = vadd.f32 %v1590, %v1632
          %v1661 = vadd.f32 %v1591, %v1631
          %v1662 = vadd.f32 %v1592, %v1632
          %v1663 = vadd.f32 %v1593, %v1631
          %v1664 = vadd.f32 %v1594, %v1632
          %v1665 = vadd.f32 %v1595, %v1631
          %v1666 = vadd.f32 %v1596, %v1632
          %v1667 = vadd.f32 %v1597, %v1631
          %v1668 = vadd.f32 %v1598, %v1632
          %v1669 = vadd.f32 %v1599, %v1631
          %v1670 = vadd.f32 %v1600, %v1632
          %v1671 = vadd.f32 %v1601, %v1631
          %v1672 = vadd.f32 %v1602, %v1632
          %v1673 = vadd.f32 %v1603, %v1631
          %v1674 = vadd.f32 %v1604, %v1632
          %v1675 = vadd.f32 %v1605, %v1631
          %v1676 = vadd.f32 %v1606, %v1632
          %v1677 = vadd.f32 %v1607, %v1631
          %v1678 = vadd.f32 %v1608, %v1632
          %v1679 = vadd.f32 %v1609, %v1631
          %v1680 = vadd.f32 %v1610, %v1632
          %v1681 = vadd.f32 %v1611, %v1631
          %v1682 = vadd.f32 %v1612, %v1632
          %v1683 = vadd.f32 %v1613, %v1631
          %v1684 = vadd.f32 %v1614, %v1632
          %v1685 = vadd.f32 %v1615, %v1631
          %v1686 = vadd.f32 %v1616, %v1632
          %v1687 = vadd.f32 %v1617, %v1631
          %v1688 = vadd.f32 %v1618, %v1632
          %v1689 = vadd.f32 %v1619, %v1631
          %v1690 = vadd.f32 %v1620, %v1632
          %v1691 = vadd.f32 %v1621, %v1631
          %v1692 = vadd.f32 %v1622, %v1632
          %v1693 = vadd.f32 %v1623, %v1631
          %v1694 = vadd.f32 %v1624, %v1632
          %v1695 = vadd.f32 %v1625, %v1631
          %v1696 = vadd.f32 %v1626, %v1632
          %v1697 = vadd.f32 %v1627, %v1631
          %v1698 = vadd.f32 %v1628, %v1632
          %v1699 = vpack.c.bf16 %v1636, %v1635
          %v1700 = vpack.c.bf16 %v1638, %v1637
          %v1701 = vpack.c.bf16 %v1640, %v1639
          %v1702 = vpack.c.bf16 %v1642, %v1641
          %v1703 = vpack.c.bf16 %v1644, %v1643
          %v1704 = vpack.c.bf16 %v1646, %v1645
          %v1705 = vpack.c.bf16 %v1648, %v1647
          %v1706 = vpack.c.bf16 %v1650, %v1649
          %v1707 = vpack.c.bf16 %v1652, %v1651
          %v1708 = vpack.c.bf16 %v1654, %v1653
          %v1709 = vpack.c.bf16 %v1656, %v1655
          %v1710 = vpack.c.bf16 %v1658, %v1657
          %v1711 = vpack.c.bf16 %v1660, %v1659
          %v1712 = vpack.c.bf16 %v1662, %v1661
          %v1713 = vpack.c.bf16 %v1664, %v1663
          %v1714 = vpack.c.bf16 %v1666, %v1665
          %v1715 = vpack.c.bf16 %v1668, %v1667
          %v1716 = vpack.c.bf16 %v1670, %v1669
          %v1717 = vpack.c.bf16 %v1672, %v1671
          %v1718 = vpack.c.bf16 %v1674, %v1673
          %v1719 = vpack.c.bf16 %v1676, %v1675
          %v1720 = vpack.c.bf16 %v1678, %v1677
          %v1721 = vpack.c.bf16 %v1680, %v1679
          %v1722 = vpack.c.bf16 %v1682, %v1681
          %v1723 = vpack.c.bf16 %v1684, %v1683
          %v1724 = vpack.c.bf16 %v1686, %v1685
          %v1725 = vpack.c.bf16 %v1688, %v1687
          %v1726 = vpack.c.bf16 %v1690, %v1689
          %v1727 = vpack.c.bf16 %v1692, %v1691
          %v1728 = vpack.c.bf16 %v1694, %v1693
          %v1729 = vpack.c.bf16 %v1696, %v1695
          %v1730 = vpack.c.bf16 %v1698, %v1697
          %1731 = vst [vmem:[%s549] sm:$0xff] %v1699
          %1732 = vst [vmem:[%s549 + $0x8] sm:$0xff] %v1700
          %1733 = vst [vmem:[%s549 + $0x10] sm:$0xff] %v1701
          %1734 = vst [vmem:[%s549 + $0x18] sm:$0xff] %v1702
          %1735 = vst [vmem:[%s549 + $0x20] sm:$0xff] %v1703
          %1736 = vst [vmem:[%s549 + $0x28] sm:$0xff] %v1704
          %1737 = vst [vmem:[%s549 + $0x30] sm:$0xff] %v1705
          %1738 = vst [vmem:[%s549 + $0x38] sm:$0xff] %v1706
          %1739 = vst [vmem:[%s549 + $0x40] sm:$0xff] %v1707
          %1740 = vst [vmem:[%s549 + $0x48] sm:$0xff] %v1708
          %1741 = vst [vmem:[%s549 + $0x50] sm:$0xff] %v1709
          %1742 = vst [vmem:[%s549 + $0x58] sm:$0xff] %v1710
          %1743 = vst [vmem:[%s549 + $0x60] sm:$0xff] %v1711
          %1744 = vst [vmem:[%s549 + $0x68] sm:$0xff] %v1712
          %1745 = vst [vmem:[%s549 + $0x70] sm:$0xff] %v1713
          %1746 = vst [vmem:[%s549 + $0x78] sm:$0xff] %v1714
          %1747 = vst [vmem:[%s549 + $0x80] sm:$0xff] %v1715
          %1748 = vst [vmem:[%s549 + $0x88] sm:$0xff] %v1716
          %1749 = vst [vmem:[%s549 + $0x90] sm:$0xff] %v1717
          %1750 = vst [vmem:[%s549 + $0x98] sm:$0xff] %v1718
          %1751 = vst [vmem:[%s549 + $0xa0] sm:$0xff] %v1719
          %1752 = vst [vmem:[%s549 + $0xa8] sm:$0xff] %v1720
          %1753 = vst [vmem:[%s549 + $0xb0] sm:$0xff] %v1721
          %1754 = vst [vmem:[%s549 + $0xb8] sm:$0xff] %v1722
          %1755 = vst [vmem:[%s549 + $0xc0] sm:$0xff] %v1723
          %1756 = vst [vmem:[%s549 + $0xc8] sm:$0xff] %v1724
          %1757 = vst [vmem:[%s549 + $0xd0] sm:$0xff] %v1725
          %1758 = vst [vmem:[%s549 + $0xd8] sm:$0xff] %v1726
          %1759 = vst [vmem:[%s549 + $0xe0] sm:$0xff] %v1727
          %1760 = vst [vmem:[%s549 + $0xe8] sm:$0xff] %v1728
          %1761 = vst [vmem:[%s549 + $0xf0] sm:$0xff] %v1729
          %1762 = vst [vmem:[%s549 + $0xf8] sm:$0xff] %v1730
        $region116: #{multi_head_attention.3} parent=99 // pred_fallthru
          _
        %s1763 = sand.u32 %s125, 1
        %s1764 = sand.u32 %s125, 1
        %s1765 = smul.addr %s1764, 256
        %s1766 = scalar_lea.vmem [#allocation5], %s1765
        // Predicated region
        $region117: #{multi_head_attention.3} parent=99 // pred_check
          %p1767 = pneg %p135
        $region118: #{multi_head_attention.3} parent=99 // pred_check_branch
          %1769 = sbr.rel (%p1767) target = $region120
        $region119: #{multi_head_attention.3} parent=99 // pred_region
          %s1770 = smul.u32 32, %s19
          %s1771 = smul.u32 2, %s20
          %s1772 = smul.addr %s1770, 6
          %s1773 = sadd.s32 %s1771, %s1772
          %s1774 = smul.addr %s1773, 4
          %s1775 = scalar_lea.vmem %s3, %s1774
          // Predicated region
          $region121: #{multi_head_attention.3} parent=119 // pred_check
            _
          $region122: #{multi_head_attention.3} parent=119 // pred_check_branch
            %1777 = sbr.rel (0) target = $region124
          $region123: #{multi_head_attention.3} parent=119 // pred_region
            // Predicated region
            $region125: #{multi_head_attention.3} parent=123 // pred_check
              _
            $region126: #{multi_head_attention.3} parent=123 // pred_check_branch
              %1779 = sbr.rel (0) target = $region128
            $region127: #{multi_head_attention.3} parent=123 // pred_region
              // Predicated region
              $region140: #{multi_head_attention.3} parent=127 // pred_check
                _
              $region141: #{multi_head_attention.3} parent=127 // pred_check_branch
                %1857 = sbr.rel (0) target = $region143
              $region142: #{multi_head_attention.3} parent=127 // pred_region
                loop: start=0, step=1, limit=1
                $region144: #{multi_head_attention.3} parent=142 // loop_pre_header
                  _
                $region145: #{multi_head_attention.3} parent=142 // loop_header
                  %s1859 = sphi 0, %s1863
                  %p1860 = scmp.ge.s32.totalorder %s1859, 1
                  %s1864 = sphi %s1766, %s1766
                  %s1865 = sphi %s1775, %s1775
                $region146: #{multi_head_attention.3} parent=142 // loop_header_branch
                  %1862 = sbr.rel (%p1860) target = $region150
                $region147: #{multi_head_attention.3} parent=142 // loop_body
                  %v1866 = vld [vmem:[%s1864] sm:$0xff]
                  %1867 = vst [vmem:[%s1865] sm:$0xff] %v1866
                  %v1868 = vld [vmem:[%s1864 + $0x8] sm:$0xff]
                  %1869 = vst [vmem:[%s1865 + $0x18] sm:$0xff] %v1868
                  %v1870 = vld [vmem:[%s1864 + $0x10] sm:$0xff]
                  %1871 = vst [vmem:[%s1865 + $0x30] sm:$0xff] %v1870
                  %v1872 = vld [vmem:[%s1864 + $0x18] sm:$0xff]
                  %1873 = vst [vmem:[%s1865 + $0x48] sm:$0xff] %v1872
                  %v1874 = vld [vmem:[%s1864 + $0x20] sm:$0xff]
                  %1875 = vst [vmem:[%s1865 + $0x60] sm:$0xff] %v1874
                  %v1876 = vld [vmem:[%s1864 + $0x28] sm:$0xff]
                  %1877 = vst [vmem:[%s1865 + $0x78] sm:$0xff] %v1876
                  %v1878 = vld [vmem:[%s1864 + $0x30] sm:$0xff]
                  %1879 = vst [vmem:[%s1865 + $0x90] sm:$0xff] %v1878
                  %v1880 = vld [vmem:[%s1864 + $0x38] sm:$0xff]
                  %1881 = vst [vmem:[%s1865 + $0xa8] sm:$0xff] %v1880
                  %v1882 = vld [vmem:[%s1864 + $0x40] sm:$0xff]
                  %1883 = vst [vmem:[%s1865 + $0xc0] sm:$0xff] %v1882
                  %v1884 = vld [vmem:[%s1864 + $0x48] sm:$0xff]
                  %1885 = vst [vmem:[%s1865 + $0xd8] sm:$0xff] %v1884
                  %v1886 = vld [vmem:[%s1864 + $0x50] sm:$0xff]
                  %1887 = vst [vmem:[%s1865 + $0xf0] sm:$0xff] %v1886
                  %v1888 = vld [vmem:[%s1864 + $0x58] sm:$0xff]
                  %1889 = vst [vmem:[%s1865 + $0x108] sm:$0xff] %v1888
                  %v1890 = vld [vmem:[%s1864 + $0x60] sm:$0xff]
                  %1891 = vst [vmem:[%s1865 + $0x120] sm:$0xff] %v1890
                  %v1892 = vld [vmem:[%s1864 + $0x68] sm:$0xff]
                  %1893 = vst [vmem:[%s1865 + $0x138] sm:$0xff] %v1892
                  %v1894 = vld [vmem:[%s1864 + $0x70] sm:$0xff]
                  %1895 = vst [vmem:[%s1865 + $0x150] sm:$0xff] %v1894
                  %v1896 = vld [vmem:[%s1864 + $0x78] sm:$0xff]
                  %1897 = vst [vmem:[%s1865 + $0x168] sm:$0xff] %v1896
                  %v1898 = vld [vmem:[%s1864 + $0x80] sm:$0xff]
                  %1899 = vst [vmem:[%s1865 + $0x180] sm:$0xff] %v1898
                  %v1900 = vld [vmem:[%s1864 + $0x88] sm:$0xff]
                  %1901 = vst [vmem:[%s1865 + $0x198] sm:$0xff] %v1900
                  %v1902 = vld [vmem:[%s1864 + $0x90] sm:$0xff]
                  %1903 = vst [vmem:[%s1865 + $0x1b0] sm:$0xff] %v1902
                  %v1904 = vld [vmem:[%s1864 + $0x98] sm:$0xff]
                  %1905 = vst [vmem:[%s1865 + $0x1c8] sm:$0xff] %v1904
                  %v1906 = vld [vmem:[%s1864 + $0xa0] sm:$0xff]
                  %1907 = vst [vmem:[%s1865 + $0x1e0] sm:$0xff] %v1906
                  %v1908 = vld [vmem:[%s1864 + $0xa8] sm:$0xff]
                  %1909 = vst [vmem:[%s1865 + $0x1f8] sm:$0xff] %v1908
                  %v1910 = vld [vmem:[%s1864 + $0xb0] sm:$0xff]
                  %1911 = vst [vmem:[%s1865 + $0x210] sm:$0xff] %v1910
                  %v1912 = vld [vmem:[%s1864 + $0xb8] sm:$0xff]
                  %1913 = vst [vmem:[%s1865 + $0x228] sm:$0xff] %v1912
                  %v1914 = vld [vmem:[%s1864 + $0xc0] sm:$0xff]
                  %1915 = vst [vmem:[%s1865 + $0x240] sm:$0xff] %v1914
                  %v1916 = vld [vmem:[%s1864 + $0xc8] sm:$0xff]
                  %1917 = vst [vmem:[%s1865 + $0x258] sm:$0xff] %v1916
                  %v1918 = vld [vmem:[%s1864 + $0xd0] sm:$0xff]
                  %1919 = vst [vmem:[%s1865 + $0x270] sm:$0xff] %v1918
                  %v1920 = vld [vmem:[%s1864 + $0xd8] sm:$0xff]
                  %1921 = vst [vmem:[%s1865 + $0x288] sm:$0xff] %v1920
                  %v1922 = vld [vmem:[%s1864 + $0xe0] sm:$0xff]
                  %1923 = vst [vmem:[%s1865 + $0x2a0] sm:$0xff] %v1922
                  %v1924 = vld [vmem:[%s1864 + $0xe8] sm:$0xff]
                  %1925 = vst [vmem:[%s1865 + $0x2b8] sm:$0xff] %v1924
                  %v1926 = vld [vmem:[%s1864 + $0xf0] sm:$0xff]
                  %1927 = vst [vmem:[%s1865 + $0x2d0] sm:$0xff] %v1926
                  %v1928 = vld [vmem:[%s1864 + $0xf8] sm:$0xff]
                  %1929 = vst [vmem:[%s1865 + $0x2e8] sm:$0xff] %v1928
                $region148: #{multi_head_attention.3} parent=142 // loop_footer
                  %s1863 = sadd.s32 1, %s1859
                $region149: #{multi_head_attention.3} parent=142 // loop_footer_branch
                  %1858 = sbr.rel target = $region145
                $region150: #{multi_head_attention.3} parent=142 // loop_exit
                  _
              $region143: #{multi_head_attention.3} parent=127 // pred_fallthru
                _
              // Predicated region
              $region151: #{multi_head_attention.3} parent=127 // pred_check
                _
              $region152: #{multi_head_attention.3} parent=127 // pred_check_branch
                %1931 = sbr.rel target = $region154
              $region153: #{multi_head_attention.3} parent=127 // pred_region
                _
              $region154: #{multi_head_attention.3} parent=127 // pred_fallthru
                _
            $region128: #{multi_head_attention.3} parent=123 // pred_fallthru
              _
            // Predicated region
            $region129: #{multi_head_attention.3} parent=123 // pred_check
              _
            $region130: #{multi_head_attention.3} parent=123 // pred_check_branch
              %1781 = sbr.rel target = $region132
            $region131: #{multi_head_attention.3} parent=123 // pred_region
              %s1783 = ssub.s32 256, 1
              loop: start=0, step=1, limit=1
              $region133: #{multi_head_attention.3} parent=131 // loop_pre_header
                _
              $region134: #{multi_head_attention.3} parent=131 // loop_header
                %s1785 = sphi 0, %s1789
                %p1786 = scmp.ge.s32.totalorder %s1785, 1
                %s1790 = sphi %s1766, %s1766
                %s1791 = sphi %s1775, %s1775
              $region135: #{multi_head_attention.3} parent=131 // loop_header_branch
                %1788 = sbr.rel (%p1786) target = $region139
              $region136: #{multi_head_attention.3} parent=131 // loop_body
                %v1792 = vld [vmem:[%s1790] sm:%s1783]
                %1793 = vst [vmem:[%s1791] sm:%s1783] %v1792
                %v1794 = vld [vmem:[%s1790 + $0x8] sm:%s1783]
                %1795 = vst [vmem:[%s1791 + $0x18] sm:%s1783] %v1794
                %v1796 = vld [vmem:[%s1790 + $0x10] sm:%s1783]
                %1797 = vst [vmem:[%s1791 + $0x30] sm:%s1783] %v1796
                %v1798 = vld [vmem:[%s1790 + $0x18] sm:%s1783]
                %1799 = vst [vmem:[%s1791 + $0x48] sm:%s1783] %v1798
                %v1800 = vld [vmem:[%s1790 + $0x20] sm:%s1783]
                %1801 = vst [vmem:[%s1791 + $0x60] sm:%s1783] %v1800
                %v1802 = vld [vmem:[%s1790 + $0x28] sm:%s1783]
                %1803 = vst [vmem:[%s1791 + $0x78] sm:%s1783] %v1802
                %v1804 = vld [vmem:[%s1790 + $0x30] sm:%s1783]
                %1805 = vst [vmem:[%s1791 + $0x90] sm:%s1783] %v1804
                %v1806 = vld [vmem:[%s1790 + $0x38] sm:%s1783]
                %1807 = vst [vmem:[%s1791 + $0xa8] sm:%s1783] %v1806
                %v1808 = vld [vmem:[%s1790 + $0x40] sm:%s1783]
                %1809 = vst [vmem:[%s1791 + $0xc0] sm:%s1783] %v1808
                %v1810 = vld [vmem:[%s1790 + $0x48] sm:%s1783]
                %1811 = vst [vmem:[%s1791 + $0xd8] sm:%s1783] %v1810
                %v1812 = vld [vmem:[%s1790 + $0x50] sm:%s1783]
                %1813 = vst [vmem:[%s1791 + $0xf0] sm:%s1783] %v1812
                %v1814 = vld [vmem:[%s1790 + $0x58] sm:%s1783]
                %1815 = vst [vmem:[%s1791 + $0x108] sm:%s1783] %v1814
                %v1816 = vld [vmem:[%s1790 + $0x60] sm:%s1783]
                %1817 = vst [vmem:[%s1791 + $0x120] sm:%s1783] %v1816
                %v1818 = vld [vmem:[%s1790 + $0x68] sm:%s1783]
                %1819 = vst [vmem:[%s1791 + $0x138] sm:%s1783] %v1818
                %v1820 = vld [vmem:[%s1790 + $0x70] sm:%s1783]
                %1821 = vst [vmem:[%s1791 + $0x150] sm:%s1783] %v1820
                %v1822 = vld [vmem:[%s1790 + $0x78] sm:%s1783]
                %1823 = vst [vmem:[%s1791 + $0x168] sm:%s1783] %v1822
                %v1824 = vld [vmem:[%s1790 + $0x80] sm:%s1783]
                %1825 = vst [vmem:[%s1791 + $0x180] sm:%s1783] %v1824
                %v1826 = vld [vmem:[%s1790 + $0x88] sm:%s1783]
                %1827 = vst [vmem:[%s1791 + $0x198] sm:%s1783] %v1826
                %v1828 = vld [vmem:[%s1790 + $0x90] sm:%s1783]
                %1829 = vst [vmem:[%s1791 + $0x1b0] sm:%s1783] %v1828
                %v1830 = vld [vmem:[%s1790 + $0x98] sm:%s1783]
                %1831 = vst [vmem:[%s1791 + $0x1c8] sm:%s1783] %v1830
                %v1832 = vld [vmem:[%s1790 + $0xa0] sm:%s1783]
                %1833 = vst [vmem:[%s1791 + $0x1e0] sm:%s1783] %v1832
                %v1834 = vld [vmem:[%s1790 + $0xa8] sm:%s1783]
                %1835 = vst [vmem:[%s1791 + $0x1f8] sm:%s1783] %v1834
                %v1836 = vld [vmem:[%s1790 + $0xb0] sm:%s1783]
                %1837 = vst [vmem:[%s1791 + $0x210] sm:%s1783] %v1836
                %v1838 = vld [vmem:[%s1790 + $0xb8] sm:%s1783]
                %1839 = vst [vmem:[%s1791 + $0x228] sm:%s1783] %v1838
                %v1840 = vld [vmem:[%s1790 + $0xc0] sm:%s1783]
                %1841 = vst [vmem:[%s1791 + $0x240] sm:%s1783] %v1840
                %v1842 = vld [vmem:[%s1790 + $0xc8] sm:%s1783]
                %1843 = vst [vmem:[%s1791 + $0x258] sm:%s1783] %v1842
                %v1844 = vld [vmem:[%s1790 + $0xd0] sm:%s1783]
                %1845 = vst [vmem:[%s1791 + $0x270] sm:%s1783] %v1844
                %v1846 = vld [vmem:[%s1790 + $0xd8] sm:%s1783]
                %1847 = vst [vmem:[%s1791 + $0x288] sm:%s1783] %v1846
                %v1848 = vld [vmem:[%s1790 + $0xe0] sm:%s1783]
                %1849 = vst [vmem:[%s1791 + $0x2a0] sm:%s1783] %v1848
                %v1850 = vld [vmem:[%s1790 + $0xe8] sm:%s1783]
                %1851 = vst [vmem:[%s1791 + $0x2b8] sm:%s1783] %v1850
                %v1852 = vld [vmem:[%s1790 + $0xf0] sm:%s1783]
                %1853 = vst [vmem:[%s1791 + $0x2d0] sm:%s1783] %v1852
                %v1854 = vld [vmem:[%s1790 + $0xf8] sm:%s1783]
                %1855 = vst [vmem:[%s1791 + $0x2e8] sm:%s1783] %v1854
              $region137: #{multi_head_attention.3} parent=131 // loop_footer
                %s1789 = sadd.s32 1, %s1785
              $region138: #{multi_head_attention.3} parent=131 // loop_footer_branch
                %1784 = sbr.rel target = $region134
              $region139: #{multi_head_attention.3} parent=131 // loop_exit
                _
            $region132: #{multi_head_attention.3} parent=123 // pred_fallthru
              _
          $region124: #{multi_head_attention.3} parent=119 // pred_fallthru
            _
          %1932 = vnop
        $region120: #{multi_head_attention.3} parent=99 // pred_fallthru
          _
      $region100: #{multi_head_attention.3} parent=5 // pred_fallthru
        _
      %p1933 = scmp.le.s32.totalorder 2, %s9
      // Predicated region
      $region155: #{multi_head_attention.3} parent=5 // pred_check
        %p1934 = pneg %p1933
      $region156: #{multi_head_attention.3} parent=5 // pred_check_branch
        %1936 = sbr.rel (%p1934) target = $region158
      $region157: #{multi_head_attention.3} parent=5 // pred_region
        %s1937 = ssub.s32 %s9, 2
        // Predicated region
        $region159: #{multi_head_attention.3} parent=157 // pred_check
          %p1938 = pneg %p141
        $region160: #{multi_head_attention.3} parent=157 // pred_check_branch
          %1940 = sbr.rel (%p1938) target = $region162
        $region161: #{multi_head_attention.3} parent=157 // pred_region
          %s1941 = sand.u32 %s126, 1
          %s1942 = sand.u32 %s126, 1
          %s1943 = smul.addr %s1942, 256
          %s1944 = scalar_lea.vmem [#allocation5], %s1943
        $region162: #{multi_head_attention.3} parent=157 // pred_fallthru
          _
      $region158: #{multi_head_attention.3} parent=5 // pred_fallthru
        _
    $region6: #{multi_head_attention.3} parent=1 // loop_footer
      %s13 = sadd.s32 1, %s9
    $region7: #{multi_head_attention.3} parent=1 // loop_footer_branch
      %8 = sbr.rel target = $region3
    $region8: #{multi_head_attention.3} parent=1 // loop_exit
      _

// kernel: multi_head_attention.4
$region0: #{multi_head_attention.4}
  #allocation0 [shape = 'u32[]', space=smem, size = 0x4, offset = 0x4, fixed_abs, tag = 'smem constant byte address 0x4 - core index']
  #allocation1 [shape = 'u32[72,128]{1,0:T(1,128)}', space=vmem, size = 0x9000, scoped, tag = 'internal scratch']
  #allocation2 [shape = 'f32[128,1]{1,0:T(8,128)}', space=vmem, size = 0x10000, scoped, tag = 'scratch operand']
  #allocation3 [shape = 'f32[128,1]{1,0:T(8,128)}', space=vmem, size = 0x10000, scoped, tag = 'scratch operand']
  #allocation4 [shape = 'f32[128,128]{1,0:T(8,128)}', space=vmem, size = 0x10000, scoped, tag = 'scratch operand']
  %s0 = inlined_call_operand.vmem [shape: bf16[2,256,768], index: 0, kind: input, shape index: {}, may-alias: {0,1,2}]
  %s1 = inlined_call_operand.vmem [shape: bf16[2,256,768], index: 1, kind: input, shape index: {}, may-alias: {0,1,2}]
  %s2 = inlined_call_operand.vmem [shape: bf16[2,256,768], index: 2, kind: input, shape index: {}, may-alias: {0,1,2}]
  %s3 = inlined_call_operand.vmem [shape: bf16[2,256,256], index: 3, kind: output, shape index: {}]
  %s4 = sld [smem:[#allocation0]]
  $region221: #{multi_head_attention.4} parent=0
    _
  %s6 = ssub.s32 1, %s4
  %s7 = scalar_select 0, %s6, %s4
  $region1: #{multi_head_attention.4} parent=0
    #allocation5 [shape = 'u8[65536]{0}', space=vmem, size = 0x10000, scoped, tag = 'input window, operand 0']
    #allocation6 [shape = 'u8[65536]{0}', space=vmem, size = 0x10000, scoped, tag = 'input window, operand 1']
    #allocation7 [shape = 'u8[65536]{0}', space=vmem, size = 0x10000, scoped, tag = 'input window, operand 2']
    #allocation8 [shape = 'u8[65536]{0}', space=vmem, size = 0x10000, scoped, tag = 'output window, operand 0']
    loop: start=0, step=1, limit=18
    $region2: #{multi_head_attention.4} parent=1 // loop_pre_header
      _
    $region3: #{multi_head_attention.4} parent=1 // loop_header
      %s9 = sphi 0, %s13
      %p10 = scmp.ge.s32.totalorder %s9, 18
      %s16 = sphi 0, %s42
      %s17 = sphi 0, %s38
      %s18 = sphi 0, %s34
      %s19 = sphi 0, %s30
      %s20 = sphi 0, %s16
      %s21 = sphi 0, %s17
      %s22 = sphi 0, %s18
      %s23 = sphi 0, %s19
      %s24 = sphi 0, %s20
      %s25 = sphi 0, %s21
      %s26 = sphi 0, %s22
      %s27 = sphi 0, %s23
      %s49 = sphi 0, %s51
      %s52 = sphi 0, %s49
      %s53 = sphi 0, %s52
      %s69 = sphi 0, %s53
      %s81 = sphi 0, %s83
      %s84 = sphi 0, %s81
      %s85 = sphi 0, %s84
      %s101 = sphi 0, %s85
      %s113 = sphi 0, %s115
      %s116 = sphi 0, %s113
      %s117 = sphi 0, %s116
      %s133 = sphi 0, %s117
      %s143 = sphi 0, %s145
      %s146 = sphi 0, %s143
      %s147 = sphi 0, %s146
      %s163 = sphi 0, %s147
    $region4: #{multi_head_attention.4} parent=1 // loop_header_branch
      %12 = sbr.rel (%p10) target = $region8
    $region5: #{multi_head_attention.4} parent=1 // loop_body
      %s14 = ssub.s32 %s9, 1
      %s15 = ssub.s32 %s9, 2
      %s28 = sadd.s32 1, %s19
      %p29 = scmp.ge.s32.totalorder %s28, 2
      %s30 = scalar_select %p29, 0, %s28
      %s31 = sadd.s32 1, %s18
      %s32 = scalar_select %p29, %s31, %s18
      %p33 = scmp.ge.s32.totalorder %s32, 2
      %s34 = scalar_select %p33, 0, %s32
      %s35 = sadd.s32 1, %s17
      %s36 = scalar_select %p33, %s35, %s17
      %p37 = scmp.ge.s32.totalorder %s36, 2
      %s38 = scalar_select %p37, 0, %s36
      %s39 = sadd.s32 1, %s16
      %s40 = scalar_select %p37, %s39, %s16
      %p41 = scmp.ge.s32.totalorder %s40, 2
      %s42 = scalar_select %p41, 0, %s40
      %s43 = ssub.s32 %s16, %s42
      %s44 = ssub.s32 %s18, %s34
      %s45 = sor.u32 %s43, %s44
      %s46 = ssub.s32 %s17, %s38
      %s47 = sor.u32 %s45, %s46
      %p48 = scmp.eq.s32.totalorder %s47, 0
      %s50 = sadd.s32 %s49, 1
      %s51 = scalar_select %p48, %s49, %s50
      %p54 = pneg %p48
      %p55 = scmp.eq.s32.totalorder %s9, 15
      %p56 = por %p54, %p55
      %p57 = scmp.ne.s32.totalorder %s49, %s52
      %p58 = scmp.eq.s32.totalorder %s9, 0
      %p59 = por %p57, %p58
      %p60 = scmp.ne.s32.totalorder %s49, %s52
      %p61 = scmp.eq.s32.totalorder %s14, 15
      %p62 = por %p60, %p61
      %p63 = scmp.ne.s32.totalorder %s52, %s53
      %p64 = scmp.eq.s32.totalorder %s14, 0
      %p65 = por %p63, %p64
      %p66 = scmp.ne.s32.totalorder %s52, %s53
      %p67 = scmp.eq.s32.totalorder %s15, 15
      %p68 = por %p66, %p67
      %p70 = scmp.ne.s32.totalorder %s53, %s69
      %p71 = scmp.eq.s32.totalorder %s15, 0
      %p72 = por %p70, %p71
      %s73 = sadd.s32 %s17, 2
      %s74 = sadd.s32 %s38, 2
      %s75 = ssub.s32 %s16, %s42
      %s76 = ssub.s32 %s19, %s30
      %s77 = sor.u32 %s75, %s76
      %s78 = ssub.s32 %s73, %s74
      %s79 = sor.u32 %s77, %s78
      %p80 = scmp.eq.s32.totalorder %s79, 0
      %s82 = sadd.s32 %s81, 1
      %s83 = scalar_select %p80, %s81, %s82
      %p86 = pneg %p80
      %p87 = scmp.eq.s32.totalorder %s9, 15
      %p88 = por %p86, %p87
      %p89 = scmp.ne.s32.totalorder %s81, %s84
      %p90 = scmp.eq.s32.totalorder %s9, 0
      %p91 = por %p89, %p90
      %p92 = scmp.ne.s32.totalorder %s81, %s84
      %p93 = scmp.eq.s32.totalorder %s14, 15
      %p94 = por %p92, %p93
      %p95 = scmp.ne.s32.totalorder %s84, %s85
      %p96 = scmp.eq.s32.totalorder %s14, 0
      %p97 = por %p95, %p96
      %p98 = scmp.ne.s32.totalorder %s84, %s85
      %p99 = scmp.eq.s32.totalorder %s15, 15
      %p100 = por %p98, %p99
      %p102 = scmp.ne.s32.totalorder %s85, %s101
      %p103 = scmp.eq.s32.totalorder %s15, 0
      %p104 = por %p102, %p103
      %s105 = sadd.s32 %s17, 4
      %s106 = sadd.s32 %s38, 4
      %s107 = ssub.s32 %s16, %s42
      %s108 = ssub.s32 %s19, %s30
      %s109 = sor.u32 %s107, %s108
      %s110 = ssub.s32 %s105, %s106
      %s111 = sor.u32 %s109, %s110
      %p112 = scmp.eq.s32.totalorder %s111, 0
      %s114 = sadd.s32 %s113, 1
      %s115 = scalar_select %p112, %s113, %s114
      %p118 = pneg %p112
      %p119 = scmp.eq.s32.totalorder %s9, 15
      %p120 = por %p118, %p119
      %p121 = scmp.ne.s32.totalorder %s113, %s116
      %p122 = scmp.eq.s32.totalorder %s9, 0
      %p123 = por %p121, %p122
      %p124 = scmp.ne.s32.totalorder %s113, %s116
      %p125 = scmp.eq.s32.totalorder %s14, 15
      %p126 = por %p124, %p125
      %p127 = scmp.ne.s32.totalorder %s116, %s117
      %p128 = scmp.eq.s32.totalorder %s14, 0
      %p129 = por %p127, %p128
      %p130 = scmp.ne.s32.totalorder %s116, %s117
      %p131 = scmp.eq.s32.totalorder %s15, 15
      %p132 = por %p130, %p131
      %p134 = scmp.ne.s32.totalorder %s117, %s133
      %p135 = scmp.eq.s32.totalorder %s15, 0
      %p136 = por %p134, %p135
      %s137 = ssub.s32 %s16, %s42
      %s138 = ssub.s32 %s18, %s34
      %s139 = sor.u32 %s137, %s138
      %s140 = ssub.s32 %s17, %s38
      %s141 = sor.u32 %s139, %s140
      %p142 = scmp.eq.s32.totalorder %s141, 0
      %s144 = sadd.s32 %s143, 1
      %s145 = scalar_select %p142, %s143, %s144
      %p148 = pneg %p142
      %p149 = scmp.eq.s32.totalorder %s9, 15
      %p150 = por %p148, %p149
      %p151 = scmp.ne.s32.totalorder %s143, %s146
      %p152 = scmp.eq.s32.totalorder %s9, 0
      %p153 = por %p151, %p152
      %p154 = scmp.ne.s32.totalorder %s143, %s146
      %p155 = scmp.eq.s32.totalorder %s14, 15
      %p156 = por %p154, %p155
      %p157 = scmp.ne.s32.totalorder %s146, %s147
      %p158 = scmp.eq.s32.totalorder %s14, 0
      %p159 = por %p157, %p158
      %p160 = scmp.ne.s32.totalorder %s146, %s147
      %p161 = scmp.eq.s32.totalorder %s15, 15
      %p162 = por %p160, %p161
      %p164 = scmp.ne.s32.totalorder %s147, %s163
      %p165 = scmp.eq.s32.totalorder %s15, 0
      %p166 = por %p164, %p165
      %p167 = scmp.le.s32.totalorder 1, %s9
      %p168 = scmp.lt.s32.totalorder %s9, 17
      %p169 = pnand %p167, %p168
      %p170 = pneg %p169
      // Predicated region
      $region9: #{multi_head_attention.4} parent=5 // pred_check
        _
      $region10: #{multi_head_attention.4} parent=5 // pred_check_branch
        %172 = sbr.rel (%p169) target = $region12
      $region11: #{multi_head_attention.4} parent=5 // pred_region
        %s173 = ssub.s32 %s9, 1
      $region12: #{multi_head_attention.4} parent=5 // pred_fallthru
        _
      %p174 = scmp.lt.s32.totalorder %s9, 16
      // Predicated region
      $region13: #{multi_head_attention.4} parent=5 // pred_check
        %p175 = pneg %p174
      $region14: #{multi_head_attention.4} parent=5 // pred_check_branch
        %177 = sbr.rel (%p175) target = $region16
      $region15: #{multi_head_attention.4} parent=5 // pred_region
        // Predicated region
        $region17: #{multi_head_attention.4} parent=15 // pred_check
          %p178 = pneg %p59
        $region18: #{multi_head_attention.4} parent=15 // pred_check_branch
          %180 = sbr.rel (%p178) target = $region20
        $region19: #{multi_head_attention.4} parent=15 // pred_region
          %s181 = sand.u32 %s49, 1
          %s182 = sand.u32 %s49, 1
          %s183 = smul.addr %s182, 64
          %s184 = scalar_lea.vmem [#allocation5], %s183
          %s185 = smul.u32 16, %s18
          %s186 = smul.addr %s185, 6
          %s187 = sadd.s32 %s17, %s186
          %s188 = smul.addr %s16, 192
          %s189 = sadd.s32 %s187, %s188
          %s190 = smul.addr %s189, 4
          %s191 = scalar_lea.vmem %s0, %s190
          // Predicated region
          $region21: #{multi_head_attention.4} parent=19 // pred_check
            _
          $region22: #{multi_head_attention.4} parent=19 // pred_check_branch
            %193 = sbr.rel (0) target = $region24
          $region23: #{multi_head_attention.4} parent=19 // pred_region
            // Predicated region
            $region25: #{multi_head_attention.4} parent=23 // pred_check
              _
            $region26: #{multi_head_attention.4} parent=23 // pred_check_branch
              %195 = sbr.rel target = $region28
            $region27: #{multi_head_attention.4} parent=23 // pred_region
              // Predicated region
              $region40: #{multi_head_attention.4} parent=27 // pred_check
                _
              $region41: #{multi_head_attention.4} parent=27 // pred_check_branch
                %241 = sbr.rel (0) target = $region43
              $region42: #{multi_head_attention.4} parent=27 // pred_region
                loop: start=0, step=1, limit=1
                $region44: #{multi_head_attention.4} parent=42 // loop_pre_header
                  _
                $region45: #{multi_head_attention.4} parent=42 // loop_header
                  %s243 = sphi 0, %s247
                  %p244 = scmp.ge.s32.totalorder %s243, 1
                  %s248 = sphi %s191, %s191
                  %s249 = sphi %s184, %s184
                $region46: #{multi_head_attention.4} parent=42 // loop_header_branch
                  %246 = sbr.rel (%p244) target = $region50
                $region47: #{multi_head_attention.4} parent=42 // loop_body
                  _
                $region48: #{multi_head_attention.4} parent=42 // loop_footer
                  %s247 = sadd.s32 1, %s243
                $region49: #{multi_head_attention.4} parent=42 // loop_footer_branch
                  %242 = sbr.rel target = $region45
                $region50: #{multi_head_attention.4} parent=42 // loop_exit
                  _
                %s251 = ssub.s32 16, 1
                loop: start=0, step=1, limit=1
                $region51: #{multi_head_attention.4} parent=42 // loop_pre_header
                  _
                $region52: #{multi_head_attention.4} parent=42 // loop_header
                  %s253 = sphi 0, %s257
                  %p254 = scmp.ge.s32.totalorder %s253, 1
                  %s258 = sphi %s191, %s191
                  %s259 = sphi %s184, %s184
                $region53: #{multi_head_attention.4} parent=42 // loop_header_branch
                  %256 = sbr.rel (%p254) target = $region57
                $region54: #{multi_head_attention.4} parent=42 // loop_body
                  %v260 = vld [vmem:[%s258] sm:%s251]
                  %261 = vst [vmem:[%s259] sm:%s251] %v260
                  %v262 = vld [vmem:[%s258 + $0x18] sm:%s251]
                  %263 = vst [vmem:[%s259 + $0x4] sm:%s251] %v262
                  %v264 = vld [vmem:[%s258 + $0x30] sm:%s251]
                  %265 = vst [vmem:[%s259 + $0x8] sm:%s251] %v264
                  %v266 = vld [vmem:[%s258 + $0x48] sm:%s251]
                  %267 = vst [vmem:[%s259 + $0xc] sm:%s251] %v266
                  %v268 = vld [vmem:[%s258 + $0x60] sm:%s251]
                  %269 = vst [vmem:[%s259 + $0x10] sm:%s251] %v268
                  %v270 = vld [vmem:[%s258 + $0x78] sm:%s251]
                  %271 = vst [vmem:[%s259 + $0x14] sm:%s251] %v270
                  %v272 = vld [vmem:[%s258 + $0x90] sm:%s251]
                  %273 = vst [vmem:[%s259 + $0x18] sm:%s251] %v272
                  %v274 = vld [vmem:[%s258 + $0xa8] sm:%s251]
                  %275 = vst [vmem:[%s259 + $0x1c] sm:%s251] %v274
                  %v276 = vld [vmem:[%s258 + $0xc0] sm:%s251]
                  %277 = vst [vmem:[%s259 + $0x20] sm:%s251] %v276
                  %v278 = vld [vmem:[%s258 + $0xd8] sm:%s251]
                  %279 = vst [vmem:[%s259 + $0x24] sm:%s251] %v278
                  %v280 = vld [vmem:[%s258 + $0xf0] sm:%s251]
                  %281 = vst [vmem:[%s259 + $0x28] sm:%s251] %v280
                  %v282 = vld [vmem:[%s258 + $0x108] sm:%s251]
                  %283 = vst [vmem:[%s259 + $0x2c] sm:%s251] %v282
                  %v284 = vld [vmem:[%s258 + $0x120] sm:%s251]
                  %285 = vst [vmem:[%s259 + $0x30] sm:%s251] %v284
                  %v286 = vld [vmem:[%s258 + $0x138] sm:%s251]
                  %287 = vst [vmem:[%s259 + $0x34] sm:%s251] %v286
                  %v288 = vld [vmem:[%s258 + $0x150] sm:%s251]
                  %289 = vst [vmem:[%s259 + $0x38] sm:%s251] %v288
                  %v290 = vld [vmem:[%s258 + $0x168] sm:%s251]
                  %291 = vst [vmem:[%s259 + $0x3c] sm:%s251] %v290
                $region55: #{multi_head_attention.4} parent=42 // loop_footer
                  %s257 = sadd.s32 1, %s253
                $region56: #{multi_head_attention.4} parent=42 // loop_footer_branch
                  %252 = sbr.rel target = $region52
                $region57: #{multi_head_attention.4} parent=42 // loop_exit
                  _
              $region43: #{multi_head_attention.4} parent=27 // pred_fallthru
                _
            $region28: #{multi_head_attention.4} parent=23 // pred_fallthru
              _
            // Predicated region
            $region29: #{multi_head_attention.4} parent=23 // pred_check
              _
            $region30: #{multi_head_attention.4} parent=23 // pred_check_branch
              %197 = sbr.rel (0) target = $region32
            $region31: #{multi_head_attention.4} parent=23 // pred_region
              %s199 = ssub.s32 16, 1
              loop: start=0, step=1, limit=1
              $region33: #{multi_head_attention.4} parent=31 // loop_pre_header
                _
              $region34: #{multi_head_attention.4} parent=31 // loop_header
                %s201 = sphi 0, %s205
                %p202 = scmp.ge.s32.totalorder %s201, 1
                %s206 = sphi %s191, %s191
                %s207 = sphi %s184, %s184
              $region35: #{multi_head_attention.4} parent=31 // loop_header_branch
                %204 = sbr.rel (%p202) target = $region39
              $region36: #{multi_head_attention.4} parent=31 // loop_body
                %v208 = vld [vmem:[%s206] sm:%s199]
                %209 = vst [vmem:[%s207] sm:%s199] %v208
                %v210 = vld [vmem:[%s206 + $0x18] sm:%s199]
                %211 = vst [vmem:[%s207 + $0x4] sm:%s199] %v210
                %v212 = vld [vmem:[%s206 + $0x30] sm:%s199]
                %213 = vst [vmem:[%s207 + $0x8] sm:%s199] %v212
                %v214 = vld [vmem:[%s206 + $0x48] sm:%s199]
                %215 = vst [vmem:[%s207 + $0xc] sm:%s199] %v214
                %v216 = vld [vmem:[%s206 + $0x60] sm:%s199]
                %217 = vst [vmem:[%s207 + $0x10] sm:%s199] %v216
                %v218 = vld [vmem:[%s206 + $0x78] sm:%s199]
                %219 = vst [vmem:[%s207 + $0x14] sm:%s199] %v218
                %v220 = vld [vmem:[%s206 + $0x90] sm:%s199]
                %221 = vst [vmem:[%s207 + $0x18] sm:%s199] %v220
                %v222 = vld [vmem:[%s206 + $0xa8] sm:%s199]
                %223 = vst [vmem:[%s207 + $0x1c] sm:%s199] %v222
                %v224 = vld [vmem:[%s206 + $0xc0] sm:%s199]
                %225 = vst [vmem:[%s207 + $0x20] sm:%s199] %v224
                %v226 = vld [vmem:[%s206 + $0xd8] sm:%s199]
                %227 = vst [vmem:[%s207 + $0x24] sm:%s199] %v226
                %v228 = vld [vmem:[%s206 + $0xf0] sm:%s199]
                %229 = vst [vmem:[%s207 + $0x28] sm:%s199] %v228
                %v230 = vld [vmem:[%s206 + $0x108] sm:%s199]
                %231 = vst [vmem:[%s207 + $0x2c] sm:%s199] %v230
                %v232 = vld [vmem:[%s206 + $0x120] sm:%s199]
                %233 = vst [vmem:[%s207 + $0x30] sm:%s199] %v232
                %v234 = vld [vmem:[%s206 + $0x138] sm:%s199]
                %235 = vst [vmem:[%s207 + $0x34] sm:%s199] %v234
                %v236 = vld [vmem:[%s206 + $0x150] sm:%s199]
                %237 = vst [vmem:[%s207 + $0x38] sm:%s199] %v236
                %v238 = vld [vmem:[%s206 + $0x168] sm:%s199]
                %239 = vst [vmem:[%s207 + $0x3c] sm:%s199] %v238
              $region37: #{multi_head_attention.4} parent=31 // loop_footer
                %s205 = sadd.s32 1, %s201
              $region38: #{multi_head_attention.4} parent=31 // loop_footer_branch
                %200 = sbr.rel target = $region34
              $region39: #{multi_head_attention.4} parent=31 // loop_exit
                _
            $region32: #{multi_head_attention.4} parent=23 // pred_fallthru
              _
          $region24: #{multi_head_attention.4} parent=19 // pred_fallthru
            _
          %292 = vnop
        $region20: #{multi_head_attention.4} parent=15 // pred_fallthru
          _
        // Predicated region
        $region58: #{multi_head_attention.4} parent=15 // pred_check
          %p293 = pneg %p91
        $region59: #{multi_head_attention.4} parent=15 // pred_check_branch
          %295 = sbr.rel (%p293) target = $region61
        $region60: #{multi_head_attention.4} parent=15 // pred_region
          %s296 = sand.u32 %s81, 1
          %s297 = sand.u32 %s81, 1
          %s298 = smul.addr %s297, 64
          %s299 = scalar_lea.vmem [#allocation6], %s298
          %s300 = sadd.s32 %s17, 2
          %s301 = smul.u32 16, %s19
          %s302 = smul.addr %s301, 6
          %s303 = sadd.s32 %s300, %s302
          %s304 = smul.addr %s16, 192
          %s305 = sadd.s32 %s303, %s304
          %s306 = smul.addr %s305, 4
          %s307 = scalar_lea.vmem %s1, %s306
          // Predicated region
          $region62: #{multi_head_attention.4} parent=60 // pred_check
            _
          $region63: #{multi_head_attention.4} parent=60 // pred_check_branch
            %309 = sbr.rel (0) target = $region65
          $region64: #{multi_head_attention.4} parent=60 // pred_region
            // Predicated region
            $region66: #{multi_head_attention.4} parent=64 // pred_check
              _
            $region67: #{multi_head_attention.4} parent=64 // pred_check_branch
              %311 = sbr.rel target = $region69
            $region68: #{multi_head_attention.4} parent=64 // pred_region
              // Predicated region
              $region81: #{multi_head_attention.4} parent=68 // pred_check
                _
              $region82: #{multi_head_attention.4} parent=68 // pred_check_branch
                %357 = sbr.rel (0) target = $region84
              $region83: #{multi_head_attention.4} parent=68 // pred_region
                loop: start=0, step=1, limit=1
                $region85: #{multi_head_attention.4} parent=83 // loop_pre_header
                  _
                $region86: #{multi_head_attention.4} parent=83 // loop_header
                  %s359 = sphi 0, %s363
                  %p360 = scmp.ge.s32.totalorder %s359, 1
                  %s364 = sphi %s307, %s307
                  %s365 = sphi %s299, %s299
                $region87: #{multi_head_attention.4} parent=83 // loop_header_branch
                  %362 = sbr.rel (%p360) target = $region91
                $region88: #{multi_head_attention.4} parent=83 // loop_body
                  _
                $region89: #{multi_head_attention.4} parent=83 // loop_footer
                  %s363 = sadd.s32 1, %s359
                $region90: #{multi_head_attention.4} parent=83 // loop_footer_branch
                  %358 = sbr.rel target = $region86
                $region91: #{multi_head_attention.4} parent=83 // loop_exit
                  _
                %s367 = ssub.s32 16, 1
                loop: start=0, step=1, limit=1
                $region92: #{multi_head_attention.4} parent=83 // loop_pre_header
                  _
                $region93: #{multi_head_attention.4} parent=83 // loop_header
                  %s369 = sphi 0, %s373
                  %p370 = scmp.ge.s32.totalorder %s369, 1
                  %s374 = sphi %s307, %s307
                  %s375 = sphi %s299, %s299
                $region94: #{multi_head_attention.4} parent=83 // loop_header_branch
                  %372 = sbr.rel (%p370) target = $region98
                $region95: #{multi_head_attention.4} parent=83 // loop_body
                  %v376 = vld [vmem:[%s374] sm:%s367]
                  %377 = vst [vmem:[%s375] sm:%s367] %v376
                  %v378 = vld [vmem:[%s374 + $0x18] sm:%s367]
                  %379 = vst [vmem:[%s375 + $0x4] sm:%s367] %v378
                  %v380 = vld [vmem:[%s374 + $0x30] sm:%s367]
                  %381 = vst [vmem:[%s375 + $0x8] sm:%s367] %v380
                  %v382 = vld [vmem:[%s374 + $0x48] sm:%s367]
                  %383 = vst [vmem:[%s375 + $0xc] sm:%s367] %v382
                  %v384 = vld [vmem:[%s374 + $0x60] sm:%s367]
                  %385 = vst [vmem:[%s375 + $0x10] sm:%s367] %v384
                  %v386 = vld [vmem:[%s374 + $0x78] sm:%s367]
                  %387 = vst [vmem:[%s375 + $0x14] sm:%s367] %v386
                  %v388 = vld [vmem:[%s374 + $0x90] sm:%s367]
                  %389 = vst [vmem:[%s375 + $0x18] sm:%s367] %v388
                  %v390 = vld [vmem:[%s374 + $0xa8] sm:%s367]
                  %391 = vst [vmem:[%s375 + $0x1c] sm:%s367] %v390
                  %v392 = vld [vmem:[%s374 + $0xc0] sm:%s367]
                  %393 = vst [vmem:[%s375 + $0x20] sm:%s367] %v392
                  %v394 = vld [vmem:[%s374 + $0xd8] sm:%s367]
                  %395 = vst [vmem:[%s375 + $0x24] sm:%s367] %v394
                  %v396 = vld [vmem:[%s374 + $0xf0] sm:%s367]
                  %397 = vst [vmem:[%s375 + $0x28] sm:%s367] %v396
                  %v398 = vld [vmem:[%s374 + $0x108] sm:%s367]
                  %399 = vst [vmem:[%s375 + $0x2c] sm:%s367] %v398
                  %v400 = vld [vmem:[%s374 + $0x120] sm:%s367]
                  %401 = vst [vmem:[%s375 + $0x30] sm:%s367] %v400
                  %v402 = vld [vmem:[%s374 + $0x138] sm:%s367]
                  %403 = vst [vmem:[%s375 + $0x34] sm:%s367] %v402
                  %v404 = vld [vmem:[%s374 + $0x150] sm:%s367]
                  %405 = vst [vmem:[%s375 + $0x38] sm:%s367] %v404
                  %v406 = vld [vmem:[%s374 + $0x168] sm:%s367]
                  %407 = vst [vmem:[%s375 + $0x3c] sm:%s367] %v406
                $region96: #{multi_head_attention.4} parent=83 // loop_footer
                  %s373 = sadd.s32 1, %s369
                $region97: #{multi_head_attention.4} parent=83 // loop_footer_branch
                  %368 = sbr.rel target = $region93
                $region98: #{multi_head_attention.4} parent=83 // loop_exit
                  _
              $region84: #{multi_head_attention.4} parent=68 // pred_fallthru
                _
            $region69: #{multi_head_attention.4} parent=64 // pred_fallthru
              _
            // Predicated region
            $region70: #{multi_head_attention.4} parent=64 // pred_check
              _
            $region71: #{multi_head_attention.4} parent=64 // pred_check_branch
              %313 = sbr.rel (0) target = $region73
            $region72: #{multi_head_attention.4} parent=64 // pred_region
              %s315 = ssub.s32 16, 1
              loop: start=0, step=1, limit=1
              $region74: #{multi_head_attention.4} parent=72 // loop_pre_header
                _
              $region75: #{multi_head_attention.4} parent=72 // loop_header
                %s317 = sphi 0, %s321
                %p318 = scmp.ge.s32.totalorder %s317, 1
                %s322 = sphi %s307, %s307
                %s323 = sphi %s299, %s299
              $region76: #{multi_head_attention.4} parent=72 // loop_header_branch
                %320 = sbr.rel (%p318) target = $region80
              $region77: #{multi_head_attention.4} parent=72 // loop_body
                %v324 = vld [vmem:[%s322] sm:%s315]
                %325 = vst [vmem:[%s323] sm:%s315] %v324
                %v326 = vld [vmem:[%s322 + $0x18] sm:%s315]
                %327 = vst [vmem:[%s323 + $0x4] sm:%s315] %v326
                %v328 = vld [vmem:[%s322 + $0x30] sm:%s315]
                %329 = vst [vmem:[%s323 + $0x8] sm:%s315] %v328
                %v330 = vld [vmem:[%s322 + $0x48] sm:%s315]
                %331 = vst [vmem:[%s323 + $0xc] sm:%s315] %v330
                %v332 = vld [vmem:[%s322 + $0x60] sm:%s315]
                %333 = vst [vmem:[%s323 + $0x10] sm:%s315] %v332
                %v334 = vld [vmem:[%s322 + $0x78] sm:%s315]
                %335 = vst [vmem:[%s323 + $0x14] sm:%s315] %v334
                %v336 = vld [vmem:[%s322 + $0x90] sm:%s315]
                %337 = vst [vmem:[%s323 + $0x18] sm:%s315] %v336
                %v338 = vld [vmem:[%s322 + $0xa8] sm:%s315]
                %339 = vst [vmem:[%s323 + $0x1c] sm:%s315] %v338
                %v340 = vld [vmem:[%s322 + $0xc0] sm:%s315]
                %341 = vst [vmem:[%s323 + $0x20] sm:%s315] %v340
                %v342 = vld [vmem:[%s322 + $0xd8] sm:%s315]
                %343 = vst [vmem:[%s323 + $0x24] sm:%s315] %v342
                %v344 = vld [vmem:[%s322 + $0xf0] sm:%s315]
                %345 = vst [vmem:[%s323 + $0x28] sm:%s315] %v344
                %v346 = vld [vmem:[%s322 + $0x108] sm:%s315]
                %347 = vst [vmem:[%s323 + $0x2c] sm:%s315] %v346
                %v348 = vld [vmem:[%s322 + $0x120] sm:%s315]
                %349 = vst [vmem:[%s323 + $0x30] sm:%s315] %v348
                %v350 = vld [vmem:[%s322 + $0x138] sm:%s315]
                %351 = vst [vmem:[%s323 + $0x34] sm:%s315] %v350
                %v352 = vld [vmem:[%s322 + $0x150] sm:%s315]
                %353 = vst [vmem:[%s323 + $0x38] sm:%s315] %v352
                %v354 = vld [vmem:[%s322 + $0x168] sm:%s315]
                %355 = vst [vmem:[%s323 + $0x3c] sm:%s315] %v354
              $region78: #{multi_head_attention.4} parent=72 // loop_footer
                %s321 = sadd.s32 1, %s317
              $region79: #{multi_head_attention.4} parent=72 // loop_footer_branch
                %316 = sbr.rel target = $region75
              $region80: #{multi_head_attention.4} parent=72 // loop_exit
                _
            $region73: #{multi_head_attention.4} parent=64 // pred_fallthru
              _
          $region65: #{multi_head_attention.4} parent=60 // pred_fallthru
            _
          %408 = vnop
        $region61: #{multi_head_attention.4} parent=15 // pred_fallthru
          _
        // Predicated region
        $region99: #{multi_head_attention.4} parent=15 // pred_check
          %p409 = pneg %p123
        $region100: #{multi_head_attention.4} parent=15 // pred_check_branch
          %411 = sbr.rel (%p409) target = $region102
        $region101: #{multi_head_attention.4} parent=15 // pred_region
          %s412 = sand.u32 %s113, 1
          %s413 = sand.u32 %s113, 1
          %s414 = smul.addr %s413, 64
          %s415 = scalar_lea.vmem [#allocation7], %s414
          %s416 = sadd.s32 %s17, 4
          %s417 = smul.u32 16, %s19
          %s418 = smul.addr %s417, 6
          %s419 = sadd.s32 %s416, %s418
          %s420 = smul.addr %s16, 192
          %s421 = sadd.s32 %s419, %s420
          %s422 = smul.addr %s421, 4
          %s423 = scalar_lea.vmem %s2, %s422
          // Predicated region
          $region103: #{multi_head_attention.4} parent=101 // pred_check
            _
          $region104: #{multi_head_attention.4} parent=101 // pred_check_branch
            %425 = sbr.rel (0) target = $region106
          $region105: #{multi_head_attention.4} parent=101 // pred_region
            // Predicated region
            $region107: #{multi_head_attention.4} parent=105 // pred_check
              _
            $region108: #{multi_head_attention.4} parent=105 // pred_check_branch
              %427 = sbr.rel target = $region110
            $region109: #{multi_head_attention.4} parent=105 // pred_region
              // Predicated region
              $region122: #{multi_head_attention.4} parent=109 // pred_check
                _
              $region123: #{multi_head_attention.4} parent=109 // pred_check_branch
                %473 = sbr.rel (0) target = $region125
              $region124: #{multi_head_attention.4} parent=109 // pred_region
                loop: start=0, step=1, limit=1
                $region126: #{multi_head_attention.4} parent=124 // loop_pre_header
                  _
                $region127: #{multi_head_attention.4} parent=124 // loop_header
                  %s475 = sphi 0, %s479
                  %p476 = scmp.ge.s32.totalorder %s475, 1
                  %s480 = sphi %s423, %s423
                  %s481 = sphi %s415, %s415
                $region128: #{multi_head_attention.4} parent=124 // loop_header_branch
                  %478 = sbr.rel (%p476) target = $region132
                $region129: #{multi_head_attention.4} parent=124 // loop_body
                  _
                $region130: #{multi_head_attention.4} parent=124 // loop_footer
                  %s479 = sadd.s32 1, %s475
                $region131: #{multi_head_attention.4} parent=124 // loop_footer_branch
                  %474 = sbr.rel target = $region127
                $region132: #{multi_head_attention.4} parent=124 // loop_exit
                  _
                %s483 = ssub.s32 16, 1
                loop: start=0, step=1, limit=1
                $region133: #{multi_head_attention.4} parent=124 // loop_pre_header
                  _
                $region134: #{multi_head_attention.4} parent=124 // loop_header
                  %s485 = sphi 0, %s489
                  %p486 = scmp.ge.s32.totalorder %s485, 1
                  %s490 = sphi %s423, %s423
                  %s491 = sphi %s415, %s415
                $region135: #{multi_head_attention.4} parent=124 // loop_header_branch
                  %488 = sbr.rel (%p486) target = $region139
                $region136: #{multi_head_attention.4} parent=124 // loop_body
                  %v492 = vld [vmem:[%s490] sm:%s483]
                  %493 = vst [vmem:[%s491] sm:%s483] %v492
                  %v494 = vld [vmem:[%s490 + $0x18] sm:%s483]
                  %495 = vst [vmem:[%s491 + $0x4] sm:%s483] %v494
                  %v496 = vld [vmem:[%s490 + $0x30] sm:%s483]
                  %497 = vst [vmem:[%s491 + $0x8] sm:%s483] %v496
                  %v498 = vld [vmem:[%s490 + $0x48] sm:%s483]
                  %499 = vst [vmem:[%s491 + $0xc] sm:%s483] %v498
                  %v500 = vld [vmem:[%s490 + $0x60] sm:%s483]
                  %501 = vst [vmem:[%s491 + $0x10] sm:%s483] %v500
                  %v502 = vld [vmem:[%s490 + $0x78] sm:%s483]
                  %503 = vst [vmem:[%s491 + $0x14] sm:%s483] %v502
                  %v504 = vld [vmem:[%s490 + $0x90] sm:%s483]
                  %505 = vst [vmem:[%s491 + $0x18] sm:%s483] %v504
                  %v506 = vld [vmem:[%s490 + $0xa8] sm:%s483]
                  %507 = vst [vmem:[%s491 + $0x1c] sm:%s483] %v506
                  %v508 = vld [vmem:[%s490 + $0xc0] sm:%s483]
                  %509 = vst [vmem:[%s491 + $0x20] sm:%s483] %v508
                  %v510 = vld [vmem:[%s490 + $0xd8] sm:%s483]
                  %511 = vst [vmem:[%s491 + $0x24] sm:%s483] %v510
                  %v512 = vld [vmem:[%s490 + $0xf0] sm:%s483]
                  %513 = vst [vmem:[%s491 + $0x28] sm:%s483] %v512
                  %v514 = vld [vmem:[%s490 + $0x108] sm:%s483]
                  %515 = vst [vmem:[%s491 + $0x2c] sm:%s483] %v514
                  %v516 = vld [vmem:[%s490 + $0x120] sm:%s483]
                  %517 = vst [vmem:[%s491 + $0x30] sm:%s483] %v516
                  %v518 = vld [vmem:[%s490 + $0x138] sm:%s483]
                  %519 = vst [vmem:[%s491 + $0x34] sm:%s483] %v518
                  %v520 = vld [vmem:[%s490 + $0x150] sm:%s483]
                  %521 = vst [vmem:[%s491 + $0x38] sm:%s483] %v520
                  %v522 = vld [vmem:[%s490 + $0x168] sm:%s483]
                  %523 = vst [vmem:[%s491 + $0x3c] sm:%s483] %v522
                $region137: #{multi_head_attention.4} parent=124 // loop_footer
                  %s489 = sadd.s32 1, %s485
                $region138: #{multi_head_attention.4} parent=124 // loop_footer_branch
                  %484 = sbr.rel target = $region134
                $region139: #{multi_head_attention.4} parent=124 // loop_exit
                  _
              $region125: #{multi_head_attention.4} parent=109 // pred_fallthru
                _
            $region110: #{multi_head_attention.4} parent=105 // pred_fallthru
              _
            // Predicated region
            $region111: #{multi_head_attention.4} parent=105 // pred_check
              _
            $region112: #{multi_head_attention.4} parent=105 // pred_check_branch
              %429 = sbr.rel (0) target = $region114
            $region113: #{multi_head_attention.4} parent=105 // pred_region
              %s431 = ssub.s32 16, 1
              loop: start=0, step=1, limit=1
              $region115: #{multi_head_attention.4} parent=113 // loop_pre_header
                _
              $region116: #{multi_head_attention.4} parent=113 // loop_header
                %s433 = sphi 0, %s437
                %p434 = scmp.ge.s32.totalorder %s433, 1
                %s438 = sphi %s423, %s423
                %s439 = sphi %s415, %s415
              $region117: #{multi_head_attention.4} parent=113 // loop_header_branch
                %436 = sbr.rel (%p434) target = $region121
              $region118: #{multi_head_attention.4} parent=113 // loop_body
                %v440 = vld [vmem:[%s438] sm:%s431]
                %441 = vst [vmem:[%s439] sm:%s431] %v440
                %v442 = vld [vmem:[%s438 + $0x18] sm:%s431]
                %443 = vst [vmem:[%s439 + $0x4] sm:%s431] %v442
                %v444 = vld [vmem:[%s438 + $0x30] sm:%s431]
                %445 = vst [vmem:[%s439 + $0x8] sm:%s431] %v444
                %v446 = vld [vmem:[%s438 + $0x48] sm:%s431]
                %447 = vst [vmem:[%s439 + $0xc] sm:%s431] %v446
                %v448 = vld [vmem:[%s438 + $0x60] sm:%s431]
                %449 = vst [vmem:[%s439 + $0x10] sm:%s431] %v448
                %v450 = vld [vmem:[%s438 + $0x78] sm:%s431]
                %451 = vst [vmem:[%s439 + $0x14] sm:%s431] %v450
                %v452 = vld [vmem:[%s438 + $0x90] sm:%s431]
                %453 = vst [vmem:[%s439 + $0x18] sm:%s431] %v452
                %v454 = vld [vmem:[%s438 + $0xa8] sm:%s431]
                %455 = vst [vmem:[%s439 + $0x1c] sm:%s431] %v454
                %v456 = vld [vmem:[%s438 + $0xc0] sm:%s431]
                %457 = vst [vmem:[%s439 + $0x20] sm:%s431] %v456
                %v458 = vld [vmem:[%s438 + $0xd8] sm:%s431]
                %459 = vst [vmem:[%s439 + $0x24] sm:%s431] %v458
                %v460 = vld [vmem:[%s438 + $0xf0] sm:%s431]
                %461 = vst [vmem:[%s439 + $0x28] sm:%s431] %v460
                %v462 = vld [vmem:[%s438 + $0x108] sm:%s431]
                %463 = vst [vmem:[%s439 + $0x2c] sm:%s431] %v462
                %v464 = vld [vmem:[%s438 + $0x120] sm:%s431]
                %465 = vst [vmem:[%s439 + $0x30] sm:%s431] %v464
                %v466 = vld [vmem:[%s438 + $0x138] sm:%s431]
                %467 = vst [vmem:[%s439 + $0x34] sm:%s431] %v466
                %v468 = vld [vmem:[%s438 + $0x150] sm:%s431]
                %469 = vst [vmem:[%s439 + $0x38] sm:%s431] %v468
                %v470 = vld [vmem:[%s438 + $0x168] sm:%s431]
                %471 = vst [vmem:[%s439 + $0x3c] sm:%s431] %v470
              $region119: #{multi_head_attention.4} parent=113 // loop_footer
                %s437 = sadd.s32 1, %s433
              $region120: #{multi_head_attention.4} parent=113 // loop_footer_branch
                %432 = sbr.rel target = $region116
              $region121: #{multi_head_attention.4} parent=113 // loop_exit
                _
            $region114: #{multi_head_attention.4} parent=105 // pred_fallthru
              _
          $region106: #{multi_head_attention.4} parent=101 // pred_fallthru
            _
          %524 = vnop
        $region102: #{multi_head_attention.4} parent=15 // pred_fallthru
          _
      $region16: #{multi_head_attention.4} parent=5 // pred_fallthru
        _
      %p525 = scmp.le.s32.totalorder 1, %s9
      %p526 = scmp.lt.s32.totalorder %s9, 17
      %p527 = pnand %p525, %p526
      %p528 = pneg %p527
      // Predicated region
      $region140: #{multi_head_attention.4} parent=5 // pred_check
        _
      $region141: #{multi_head_attention.4} parent=5 // pred_check_branch
        %530 = sbr.rel (%p527) target = $region143
      $region142: #{multi_head_attention.4} parent=5 // pred_region
        %s531 = ssub.s32 %s9, 1
        %s532 = sand.u32 %s52, 1
        %s533 = sand.u32 %s52, 1
        %s534 = smul.addr %s533, 64
        %s535 = scalar_lea.vmem [#allocation5], %s534
        // Predicated region
        $region144: #{multi_head_attention.4} parent=142 // pred_check
          %p536 = pneg %p65
        $region145: #{multi_head_attention.4} parent=142 // pred_check_branch
          %538 = sbr.rel (%p536) target = $region147
        $region146: #{multi_head_attention.4} parent=142 // pred_region
          _
        $region147: #{multi_head_attention.4} parent=142 // pred_fallthru
          _
        %s539 = sand.u32 %s84, 1
        %s540 = sand.u32 %s84, 1
        %s541 = smul.addr %s540, 64
        %s542 = scalar_lea.vmem [#allocation6], %s541
        // Predicated region
        $region148: #{multi_head_attention.4} parent=142 // pred_check
          %p543 = pneg %p97
        $region149: #{multi_head_attention.4} parent=142 // pred_check_branch
          %545 = sbr.rel (%p543) target = $region151
        $region150: #{multi_head_attention.4} parent=142 // pred_region
          _
        $region151: #{multi_head_attention.4} parent=142 // pred_fallthru
          _
        %s546 = sand.u32 %s116, 1
        %s547 = sand.u32 %s116, 1
        %s548 = smul.addr %s547, 64
        %s549 = scalar_lea.vmem [#allocation7], %s548
        // Predicated region
        $region152: #{multi_head_attention.4} parent=142 // pred_check
          %p550 = pneg %p129
        $region153: #{multi_head_attention.4} parent=142 // pred_check_branch
          %552 = sbr.rel (%p550) target = $region155
        $region154: #{multi_head_attention.4} parent=142 // pred_region
          _
        $region155: #{multi_head_attention.4} parent=142 // pred_fallthru
          _
        %s553 = sand.u32 %s52, 1
        %s554 = sand.u32 %s52, 1
        %s555 = smul.addr %s554, 64
        %s556 = scalar_lea.vmem [#allocation5], %s555
        %p557 = pneg %p65
        %p558 = pneg %p62
        %s559 = sand.u32 %s84, 1
        %s560 = sand.u32 %s84, 1
        %s561 = smul.addr %s560, 64
        %s562 = scalar_lea.vmem [#allocation6], %s561
        %p563 = pneg %p97
        %p564 = pneg %p94
        %s565 = sand.u32 %s116, 1
        %s566 = sand.u32 %s116, 1
        %s567 = smul.addr %s566, 64
        %s568 = scalar_lea.vmem [#allocation7], %s567
        %p569 = pneg %p129
        %p570 = pneg %p126
        %p571 = pneg %p159
        %p572 = pneg %p156
        %s573 = sand.u32 %s146, 1
        %s574 = sand.u32 %s146, 1
        %s575 = smul.addr %s574, 64
        %s576 = scalar_lea.vmem [#allocation8], %s575
        %s577 = smul.u32 16, %s22
        %s578 = sadd.s32 %s21, 2
        %s579 = smul.u32 16, %s23
        %s580 = sadd.s32 %s21, 4
        %s581 = smul.u32 16, %s23
        %s582 = smul.u32 16, %s22
        %p583 = scmp.eq.s32.totalorder %s23, 0
        // Predicated region
        $region156: #{multi_head_attention.4} parent=142 // pred_check
          %p584 = pneg %p583
        $region157: #{multi_head_attention.4} parent=142 // pred_check_branch
          %586 = sbr.rel (%p584) target = $region159
        $region158: #{multi_head_attention.4} parent=142 // pred_region
          %vm587 = vcmask 7168
          %588 = vst.msk [vmem:[#allocation2] sm:$0xff] %vm587, -1e+30
          %589 = vst.msk [vmem:[#allocation2 + $0x8] sm:$0xff] %vm587, -1e+30
          %590 = vst.msk [vmem:[#allocation2 + $0x10] sm:$0xff] %vm587, -1e+30
          %591 = vst.msk [vmem:[#allocation2 + $0x18] sm:$0xff] %vm587, -1e+30
          %592 = vst.msk [vmem:[#allocation2 + $0x20] sm:$0xff] %vm587, -1e+30
          %593 = vst.msk [vmem:[#allocation2 + $0x28] sm:$0xff] %vm587, -1e+30
          %594 = vst.msk [vmem:[#allocation2 + $0x30] sm:$0xff] %vm587, -1e+30
          %595 = vst.msk [vmem:[#allocation2 + $0x38] sm:$0xff] %vm587, -1e+30
          %596 = vst.msk [vmem:[#allocation2 + $0x40] sm:$0xff] %vm587, -1e+30
          %597 = vst.msk [vmem:[#allocation2 + $0x48] sm:$0xff] %vm587, -1e+30
          %598 = vst.msk [vmem:[#allocation2 + $0x50] sm:$0xff] %vm587, -1e+30
          %599 = vst.msk [vmem:[#allocation2 + $0x58] sm:$0xff] %vm587, -1e+30
          %600 = vst.msk [vmem:[#allocation2 + $0x60] sm:$0xff] %vm587, -1e+30
          %601 = vst.msk [vmem:[#allocation2 + $0x68] sm:$0xff] %vm587, -1e+30
          %602 = vst.msk [vmem:[#allocation2 + $0x70] sm:$0xff] %vm587, -1e+30
          %603 = vst.msk [vmem:[#allocation2 + $0x78] sm:$0xff] %vm587, -1e+30
          %604 = vst.msk [vmem:[#allocation3] sm:$0xff] %vm587, 0.0
          %605 = vst.msk [vmem:[#allocation3 + $0x8] sm:$0xff] %vm587, 0.0
          %606 = vst.msk [vmem:[#allocation3 + $0x10] sm:$0xff] %vm587, 0.0
          %607 = vst.msk [vmem:[#allocation3 + $0x18] sm:$0xff] %vm587, 0.0
          %608 = vst.msk [vmem:[#allocation3 + $0x20] sm:$0xff] %vm587, 0.0
          %609 = vst.msk [vmem:[#allocation3 + $0x28] sm:$0xff] %vm587, 0.0
          %610 = vst.msk [vmem:[#allocation3 + $0x30] sm:$0xff] %vm587, 0.0
          %611 = vst.msk [vmem:[#allocation3 + $0x38] sm:$0xff] %vm587, 0.0
          %612 = vst.msk [vmem:[#allocation3 + $0x40] sm:$0xff] %vm587, 0.0
          %613 = vst.msk [vmem:[#allocation3 + $0x48] sm:$0xff] %vm587, 0.0
          %614 = vst.msk [vmem:[#allocation3 + $0x50] sm:$0xff] %vm587, 0.0
          %615 = vst.msk [vmem:[#allocation3 + $0x58] sm:$0xff] %vm587, 0.0
          %616 = vst.msk [vmem:[#allocation3 + $0x60] sm:$0xff] %vm587, 0.0
          %617 = vst.msk [vmem:[#allocation3 + $0x68] sm:$0xff] %vm587, 0.0
          %618 = vst.msk [vmem:[#allocation3 + $0x70] sm:$0xff] %vm587, 0.0
          %619 = vst.msk [vmem:[#allocation3 + $0x78] sm:$0xff] %vm587, 0.0
          %620 = vst [vmem:[#allocation4] sm:$0xff] 0.0
          %621 = vst [vmem:[#allocation4 + $0x8] sm:$0xff] 0.0
          %622 = vst [vmem:[#allocation4 + $0x10] sm:$0xff] 0.0
          %623 = vst [vmem:[#allocation4 + $0x18] sm:$0xff] 0.0
          %624 = vst [vmem:[#allocation4 + $0x20] sm:$0xff] 0.0
          %625 = vst [vmem:[#allocation4 + $0x28] sm:$0xff] 0.0
          %626 = vst [vmem:[#allocation4 + $0x30] sm:$0xff] 0.0
          %627 = vst [vmem:[#allocation4 + $0x38] sm:$0xff] 0.0
          %628 = vst [vmem:[#allocation4 + $0x40] sm:$0xff] 0.0
          %629 = vst [vmem:[#allocation4 + $0x48] sm:$0xff] 0.0
          %630 = vst [vmem:[#allocation4 + $0x50] sm:$0xff] 0.0
          %631 = vst [vmem:[#allocation4 + $0x58] sm:$0xff] 0.0
          %632 = vst [vmem:[#allocation4 + $0x60] sm:$0xff] 0.0
          %633 = vst [vmem:[#allocation4 + $0x68] sm:$0xff] 0.0
          %634 = vst [vmem:[#allocation4 + $0x70] sm:$0xff] 0.0
          %635 = vst [vmem:[#allocation4 + $0x78] sm:$0xff] 0.0
        $region159: #{multi_head_attention.4} parent=142 // pred_fallthru
          _
        %s636 = smul.u32 %s22, 128
        %s637 = smul.u32 %s23, 128
        %s638 = sadd.s32 %s636, 128
        %p639 = scmp.lt.s32.totalorder %s637, %s638
        %s640 = sadd.s32 %s637, 128
        %s641 = sadd.s32 %s636, 1
        %p642 = scmp.gt.s32.totalorder %s640, %s641
        %p643 = pnand %p639, %p642
        %p644 = pneg %p643
        // Predicated region
        $region160: #{multi_head_attention.4} parent=142 // pred_check
          _
        $region161: #{multi_head_attention.4} parent=142 // pred_check_branch
          %646 = sbr.rel (%p643) target = $region163
        $region162: #{multi_head_attention.4} parent=142 // pred_region
          %v647 = vld [vmem:[%s535] sm:$0xf]
          %v648 = vld [vmem:[%s535 + $0x4] sm:$0xf]
          %v649 = vld [vmem:[%s535 + $0x8] sm:$0xf]
          %v650 = vld [vmem:[%s535 + $0xc] sm:$0xf]
          %v651 = vld [vmem:[%s535 + $0x10] sm:$0xf]
          %v652 = vld [vmem:[%s535 + $0x14] sm:$0xf]
          %v653 = vld [vmem:[%s535 + $0x18] sm:$0xf]
          %v654 = vld [vmem:[%s535 + $0x1c] sm:$0xf]
          %v655 = vld [vmem:[%s535 + $0x20] sm:$0xf]
          %v656 = vld [vmem:[%s535 + $0x24] sm:$0xf]
          %v657 = vld [vmem:[%s535 + $0x28] sm:$0xf]
          %v658 = vld [vmem:[%s535 + $0x2c] sm:$0xf]
          %v659 = vld [vmem:[%s535 + $0x30] sm:$0xf]
          %v660 = vld [vmem:[%s535 + $0x34] sm:$0xf]
          %v661 = vld [vmem:[%s535 + $0x38] sm:$0xf]
          %v662 = vld [vmem:[%s535 + $0x3c] sm:$0xf]
          %v663 = vld [vmem:[%s542] sm:$0xf]
          %v664 = vld [vmem:[%s542 + $0x4] sm:$0xf]
          %v665 = vld [vmem:[%s542 + $0x8] sm:$0xf]
          %v666 = vld [vmem:[%s542 + $0xc] sm:$0xf]
          %v667 = vld [vmem:[%s542 + $0x10] sm:$0xf]
          %v668 = vld [vmem:[%s542 + $0x14] sm:$0xf]
          %v669 = vld [vmem:[%s542 + $0x18] sm:$0xf]
          %v670 = vld [vmem:[%s542 + $0x1c] sm:$0xf]
          %v671 = vld [vmem:[%s542 + $0x20] sm:$0xf]
          %v672 = vld [vmem:[%s542 + $0x24] sm:$0xf]
          %v673 = vld [vmem:[%s542 + $0x28] sm:$0xf]
          %v674 = vld [vmem:[%s542 + $0x2c] sm:$0xf]
          %v675 = vld [vmem:[%s542 + $0x30] sm:$0xf]
          %v676 = vld [vmem:[%s542 + $0x34] sm:$0xf]
          %v677 = vld [vmem:[%s542 + $0x38] sm:$0xf]
          %v678 = vld [vmem:[%s542 + $0x3c] sm:$0xf]
          %v695 = vunpack.c.l.b16 %v647
          %v696 = vunpack.c.l.b16 %v648
          %v697 = vunpack.c.l.b16 %v649
          %v698 = vunpack.c.l.b16 %v650
          %v699 = vunpack.c.l.b16 %v651
          %v700 = vunpack.c.l.b16 %v652
          %v701 = vunpack.c.l.b16 %v653
          %v702 = vunpack.c.l.b16 %v654
          %v703 = vunpack.c.l.b16 %v655
          %v704 = vunpack.c.l.b16 %v656
          %v705 = vunpack.c.l.b16 %v657
          %v706 = vunpack.c.l.b16 %v658
          %v707 = vunpack.c.l.b16 %v659
          %v708 = vunpack.c.l.b16 %v660
          %v709 = vunpack.c.l.b16 %v661
          %v710 = vunpack.c.l.b16 %v662
          %v711 = vpack.c.b16 %v696, %v695
          %v712 = vpack.c.b16 %v698, %v697
          %v713 = vpack.c.b16 %v700, %v699
          %v714 = vpack.c.b16 %v702, %v701
          %v715 = vpack.c.b16 %v704, %v703
          %v716 = vpack.c.b16 %v706, %v705
          %v717 = vpack.c.b16 %v708, %v707
          %v718 = vpack.c.b16 %v710, %v709
          %v743 = vunpack.c.l.b16 %v663
          %v744 = vunpack.c.l.b16 %v664
          %v745 = vunpack.c.l.b16 %v665
          %v746 = vunpack.c.l.b16 %v666
          %v747 = vunpack.c.l.b16 %v667
          %v748 = vunpack.c.l.b16 %v668
          %v749 = vunpack.c.l.b16 %v669
          %v750 = vunpack.c.l.b16 %v670
          %v751 = vunpack.c.l.b16 %v671
          %v752 = vunpack.c.l.b16 %v672
          %v753 = vunpack.c.l.b16 %v673
          %v754 = vunpack.c.l.b16 %v674
          %v755 = vunpack.c.l.b16 %v675
          %v756 = vunpack.c.l.b16 %v676
          %v757 = vunpack.c.l.b16 %v677
          %v758 = vunpack.c.l.b16 %v678
          %v759 = vpack.c.b16 %v744, %v743
          %v760 = vpack.c.b16 %v746, %v745
          %v761 = vpack.c.b16 %v748, %v747
          %v762 = vpack.c.b16 %v750, %v749
          %v763 = vpack.c.b16 %v752, %v751
          %v764 = vpack.c.b16 %v754, %v753
          %v765 = vpack.c.b16 %v756, %v755
          %v766 = vpack.c.b16 %v758, %v757
          %775 = vmatpush.bf16.xpose.msra.mxu0 %v766
          %776 = vmatpush.bf16.xpose.msra.mxu0 %v765
          %777 = vmatpush.bf16.xpose.msra.mxu0 %v764
          %778 = vmatpush.bf16.xpose.msra.mxu0 %v763
          %779 = vmatpush.bf16.xpose.msra.mxu0 %v762
          %780 = vmatpush.bf16.xpose.msra.mxu0 %v761
          %781 = vmatpush.bf16.xpose.msra.mxu0 %v760
          %782 = vmatpush.bf16.xpose.msra.mxu0 %v759
          %783 = vmatmul.bf16.gmra.mxu0 %v711
          %v784 = vpop.f32.mrf.mxu0
          %v785 = vadd.f32 0.0, %v784
          %v786 = vpop.f32.mrf.mxu0
          %v787 = vadd.f32 0.0, %v786
          %788 = vmatmul.bf16.gmra.mxu0 %v712
          %v789 = vpop.f32.mrf.mxu0
          %v790 = vadd.f32 0.0, %v789
          %v791 = vpop.f32.mrf.mxu0
          %v792 = vadd.f32 0.0, %v791
          %793 = vmatmul.bf16.gmra.mxu0 %v713
          %v794 = vpop.f32.mrf.mxu0
          %v795 = vadd.f32 0.0, %v794
          %v796 = vpop.f32.mrf.mxu0
          %v797 = vadd.f32 0.0, %v796
          %798 = vmatmul.bf16.gmra.mxu0 %v714
          %v799 = vpop.f32.mrf.mxu0
          %v800 = vadd.f32 0.0, %v799
          %v801 = vpop.f32.mrf.mxu0
          %v802 = vadd.f32 0.0, %v801
          %803 = vmatmul.bf16.gmra.mxu0 %v715
          %v804 = vpop.f32.mrf.mxu0
          %v805 = vadd.f32 0.0, %v804
          %v806 = vpop.f32.mrf.mxu0
          %v807 = vadd.f32 0.0, %v806
          %808 = vmatmul.bf16.gmra.mxu0 %v716
          %v809 = vpop.f32.mrf.mxu0
          %v810 = vadd.f32 0.0, %v809
          %v811 = vpop.f32.mrf.mxu0
          %v812 = vadd.f32 0.0, %v811
          %813 = vmatmul.bf16.gmra.mxu0 %v717
          %v814 = vpop.f32.mrf.mxu0
          %v815 = vadd.f32 0.0, %v814
          %v816 = vpop.f32.mrf.mxu0
          %v817 = vadd.f32 0.0, %v816
          %818 = vmatmul.bf16.gmra.mxu0 %v718
          %v819 = vpop.f32.mrf.mxu0
          %v820 = vadd.f32 0.0, %v819
          %v821 = vpop.f32.mrf.mxu0
          %v822 = vadd.f32 0.0, %v821
          %823 = vdwg.mxu0
          %v824 = vmul.f32 %v785, 0.088388346
          %v825 = vmul.f32 %v787, 0.088388346
          %v826 = vmul.f32 %v790, 0.088388346
          %v827 = vmul.f32 %v792, 0.088388346
          %v828 = vmul.f32 %v795, 0.088388346
          %v829 = vmul.f32 %v797, 0.088388346
          %v830 = vmul.f32 %v800, 0.088388346
          %v831 = vmul.f32 %v802, 0.088388346
          %v832 = vmul.f32 %v805, 0.088388346
          %v833 = vmul.f32 %v807, 0.088388346
          %v834 = vmul.f32 %v810, 0.088388346
          %v835 = vmul.f32 %v812, 0.088388346
          %v836 = vmul.f32 %v815, 0.088388346
          %v837 = vmul.f32 %v817, 0.088388346
          %v838 = vmul.f32 %v820, 0.088388346
          %v839 = vmul.f32 %v822, 0.088388346
          %v840 = vlaneseq
          %v841 = vshrl.u32 %v840, 7
          %v842 = vadd.s32 %v841, 8
          %v843 = vadd.s32 %v841, 16
          %v844 = vadd.s32 %v841, 24
          %v845 = vadd.s32 %v841, 32
          %v846 = vadd.s32 %v841, 40
          %v847 = vadd.s32 %v841, 48
          %v848 = vadd.s32 %v841, 56
          %v849 = vadd.s32 %v841, 64
          %v850 = vadd.s32 %v841, 72
          %v851 = vadd.s32 %v841, 80
          %v852 = vadd.s32 %v841, 88
          %v853 = vadd.s32 %v841, 96
          %v854 = vadd.s32 %v841, 104
          %v855 = vadd.s32 %v841, 112
          %v856 = vadd.s32 %v841, 120
          %v857 = vstv %s636
          %v858 = vadd.s32 %v857, %v841
          %v859 = vadd.s32 %v857, %v842
          %v860 = vadd.s32 %v857, %v843
          %v861 = vadd.s32 %v857, %v844
          %v862 = vadd.s32 %v857, %v845
          %v863 = vadd.s32 %v857, %v846
          %v864 = vadd.s32 %v857, %v847
          %v865 = vadd.s32 %v857, %v848
          %v866 = vadd.s32 %v857, %v849
          %v867 = vadd.s32 %v857, %v850
          %v868 = vadd.s32 %v857, %v851
          %v869 = vadd.s32 %v857, %v852
          %v870 = vadd.s32 %v857, %v853
          %v871 = vadd.s32 %v857, %v854
          %v872 = vadd.s32 %v857, %v855
          %v873 = vadd.s32 %v857, %v856
          %v874 = vlaneseq
          %v875 = vand.u32 %v874, 127
          %v876 = vstv %s637
          %v877 = vadd.s32 %v876, %v875
          %vm878 = vcmp.le.s32.totalorder %v877, %v858
          %vm879 = vcmp.le.s32.totalorder %v877, %v859
          %vm880 = vcmp.le.s32.totalorder %v877, %v860
          %vm881 = vcmp.le.s32.totalorder %v877, %v861
          %vm882 = vcmp.le.s32.totalorder %v877, %v862
          %vm883 = vcmp.le.s32.totalorder %v877, %v863
          %vm884 = vcmp.le.s32.totalorder %v877, %v864
          %vm885 = vcmp.le.s32.totalorder %v877, %v865
          %vm886 = vcmp.le.s32.totalorder %v877, %v866
          %vm887 = vcmp.le.s32.totalorder %v877, %v867
          %vm888 = vcmp.le.s32.totalorder %v877, %v868
          %vm889 = vcmp.le.s32.totalorder %v877, %v869
          %vm890 = vcmp.le.s32.totalorder %v877, %v870
          %vm891 = vcmp.le.s32.totalorder %v877, %v871
          %vm892 = vcmp.le.s32.totalorder %v877, %v872
          %vm893 = vcmp.le.s32.totalorder %v877, %v873
          %v894 = vsel %vm878, %v824, -1e+30
          %v895 = vsel %vm879, %v825, -1e+30
          %v896 = vsel %vm880, %v826, -1e+30
          %v897 = vsel %vm881, %v827, -1e+30
          %v898 = vsel %vm882, %v828, -1e+30
          %v899 = vsel %vm883, %v829, -1e+30
          %v900 = vsel %vm884, %v830, -1e+30
          %v901 = vsel %vm885, %v831, -1e+30
          %v902 = vsel %vm886, %v832, -1e+30
          %v903 = vsel %vm887, %v833, -1e+30
          %v904 = vsel %vm888, %v834, -1e+30
          %v905 = vsel %vm889, %v835, -1e+30
          %v906 = vsel %vm890, %v836, -1e+30
          %v907 = vsel %vm891, %v837, -1e+30
          %v908 = vsel %vm892, %v838, -1e+30
          %v909 = vsel %vm893, %v839, -1e+30
          %v910 = vld [vmem:[#allocation2] sm:$0xff]
          %v911 = vld [vmem:[#allocation2 + $0x8] sm:$0xff]
          %v912 = vld [vmem:[#allocation2 + $0x10] sm:$0xff]
          %v913 = vld [vmem:[#allocation2 + $0x18] sm:$0xff]
          %v914 = vld [vmem:[#allocation2 + $0x20] sm:$0xff]
          %v915 = vld [vmem:[#allocation2 + $0x28] sm:$0xff]
          %v916 = vld [vmem:[#allocation2 + $0x30] sm:$0xff]
          %v917 = vld [vmem:[#allocation2 + $0x38] sm:$0xff]
          %v918 = vld [vmem:[#allocation2 + $0x40] sm:$0xff]
          %v919 = vld [vmem:[#allocation2 + $0x48] sm:$0xff]
          %v920 = vld [vmem:[#allocation2 + $0x50] sm:$0xff]
          %v921 = vld [vmem:[#allocation2 + $0x58] sm:$0xff]
          %v922 = vld [vmem:[#allocation2 + $0x60] sm:$0xff]
          %v923 = vld [vmem:[#allocation2 + $0x68] sm:$0xff]
          %v924 = vld [vmem:[#allocation2 + $0x70] sm:$0xff]
          %v925 = vld [vmem:[#allocation2 + $0x78] sm:$0xff]
          %926 = vmax.xlane.f32.xlu0 %v894
          %v927 = vpop.xlane.xlu0 %926
          %928 = vmax.xlane.f32.xlu0 %v895
          %v929 = vpop.xlane.xlu0 %928
          %930 = vmax.xlane.f32.xlu0 %v896
          %v931 = vpop.xlane.xlu0 %930
          %932 = vmax.xlane.f32.xlu0 %v897
          %v933 = vpop.xlane.xlu0 %932
          %934 = vmax.xlane.f32.xlu0 %v898
          %v935 = vpop.xlane.xlu0 %934
          %936 = vmax.xlane.f32.xlu0 %v899
          %v937 = vpop.xlane.xlu0 %936
          %938 = vmax.xlane.f32.xlu0 %v900
          %v939 = vpop.xlane.xlu0 %938
          %940 = vmax.xlane.f32.xlu0 %v901
          %v941 = vpop.xlane.xlu0 %940
          %942 = vmax.xlane.f32.xlu0 %v902
          %v943 = vpop.xlane.xlu0 %942
          %944 = vmax.xlane.f32.xlu0 %v903
          %v945 = vpop.xlane.xlu0 %944
          %946 = vmax.xlane.f32.xlu0 %v904
          %v947 = vpop.xlane.xlu0 %946
          %948 = vmax.xlane.f32.xlu0 %v905
          %v949 = vpop.xlane.xlu0 %948
          %950 = vmax.xlane.f32.xlu0 %v906
          %v951 = vpop.xlane.xlu0 %950
          %952 = vmax.xlane.f32.xlu0 %v907
          %v953 = vpop.xlane.xlu0 %952
          %954 = vmax.xlane.f32.xlu0 %v908
          %v955 = vpop.xlane.xlu0 %954
          %956 = vmax.xlane.f32.xlu0 %v909
          %v957 = vpop.xlane.xlu0 %956
          %v958 = vmax.f32 %v910, %v927
          %v959 = vmax.f32 %v911, %v929
          %v960 = vmax.f32 %v912, %v931
          %v961 = vmax.f32 %v913, %v933
          %v962 = vmax.f32 %v914, %v935
          %v963 = vmax.f32 %v915, %v937
          %v964 = vmax.f32 %v916, %v939
          %v965 = vmax.f32 %v917, %v941
          %v966 = vmax.f32 %v918, %v943
          %v967 = vmax.f32 %v919, %v945
          %v968 = vmax.f32 %v920, %v947
          %v969 = vmax.f32 %v921, %v949
          %v970 = vmax.f32 %v922, %v951
          %v971 = vmax.f32 %v923, %v953
          %v972 = vmax.f32 %v924, %v955
          %v973 = vmax.f32 %v925, %v957
          %v974 = vsub.f32 %v910, %v958
          %v975 = vsub.f32 %v911, %v959
          %v976 = vsub.f32 %v912, %v960
          %v977 = vsub.f32 %v913, %v961
          %v978 = vsub.f32 %v914, %v962
          %v979 = vsub.f32 %v915, %v963
          %v980 = vsub.f32 %v916, %v964
          %v981 = vsub.f32 %v917, %v965
          %v982 = vsub.f32 %v918, %v966
          %v983 = vsub.f32 %v919, %v967
          %v984 = vsub.f32 %v920, %v968
          %v985 = vsub.f32 %v921, %v969
          %v986 = vsub.f32 %v922, %v970
          %v987 = vsub.f32 %v923, %v971
          %v988 = vsub.f32 %v924, %v972
          %v989 = vsub.f32 %v925, %v973
          %v990 = vmul.f32 %v974, 1.442695
          %v991 = vpow.pop %v990
          %v992 = vmul.f32 %v975, 1.442695
          %v993 = vpow.pop %v992
          %v994 = vmul.f32 %v976, 1.442695
          %v995 = vpow.pop %v994
          %v996 = vmul.f32 %v977, 1.442695
          %v997 = vpow.pop %v996
          %v998 = vmul.f32 %v978, 1.442695
          %v999 = vpow.pop %v998
          %v1000 = vmul.f32 %v979, 1.442695
          %v1001 = vpow.pop %v1000
          %v1002 = vmul.f32 %v980, 1.442695
          %v1003 = vpow.pop %v1002
          %v1004 = vmul.f32 %v981, 1.442695
          %v1005 = vpow.pop %v1004
          %v1006 = vmul.f32 %v982, 1.442695
          %v1007 = vpow.pop %v1006
          %v1008 = vmul.f32 %v983, 1.442695
          %v1009 = vpow.pop %v1008
          %v1010 = vmul.f32 %v984, 1.442695
          %v1011 = vpow.pop %v1010
          %v1012 = vmul.f32 %v985, 1.442695
          %v1013 = vpow.pop %v1012
          %v1014 = vmul.f32 %v986, 1.442695
          %v1015 = vpow.pop %v1014
          %v1016 = vmul.f32 %v987, 1.442695
          %v1017 = vpow.pop %v1016
          %v1018 = vmul.f32 %v988, 1.442695
          %v1019 = vpow.pop %v1018
          %v1020 = vmul.f32 %v989, 1.442695
          %v1021 = vpow.pop %v1020
          %1023 = vset.pattern.permute.xlu0 0
          %1024 = vperm.xlu0 %1023, %v958
          %v1025 = vpop.permute.xlu0 %1024
          %1028 = vset.pattern.permute.xlu0 0
          %1029 = vperm.xlu0 %1028, %v959
          %v1030 = vpop.permute.xlu0 %1029
          %1033 = vset.pattern.permute.xlu0 0
          %1034 = vperm.xlu0 %1033, %v960
          %v1035 = vpop.permute.xlu0 %1034
          %1038 = vset.pattern.permute.xlu0 0
          %1039 = vperm.xlu0 %1038, %v961
          %v1040 = vpop.permute.xlu0 %1039
          %1043 = vset.pattern.permute.xlu0 0
          %1044 = vperm.xlu0 %1043, %v962
          %v1045 = vpop.permute.xlu0 %1044
          %1048 = vset.pattern.permute.xlu0 0
          %1049 = vperm.xlu0 %1048, %v963
          %v1050 = vpop.permute.xlu0 %1049
          %1053 = vset.pattern.permute.xlu0 0
          %1054 = vperm.xlu0 %1053, %v964
          %v1055 = vpop.permute.xlu0 %1054
          %1058 = vset.pattern.permute.xlu0 0
          %1059 = vperm.xlu0 %1058, %v965
          %v1060 = vpop.permute.xlu0 %1059
          %1063 = vset.pattern.permute.xlu0 0
          %1064 = vperm.xlu0 %1063, %v966
          %v1065 = vpop.permute.xlu0 %1064
          %1068 = vset.pattern.permute.xlu0 0
          %1069 = vperm.xlu0 %1068, %v967
          %v1070 = vpop.permute.xlu0 %1069
          %1073 = vset.pattern.permute.xlu0 0
          %1074 = vperm.xlu0 %1073, %v968
          %v1075 = vpop.permute.xlu0 %1074
          %1078 = vset.pattern.permute.xlu0 0
          %1079 = vperm.xlu0 %1078, %v969
          %v1080 = vpop.permute.xlu0 %1079
          %1083 = vset.pattern.permute.xlu0 0
          %1084 = vperm.xlu0 %1083, %v970
          %v1085 = vpop.permute.xlu0 %1084
          %1088 = vset.pattern.permute.xlu0 0
          %1089 = vperm.xlu0 %1088, %v971
          %v1090 = vpop.permute.xlu0 %1089
          %1093 = vset.pattern.permute.xlu0 0
          %1094 = vperm.xlu0 %1093, %v972
          %v1095 = vpop.permute.xlu0 %1094
          %1098 = vset.pattern.permute.xlu0 0
          %1099 = vperm.xlu0 %1098, %v973
          %v1100 = vpop.permute.xlu0 %1099
          %v1102 = vsub.f32 %v894, %v1025
          %v1103 = vsub.f32 %v895, %v1030
          %v1104 = vsub.f32 %v896, %v1035
          %v1105 = vsub.f32 %v897, %v1040
          %v1106 = vsub.f32 %v898, %v1045
          %v1107 = vsub.f32 %v899, %v1050
          %v1108 = vsub.f32 %v900, %v1055
          %v1109 = vsub.f32 %v901, %v1060
          %v1110 = vsub.f32 %v902, %v1065
          %v1111 = vsub.f32 %v903, %v1070
          %v1112 = vsub.f32 %v904, %v1075
          %v1113 = vsub.f32 %v905, %v1080
          %v1114 = vsub.f32 %v906, %v1085
          %v1115 = vsub.f32 %v907, %v1090
          %v1116 = vsub.f32 %v908, %v1095
          %v1117 = vsub.f32 %v909, %v1100
          %v1118 = vmul.f32 %v1102, 1.442695
          %v1119 = vpow.pop %v1118
          %v1120 = vmul.f32 %v1103, 1.442695
          %v1121 = vpow.pop %v1120
          %v1122 = vmul.f32 %v1104, 1.442695
          %v1123 = vpow.pop %v1122
          %v1124 = vmul.f32 %v1105, 1.442695
          %v1125 = vpow.pop %v1124
          %v1126 = vmul.f32 %v1106, 1.442695
          %v1127 = vpow.pop %v1126
          %v1128 = vmul.f32 %v1107, 1.442695
          %v1129 = vpow.pop %v1128
          %v1130 = vmul.f32 %v1108, 1.442695
          %v1131 = vpow.pop %v1130
          %v1132 = vmul.f32 %v1109, 1.442695
          %v1133 = vpow.pop %v1132
          %v1134 = vmul.f32 %v1110, 1.442695
          %v1135 = vpow.pop %v1134
          %v1136 = vmul.f32 %v1111, 1.442695
          %v1137 = vpow.pop %v1136
          %v1138 = vmul.f32 %v1112, 1.442695
          %v1139 = vpow.pop %v1138
          %v1140 = vmul.f32 %v1113, 1.442695
          %v1141 = vpow.pop %v1140
          %v1142 = vmul.f32 %v1114, 1.442695
          %v1143 = vpow.pop %v1142
          %v1144 = vmul.f32 %v1115, 1.442695
          %v1145 = vpow.pop %v1144
          %v1146 = vmul.f32 %v1116, 1.442695
          %v1147 = vpow.pop %v1146
          %v1148 = vmul.f32 %v1117, 1.442695
          %v1149 = vpow.pop %v1148
          %v1150 = vld [vmem:[#allocation3] sm:$0xff]
          %v1151 = vld [vmem:[#allocation3 + $0x8] sm:$0xff]
          %v1152 = vld [vmem:[#allocation3 + $0x10] sm:$0xff]
          %v1153 = vld [vmem:[#allocation3 + $0x18] sm:$0xff]
          %v1154 = vld [vmem:[#allocation3 + $0x20] sm:$0xff]
          %v1155 = vld [vmem:[#allocation3 + $0x28] sm:$0xff]
          %v1156 = vld [vmem:[#allocation3 + $0x30] sm:$0xff]
          %v1157 = vld [vmem:[#allocation3 + $0x38] sm:$0xff]
          %v1158 = vld [vmem:[#allocation3 + $0x40] sm:$0xff]
          %v1159 = vld [vmem:[#allocation3 + $0x48] sm:$0xff]
          %v1160 = vld [vmem:[#allocation3 + $0x50] sm:$0xff]
          %v1161 = vld [vmem:[#allocation3 + $0x58] sm:$0xff]
          %v1162 = vld [vmem:[#allocation3 + $0x60] sm:$0xff]
          %v1163 = vld [vmem:[#allocation3 + $0x68] sm:$0xff]
          %v1164 = vld [vmem:[#allocation3 + $0x70] sm:$0xff]
          %v1165 = vld [vmem:[#allocation3 + $0x78] sm:$0xff]
          %v1166 = vmul.f32 %v991, %v1150
          %v1167 = vmul.f32 %v993, %v1151
          %v1168 = vmul.f32 %v995, %v1152
          %v1169 = vmul.f32 %v997, %v1153
          %v1170 = vmul.f32 %v999, %v1154
          %v1171 = vmul.f32 %v1001, %v1155
          %v1172 = vmul.f32 %v1003, %v1156
          %v1173 = vmul.f32 %v1005, %v1157
          %v1174 = vmul.f32 %v1007, %v1158
          %v1175 = vmul.f32 %v1009, %v1159
          %v1176 = vmul.f32 %v1011, %v1160
          %v1177 = vmul.f32 %v1013, %v1161
          %v1178 = vmul.f32 %v1015, %v1162
          %v1179 = vmul.f32 %v1017, %v1163
          %v1180 = vmul.f32 %v1019, %v1164
          %v1181 = vmul.f32 %v1021, %v1165
          %1182 = vadd.xlane.f32.xlu0 %v1119
          %v1183 = vpop.xlane.xlu0 %1182
          %1184 = vadd.xlane.f32.xlu0 %v1121
          %v1185 = vpop.xlane.xlu0 %1184
          %1186 = vadd.xlane.f32.xlu0 %v1123
          %v1187 = vpop.xlane.xlu0 %1186
          %1188 = vadd.xlane.f32.xlu0 %v1125
          %v1189 = vpop.xlane.xlu0 %1188
          %1190 = vadd.xlane.f32.xlu0 %v1127
          %v1191 = vpop.xlane.xlu0 %1190
          %1192 = vadd.xlane.f32.xlu0 %v1129
          %v1193 = vpop.xlane.xlu0 %1192
          %1194 = vadd.xlane.f32.xlu0 %v1131
          %v1195 = vpop.xlane.xlu0 %1194
          %1196 = vadd.xlane.f32.xlu0 %v1133
          %v1197 = vpop.xlane.xlu0 %1196
          %1198 = vadd.xlane.f32.xlu0 %v1135
          %v1199 = vpop.xlane.xlu0 %1198
          %1200 = vadd.xlane.f32.xlu0 %v1137
          %v1201 = vpop.xlane.xlu0 %1200
          %1202 = vadd.xlane.f32.xlu0 %v1139
          %v1203 = vpop.xlane.xlu0 %1202
          %1204 = vadd.xlane.f32.xlu0 %v1141
          %v1205 = vpop.xlane.xlu0 %1204
          %1206 = vadd.xlane.f32.xlu0 %v1143
          %v1207 = vpop.xlane.xlu0 %1206
          %1208 = vadd.xlane.f32.xlu0 %v1145
          %v1209 = vpop.xlane.xlu0 %1208
          %1210 = vadd.xlane.f32.xlu0 %v1147
          %v1211 = vpop.xlane.xlu0 %1210
          %1212 = vadd.xlane.f32.xlu0 %v1149
          %v1213 = vpop.xlane.xlu0 %1212
          %v1214 = vadd.f32 %v1166, %v1183
          %v1215 = vadd.f32 %v1167, %v1185
          %v1216 = vadd.f32 %v1168, %v1187
          %v1217 = vadd.f32 %v1169, %v1189
          %v1218 = vadd.f32 %v1170, %v1191
          %v1219 = vadd.f32 %v1171, %v1193
          %v1220 = vadd.f32 %v1172, %v1195
          %v1221 = vadd.f32 %v1173, %v1197
          %v1222 = vadd.f32 %v1174, %v1199
          %v1223 = vadd.f32 %v1175, %v1201
          %v1224 = vadd.f32 %v1176, %v1203
          %v1225 = vadd.f32 %v1177, %v1205
          %v1226 = vadd.f32 %v1178, %v1207
          %v1227 = vadd.f32 %v1179, %v1209
          %v1228 = vadd.f32 %v1180, %v1211
          %v1229 = vadd.f32 %v1181, %v1213
          %vm1230 = vcmask 7168
          %1231 = vst.msk [vmem:[#allocation3] sm:$0xff] %vm1230, %v1214
          %1232 = vst.msk [vmem:[#allocation3 + $0x8] sm:$0xff] %vm1230, %v1215
          %1233 = vst.msk [vmem:[#allocation3 + $0x10] sm:$0xff] %vm1230, %v1216
          %1234 = vst.msk [vmem:[#allocation3 + $0x18] sm:$0xff] %vm1230, %v1217
          %1235 = vst.msk [vmem:[#allocation3 + $0x20] sm:$0xff] %vm1230, %v1218
          %1236 = vst.msk [vmem:[#allocation3 + $0x28] sm:$0xff] %vm1230, %v1219
          %1237 = vst.msk [vmem:[#allocation3 + $0x30] sm:$0xff] %vm1230, %v1220
          %1238 = vst.msk [vmem:[#allocation3 + $0x38] sm:$0xff] %vm1230, %v1221
          %1239 = vst.msk [vmem:[#allocation3 + $0x40] sm:$0xff] %vm1230, %v1222
          %1240 = vst.msk [vmem:[#allocation3 + $0x48] sm:$0xff] %vm1230, %v1223
          %1241 = vst.msk [vmem:[#allocation3 + $0x50] sm:$0xff] %vm1230, %v1224
          %1242 = vst.msk [vmem:[#allocation3 + $0x58] sm:$0xff] %vm1230, %v1225
          %1243 = vst.msk [vmem:[#allocation3 + $0x60] sm:$0xff] %vm1230, %v1226
          %1244 = vst.msk [vmem:[#allocation3 + $0x68] sm:$0xff] %vm1230, %v1227
          %1245 = vst.msk [vmem:[#allocation3 + $0x70] sm:$0xff] %vm1230, %v1228
          %1246 = vst.msk [vmem:[#allocation3 + $0x78] sm:$0xff] %vm1230, %v1229
          %v1247 = vld [vmem:[#allocation4] sm:$0xff]
          %v1248 = vld [vmem:[#allocation4 + $0x8] sm:$0xff]
          %v1249 = vld [vmem:[#allocation4 + $0x10] sm:$0xff]
          %v1250 = vld [vmem:[#allocation4 + $0x18] sm:$0xff]
          %v1251 = vld [vmem:[#allocation4 + $0x20] sm:$0xff]
          %v1252 = vld [vmem:[#allocation4 + $0x28] sm:$0xff]
          %v1253 = vld [vmem:[#allocation4 + $0x30] sm:$0xff]
          %v1254 = vld [vmem:[#allocation4 + $0x38] sm:$0xff]
          %v1255 = vld [vmem:[#allocation4 + $0x40] sm:$0xff]
          %v1256 = vld [vmem:[#allocation4 + $0x48] sm:$0xff]
          %v1257 = vld [vmem:[#allocation4 + $0x50] sm:$0xff]
          %v1258 = vld [vmem:[#allocation4 + $0x58] sm:$0xff]
          %v1259 = vld [vmem:[#allocation4 + $0x60] sm:$0xff]
          %v1260 = vld [vmem:[#allocation4 + $0x68] sm:$0xff]
          %v1261 = vld [vmem:[#allocation4 + $0x70] sm:$0xff]
          %v1262 = vld [vmem:[#allocation4 + $0x78] sm:$0xff]
          %1264 = vset.pattern.permute.xlu0 0
          %1265 = vperm.xlu0 %1264, %v991
          %v1266 = vpop.permute.xlu0 %1265
          %1269 = vset.pattern.permute.xlu0 0
          %1270 = vperm.xlu0 %1269, %v993
          %v1271 = vpop.permute.xlu0 %1270
          %1274 = vset.pattern.permute.xlu0 0
          %1275 = vperm.xlu0 %1274, %v995
          %v1276 = vpop.permute.xlu0 %1275
          %1279 = vset.pattern.permute.xlu0 0
          %1280 = vperm.xlu0 %1279, %v997
          %v1281 = vpop.permute.xlu0 %1280
          %1284 = vset.pattern.permute.xlu0 0
          %1285 = vperm.xlu0 %1284, %v999
          %v1286 = vpop.permute.xlu0 %1285
          %1289 = vset.pattern.permute.xlu0 0
          %1290 = vperm.xlu0 %1289, %v1001
          %v1291 = vpop.permute.xlu0 %1290
          %1294 = vset.pattern.permute.xlu0 0
          %1295 = vperm.xlu0 %1294, %v1003
          %v1296 = vpop.permute.xlu0 %1295
          %1299 = vset.pattern.permute.xlu0 0
          %1300 = vperm.xlu0 %1299, %v1005
          %v1301 = vpop.permute.xlu0 %1300
          %1304 = vset.pattern.permute.xlu0 0
          %1305 = vperm.xlu0 %1304, %v1007
          %v1306 = vpop.permute.xlu0 %1305
          %1309 = vset.pattern.permute.xlu0 0
          %1310 = vperm.xlu0 %1309, %v1009
          %v1311 = vpop.permute.xlu0 %1310
          %1314 = vset.pattern.permute.xlu0 0
          %1315 = vperm.xlu0 %1314, %v1011
          %v1316 = vpop.permute.xlu0 %1315
          %1319 = vset.pattern.permute.xlu0 0
          %1320 = vperm.xlu0 %1319, %v1013
          %v1321 = vpop.permute.xlu0 %1320
          %1324 = vset.pattern.permute.xlu0 0
          %1325 = vperm.xlu0 %1324, %v1015
          %v1326 = vpop.permute.xlu0 %1325
          %1329 = vset.pattern.permute.xlu0 0
          %1330 = vperm.xlu0 %1329, %v1017
          %v1331 = vpop.permute.xlu0 %1330
          %1334 = vset.pattern.permute.xlu0 0
          %1335 = vperm.xlu0 %1334, %v1019
          %v1336 = vpop.permute.xlu0 %1335
          %1339 = vset.pattern.permute.xlu0 0
          %1340 = vperm.xlu0 %1339, %v1021
          %v1341 = vpop.permute.xlu0 %1340
          %v1343 = vmul.f32 %v1266, %v1247
          %v1344 = vmul.f32 %v1271, %v1248
          %v1345 = vmul.f32 %v1276, %v1249
          %v1346 = vmul.f32 %v1281, %v1250
          %v1347 = vmul.f32 %v1286, %v1251
          %v1348 = vmul.f32 %v1291, %v1252
          %v1349 = vmul.f32 %v1296, %v1253
          %v1350 = vmul.f32 %v1301, %v1254
          %v1351 = vmul.f32 %v1306, %v1255
          %v1352 = vmul.f32 %v1311, %v1256
          %v1353 = vmul.f32 %v1316, %v1257
          %v1354 = vmul.f32 %v1321, %v1258
          %v1355 = vmul.f32 %v1326, %v1259
          %v1356 = vmul.f32 %v1331, %v1260
          %v1357 = vmul.f32 %v1336, %v1261
          %v1358 = vmul.f32 %v1341, %v1262
          %v1359 = vpack.c.bf16 %v1121, %v1119
          %v1360 = vpack.c.bf16 %v1125, %v1123
          %v1361 = vpack.c.bf16 %v1129, %v1127
          %v1362 = vpack.c.bf16 %v1133, %v1131
          %v1363 = vpack.c.bf16 %v1137, %v1135
          %v1364 = vpack.c.bf16 %v1141, %v1139
          %v1365 = vpack.c.bf16 %v1145, %v1143
          %v1366 = vpack.c.bf16 %v1149, %v1147
          %v1367 = vld [vmem:[%s549] sm:$0xf]
          %v1368 = vld [vmem:[%s549 + $0x4] sm:$0xf]
          %v1369 = vld [vmem:[%s549 + $0x8] sm:$0xf]
          %v1370 = vld [vmem:[%s549 + $0xc] sm:$0xf]
          %v1371 = vld [vmem:[%s549 + $0x10] sm:$0xf]
          %v1372 = vld [vmem:[%s549 + $0x14] sm:$0xf]
          %v1373 = vld [vmem:[%s549 + $0x18] sm:$0xf]
          %v1374 = vld [vmem:[%s549 + $0x1c] sm:$0xf]
          %v1375 = vld [vmem:[%s549 + $0x20] sm:$0xf]
          %v1376 = vld [vmem:[%s549 + $0x24] sm:$0xf]
          %v1377 = vld [vmem:[%s549 + $0x28] sm:$0xf]
          %v1378 = vld [vmem:[%s549 + $0x2c] sm:$0xf]
          %v1379 = vld [vmem:[%s549 + $0x30] sm:$0xf]
          %v1380 = vld [vmem:[%s549 + $0x34] sm:$0xf]
          %v1381 = vld [vmem:[%s549 + $0x38] sm:$0xf]
          %v1382 = vld [vmem:[%s549 + $0x3c] sm:$0xf]
          %v1399 = vunpack.c.l.b16 %v1367
          %v1400 = vunpack.c.l.b16 %v1368
          %v1401 = vunpack.c.l.b16 %v1369
          %v1402 = vunpack.c.l.b16 %v1370
          %v1403 = vunpack.c.l.b16 %v1371
          %v1404 = vunpack.c.l.b16 %v1372
          %v1405 = vunpack.c.l.b16 %v1373
          %v1406 = vunpack.c.l.b16 %v1374
          %v1407 = vunpack.c.l.b16 %v1375
          %v1408 = vunpack.c.l.b16 %v1376
          %v1409 = vunpack.c.l.b16 %v1377
          %v1410 = vunpack.c.l.b16 %v1378
          %v1411 = vunpack.c.l.b16 %v1379
          %v1412 = vunpack.c.l.b16 %v1380
          %v1413 = vunpack.c.l.b16 %v1381
          %v1414 = vunpack.c.l.b16 %v1382
          %v1415 = vpack.c.b16 %v1400, %v1399
          %v1416 = vpack.c.b16 %v1402, %v1401
          %v1417 = vpack.c.b16 %v1404, %v1403
          %v1418 = vpack.c.b16 %v1406, %v1405
          %v1419 = vpack.c.b16 %v1408, %v1407
          %v1420 = vpack.c.b16 %v1410, %v1409
          %v1421 = vpack.c.b16 %v1412, %v1411
          %v1422 = vpack.c.b16 %v1414, %v1413
          %1431 = vmatpush.bf16.msra.mxu0 %v1422
          %1432 = vmatpush.bf16.msra.mxu0 %v1421
          %1433 = vmatpush.bf16.msra.mxu0 %v1420
          %1434 = vmatpush.bf16.msra.mxu0 %v1419
          %1435 = vmatpush.bf16.msra.mxu0 %v1418
          %1436 = vmatpush.bf16.msra.mxu0 %v1417
          %1437 = vmatpush.bf16.msra.mxu0 %v1416
          %1438 = vmatpush.bf16.msra.mxu0 %v1415
          %1439 = vmatmul.bf16.gmra.mxu0 %v1359
          %v1440 = vpop.f32.mrf.mxu0
          %v1441 = vadd.f32 0.0, %v1440
          %v1442 = vpop.f32.mrf.mxu0
          %v1443 = vadd.f32 0.0, %v1442
          %1444 = vmatmul.bf16.gmra.mxu0 %v1360
          %v1445 = vpop.f32.mrf.mxu0
          %v1446 = vadd.f32 0.0, %v1445
          %v1447 = vpop.f32.mrf.mxu0
          %v1448 = vadd.f32 0.0, %v1447
          %1449 = vmatmul.bf16.gmra.mxu0 %v1361
          %v1450 = vpop.f32.mrf.mxu0
          %v1451 = vadd.f32 0.0, %v1450
          %v1452 = vpop.f32.mrf.mxu0
          %v1453 = vadd.f32 0.0, %v1452
          %1454 = vmatmul.bf16.gmra.mxu0 %v1362
          %v1455 = vpop.f32.mrf.mxu0
          %v1456 = vadd.f32 0.0, %v1455
          %v1457 = vpop.f32.mrf.mxu0
          %v1458 = vadd.f32 0.0, %v1457
          %1459 = vmatmul.bf16.gmra.mxu0 %v1363
          %v1460 = vpop.f32.mrf.mxu0
          %v1461 = vadd.f32 0.0, %v1460
          %v1462 = vpop.f32.mrf.mxu0
          %v1463 = vadd.f32 0.0, %v1462
          %1464 = vmatmul.bf16.gmra.mxu0 %v1364
          %v1465 = vpop.f32.mrf.mxu0
          %v1466 = vadd.f32 0.0, %v1465
          %v1467 = vpop.f32.mrf.mxu0
          %v1468 = vadd.f32 0.0, %v1467
          %1469 = vmatmul.bf16.gmra.mxu0 %v1365
          %v1470 = vpop.f32.mrf.mxu0
          %v1471 = vadd.f32 0.0, %v1470
          %v1472 = vpop.f32.mrf.mxu0
          %v1473 = vadd.f32 0.0, %v1472
          %1474 = vmatmul.bf16.gmra.mxu0 %v1366
          %v1475 = vpop.f32.mrf.mxu0
          %v1476 = vadd.f32 0.0, %v1475
          %v1477 = vpop.f32.mrf.mxu0
          %v1478 = vadd.f32 0.0, %v1477
          %1479 = vdwg.mxu0
          %v1480 = vadd.f32 %v1343, %v1441
          %v1481 = vadd.f32 %v1344, %v1443
          %v1482 = vadd.f32 %v1345, %v1446
          %v1483 = vadd.f32 %v1346, %v1448
          %v1484 = vadd.f32 %v1347, %v1451
          %v1485 = vadd.f32 %v1348, %v1453
          %v1486 = vadd.f32 %v1349, %v1456
          %v1487 = vadd.f32 %v1350, %v1458
          %v1488 = vadd.f32 %v1351, %v1461
          %v1489 = vadd.f32 %v1352, %v1463
          %v1490 = vadd.f32 %v1353, %v1466
          %v1491 = vadd.f32 %v1354, %v1468
          %v1492 = vadd.f32 %v1355, %v1471
          %v1493 = vadd.f32 %v1356, %v1473
          %v1494 = vadd.f32 %v1357, %v1476
          %v1495 = vadd.f32 %v1358, %v1478
          %1496 = vst [vmem:[#allocation4] sm:$0xff] %v1480
          %1497 = vst [vmem:[#allocation4 + $0x8] sm:$0xff] %v1481
          %1498 = vst [vmem:[#allocation4 + $0x10] sm:$0xff] %v1482
          %1499 = vst [vmem:[#allocation4 + $0x18] sm:$0xff] %v1483
          %1500 = vst [vmem:[#allocation4 + $0x20] sm:$0xff] %v1484
          %1501 = vst [vmem:[#allocation4 + $0x28] sm:$0xff] %v1485
          %1502 = vst [vmem:[#allocation4 + $0x30] sm:$0xff] %v1486
          %1503 = vst [vmem:[#allocation4 + $0x38] sm:$0xff] %v1487
          %1504 = vst [vmem:[#allocation4 + $0x40] sm:$0xff] %v1488
          %1505 = vst [vmem:[#allocation4 + $0x48] sm:$0xff] %v1489
          %1506 = vst [vmem:[#allocation4 + $0x50] sm:$0xff] %v1490
          %1507 = vst [vmem:[#allocation4 + $0x58] sm:$0xff] %v1491
          %1508 = vst [vmem:[#allocation4 + $0x60] sm:$0xff] %v1492
          %1509 = vst [vmem:[#allocation4 + $0x68] sm:$0xff] %v1493
          %1510 = vst [vmem:[#allocation4 + $0x70] sm:$0xff] %v1494
          %1511 = vst [vmem:[#allocation4 + $0x78] sm:$0xff] %v1495
          %1512 = vst.msk [vmem:[#allocation2] sm:$0xff] %vm1230, %v958
          %1513 = vst.msk [vmem:[#allocation2 + $0x8] sm:$0xff] %vm1230, %v959
          %1514 = vst.msk [vmem:[#allocation2 + $0x10] sm:$0xff] %vm1230, %v960
          %1515 = vst.msk [vmem:[#allocation2 + $0x18] sm:$0xff] %vm1230, %v961
          %1516 = vst.msk [vmem:[#allocation2 + $0x20] sm:$0xff] %vm1230, %v962
          %1517 = vst.msk [vmem:[#allocation2 + $0x28] sm:$0xff] %vm1230, %v963
          %1518 = vst.msk [vmem:[#allocation2 + $0x30] sm:$0xff] %vm1230, %v964
          %1519 = vst.msk [vmem:[#allocation2 + $0x38] sm:$0xff] %vm1230, %v965
          %1520 = vst.msk [vmem:[#allocation2 + $0x40] sm:$0xff] %vm1230, %v966
          %1521 = vst.msk [vmem:[#allocation2 + $0x48] sm:$0xff] %vm1230, %v967
          %1522 = vst.msk [vmem:[#allocation2 + $0x50] sm:$0xff] %vm1230, %v968
          %1523 = vst.msk [vmem:[#allocation2 + $0x58] sm:$0xff] %vm1230, %v969
          %1524 = vst.msk [vmem:[#allocation2 + $0x60] sm:$0xff] %vm1230, %v970
          %1525 = vst.msk [vmem:[#allocation2 + $0x68] sm:$0xff] %vm1230, %v971
          %1526 = vst.msk [vmem:[#allocation2 + $0x70] sm:$0xff] %vm1230, %v972
          %1527 = vst.msk [vmem:[#allocation2 + $0x78] sm:$0xff] %vm1230, %v973
        $region163: #{multi_head_attention.4} parent=142 // pred_fallthru
          _
        %p1528 = scmp.le.s32.totalorder %s640, %s641
        // Predicated region
        $region164: #{multi_head_attention.4} parent=142 // pred_check
          %p1529 = pneg %p1528
        $region165: #{multi_head_attention.4} parent=142 // pred_check_branch
          %1531 = sbr.rel (%p1529) target = $region167
        $region166: #{multi_head_attention.4} parent=142 // pred_region
          %v1532 = vld [vmem:[%s535] sm:$0xf]
          %v1533 = vld [vmem:[%s535 + $0x4] sm:$0xf]
          %v1534 = vld [vmem:[%s535 + $0x8] sm:$0xf]
          %v1535 = vld [vmem:[%s535 + $0xc] sm:$0xf]
          %v1536 = vld [vmem:[%s535 + $0x10] sm:$0xf]
          %v1537 = vld [vmem:[%s535 + $0x14] sm:$0xf]
          %v1538 = vld [vmem:[%s535 + $0x18] sm:$0xf]
          %v1539 = vld [vmem:[%s535 + $0x1c] sm:$0xf]
          %v1540 = vld [vmem:[%s535 + $0x20] sm:$0xf]
          %v1541 = vld [vmem:[%s535 + $0x24] sm:$0xf]
          %v1542 = vld [vmem:[%s535 + $0x28] sm:$0xf]
          %v1543 = vld [vmem:[%s535 + $0x2c] sm:$0xf]
          %v1544 = vld [vmem:[%s535 + $0x30] sm:$0xf]
          %v1545 = vld [vmem:[%s535 + $0x34] sm:$0xf]
          %v1546 = vld [vmem:[%s535 + $0x38] sm:$0xf]
          %v1547 = vld [vmem:[%s535 + $0x3c] sm:$0xf]
          %v1548 = vld [vmem:[%s542] sm:$0xf]
          %v1549 = vld [vmem:[%s542 + $0x4] sm:$0xf]
          %v1550 = vld [vmem:[%s542 + $0x8] sm:$0xf]
          %v1551 = vld [vmem:[%s542 + $0xc] sm:$0xf]
          %v1552 = vld [vmem:[%s542 + $0x10] sm:$0xf]
          %v1553 = vld [vmem:[%s542 + $0x14] sm:$0xf]
          %v1554 = vld [vmem:[%s542 + $0x18] sm:$0xf]
          %v1555 = vld [vmem:[%s542 + $0x1c] sm:$0xf]
          %v1556 = vld [vmem:[%s542 + $0x20] sm:$0xf]
          %v1557 = vld [vmem:[%s542 + $0x24] sm:$0xf]
          %v1558 = vld [vmem:[%s542 + $0x28] sm:$0xf]
          %v1559 = vld [vmem:[%s542 + $0x2c] sm:$0xf]
          %v1560 = vld [vmem:[%s542 + $0x30] sm:$0xf]
          %v1561 = vld [vmem:[%s542 + $0x34] sm:$0xf]
          %v1562 = vld [vmem:[%s542 + $0x38] sm:$0xf]
          %v1563 = vld [vmem:[%s542 + $0x3c] sm:$0xf]
          %v1580 = vunpack.c.l.b16 %v1532
          %v1581 = vunpack.c.l.b16 %v1533
          %v1582 = vunpack.c.l.b16 %v1534
          %v1583 = vunpack.c.l.b16 %v1535
          %v1584 = vunpack.c.l.b16 %v1536
          %v1585 = vunpack.c.l.b16 %v1537
          %v1586 = vunpack.c.l.b16 %v1538
          %v1587 = vunpack.c.l.b16 %v1539
          %v1588 = vunpack.c.l.b16 %v1540
          %v1589 = vunpack.c.l.b16 %v1541
          %v1590 = vunpack.c.l.b16 %v1542
          %v1591 = vunpack.c.l.b16 %v1543
          %v1592 = vunpack.c.l.b16 %v1544
          %v1593 = vunpack.c.l.b16 %v1545
          %v1594 = vunpack.c.l.b16 %v1546
          %v1595 = vunpack.c.l.b16 %v1547
          %v1596 = vpack.c.b16 %v1581, %v1580
          %v1597 = vpack.c.b16 %v1583, %v1582
          %v1598 = vpack.c.b16 %v1585, %v1584
          %v1599 = vpack.c.b16 %v1587, %v1586
          %v1600 = vpack.c.b16 %v1589, %v1588
          %v1601 = vpack.c.b16 %v1591, %v1590
          %v1602 = vpack.c.b16 %v1593, %v1592
          %v1603 = vpack.c.b16 %v1595, %v1594
          %v1628 = vunpack.c.l.b16 %v1548
          %v1629 = vunpack.c.l.b16 %v1549
          %v1630 = vunpack.c.l.b16 %v1550
          %v1631 = vunpack.c.l.b16 %v1551
          %v1632 = vunpack.c.l.b16 %v1552
          %v1633 = vunpack.c.l.b16 %v1553
          %v1634 = vunpack.c.l.b16 %v1554
          %v1635 = vunpack.c.l.b16 %v1555
          %v1636 = vunpack.c.l.b16 %v1556
          %v1637 = vunpack.c.l.b16 %v1557
          %v1638 = vunpack.c.l.b16 %v1558
          %v1639 = vunpack.c.l.b16 %v1559
          %v1640 = vunpack.c.l.b16 %v1560
          %v1641 = vunpack.c.l.b16 %v1561
          %v1642 = vunpack.c.l.b16 %v1562
          %v1643 = vunpack.c.l.b16 %v1563
          %v1644 = vpack.c.b16 %v1629, %v1628
          %v1645 = vpack.c.b16 %v1631, %v1630
          %v1646 = vpack.c.b16 %v1633, %v1632
          %v1647 = vpack.c.b16 %v1635, %v1634
          %v1648 = vpack.c.b16 %v1637, %v1636
          %v1649 = vpack.c.b16 %v1639, %v1638
          %v1650 = vpack.c.b16 %v1641, %v1640
          %v1651 = vpack.c.b16 %v1643, %v1642
          %1660 = vmatpush.bf16.xpose.msra.mxu0 %v1651
          %1661 = vmatpush.bf16.xpose.msra.mxu0 %v1650
          %1662 = vmatpush.bf16.xpose.msra.mxu0 %v1649
          %1663 = vmatpush.bf16.xpose.msra.mxu0 %v1648
          %1664 = vmatpush.bf16.xpose.msra.mxu0 %v1647
          %1665 = vmatpush.bf16.xpose.msra.mxu0 %v1646
          %1666 = vmatpush.bf16.xpose.msra.mxu0 %v1645
          %1667 = vmatpush.bf16.xpose.msra.mxu0 %v1644
          %1668 = vmatmul.bf16.gmra.mxu0 %v1596
          %v1669 = vpop.f32.mrf.mxu0
          %v1670 = vadd.f32 0.0, %v1669
          %v1671 = vpop.f32.mrf.mxu0
          %v1672 = vadd.f32 0.0, %v1671
          %1673 = vmatmul.bf16.gmra.mxu0 %v1597
          %v1674 = vpop.f32.mrf.mxu0
          %v1675 = vadd.f32 0.0, %v1674
          %v1676 = vpop.f32.mrf.mxu0
          %v1677 = vadd.f32 0.0, %v1676
          %1678 = vmatmul.bf16.gmra.mxu0 %v1598
          %v1679 = vpop.f32.mrf.mxu0
          %v1680 = vadd.f32 0.0, %v1679
          %v1681 = vpop.f32.mrf.mxu0
          %v1682 = vadd.f32 0.0, %v1681
          %1683 = vmatmul.bf16.gmra.mxu0 %v1599
          %v1684 = vpop.f32.mrf.mxu0
          %v1685 = vadd.f32 0.0, %v1684
          %v1686 = vpop.f32.mrf.mxu0
          %v1687 = vadd.f32 0.0, %v1686
          %1688 = vmatmul.bf16.gmra.mxu0 %v1600
          %v1689 = vpop.f32.mrf.mxu0
          %v1690 = vadd.f32 0.0, %v1689
          %v1691 = vpop.f32.mrf.mxu0
          %v1692 = vadd.f32 0.0, %v1691
          %1693 = vmatmul.bf16.gmra.mxu0 %v1601
          %v1694 = vpop.f32.mrf.mxu0
          %v1695 = vadd.f32 0.0, %v1694
          %v1696 = vpop.f32.mrf.mxu0
          %v1697 = vadd.f32 0.0, %v1696
          %1698 = vmatmul.bf16.gmra.mxu0 %v1602
          %v1699 = vpop.f32.mrf.mxu0
          %v1700 = vadd.f32 0.0, %v1699
          %v1701 = vpop.f32.mrf.mxu0
          %v1702 = vadd.f32 0.0, %v1701
          %1703 = vmatmul.bf16.gmra.mxu0 %v1603
          %v1704 = vpop.f32.mrf.mxu0
          %v1705 = vadd.f32 0.0, %v1704
          %v1706 = vpop.f32.mrf.mxu0
          %v1707 = vadd.f32 0.0, %v1706
          %1708 = vdwg.mxu0
          %v1709 = vmul.f32 %v1670, 0.088388346
          %v1710 = vmul.f32 %v1672, 0.088388346
          %v1711 = vmul.f32 %v1675, 0.088388346
          %v1712 = vmul.f32 %v1677, 0.088388346
          %v1713 = vmul.f32 %v1680, 0.088388346
          %v1714 = vmul.f32 %v1682, 0.088388346
          %v1715 = vmul.f32 %v1685, 0.088388346
          %v1716 = vmul.f32 %v1687, 0.088388346
          %v1717 = vmul.f32 %v1690, 0.088388346
          %v1718 = vmul.f32 %v1692, 0.088388346
          %v1719 = vmul.f32 %v1695, 0.088388346
          %v1720 = vmul.f32 %v1697, 0.088388346
          %v1721 = vmul.f32 %v1700, 0.088388346
          %v1722 = vmul.f32 %v1702, 0.088388346
          %v1723 = vmul.f32 %v1705, 0.088388346
          %v1724 = vmul.f32 %v1707, 0.088388346
          %v1725 = vld [vmem:[#allocation2] sm:$0xff]
          %v1726 = vld [vmem:[#allocation2 + $0x8] sm:$0xff]
          %v1727 = vld [vmem:[#allocation2 + $0x10] sm:$0xff]
          %v1728 = vld [vmem:[#allocation2 + $0x18] sm:$0xff]
          %v1729 = vld [vmem:[#allocation2 + $0x20] sm:$0xff]
          %v1730 = vld [vmem:[#allocation2 + $0x28] sm:$0xff]
          %v1731 = vld [vmem:[#allocation2 + $0x30] sm:$0xff]
          %v1732 = vld [vmem:[#allocation2 + $0x38] sm:$0xff]
          %v1733 = vld [vmem:[#allocation2 + $0x40] sm:$0xff]
          %v1734 = vld [vmem:[#allocation2 + $0x48] sm:$0xff]
          %v1735 = vld [vmem:[#allocation2 + $0x50] sm:$0xff]
          %v1736 = vld [vmem:[#allocation2 + $0x58] sm:$0xff]
          %v1737 = vld [vmem:[#allocation2 + $0x60] sm:$0xff]
          %v1738 = vld [vmem:[#allocation2 + $0x68] sm:$0xff]
          %v1739 = vld [vmem:[#allocation2 + $0x70] sm:$0xff]
          %v1740 = vld [vmem:[#allocation2 + $0x78] sm:$0xff]
          %1741 = vmax.xlane.f32.xlu0 %v1709
          %v1742 = vpop.xlane.xlu0 %1741
          %1743 = vmax.xlane.f32.xlu0 %v1710
          %v1744 = vpop.xlane.xlu0 %1743
          %1745 = vmax.xlane.f32.xlu0 %v1711
          %v1746 = vpop.xlane.xlu0 %1745
          %1747 = vmax.xlane.f32.xlu0 %v1712
          %v1748 = vpop.xlane.xlu0 %1747
          %1749 = vmax.xlane.f32.xlu0 %v1713
          %v1750 = vpop.xlane.xlu0 %1749
          %1751 = vmax.xlane.f32.xlu0 %v1714
          %v1752 = vpop.xlane.xlu0 %1751
          %1753 = vmax.xlane.f32.xlu0 %v1715
          %v1754 = vpop.xlane.xlu0 %1753
          %1755 = vmax.xlane.f32.xlu0 %v1716
          %v1756 = vpop.xlane.xlu0 %1755
          %1757 = vmax.xlane.f32.xlu0 %v1717
          %v1758 = vpop.xlane.xlu0 %1757
          %1759 = vmax.xlane.f32.xlu0 %v1718
          %v1760 = vpop.xlane.xlu0 %1759
          %1761 = vmax.xlane.f32.xlu0 %v1719
          %v1762 = vpop.xlane.xlu0 %1761
          %1763 = vmax.xlane.f32.xlu0 %v1720
          %v1764 = vpop.xlane.xlu0 %1763
          %1765 = vmax.xlane.f32.xlu0 %v1721
          %v1766 = vpop.xlane.xlu0 %1765
          %1767 = vmax.xlane.f32.xlu0 %v1722
          %v1768 = vpop.xlane.xlu0 %1767
          %1769 = vmax.xlane.f32.xlu0 %v1723
          %v1770 = vpop.xlane.xlu0 %1769
          %1771 = vmax.xlane.f32.xlu0 %v1724
          %v1772 = vpop.xlane.xlu0 %1771
          %v1773 = vmax.f32 %v1725, %v1742
          %v1774 = vmax.f32 %v1726, %v1744
          %v1775 = vmax.f32 %v1727, %v1746
          %v1776 = vmax.f32 %v1728, %v1748
          %v1777 = vmax.f32 %v1729, %v1750
          %v1778 = vmax.f32 %v1730, %v1752
          %v1779 = vmax.f32 %v1731, %v1754
          %v1780 = vmax.f32 %v1732, %v1756
          %v1781 = vmax.f32 %v1733, %v1758
          %v1782 = vmax.f32 %v1734, %v1760
          %v1783 = vmax.f32 %v1735, %v1762
          %v1784 = vmax.f32 %v1736, %v1764
          %v1785 = vmax.f32 %v1737, %v1766
          %v1786 = vmax.f32 %v1738, %v1768
          %v1787 = vmax.f32 %v1739, %v1770
          %v1788 = vmax.f32 %v1740, %v1772
          %v1789 = vsub.f32 %v1725, %v1773
          %v1790 = vsub.f32 %v1726, %v1774
          %v1791 = vsub.f32 %v1727, %v1775
          %v1792 = vsub.f32 %v1728, %v1776
          %v1793 = vsub.f32 %v1729, %v1777
          %v1794 = vsub.f32 %v1730, %v1778
          %v1795 = vsub.f32 %v1731, %v1779
          %v1796 = vsub.f32 %v1732, %v1780
          %v1797 = vsub.f32 %v1733, %v1781
          %v1798 = vsub.f32 %v1734, %v1782
          %v1799 = vsub.f32 %v1735, %v1783
          %v1800 = vsub.f32 %v1736, %v1784
          %v1801 = vsub.f32 %v1737, %v1785
          %v1802 = vsub.f32 %v1738, %v1786
          %v1803 = vsub.f32 %v1739, %v1787
          %v1804 = vsub.f32 %v1740, %v1788
          %v1805 = vmul.f32 %v1789, 1.442695
          %v1806 = vpow.pop %v1805
          %v1807 = vmul.f32 %v1790, 1.442695
          %v1808 = vpow.pop %v1807
          %v1809 = vmul.f32 %v1791, 1.442695
          %v1810 = vpow.pop %v1809
          %v1811 = vmul.f32 %v1792, 1.442695
          %v1812 = vpow.pop %v1811
          %v1813 = vmul.f32 %v1793, 1.442695
          %v1814 = vpow.pop %v1813
          %v1815 = vmul.f32 %v1794, 1.442695
          %v1816 = vpow.pop %v1815
          %v1817 = vmul.f32 %v1795, 1.442695
          %v1818 = vpow.pop %v1817
          %v1819 = vmul.f32 %v1796, 1.442695
          %v1820 = vpow.pop %v1819
          %v1821 = vmul.f32 %v1797, 1.442695
          %v1822 = vpow.pop %v1821
          %v1823 = vmul.f32 %v1798, 1.442695
          %v1824 = vpow.pop %v1823
          %v1825 = vmul.f32 %v1799, 1.442695
          %v1826 = vpow.pop %v1825
          %v1827 = vmul.f32 %v1800, 1.442695
          %v1828 = vpow.pop %v1827
          %v1829 = vmul.f32 %v1801, 1.442695
          %v1830 = vpow.pop %v1829
          %v1831 = vmul.f32 %v1802, 1.442695
          %v1832 = vpow.pop %v1831
          %v1833 = vmul.f32 %v1803, 1.442695
          %v1834 = vpow.pop %v1833
          %v1835 = vmul.f32 %v1804, 1.442695
          %v1836 = vpow.pop %v1835
          %1838 = vset.pattern.permute.xlu0 0
          %1839 = vperm.xlu0 %1838, %v1773
          %v1840 = vpop.permute.xlu0 %1839
          %1843 = vset.pattern.permute.xlu0 0
          %1844 = vperm.xlu0 %1843, %v1774
          %v1845 = vpop.permute.xlu0 %1844
          %1848 = vset.pattern.permute.xlu0 0
          %1849 = vperm.xlu0 %1848, %v1775
          %v1850 = vpop.permute.xlu0 %1849
          %1853 = vset.pattern.permute.xlu0 0
          %1854 = vperm.xlu0 %1853, %v1776
          %v1855 = vpop.permute.xlu0 %1854
          %1858 = vset.pattern.permute.xlu0 0
          %1859 = vperm.xlu0 %1858, %v1777
          %v1860 = vpop.permute.xlu0 %1859
          %1863 = vset.pattern.permute.xlu0 0
          %1864 = vperm.xlu0 %1863, %v1778
          %v1865 = vpop.permute.xlu0 %1864
          %1868 = vset.pattern.permute.xlu0 0
          %1869 = vperm.xlu0 %1868, %v1779
          %v1870 = vpop.permute.xlu0 %1869
          %1873 = vset.pattern.permute.xlu0 0
          %1874 = vperm.xlu0 %1873, %v1780
          %v1875 = vpop.permute.xlu0 %1874
          %1878 = vset.pattern.permute.xlu0 0
          %1879 = vperm.xlu0 %1878, %v1781
          %v1880 = vpop.permute.xlu0 %1879
          %1883 = vset.pattern.permute.xlu0 0
          %1884 = vperm.xlu0 %1883, %v1782
          %v1885 = vpop.permute.xlu0 %1884
          %1888 = vset.pattern.permute.xlu0 0
          %1889 = vperm.xlu0 %1888, %v1783
          %v1890 = vpop.permute.xlu0 %1889
          %1893 = vset.pattern.permute.xlu0 0
          %1894 = vperm.xlu0 %1893, %v1784
          %v1895 = vpop.permute.xlu0 %1894
          %1898 = vset.pattern.permute.xlu0 0
          %1899 = vperm.xlu0 %1898, %v1785
          %v1900 = vpop.permute.xlu0 %1899
          %1903 = vset.pattern.permute.xlu0 0
          %1904 = vperm.xlu0 %1903, %v1786
          %v1905 = vpop.permute.xlu0 %1904
          %1908 = vset.pattern.permute.xlu0 0
          %1909 = vperm.xlu0 %1908, %v1787
          %v1910 = vpop.permute.xlu0 %1909
          %1913 = vset.pattern.permute.xlu0 0
          %1914 = vperm.xlu0 %1913, %v1788
          %v1915 = vpop.permute.xlu0 %1914
          %v1917 = vsub.f32 %v1709, %v1840
          %v1918 = vsub.f32 %v1710, %v1845
          %v1919 = vsub.f32 %v1711, %v1850
          %v1920 = vsub.f32 %v1712, %v1855
          %v1921 = vsub.f32 %v1713, %v1860
          %v1922 = vsub.f32 %v1714, %v1865
          %v1923 = vsub.f32 %v1715, %v1870
          %v1924 = vsub.f32 %v1716, %v1875
          %v1925 = vsub.f32 %v1717, %v1880
          %v1926 = vsub.f32 %v1718, %v1885
          %v1927 = vsub.f32 %v1719, %v1890
          %v1928 = vsub.f32 %v1720, %v1895
          %v1929 = vsub.f32 %v1721, %v1900
          %v1930 = vsub.f32 %v1722, %v1905
          %v1931 = vsub.f32 %v1723, %v1910
          %v1932 = vsub.f32 %v1724, %v1915
          %v1933 = vmul.f32 %v1917, 1.442695
          %v1934 = vpow.pop %v1933
          %v1935 = vmul.f32 %v1918, 1.442695
          %v1936 = vpow.pop %v1935
          %v1937 = vmul.f32 %v1919, 1.442695
          %v1938 = vpow.pop %v1937
          %v1939 = vmul.f32 %v1920, 1.442695
          %v1940 = vpow.pop %v1939
          %v1941 = vmul.f32 %v1921, 1.442695
          %v1942 = vpow.pop %v1941
          %v1943 = vmul.f32 %v1922, 1.442695
          %v1944 = vpow.pop %v1943
          %v1945 = vmul.f32 %v1923, 1.442695
          %v1946 = vpow.pop %v1945
          %v1947 = vmul.f32 %v1924, 1.442695
          %v1948 = vpow.pop %v1947
          %v1949 = vmul.f32 %v1925, 1.442695
          %v1950 = vpow.pop %v1949
          %v1951 = vmul.f32 %v1926, 1.442695
          %v1952 = vpow.pop %v1951
          %v1953 = vmul.f32 %v1927, 1.442695
          %v1954 = vpow.pop %v1953
          %v1955 = vmul.f32 %v1928, 1.442695
          %v1956 = vpow.pop %v1955
          %v1957 = vmul.f32 %v1929, 1.442695
          %v1958 = vpow.pop %v1957
          %v1959 = vmul.f32 %v1930, 1.442695
          %v1960 = vpow.pop %v1959
          %v1961 = vmul.f32 %v1931, 1.442695
          %v1962 = vpow.pop %v1961
          %v1963 = vmul.f32 %v1932, 1.442695
          %v1964 = vpow.pop %v1963
          %v1965 = vld [vmem:[#allocation3] sm:$0xff]
          %v1966 = vld [vmem:[#allocation3 + $0x8] sm:$0xff]
          %v1967 = vld [vmem:[#allocation3 + $0x10] sm:$0xff]
          %v1968 = vld [vmem:[#allocation3 + $0x18] sm:$0xff]
          %v1969 = vld [vmem:[#allocation3 + $0x20] sm:$0xff]
          %v1970 = vld [vmem:[#allocation3 + $0x28] sm:$0xff]
          %v1971 = vld [vmem:[#allocation3 + $0x30] sm:$0xff]
          %v1972 = vld [vmem:[#allocation3 + $0x38] sm:$0xff]
          %v1973 = vld [vmem:[#allocation3 + $0x40] sm:$0xff]
          %v1974 = vld [vmem:[#allocation3 + $0x48] sm:$0xff]
          %v1975 = vld [vmem:[#allocation3 + $0x50] sm:$0xff]
          %v1976 = vld [vmem:[#allocation3 + $0x58] sm:$0xff]
          %v1977 = vld [vmem:[#allocation3 + $0x60] sm:$0xff]
          %v1978 = vld [vmem:[#allocation3 + $0x68] sm:$0xff]
          %v1979 = vld [vmem:[#allocation3 + $0x70] sm:$0xff]
          %v1980 = vld [vmem:[#allocation3 + $0x78] sm:$0xff]
          %v1981 = vmul.f32 %v1806, %v1965
          %v1982 = vmul.f32 %v1808, %v1966
          %v1983 = vmul.f32 %v1810, %v1967
          %v1984 = vmul.f32 %v1812, %v1968
          %v1985 = vmul.f32 %v1814, %v1969
          %v1986 = vmul.f32 %v1816, %v1970
          %v1987 = vmul.f32 %v1818, %v1971
          %v1988 = vmul.f32 %v1820, %v1972
          %v1989 = vmul.f32 %v1822, %v1973
          %v1990 = vmul.f32 %v1824, %v1974
          %v1991 = vmul.f32 %v1826, %v1975
          %v1992 = vmul.f32 %v1828, %v1976
          %v1993 = vmul.f32 %v1830, %v1977
          %v1994 = vmul.f32 %v1832, %v1978
          %v1995 = vmul.f32 %v1834, %v1979
          %v1996 = vmul.f32 %v1836, %v1980
          %1997 = vadd.xlane.f32.xlu0 %v1934
          %v1998 = vpop.xlane.xlu0 %1997
          %1999 = vadd.xlane.f32.xlu0 %v1936
          %v2000 = vpop.xlane.xlu0 %1999
          %2001 = vadd.xlane.f32.xlu0 %v1938
          %v2002 = vpop.xlane.xlu0 %2001
          %2003 = vadd.xlane.f32.xlu0 %v1940
          %v2004 = vpop.xlane.xlu0 %2003
          %2005 = vadd.xlane.f32.xlu0 %v1942
          %v2006 = vpop.xlane.xlu0 %2005
          %2007 = vadd.xlane.f32.xlu0 %v1944
          %v2008 = vpop.xlane.xlu0 %2007
          %2009 = vadd.xlane.f32.xlu0 %v1946
          %v2010 = vpop.xlane.xlu0 %2009
          %2011 = vadd.xlane.f32.xlu0 %v1948
          %v2012 = vpop.xlane.xlu0 %2011
          %2013 = vadd.xlane.f32.xlu0 %v1950
          %v2014 = vpop.xlane.xlu0 %2013
          %2015 = vadd.xlane.f32.xlu0 %v1952
          %v2016 = vpop.xlane.xlu0 %2015
          %2017 = vadd.xlane.f32.xlu0 %v1954
          %v2018 = vpop.xlane.xlu0 %2017
          %2019 = vadd.xlane.f32.xlu0 %v1956
          %v2020 = vpop.xlane.xlu0 %2019
          %2021 = vadd.xlane.f32.xlu0 %v1958
          %v2022 = vpop.xlane.xlu0 %2021
          %2023 = vadd.xlane.f32.xlu0 %v1960
          %v2024 = vpop.xlane.xlu0 %2023
          %2025 = vadd.xlane.f32.xlu0 %v1962
          %v2026 = vpop.xlane.xlu0 %2025
          %2027 = vadd.xlane.f32.xlu0 %v1964
          %v2028 = vpop.xlane.xlu0 %2027
          %v2029 = vadd.f32 %v1981, %v1998
          %v2030 = vadd.f32 %v1982, %v2000
          %v2031 = vadd.f32 %v1983, %v2002
          %v2032 = vadd.f32 %v1984, %v2004
          %v2033 = vadd.f32 %v1985, %v2006
          %v2034 = vadd.f32 %v1986, %v2008
          %v2035 = vadd.f32 %v1987, %v2010
          %v2036 = vadd.f32 %v1988, %v2012
          %v2037 = vadd.f32 %v1989, %v2014
          %v2038 = vadd.f32 %v1990, %v2016
          %v2039 = vadd.f32 %v1991, %v2018
          %v2040 = vadd.f32 %v1992, %v2020
          %v2041 = vadd.f32 %v1993, %v2022
          %v2042 = vadd.f32 %v1994, %v2024
          %v2043 = vadd.f32 %v1995, %v2026
          %v2044 = vadd.f32 %v1996, %v2028
          %vm2045 = vcmask 7168
          %2046 = vst.msk [vmem:[#allocation3] sm:$0xff] %vm2045, %v2029
          %2047 = vst.msk [vmem:[#allocation3 + $0x8] sm:$0xff] %vm2045, %v2030
          %2048 = vst.msk [vmem:[#allocation3 + $0x10] sm:$0xff] %vm2045, %v2031
          %2049 = vst.msk [vmem:[#allocation3 + $0x18] sm:$0xff] %vm2045, %v2032
          %2050 = vst.msk [vmem:[#allocation3 + $0x20] sm:$0xff] %vm2045, %v2033
          %2051 = vst.msk [vmem:[#allocation3 + $0x28] sm:$0xff] %vm2045, %v2034
          %2052 = vst.msk [vmem:[#allocation3 + $0x30] sm:$0xff] %vm2045, %v2035
          %2053 = vst.msk [vmem:[#allocation3 + $0x38] sm:$0xff] %vm2045, %v2036
          %2054 = vst.msk [vmem:[#allocation3 + $0x40] sm:$0xff] %vm2045, %v2037
          %2055 = vst.msk [vmem:[#allocation3 + $0x48] sm:$0xff] %vm2045, %v2038
          %2056 = vst.msk [vmem:[#allocation3 + $0x50] sm:$0xff] %vm2045, %v2039
          %2057 = vst.msk [vmem:[#allocation3 + $0x58] sm:$0xff] %vm2045, %v2040
          %2058 = vst.msk [vmem:[#allocation3 + $0x60] sm:$0xff] %vm2045, %v2041
          %2059 = vst.msk [vmem:[#allocation3 + $0x68] sm:$0xff] %vm2045, %v2042
          %2060 = vst.msk [vmem:[#allocation3 + $0x70] sm:$0xff] %vm2045, %v2043
          %2061 = vst.msk [vmem:[#allocation3 + $0x78] sm:$0xff] %vm2045, %v2044
          %v2062 = vld [vmem:[#allocation4] sm:$0xff]
          %v2063 = vld [vmem:[#allocation4 + $0x8] sm:$0xff]
          %v2064 = vld [vmem:[#allocation4 + $0x10] sm:$0xff]
          %v2065 = vld [vmem:[#allocation4 + $0x18] sm:$0xff]
          %v2066 = vld [vmem:[#allocation4 + $0x20] sm:$0xff]
          %v2067 = vld [vmem:[#allocation4 + $0x28] sm:$0xff]
          %v2068 = vld [vmem:[#allocation4 + $0x30] sm:$0xff]
          %v2069 = vld [vmem:[#allocation4 + $0x38] sm:$0xff]
          %v2070 = vld [vmem:[#allocation4 + $0x40] sm:$0xff]
          %v2071 = vld [vmem:[#allocation4 + $0x48] sm:$0xff]
          %v2072 = vld [vmem:[#allocation4 + $0x50] sm:$0xff]
          %v2073 = vld [vmem:[#allocation4 + $0x58] sm:$0xff]
          %v2074 = vld [vmem:[#allocation4 + $0x60] sm:$0xff]
          %v2075 = vld [vmem:[#allocation4 + $0x68] sm:$0xff]
          %v2076 = vld [vmem:[#allocation4 + $0x70] sm:$0xff]
          %v2077 = vld [vmem:[#allocation4 + $0x78] sm:$0xff]
          %2079 = vset.pattern.permute.xlu0 0
          %2080 = vperm.xlu0 %2079, %v1806
          %v2081 = vpop.permute.xlu0 %2080
          %2084 = vset.pattern.permute.xlu0 0
          %2085 = vperm.xlu0 %2084, %v1808
          %v2086 = vpop.permute.xlu0 %2085
          %2089 = vset.pattern.permute.xlu0 0
          %2090 = vperm.xlu0 %2089, %v1810
          %v2091 = vpop.permute.xlu0 %2090
          %2094 = vset.pattern.permute.xlu0 0
          %2095 = vperm.xlu0 %2094, %v1812
          %v2096 = vpop.permute.xlu0 %2095
          %2099 = vset.pattern.permute.xlu0 0
          %2100 = vperm.xlu0 %2099, %v1814
          %v2101 = vpop.permute.xlu0 %2100
          %2104 = vset.pattern.permute.xlu0 0
          %2105 = vperm.xlu0 %2104, %v1816
          %v2106 = vpop.permute.xlu0 %2105
          %2109 = vset.pattern.permute.xlu0 0
          %2110 = vperm.xlu0 %2109, %v1818
          %v2111 = vpop.permute.xlu0 %2110
          %2114 = vset.pattern.permute.xlu0 0
          %2115 = vperm.xlu0 %2114, %v1820
          %v2116 = vpop.permute.xlu0 %2115
          %2119 = vset.pattern.permute.xlu0 0
          %2120 = vperm.xlu0 %2119, %v1822
          %v2121 = vpop.permute.xlu0 %2120
          %2124 = vset.pattern.permute.xlu0 0
          %2125 = vperm.xlu0 %2124, %v1824
          %v2126 = vpop.permute.xlu0 %2125
          %2129 = vset.pattern.permute.xlu0 0
          %2130 = vperm.xlu0 %2129, %v1826
          %v2131 = vpop.permute.xlu0 %2130
          %2134 = vset.pattern.permute.xlu0 0
          %2135 = vperm.xlu0 %2134, %v1828
          %v2136 = vpop.permute.xlu0 %2135
          %2139 = vset.pattern.permute.xlu0 0
          %2140 = vperm.xlu0 %2139, %v1830
          %v2141 = vpop.permute.xlu0 %2140
          %2144 = vset.pattern.permute.xlu0 0
          %2145 = vperm.xlu0 %2144, %v1832
          %v2146 = vpop.permute.xlu0 %2145
          %2149 = vset.pattern.permute.xlu0 0
          %2150 = vperm.xlu0 %2149, %v1834
          %v2151 = vpop.permute.xlu0 %2150
          %2154 = vset.pattern.permute.xlu0 0
          %2155 = vperm.xlu0 %2154, %v1836
          %v2156 = vpop.permute.xlu0 %2155
          %v2158 = vmul.f32 %v2081, %v2062
          %v2159 = vmul.f32 %v2086, %v2063
          %v2160 = vmul.f32 %v2091, %v2064
          %v2161 = vmul.f32 %v2096, %v2065
          %v2162 = vmul.f32 %v2101, %v2066
          %v2163 = vmul.f32 %v2106, %v2067
          %v2164 = vmul.f32 %v2111, %v2068
          %v2165 = vmul.f32 %v2116, %v2069
          %v2166 = vmul.f32 %v2121, %v2070
          %v2167 = vmul.f32 %v2126, %v2071
          %v2168 = vmul.f32 %v2131, %v2072
          %v2169 = vmul.f32 %v2136, %v2073
          %v2170 = vmul.f32 %v2141, %v2074
          %v2171 = vmul.f32 %v2146, %v2075
          %v2172 = vmul.f32 %v2151, %v2076
          %v2173 = vmul.f32 %v2156, %v2077
          %v2174 = vpack.c.bf16 %v1936, %v1934
          %v2175 = vpack.c.bf16 %v1940, %v1938
          %v2176 = vpack.c.bf16 %v1944, %v1942
          %v2177 = vpack.c.bf16 %v1948, %v1946
          %v2178 = vpack.c.bf16 %v1952, %v1950
          %v2179 = vpack.c.bf16 %v1956, %v1954
          %v2180 = vpack.c.bf16 %v1960, %v1958
          %v2181 = vpack.c.bf16 %v1964, %v1962
          %v2182 = vld [vmem:[%s549] sm:$0xf]
          %v2183 = vld [vmem:[%s549 + $0x4] sm:$0xf]
          %v2184 = vld [vmem:[%s549 + $0x8] sm:$0xf]
          %v2185 = vld [vmem:[%s549 + $0xc] sm:$0xf]
          %v2186 = vld [vmem:[%s549 + $0x10] sm:$0xf]
          %v2187 = vld [vmem:[%s549 + $0x14] sm:$0xf]
          %v2188 = vld [vmem:[%s549 + $0x18] sm:$0xf]
          %v2189 = vld [vmem:[%s549 + $0x1c] sm:$0xf]
          %v2190 = vld [vmem:[%s549 + $0x20] sm:$0xf]
          %v2191 = vld [vmem:[%s549 + $0x24] sm:$0xf]
          %v2192 = vld [vmem:[%s549 + $0x28] sm:$0xf]
          %v2193 = vld [vmem:[%s549 + $0x2c] sm:$0xf]
          %v2194 = vld [vmem:[%s549 + $0x30] sm:$0xf]
          %v2195 = vld [vmem:[%s549 + $0x34] sm:$0xf]
          %v2196 = vld [vmem:[%s549 + $0x38] sm:$0xf]
          %v2197 = vld [vmem:[%s549 + $0x3c] sm:$0xf]
          %v2214 = vunpack.c.l.b16 %v2182
          %v2215 = vunpack.c.l.b16 %v2183
          %v2216 = vunpack.c.l.b16 %v2184
          %v2217 = vunpack.c.l.b16 %v2185
          %v2218 = vunpack.c.l.b16 %v2186
          %v2219 = vunpack.c.l.b16 %v2187
          %v2220 = vunpack.c.l.b16 %v2188
          %v2221 = vunpack.c.l.b16 %v2189
          %v2222 = vunpack.c.l.b16 %v2190
          %v2223 = vunpack.c.l.b16 %v2191
          %v2224 = vunpack.c.l.b16 %v2192
          %v2225 = vunpack.c.l.b16 %v2193
          %v2226 = vunpack.c.l.b16 %v2194
          %v2227 = vunpack.c.l.b16 %v2195
          %v2228 = vunpack.c.l.b16 %v2196
          %v2229 = vunpack.c.l.b16 %v2197
          %v2230 = vpack.c.b16 %v2215, %v2214
          %v2231 = vpack.c.b16 %v2217, %v2216
          %v2232 = vpack.c.b16 %v2219, %v2218
          %v2233 = vpack.c.b16 %v2221, %v2220
          %v2234 = vpack.c.b16 %v2223, %v2222
          %v2235 = vpack.c.b16 %v2225, %v2224
          %v2236 = vpack.c.b16 %v2227, %v2226
          %v2237 = vpack.c.b16 %v2229, %v2228
          %2246 = vmatpush.bf16.msra.mxu0 %v2237
          %2247 = vmatpush.bf16.msra.mxu0 %v2236
          %2248 = vmatpush.bf16.msra.mxu0 %v2235
          %2249 = vmatpush.bf16.msra.mxu0 %v2234
          %2250 = vmatpush.bf16.msra.mxu0 %v2233
          %2251 = vmatpush.bf16.msra.mxu0 %v2232
          %2252 = vmatpush.bf16.msra.mxu0 %v2231
          %2253 = vmatpush.bf16.msra.mxu0 %v2230
          %2254 = vmatmul.bf16.gmra.mxu0 %v2174
          %v2255 = vpop.f32.mrf.mxu0
          %v2256 = vadd.f32 0.0, %v2255
          %v2257 = vpop.f32.mrf.mxu0
          %v2258 = vadd.f32 0.0, %v2257
          %2259 = vmatmul.bf16.gmra.mxu0 %v2175
          %v2260 = vpop.f32.mrf.mxu0
          %v2261 = vadd.f32 0.0, %v2260
          %v2262 = vpop.f32.mrf.mxu0
          %v2263 = vadd.f32 0.0, %v2262
          %2264 = vmatmul.bf16.gmra.mxu0 %v2176
          %v2265 = vpop.f32.mrf.mxu0
          %v2266 = vadd.f32 0.0, %v2265
          %v2267 = vpop.f32.mrf.mxu0
          %v2268 = vadd.f32 0.0, %v2267
          %2269 = vmatmul.bf16.gmra.mxu0 %v2177
          %v2270 = vpop.f32.mrf.mxu0
          %v2271 = vadd.f32 0.0, %v2270
          %v2272 = vpop.f32.mrf.mxu0
          %v2273 = vadd.f32 0.0, %v2272
          %2274 = vmatmul.bf16.gmra.mxu0 %v2178
          %v2275 = vpop.f32.mrf.mxu0
          %v2276 = vadd.f32 0.0, %v2275
          %v2277 = vpop.f32.mrf.mxu0
          %v2278 = vadd.f32 0.0, %v2277
          %2279 = vmatmul.bf16.gmra.mxu0 %v2179
          %v2280 = vpop.f32.mrf.mxu0
          %v2281 = vadd.f32 0.0, %v2280
          %v2282 = vpop.f32.mrf.mxu0
          %v2283 = vadd.f32 0.0, %v2282
          %2284 = vmatmul.bf16.gmra.mxu0 %v2180
          %v2285 = vpop.f32.mrf.mxu0
          %v2286 = vadd.f32 0.0, %v2285
          %v2287 = vpop.f32.mrf.mxu0
          %v2288 = vadd.f32 0.0, %v2287
          %2289 = vmatmul.bf16.gmra.mxu0 %v2181
          %v2290 = vpop.f32.mrf.mxu0
          %v2291 = vadd.f32 0.0, %v2290
          %v2292 = vpop.f32.mrf.mxu0
          %v2293 = vadd.f32 0.0, %v2292
          %2294 = vdwg.mxu0
          %v2295 = vadd.f32 %v2158, %v2256
          %v2296 = vadd.f32 %v2159, %v2258
          %v2297 = vadd.f32 %v2160, %v2261
          %v2298 = vadd.f32 %v2161, %v2263
          %v2299 = vadd.f32 %v2162, %v2266
          %v2300 = vadd.f32 %v2163, %v2268
          %v2301 = vadd.f32 %v2164, %v2271
          %v2302 = vadd.f32 %v2165, %v2273
          %v2303 = vadd.f32 %v2166, %v2276
          %v2304 = vadd.f32 %v2167, %v2278
          %v2305 = vadd.f32 %v2168, %v2281
          %v2306 = vadd.f32 %v2169, %v2283
          %v2307 = vadd.f32 %v2170, %v2286
          %v2308 = vadd.f32 %v2171, %v2288
          %v2309 = vadd.f32 %v2172, %v2291
          %v2310 = vadd.f32 %v2173, %v2293
          %2311 = vst [vmem:[#allocation4] sm:$0xff] %v2295
          %2312 = vst [vmem:[#allocation4 + $0x8] sm:$0xff] %v2296
          %2313 = vst [vmem:[#allocation4 + $0x10] sm:$0xff] %v2297
          %2314 = vst [vmem:[#allocation4 + $0x18] sm:$0xff] %v2298
          %2315 = vst [vmem:[#allocation4 + $0x20] sm:$0xff] %v2299
          %2316 = vst [vmem:[#allocation4 + $0x28] sm:$0xff] %v2300
          %2317 = vst [vmem:[#allocation4 + $0x30] sm:$0xff] %v2301
          %2318 = vst [vmem:[#allocation4 + $0x38] sm:$0xff] %v2302
          %2319 = vst [vmem:[#allocation4 + $0x40] sm:$0xff] %v2303
          %2320 = vst [vmem:[#allocation4 + $0x48] sm:$0xff] %v2304
          %2321 = vst [vmem:[#allocation4 + $0x50] sm:$0xff] %v2305
          %2322 = vst [vmem:[#allocation4 + $0x58] sm:$0xff] %v2306
          %2323 = vst [vmem:[#allocation4 + $0x60] sm:$0xff] %v2307
          %2324 = vst [vmem:[#allocation4 + $0x68] sm:$0xff] %v2308
          %2325 = vst [vmem:[#allocation4 + $0x70] sm:$0xff] %v2309
          %2326 = vst [vmem:[#allocation4 + $0x78] sm:$0xff] %v2310
          %2327 = vst.msk [vmem:[#allocation2] sm:$0xff] %vm2045, %v1773
          %2328 = vst.msk [vmem:[#allocation2 + $0x8] sm:$0xff] %vm2045, %v1774
          %2329 = vst.msk [vmem:[#allocation2 + $0x10] sm:$0xff] %vm2045, %v1775
          %2330 = vst.msk [vmem:[#allocation2 + $0x18] sm:$0xff] %vm2045, %v1776
          %2331 = vst.msk [vmem:[#allocation2 + $0x20] sm:$0xff] %vm2045, %v1777
          %2332 = vst.msk [vmem:[#allocation2 + $0x28] sm:$0xff] %vm2045, %v1778
          %2333 = vst.msk [vmem:[#allocation2 + $0x30] sm:$0xff] %vm2045, %v1779
          %2334 = vst.msk [vmem:[#allocation2 + $0x38] sm:$0xff] %vm2045, %v1780
          %2335 = vst.msk [vmem:[#allocation2 + $0x40] sm:$0xff] %vm2045, %v1781
          %2336 = vst.msk [vmem:[#allocation2 + $0x48] sm:$0xff] %vm2045, %v1782
          %2337 = vst.msk [vmem:[#allocation2 + $0x50] sm:$0xff] %vm2045, %v1783
          %2338 = vst.msk [vmem:[#allocation2 + $0x58] sm:$0xff] %vm2045, %v1784
          %2339 = vst.msk [vmem:[#allocation2 + $0x60] sm:$0xff] %vm2045, %v1785
          %2340 = vst.msk [vmem:[#allocation2 + $0x68] sm:$0xff] %vm2045, %v1786
          %2341 = vst.msk [vmem:[#allocation2 + $0x70] sm:$0xff] %vm2045, %v1787
          %2342 = vst.msk [vmem:[#allocation2 + $0x78] sm:$0xff] %vm2045, %v1788
        $region167: #{multi_head_attention.4} parent=142 // pred_fallthru
          _
        %p2343 = scmp.eq.s32.totalorder %s23, 1
        // Predicated region
        $region168: #{multi_head_attention.4} parent=142 // pred_check
          %p2344 = pneg %p2343
        $region169: #{multi_head_attention.4} parent=142 // pred_check_branch
          %2346 = sbr.rel (%p2344) target = $region171
        $region170: #{multi_head_attention.4} parent=142 // pred_region
          %v2347 = vld [vmem:[#allocation4] sm:$0xff]
          %v2348 = vld [vmem:[#allocation4 + $0x8] sm:$0xff]
          %v2349 = vld [vmem:[#allocation4 + $0x10] sm:$0xff]
          %v2350 = vld [vmem:[#allocation4 + $0x18] sm:$0xff]
          %v2351 = vld [vmem:[#allocation4 + $0x20] sm:$0xff]
          %v2352 = vld [vmem:[#allocation4 + $0x28] sm:$0xff]
          %v2353 = vld [vmem:[#allocation4 + $0x30] sm:$0xff]
          %v2354 = vld [vmem:[#allocation4 + $0x38] sm:$0xff]
          %v2355 = vld [vmem:[#allocation4 + $0x40] sm:$0xff]
          %v2356 = vld [vmem:[#allocation4 + $0x48] sm:$0xff]
          %v2357 = vld [vmem:[#allocation4 + $0x50] sm:$0xff]
          %v2358 = vld [vmem:[#allocation4 + $0x58] sm:$0xff]
          %v2359 = vld [vmem:[#allocation4 + $0x60] sm:$0xff]
          %v2360 = vld [vmem:[#allocation4 + $0x68] sm:$0xff]
          %v2361 = vld [vmem:[#allocation4 + $0x70] sm:$0xff]
          %v2362 = vld [vmem:[#allocation4 + $0x78] sm:$0xff]
          %v2363 = vld [vmem:[#allocation3] sm:$0xff]
          %v2364 = vld [vmem:[#allocation3 + $0x8] sm:$0xff]
          %v2365 = vld [vmem:[#allocation3 + $0x10] sm:$0xff]
          %v2366 = vld [vmem:[#allocation3 + $0x18] sm:$0xff]
          %v2367 = vld [vmem:[#allocation3 + $0x20] sm:$0xff]
          %v2368 = vld [vmem:[#allocation3 + $0x28] sm:$0xff]
          %v2369 = vld [vmem:[#allocation3 + $0x30] sm:$0xff]
          %v2370 = vld [vmem:[#allocation3 + $0x38] sm:$0xff]
          %v2371 = vld [vmem:[#allocation3 + $0x40] sm:$0xff]
          %v2372 = vld [vmem:[#allocation3 + $0x48] sm:$0xff]
          %v2373 = vld [vmem:[#allocation3 + $0x50] sm:$0xff]
          %v2374 = vld [vmem:[#allocation3 + $0x58] sm:$0xff]
          %v2375 = vld [vmem:[#allocation3 + $0x60] sm:$0xff]
          %v2376 = vld [vmem:[#allocation3 + $0x68] sm:$0xff]
          %v2377 = vld [vmem:[#allocation3 + $0x70] sm:$0xff]
          %v2378 = vld [vmem:[#allocation3 + $0x78] sm:$0xff]
          %v2379 = vrcp.pop %v2363
          %v2380 = vrcp.pop %v2364
          %v2381 = vrcp.pop %v2365
          %v2382 = vrcp.pop %v2366
          %v2383 = vrcp.pop %v2367
          %v2384 = vrcp.pop %v2368
          %v2385 = vrcp.pop %v2369
          %v2386 = vrcp.pop %v2370
          %v2387 = vrcp.pop %v2371
          %v2388 = vrcp.pop %v2372
          %v2389 = vrcp.pop %v2373
          %v2390 = vrcp.pop %v2374
          %v2391 = vrcp.pop %v2375
          %v2392 = vrcp.pop %v2376
          %v2393 = vrcp.pop %v2377
          %v2394 = vrcp.pop %v2378
          %2396 = vset.pattern.permute.xlu0 0
          %2397 = vperm.xlu0 %2396, %v2379
          %v2398 = vpop.permute.xlu0 %2397
          %2401 = vset.pattern.permute.xlu0 0
          %2402 = vperm.xlu0 %2401, %v2380
          %v2403 = vpop.permute.xlu0 %2402
          %2406 = vset.pattern.permute.xlu0 0
          %2407 = vperm.xlu0 %2406, %v2381
          %v2408 = vpop.permute.xlu0 %2407
          %2411 = vset.pattern.permute.xlu0 0
          %2412 = vperm.xlu0 %2411, %v2382
          %v2413 = vpop.permute.xlu0 %2412
          %2416 = vset.pattern.permute.xlu0 0
          %2417 = vperm.xlu0 %2416, %v2383
          %v2418 = vpop.permute.xlu0 %2417
          %2421 = vset.pattern.permute.xlu0 0
          %2422 = vperm.xlu0 %2421, %v2384
          %v2423 = vpop.permute.xlu0 %2422
          %2426 = vset.pattern.permute.xlu0 0
          %2427 = vperm.xlu0 %2426, %v2385
          %v2428 = vpop.permute.xlu0 %2427
          %2431 = vset.pattern.permute.xlu0 0
          %2432 = vperm.xlu0 %2431, %v2386
          %v2433 = vpop.permute.xlu0 %2432
          %2436 = vset.pattern.permute.xlu0 0
          %2437 = vperm.xlu0 %2436, %v2387
          %v2438 = vpop.permute.xlu0 %2437
          %2441 = vset.pattern.permute.xlu0 0
          %2442 = vperm.xlu0 %2441, %v2388
          %v2443 = vpop.permute.xlu0 %2442
          %2446 = vset.pattern.permute.xlu0 0
          %2447 = vperm.xlu0 %2446, %v2389
          %v2448 = vpop.permute.xlu0 %2447
          %2451 = vset.pattern.permute.xlu0 0
          %2452 = vperm.xlu0 %2451, %v2390
          %v2453 = vpop.permute.xlu0 %2452
          %2456 = vset.pattern.permute.xlu0 0
          %2457 = vperm.xlu0 %2456, %v2391
          %v2458 = vpop.permute.xlu0 %2457
          %2461 = vset.pattern.permute.xlu0 0
          %2462 = vperm.xlu0 %2461, %v2392
          %v2463 = vpop.permute.xlu0 %2462
          %2466 = vset.pattern.permute.xlu0 0
          %2467 = vperm.xlu0 %2466, %v2393
          %v2468 = vpop.permute.xlu0 %2467
          %2471 = vset.pattern.permute.xlu0 0
          %2472 = vperm.xlu0 %2471, %v2394
          %v2473 = vpop.permute.xlu0 %2472
          %v2475 = vmul.f32 %v2347, %v2398
          %v2476 = vmul.f32 %v2348, %v2403
          %v2477 = vmul.f32 %v2349, %v2408
          %v2478 = vmul.f32 %v2350, %v2413
          %v2479 = vmul.f32 %v2351, %v2418
          %v2480 = vmul.f32 %v2352, %v2423
          %v2481 = vmul.f32 %v2353, %v2428
          %v2482 = vmul.f32 %v2354, %v2433
          %v2483 = vmul.f32 %v2355, %v2438
          %v2484 = vmul.f32 %v2356, %v2443
          %v2485 = vmul.f32 %v2357, %v2448
          %v2486 = vmul.f32 %v2358, %v2453
          %v2487 = vmul.f32 %v2359, %v2458
          %v2488 = vmul.f32 %v2360, %v2463
          %v2489 = vmul.f32 %v2361, %v2468
          %v2490 = vmul.f32 %v2362, %v2473
          %v2491 = vpack.c.bf16 %v2475, %v2475
          %v2492 = vpack.c.bf16 %v2476, %v2476
          %v2493 = vpack.c.bf16 %v2477, %v2477
          %v2494 = vpack.c.bf16 %v2478, %v2478
          %v2495 = vpack.c.bf16 %v2479, %v2479
          %v2496 = vpack.c.bf16 %v2480, %v2480
          %v2497 = vpack.c.bf16 %v2481, %v2481
          %v2498 = vpack.c.bf16 %v2482, %v2482
          %v2499 = vpack.c.bf16 %v2483, %v2483
          %v2500 = vpack.c.bf16 %v2484, %v2484
          %v2501 = vpack.c.bf16 %v2485, %v2485
          %v2502 = vpack.c.bf16 %v2486, %v2486
          %v2503 = vpack.c.bf16 %v2487, %v2487
          %v2504 = vpack.c.bf16 %v2488, %v2488
          %v2505 = vpack.c.bf16 %v2489, %v2489
          %v2506 = vpack.c.bf16 %v2490, %v2490
          %2507 = vst [vmem:[%s576] sm:$0xf] %v2491
          %2508 = vst [vmem:[%s576 + $0x4] sm:$0xf] %v2492
          %2509 = vst [vmem:[%s576 + $0x8] sm:$0xf] %v2493
          %2510 = vst [vmem:[%s576 + $0xc] sm:$0xf] %v2494
          %2511 = vst [vmem:[%s576 + $0x10] sm:$0xf] %v2495
          %2512 = vst [vmem:[%s576 + $0x14] sm:$0xf] %v2496
          %2513 = vst [vmem:[%s576 + $0x18] sm:$0xf] %v2497
          %2514 = vst [vmem:[%s576 + $0x1c] sm:$0xf] %v2498
          %2515 = vst [vmem:[%s576 + $0x20] sm:$0xf] %v2499
          %2516 = vst [vmem:[%s576 + $0x24] sm:$0xf] %v2500
          %2517 = vst [vmem:[%s576 + $0x28] sm:$0xf] %v2501
          %2518 = vst [vmem:[%s576 + $0x2c] sm:$0xf] %v2502
          %2519 = vst [vmem:[%s576 + $0x30] sm:$0xf] %v2503
          %2520 = vst [vmem:[%s576 + $0x34] sm:$0xf] %v2504
          %2521 = vst [vmem:[%s576 + $0x38] sm:$0xf] %v2505
          %2522 = vst [vmem:[%s576 + $0x3c] sm:$0xf] %v2506
        $region171: #{multi_head_attention.4} parent=142 // pred_fallthru
          _
        %s2523 = sand.u32 %s146, 1
        %s2524 = sand.u32 %s146, 1
        %s2525 = smul.addr %s2524, 64
        %s2526 = scalar_lea.vmem [#allocation8], %s2525
        // Predicated region
        $region172: #{multi_head_attention.4} parent=142 // pred_check
          %p2527 = pneg %p156
        $region173: #{multi_head_attention.4} parent=142 // pred_check_branch
          %2529 = sbr.rel (%p2527) target = $region175
        $region174: #{multi_head_attention.4} parent=142 // pred_region
          %s2530 = smul.u32 16, %s22
          %s2531 = smul.addr %s2530, 2
          %s2532 = sadd.s32 %s21, %s2531
          %s2533 = smul.addr %s20, 64
          %s2534 = sadd.s32 %s2532, %s2533
          %s2535 = smul.addr %s2534, 4
          %s2536 = scalar_lea.vmem %s3, %s2535
          // Predicated region
          $region176: #{multi_head_attention.4} parent=174 // pred_check
            _
          $region177: #{multi_head_attention.4} parent=174 // pred_check_branch
            %2538 = sbr.rel (0) target = $region179
          $region178: #{multi_head_attention.4} parent=174 // pred_region
            // Predicated region
            $region180: #{multi_head_attention.4} parent=178 // pred_check
              _
            $region181: #{multi_head_attention.4} parent=178 // pred_check_branch
              %2540 = sbr.rel target = $region183
            $region182: #{multi_head_attention.4} parent=178 // pred_region
              // Predicated region
              $region195: #{multi_head_attention.4} parent=182 // pred_check
                _
              $region196: #{multi_head_attention.4} parent=182 // pred_check_branch
                %2586 = sbr.rel (0) target = $region198
              $region197: #{multi_head_attention.4} parent=182 // pred_region
                loop: start=0, step=1, limit=1
                $region199: #{multi_head_attention.4} parent=197 // loop_pre_header
                  _
                $region200: #{multi_head_attention.4} parent=197 // loop_header
                  %s2588 = sphi 0, %s2592
                  %p2589 = scmp.ge.s32.totalorder %s2588, 1
                  %s2593 = sphi %s2526, %s2526
                  %s2594 = sphi %s2536, %s2536
                $region201: #{multi_head_attention.4} parent=197 // loop_header_branch
                  %2591 = sbr.rel (%p2589) target = $region205
                $region202: #{multi_head_attention.4} parent=197 // loop_body
                  _
                $region203: #{multi_head_attention.4} parent=197 // loop_footer
                  %s2592 = sadd.s32 1, %s2588
                $region204: #{multi_head_attention.4} parent=197 // loop_footer_branch
                  %2587 = sbr.rel target = $region200
                $region205: #{multi_head_attention.4} parent=197 // loop_exit
                  _
                %s2596 = ssub.s32 16, 1
                loop: start=0, step=1, limit=1
                $region206: #{multi_head_attention.4} parent=197 // loop_pre_header
                  _
                $region207: #{multi_head_attention.4} parent=197 // loop_header
                  %s2598 = sphi 0, %s2602
                  %p2599 = scmp.ge.s32.totalorder %s2598, 1
                  %s2603 = sphi %s2526, %s2526
                  %s2604 = sphi %s2536, %s2536
                $region208: #{multi_head_attention.4} parent=197 // loop_header_branch
                  %2601 = sbr.rel (%p2599) target = $region212
                $region209: #{multi_head_attention.4} parent=197 // loop_body
                  %v2605 = vld [vmem:[%s2603] sm:%s2596]
                  %2606 = vst [vmem:[%s2604] sm:%s2596] %v2605
                  %v2607 = vld [vmem:[%s2603 + $0x4] sm:%s2596]
                  %2608 = vst [vmem:[%s2604 + $0x8] sm:%s2596] %v2607
                  %v2609 = vld [vmem:[%s2603 + $0x8] sm:%s2596]
                  %2610 = vst [vmem:[%s2604 + $0x10] sm:%s2596] %v2609
                  %v2611 = vld [vmem:[%s2603 + $0xc] sm:%s2596]
                  %2612 = vst [vmem:[%s2604 + $0x18] sm:%s2596] %v2611
                  %v2613 = vld [vmem:[%s2603 + $0x10] sm:%s2596]
                  %2614 = vst [vmem:[%s2604 + $0x20] sm:%s2596] %v2613
                  %v2615 = vld [vmem:[%s2603 + $0x14] sm:%s2596]
                  %2616 = vst [vmem:[%s2604 + $0x28] sm:%s2596] %v2615
                  %v2617 = vld [vmem:[%s2603 + $0x18] sm:%s2596]
                  %2618 = vst [vmem:[%s2604 + $0x30] sm:%s2596] %v2617
                  %v2619 = vld [vmem:[%s2603 + $0x1c] sm:%s2596]
                  %2620 = vst [vmem:[%s2604 + $0x38] sm:%s2596] %v2619
                  %v2621 = vld [vmem:[%s2603 + $0x20] sm:%s2596]
                  %2622 = vst [vmem:[%s2604 + $0x40] sm:%s2596] %v2621
                  %v2623 = vld [vmem:[%s2603 + $0x24] sm:%s2596]
                  %2624 = vst [vmem:[%s2604 + $0x48] sm:%s2596] %v2623
                  %v2625 = vld [vmem:[%s2603 + $0x28] sm:%s2596]
                  %2626 = vst [vmem:[%s2604 + $0x50] sm:%s2596] %v2625
                  %v2627 = vld [vmem:[%s2603 + $0x2c] sm:%s2596]
                  %2628 = vst [vmem:[%s2604 + $0x58] sm:%s2596] %v2627
                  %v2629 = vld [vmem:[%s2603 + $0x30] sm:%s2596]
                  %2630 = vst [vmem:[%s2604 + $0x60] sm:%s2596] %v2629
                  %v2631 = vld [vmem:[%s2603 + $0x34] sm:%s2596]
                  %2632 = vst [vmem:[%s2604 + $0x68] sm:%s2596] %v2631
                  %v2633 = vld [vmem:[%s2603 + $0x38] sm:%s2596]
                  %2634 = vst [vmem:[%s2604 + $0x70] sm:%s2596] %v2633
                  %v2635 = vld [vmem:[%s2603 + $0x3c] sm:%s2596]
                  %2636 = vst [vmem:[%s2604 + $0x78] sm:%s2596] %v2635
                $region210: #{multi_head_attention.4} parent=197 // loop_footer
                  %s2602 = sadd.s32 1, %s2598
                $region211: #{multi_head_attention.4} parent=197 // loop_footer_branch
                  %2597 = sbr.rel target = $region207
                $region212: #{multi_head_attention.4} parent=197 // loop_exit
                  _
              $region198: #{multi_head_attention.4} parent=182 // pred_fallthru
                _
            $region183: #{multi_head_attention.4} parent=178 // pred_fallthru
              _
            // Predicated region
            $region184: #{multi_head_attention.4} parent=178 // pred_check
              _
            $region185: #{multi_head_attention.4} parent=178 // pred_check_branch
              %2542 = sbr.rel (0) target = $region187
            $region186: #{multi_head_attention.4} parent=178 // pred_region
              %s2544 = ssub.s32 16, 1
              loop: start=0, step=1, limit=1
              $region188: #{multi_head_attention.4} parent=186 // loop_pre_header
                _
              $region189: #{multi_head_attention.4} parent=186 // loop_header
                %s2546 = sphi 0, %s2550
                %p2547 = scmp.ge.s32.totalorder %s2546, 1
                %s2551 = sphi %s2526, %s2526
                %s2552 = sphi %s2536, %s2536
              $region190: #{multi_head_attention.4} parent=186 // loop_header_branch
                %2549 = sbr.rel (%p2547) target = $region194
              $region191: #{multi_head_attention.4} parent=186 // loop_body
                %v2553 = vld [vmem:[%s2551] sm:%s2544]
                %2554 = vst [vmem:[%s2552] sm:%s2544] %v2553
                %v2555 = vld [vmem:[%s2551 + $0x4] sm:%s2544]
                %2556 = vst [vmem:[%s2552 + $0x8] sm:%s2544] %v2555
                %v2557 = vld [vmem:[%s2551 + $0x8] sm:%s2544]
                %2558 = vst [vmem:[%s2552 + $0x10] sm:%s2544] %v2557
                %v2559 = vld [vmem:[%s2551 + $0xc] sm:%s2544]
                %2560 = vst [vmem:[%s2552 + $0x18] sm:%s2544] %v2559
                %v2561 = vld [vmem:[%s2551 + $0x10] sm:%s2544]
                %2562 = vst [vmem:[%s2552 + $0x20] sm:%s2544] %v2561
                %v2563 = vld [vmem:[%s2551 + $0x14] sm:%s2544]
                %2564 = vst [vmem:[%s2552 + $0x28] sm:%s2544] %v2563
                %v2565 = vld [vmem:[%s2551 + $0x18] sm:%s2544]
                %2566 = vst [vmem:[%s2552 + $0x30] sm:%s2544] %v2565
                %v2567 = vld [vmem:[%s2551 + $0x1c] sm:%s2544]
                %2568 = vst [vmem:[%s2552 + $0x38] sm:%s2544] %v2567
                %v2569 = vld [vmem:[%s2551 + $0x20] sm:%s2544]
                %2570 = vst [vmem:[%s2552 + $0x40] sm:%s2544] %v2569
                %v2571 = vld [vmem:[%s2551 + $0x24] sm:%s2544]
                %2572 = vst [vmem:[%s2552 + $0x48] sm:%s2544] %v2571
                %v2573 = vld [vmem:[%s2551 + $0x28] sm:%s2544]
                %2574 = vst [vmem:[%s2552 + $0x50] sm:%s2544] %v2573
                %v2575 = vld [vmem:[%s2551 + $0x2c] sm:%s2544]
                %2576 = vst [vmem:[%s2552 + $0x58] sm:%s2544] %v2575
                %v2577 = vld [vmem:[%s2551 + $0x30] sm:%s2544]
                %2578 = vst [vmem:[%s2552 + $0x60] sm:%s2544] %v2577
                %v2579 = vld [vmem:[%s2551 + $0x34] sm:%s2544]
                %2580 = vst [vmem:[%s2552 + $0x68] sm:%s2544] %v2579
                %v2581 = vld [vmem:[%s2551 + $0x38] sm:%s2544]
                %2582 = vst [vmem:[%s2552 + $0x70] sm:%s2544] %v2581
                %v2583 = vld [vmem:[%s2551 + $0x3c] sm:%s2544]
                %2584 = vst [vmem:[%s2552 + $0x78] sm:%s2544] %v2583
              $region192: #{multi_head_attention.4} parent=186 // loop_footer
                %s2550 = sadd.s32 1, %s2546
              $region193: #{multi_head_attention.4} parent=186 // loop_footer_branch
                %2545 = sbr.rel target = $region189
              $region194: #{multi_head_attention.4} parent=186 // loop_exit
                _
            $region187: #{multi_head_attention.4} parent=178 // pred_fallthru
              _
          $region179: #{multi_head_attention.4} parent=174 // pred_fallthru
            _
          %2637 = vnop
        $region175: #{multi_head_attention.4} parent=142 // pred_fallthru
          _
      $region143: #{multi_head_attention.4} parent=5 // pred_fallthru
        _
      %p2638 = scmp.le.s32.totalorder 2, %s9
      // Predicated region
      $region213: #{multi_head_attention.4} parent=5 // pred_check
        %p2639 = pneg %p2638
      $region214: #{multi_head_attention.4} parent=5 // pred_check_branch
        %2641 = sbr.rel (%p2639) target = $region216
      $region215: #{multi_head_attention.4} parent=5 // pred_region
        %s2642 = ssub.s32 %s9, 2
        // Predicated region
        $region217: #{multi_head_attention.4} parent=215 // pred_check
          %p2643 = pneg %p162
        $region218: #{multi_head_attention.4} parent=215 // pred_check_branch
          %2645 = sbr.rel (%p2643) target = $region220
        $region219: #{multi_head_attention.4} parent=215 // pred_region
          %s2646 = sand.u32 %s147, 1
          %s2647 = sand.u32 %s147, 1
          %s2648 = smul.addr %s2647, 64
          %s2649 = scalar_lea.vmem [#allocation8], %s2648
        $region220: #{multi_head_attention.4} parent=215 // pred_fallthru
          _
      $region216: #{multi_head_attention.4} parent=5 // pred_fallthru
        _
    $region6: #{multi_head_attention.4} parent=1 // loop_footer
      %s13 = sadd.s32 1, %s9
    $region7: #{multi_head_attention.4} parent=1 // loop_footer_branch
      %8 = sbr.rel target = $region3
    $region8: #{multi_head_attention.4} parent=1 // loop_exit
      _

// kernel: multi_head_attention.5
$region0: #{multi_head_attention.5}
  #allocation0 [shape = 'u32[]', space=smem, size = 0x4, offset = 0x4, fixed_abs, tag = 'smem constant byte address 0x4 - core index']
  #allocation1 [shape = 'u32[72,128]{1,0:T(1,128)}', space=vmem, size = 0x9000, scoped, tag = 'internal scratch']
  #allocation2 [shape = 'f32[256,256]{1,0:T(8,128)}', space=vmem, size = 0x40000, scoped, tag = 'scratch operand']
  %s0 = inlined_call_operand.vmem [shape: bf16[512,256], index: 0, kind: input, shape index: {}]
  %s1 = inlined_call_operand.vmem [shape: bf16[256,256], index: 1, kind: input, shape index: {}]
  %s2 = inlined_call_operand.vmem [shape: f32[1,256], index: 2, kind: input, shape index: {}]
  %s3 = inlined_call_operand.hbm [shape: f32[512,256], index: 3, kind: output, shape index: {}]
  %s4 = sld [smem:[#allocation0]]
  $region53: #{multi_head_attention.5} parent=0
    _
  %s6 = ssub.s32 1, %s4
  %s7 = scalar_select 0, %s6, %s4
  $region1: #{multi_head_attention.5} parent=0
    #allocation3 [shape = 'u8[524288]{0}', space=vmem, size = 0x80000, scoped, tag = 'output window, operand 0']
    #allocation4 [shape = 's32[2]{0}', space=sflag, size = 0x8, scoped, tag = 'scoped memory for multi_head_attention.5']
    %8 = vsyncpa [#allocation4], 0
    %s9 = scalar_lea.sflag [#allocation4], 1
    %10 = vsyncpa %s9, 0
    loop: start=0, step=1, limit=4
    $region2: #{multi_head_attention.5} parent=1 // loop_pre_header
      _
    $region3: #{multi_head_attention.5} parent=1 // loop_header
      %s12 = sphi 0, %s16
      %p13 = scmp.ge.s32.totalorder %s12, 4
      %s19 = sphi 0, %s38
      %s20 = sphi 0, %s34
      %s21 = sphi 0, %s30
      %s22 = sphi 0, %s19
      %s23 = sphi 0, %s20
      %s24 = sphi 0, %s21
      %s25 = sphi 0, %s22
      %s26 = sphi 0, %s23
      %s27 = sphi 0, %s24
      %s43 = sphi 0, %s45
      %s46 = sphi 0, %s43
      %s47 = sphi 0, %s46
      %s63 = sphi 0, %s47
      %s71 = sphi 0, %s73
      %s74 = sphi 0, %s71
      %s75 = sphi 0, %s74
      %s91 = sphi 0, %s75
      %s97 = sphi 0, %s99
      %s100 = sphi 0, %s97
      %s101 = sphi 0, %s100
      %s117 = sphi 0, %s101
      %s125 = sphi 0, %s127
      %s128 = sphi 0, %s125
      %s129 = sphi 0, %s128
      %s145 = sphi 0, %s129
    $region4: #{multi_head_attention.5} parent=1 // loop_header_branch
      %15 = sbr.rel (%p13) target = $region8
    $region5: #{multi_head_attention.5} parent=1 // loop_body
      %s17 = ssub.s32 %s12, 1
      %s18 = ssub.s32 %s12, 2
      %s28 = sadd.s32 1, %s21
      %p29 = scmp.ge.s32.totalorder %s28, 1
      %s30 = scalar_select %p29, 0, %s28
      %s31 = sadd.s32 1, %s20
      %s32 = scalar_select %p29, %s31, %s20
      %p33 = scmp.ge.s32.totalorder %s32, 1
      %s34 = scalar_select %p33, 0, %s32
      %s35 = sadd.s32 1, %s19
      %s36 = scalar_select %p33, %s35, %s19
      %p37 = scmp.ge.s32.totalorder %s36, 2
      %s38 = scalar_select %p37, 0, %s36
      %s39 = ssub.s32 %s19, %s38
      %s40 = ssub.s32 %s21, %s30
      %s41 = sor.u32 %s39, %s40
      %p42 = scmp.eq.s32.totalorder %s41, 0
      %s44 = sadd.s32 %s43, 1
      %s45 = scalar_select %p42, %s43, %s44
      %p48 = pneg %p42
      %p49 = scmp.eq.s32.totalorder %s12, 1
      %p50 = por %p48, %p49
      %p51 = scmp.ne.s32.totalorder %s43, %s46
      %p52 = scmp.eq.s32.totalorder %s12, 0
      %p53 = por %p51, %p52
      %p54 = scmp.ne.s32.totalorder %s43, %s46
      %p55 = scmp.eq.s32.totalorder %s17, 1
      %p56 = por %p54, %p55
      %p57 = scmp.ne.s32.totalorder %s46, %s47
      %p58 = scmp.eq.s32.totalorder %s17, 0
      %p59 = por %p57, %p58
      %p60 = scmp.ne.s32.totalorder %s46, %s47
      %p61 = scmp.eq.s32.totalorder %s18, 1
      %p62 = por %p60, %p61
      %p64 = scmp.ne.s32.totalorder %s47, %s63
      %p65 = scmp.eq.s32.totalorder %s18, 0
      %p66 = por %p64, %p65
      %s67 = ssub.s32 %s21, %s30
      %s68 = ssub.s32 %s20, %s34
      %s69 = sor.u32 %s67, %s68
      %p70 = scmp.eq.s32.totalorder %s69, 0
      %s72 = sadd.s32 %s71, 1
      %s73 = scalar_select %p70, %s71, %s72
      %p76 = pneg %p70
      %p77 = scmp.eq.s32.totalorder %s12, 1
      %p78 = por %p76, %p77
      %p79 = scmp.ne.s32.totalorder %s71, %s74
      %p80 = scmp.eq.s32.totalorder %s12, 0
      %p81 = por %p79, %p80
      %p82 = scmp.ne.s32.totalorder %s71, %s74
      %p83 = scmp.eq.s32.totalorder %s17, 1
      %p84 = por %p82, %p83
      %p85 = scmp.ne.s32.totalorder %s74, %s75
      %p86 = scmp.eq.s32.totalorder %s17, 0
      %p87 = por %p85, %p86
      %p88 = scmp.ne.s32.totalorder %s74, %s75
      %p89 = scmp.eq.s32.totalorder %s18, 1
      %p90 = por %p88, %p89
      %p92 = scmp.ne.s32.totalorder %s75, %s91
      %p93 = scmp.eq.s32.totalorder %s18, 0
      %p94 = por %p92, %p93
      %s95 = ssub.s32 %s20, %s34
      %p96 = scmp.eq.s32.totalorder %s95, 0
      %s98 = sadd.s32 %s97, 1
      %s99 = scalar_select %p96, %s97, %s98
      %p102 = pneg %p96
      %p103 = scmp.eq.s32.totalorder %s12, 1
      %p104 = por %p102, %p103
      %p105 = scmp.ne.s32.totalorder %s97, %s100
      %p106 = scmp.eq.s32.totalorder %s12, 0
      %p107 = por %p105, %p106
      %p108 = scmp.ne.s32.totalorder %s97, %s100
      %p109 = scmp.eq.s32.totalorder %s17, 1
      %p110 = por %p108, %p109
      %p111 = scmp.ne.s32.totalorder %s100, %s101
      %p112 = scmp.eq.s32.totalorder %s17, 0
      %p113 = por %p111, %p112
      %p114 = scmp.ne.s32.totalorder %s100, %s101
      %p115 = scmp.eq.s32.totalorder %s18, 1
      %p116 = por %p114, %p115
      %p118 = scmp.ne.s32.totalorder %s101, %s117
      %p119 = scmp.eq.s32.totalorder %s18, 0
      %p120 = por %p118, %p119
      %s121 = ssub.s32 %s19, %s38
      %s122 = ssub.s32 %s20, %s34
      %s123 = sor.u32 %s121, %s122
      %p124 = scmp.eq.s32.totalorder %s123, 0
      %s126 = sadd.s32 %s125, 1
      %s127 = scalar_select %p124, %s125, %s126
      %p130 = pneg %p124
      %p131 = scmp.eq.s32.totalorder %s12, 1
      %p132 = por %p130, %p131
      %p133 = scmp.ne.s32.totalorder %s125, %s128
      %p134 = scmp.eq.s32.totalorder %s12, 0
      %p135 = por %p133, %p134
      %p136 = scmp.ne.s32.totalorder %s125, %s128
      %p137 = scmp.eq.s32.totalorder %s17, 1
      %p138 = por %p136, %p137
      %p139 = scmp.ne.s32.totalorder %s128, %s129
      %p140 = scmp.eq.s32.totalorder %s17, 0
      %p141 = por %p139, %p140
      %p142 = scmp.ne.s32.totalorder %s128, %s129
      %p143 = scmp.eq.s32.totalorder %s18, 1
      %p144 = por %p142, %p143
      %p146 = scmp.ne.s32.totalorder %s129, %s145
      %p147 = scmp.eq.s32.totalorder %s18, 0
      %p148 = por %p146, %p147
      %p149 = scmp.le.s32.totalorder 1, %s12
      %p150 = scmp.lt.s32.totalorder %s12, 3
      %p151 = pnand %p149, %p150
      %p152 = pneg %p151
      // Predicated region
      $region9: #{multi_head_attention.5} parent=5 // pred_check
        _
      $region10: #{multi_head_attention.5} parent=5 // pred_check_branch
        %154 = sbr.rel (%p151) target = $region12
      $region11: #{multi_head_attention.5} parent=5 // pred_region
        %s155 = ssub.s32 %s12, 1
        // Predicated region
        $region13: #{multi_head_attention.5} parent=11 // pred_check
          %p156 = pneg %p87
        $region14: #{multi_head_attention.5} parent=11 // pred_check_branch
          %158 = sbr.rel (%p156) target = $region16
        $region15: #{multi_head_attention.5} parent=11 // pred_region
          %s159 = smul.u32 32, %s24
          %s160 = smul.u32 2, %s23
          %p161 = scmp.lt.s32.totalorder %s159, 31
          %s162 = scalar_select %p161, %s159, 31
          %p163 = scmp.lt.s32.totalorder %s160, 1
          %s164 = scalar_select %p163, %s160, 1
          %s165 = smul.addr %s162, 2
          %s166 = sadd.s32 %s164, %s165
          %s167 = smul.addr %s166, 4
          %s168 = scalar_lea.vmem %s1, %s167
          %s169 = smul.u32 32, %s24
          %s170 = smul.u32 2, %s23
        $region16: #{multi_head_attention.5} parent=11 // pred_fallthru
          _
        // Predicated region
        $region17: #{multi_head_attention.5} parent=11 // pred_check
          %p171 = pneg %p113
        $region18: #{multi_head_attention.5} parent=11 // pred_check_branch
          %173 = sbr.rel (%p171) target = $region20
        $region19: #{multi_head_attention.5} parent=11 // pred_region
          %s174 = smul.u32 2, %s23
          %p175 = scmp.lt.s32.totalorder %s174, 1
          %s176 = scalar_select %p175, %s174, 1
          %s177 = scalar_lea.vmem %s2, %s176
          %s178 = smul.u32 2, %s23
        $region20: #{multi_head_attention.5} parent=11 // pred_fallthru
          _
      $region12: #{multi_head_attention.5} parent=5 // pred_fallthru
        _
      %p179 = scmp.lt.s32.totalorder %s12, 2
      // Predicated region
      $region21: #{multi_head_attention.5} parent=5 // pred_check
        %p180 = pneg %p179
      $region22: #{multi_head_attention.5} parent=5 // pred_check_branch
        %182 = sbr.rel (%p180) target = $region24
      $region23: #{multi_head_attention.5} parent=5 // pred_region
        // Predicated region
        $region25: #{multi_head_attention.5} parent=23 // pred_check
          %p183 = pneg %p53
        $region26: #{multi_head_attention.5} parent=23 // pred_check_branch
          %185 = sbr.rel (%p183) target = $region28
        $region27: #{multi_head_attention.5} parent=23 // pred_region
          %s186 = smul.u32 32, %s19
          %s187 = smul.u32 2, %s21
          %p188 = scmp.lt.s32.totalorder %s186, 63
          %s189 = scalar_select %p188, %s186, 63
          %p190 = scmp.lt.s32.totalorder %s187, 1
          %s191 = scalar_select %p190, %s187, 1
          %s192 = smul.addr %s189, 2
          %s193 = sadd.s32 %s191, %s192
          %s194 = smul.addr %s193, 4
          %s195 = scalar_lea.vmem %s0, %s194
          %s196 = smul.u32 32, %s19
          %s197 = smul.u32 2, %s21
        $region28: #{multi_head_attention.5} parent=23 // pred_fallthru
          _
      $region24: #{multi_head_attention.5} parent=5 // pred_fallthru
        _
      %p198 = scmp.le.s32.totalorder 1, %s12
      %p199 = scmp.lt.s32.totalorder %s12, 3
      %p200 = pnand %p198, %p199
      %p201 = pneg %p200
      // Predicated region
      $region29: #{multi_head_attention.5} parent=5 // pred_check
        _
      $region30: #{multi_head_attention.5} parent=5 // pred_check_branch
        %203 = sbr.rel (%p200) target = $region32
      $region31: #{multi_head_attention.5} parent=5 // pred_region
        %s204 = ssub.s32 %s12, 1
        %s205 = smul.u32 32, %s22
        %s206 = smul.u32 2, %s24
        %p207 = scmp.lt.s32.totalorder %s205, 63
        %s208 = scalar_select %p207, %s205, 63
        %p209 = scmp.lt.s32.totalorder %s206, 1
        %s210 = scalar_select %p209, %s206, 1
        %s211 = smul.addr %s208, 2
        %s212 = sadd.s32 %s210, %s211
        %s213 = smul.addr %s212, 4
        %s214 = scalar_lea.vmem %s0, %s213
        %p215 = pneg %p59
        %p216 = pneg %p56
        %s217 = smul.u32 32, %s24
        %s218 = smul.u32 2, %s23
        %p219 = scmp.lt.s32.totalorder %s217, 31
        %s220 = scalar_select %p219, %s217, 31
        %p221 = scmp.lt.s32.totalorder %s218, 1
        %s222 = scalar_select %p221, %s218, 1
        %s223 = smul.addr %s220, 2
        %s224 = sadd.s32 %s222, %s223
        %s225 = smul.addr %s224, 4
        %s226 = scalar_lea.vmem %s1, %s225
        %p227 = pneg %p87
        %p228 = pneg %p84
        %s229 = smul.u32 2, %s23
        %p230 = scmp.lt.s32.totalorder %s229, 1
        %s231 = scalar_select %p230, %s229, 1
        %s232 = scalar_lea.vmem %s2, %s231
        %p233 = pneg %p113
        %p234 = pneg %p110
        %p235 = pneg %p141
        %p236 = pneg %p138
        %s237 = sand.u32 %s128, 1
        %s238 = scalar_lea.sflag [#allocation4], %s237
        %s239 = sand.u32 %s128, 1
        %s240 = smul.addr %s239, 512
        %s241 = scalar_lea.vmem [#allocation3], %s240
        %s242 = smul.u32 32, %s22
        %s243 = smul.u32 2, %s24
        %p244 = scmp.lt.s32.totalorder %s242, 63
        %s245 = scalar_select %p244, %s242, 63
        %p246 = scmp.lt.s32.totalorder %s243, 1
        %s247 = scalar_select %p246, %s243, 1
        %s248 = smul.addr %s245, 2
        %s249 = sadd.s32 %s247, %s248
        %s250 = smul.addr %s249, 4
        %s251 = scalar_lea.vmem %s0, %s250
        %s252 = smul.u32 32, %s22
        %s253 = smul.u32 2, %s24
        %s254 = smul.u32 32, %s24
        %s255 = smul.u32 2, %s23
        %p256 = scmp.lt.s32.totalorder %s254, 31
        %s257 = scalar_select %p256, %s254, 31
        %p258 = scmp.lt.s32.totalorder %s255, 1
        %s259 = scalar_select %p258, %s255, 1
        %s260 = smul.addr %s257, 2
        %s261 = sadd.s32 %s259, %s260
        %s262 = smul.addr %s261, 4
        %s263 = scalar_lea.vmem %s1, %s262
        %s264 = smul.u32 32, %s24
        %s265 = smul.u32 2, %s23
        %s266 = smul.u32 2, %s23
        %p267 = scmp.lt.s32.totalorder %s266, 1
        %s268 = scalar_select %p267, %s266, 1
        %s269 = scalar_lea.vmem %s2, %s268
        %s270 = smul.u32 2, %s23
        %s271 = smul.u32 32, %s22
        %s272 = smul.u32 2, %s23
        %p273 = scmp.eq.s32.totalorder %s24, 0
        // Predicated region
        $region33: #{multi_head_attention.5} parent=31 // pred_check
          %p274 = pneg %p273
        $region34: #{multi_head_attention.5} parent=31 // pred_check_branch
          %276 = sbr.rel (%p274) target = $region36
        $region35: #{multi_head_attention.5} parent=31 // pred_region
          %277 = vst [vmem:[#allocation2] sm:$0xff] 0.0
          %278 = vst [vmem:[#allocation2 + $0x8] sm:$0xff] 0.0
          %279 = vst [vmem:[#allocation2 + $0x10] sm:$0xff] 0.0
          %280 = vst [vmem:[#allocation2 + $0x18] sm:$0xff] 0.0
          %281 = vst [vmem:[#allocation2 + $0x20] sm:$0xff] 0.0
          %282 = vst [vmem:[#allocation2 + $0x28] sm:$0xff] 0.0
          %283 = vst [vmem:[#allocation2 + $0x30] sm:$0xff] 0.0
          %284 = vst [vmem:[#allocation2 + $0x38] sm:$0xff] 0.0
          %285 = vst [vmem:[#allocation2 + $0x40] sm:$0xff] 0.0
          %286 = vst [vmem:[#allocation2 + $0x48] sm:$0xff] 0.0
          %287 = vst [vmem:[#allocation2 + $0x50] sm:$0xff] 0.0
          %288 = vst [vmem:[#allocation2 + $0x58] sm:$0xff] 0.0
          %289 = vst [vmem:[#allocation2 + $0x60] sm:$0xff] 0.0
          %290 = vst [vmem:[#allocation2 + $0x68] sm:$0xff] 0.0
          %291 = vst [vmem:[#allocation2 + $0x70] sm:$0xff] 0.0
          %292 = vst [vmem:[#allocation2 + $0x78] sm:$0xff] 0.0
          %293 = vst [vmem:[#allocation2 + $0x80] sm:$0xff] 0.0
          %294 = vst [vmem:[#allocation2 + $0x88] sm:$0xff] 0.0
          %295 = vst [vmem:[#allocation2 + $0x90] sm:$0xff] 0.0
          %296 = vst [vmem:[#allocation2 + $0x98] sm:$0xff] 0.0
          %297 = vst [vmem:[#allocation2 + $0xa0] sm:$0xff] 0.0
          %298 = vst [vmem:[#allocation2 + $0xa8] sm:$0xff] 0.0
          %299 = vst [vmem:[#allocation2 + $0xb0] sm:$0xff] 0.0
          %300 = vst [vmem:[#allocation2 + $0xb8] sm:$0xff] 0.0
          %301 = vst [vmem:[#allocation2 + $0xc0] sm:$0xff] 0.0
          %302 = vst [vmem:[#allocation2 + $0xc8] sm:$0xff] 0.0
          %303 = vst [vmem:[#allocation2 + $0xd0] sm:$0xff] 0.0
          %304 = vst [vmem:[#allocation2 + $0xd8] sm:$0xff] 0.0
          %305 = vst [vmem:[#allocation2 + $0xe0] sm:$0xff] 0.0
          %306 = vst [vmem:[#allocation2 + $0xe8] sm:$0xff] 0.0
          %307 = vst [vmem:[#allocation2 + $0xf0] sm:$0xff] 0.0
          %308 = vst [vmem:[#allocation2 + $0xf8] sm:$0xff] 0.0
          %309 = vst [vmem:[#allocation2 + $0x100] sm:$0xff] 0.0
          %310 = vst [vmem:[#allocation2 + $0x108] sm:$0xff] 0.0
          %311 = vst [vmem:[#allocation2 + $0x110] sm:$0xff] 0.0
          %312 = vst [vmem:[#allocation2 + $0x118] sm:$0xff] 0.0
          %313 = vst [vmem:[#allocation2 + $0x120] sm:$0xff] 0.0
          %314 = vst [vmem:[#allocation2 + $0x128] sm:$0xff] 0.0
          %315 = vst [vmem:[#allocation2 + $0x130] sm:$0xff] 0.0
          %316 = vst [vmem:[#allocation2 + $0x138] sm:$0xff] 0.0
          %317 = vst [vmem:[#allocation2 + $0x140] sm:$0xff] 0.0
          %318 = vst [vmem:[#allocation2 + $0x148] sm:$0xff] 0.0
          %319 = vst [vmem:[#allocation2 + $0x150] sm:$0xff] 0.0
          %320 = vst [vmem:[#allocation2 + $0x158] sm:$0xff] 0.0
          %321 = vst [vmem:[#allocation2 + $0x160] sm:$0xff] 0.0
          %322 = vst [vmem:[#allocation2 + $0x168] sm:$0xff] 0.0
          %323 = vst [vmem:[#allocation2 + $0x170] sm:$0xff] 0.0
          %324 = vst [vmem:[#allocation2 + $0x178] sm:$0xff] 0.0
          %325 = vst [vmem:[#allocation2 + $0x180] sm:$0xff] 0.0
          %326 = vst [vmem:[#allocation2 + $0x188] sm:$0xff] 0.0
          %327 = vst [vmem:[#allocation2 + $0x190] sm:$0xff] 0.0
          %328 = vst [vmem:[#allocation2 + $0x198] sm:$0xff] 0.0
          %329 = vst [vmem:[#allocation2 + $0x1a0] sm:$0xff] 0.0
          %330 = vst [vmem:[#allocation2 + $0x1a8] sm:$0xff] 0.0
          %331 = vst [vmem:[#allocation2 + $0x1b0] sm:$0xff] 0.0
          %332 = vst [vmem:[#allocation2 + $0x1b8] sm:$0xff] 0.0
          %333 = vst [vmem:[#allocation2 + $0x1c0] sm:$0xff] 0.0
          %334 = vst [vmem:[#allocation2 + $0x1c8] sm:$0xff] 0.0
          %335 = vst [vmem:[#allocation2 + $0x1d0] sm:$0xff] 0.0
          %336 = vst [vmem:[#allocation2 + $0x1d8] sm:$0xff] 0.0
          %337 = vst [vmem:[#allocation2 + $0x1e0] sm:$0xff] 0.0
          %338 = vst [vmem:[#allocation2 + $0x1e8] sm:$0xff] 0.0
          %339 = vst [vmem:[#allocation2 + $0x1f0] sm:$0xff] 0.0
          %340 = vst [vmem:[#allocation2 + $0x1f8] sm:$0xff] 0.0
        $region36: #{multi_head_attention.5} parent=31 // pred_fallthru
          _
        %v341 = vld [vmem:[#allocation2] sm:$0xff]
        %v342 = vld [vmem:[#allocation2 + $0x8] sm:$0xff]
        %v343 = vld [vmem:[#allocation2 + $0x10] sm:$0xff]
        %v344 = vld [vmem:[#allocation2 + $0x18] sm:$0xff]
        %v345 = vld [vmem:[#allocation2 + $0x20] sm:$0xff]
        %v346 = vld [vmem:[#allocation2 + $0x28] sm:$0xff]
        %v347 = vld [vmem:[#allocation2 + $0x30] sm:$0xff]
        %v348 = vld [vmem:[#allocation2 + $0x38] sm:$0xff]
        %v349 = vld [vmem:[#allocation2 + $0x40] sm:$0xff]
        %v350 = vld [vmem:[#allocation2 + $0x48] sm:$0xff]
        %v351 = vld [vmem:[#allocation2 + $0x50] sm:$0xff]
        %v352 = vld [vmem:[#allocation2 + $0x58] sm:$0xff]
        %v353 = vld [vmem:[#allocation2 + $0x60] sm:$0xff]
        %v354 = vld [vmem:[#allocation2 + $0x68] sm:$0xff]
        %v355 = vld [vmem:[#allocation2 + $0x70] sm:$0xff]
        %v356 = vld [vmem:[#allocation2 + $0x78] sm:$0xff]
        %v357 = vld [vmem:[#allocation2 + $0x80] sm:$0xff]
        %v358 = vld [vmem:[#allocation2 + $0x88] sm:$0xff]
        %v359 = vld [vmem:[#allocation2 + $0x90] sm:$0xff]
        %v360 = vld [vmem:[#allocation2 + $0x98] sm:$0xff]
        %v361 = vld [vmem:[#allocation2 + $0xa0] sm:$0xff]
        %v362 = vld [vmem:[#allocation2 + $0xa8] sm:$0xff]
        %v363 = vld [vmem:[#allocation2 + $0xb0] sm:$0xff]
        %v364 = vld [vmem:[#allocation2 + $0xb8] sm:$0xff]
        %v365 = vld [vmem:[#allocation2 + $0xc0] sm:$0xff]
        %v366 = vld [vmem:[#allocation2 + $0xc8] sm:$0xff]
        %v367 = vld [vmem:[#allocation2 + $0xd0] sm:$0xff]
        %v368 = vld [vmem:[#allocation2 + $0xd8] sm:$0xff]
        %v369 = vld [vmem:[#allocation2 + $0xe0] sm:$0xff]
        %v370 = vld [vmem:[#allocation2 + $0xe8] sm:$0xff]
        %v371 = vld [vmem:[#allocation2 + $0xf0] sm:$0xff]
        %v372 = vld [vmem:[#allocation2 + $0xf8] sm:$0xff]
        %v373 = vld [vmem:[#allocation2 + $0x100] sm:$0xff]
        %v374 = vld [vmem:[#allocation2 + $0x108] sm:$0xff]
        %v375 = vld [vmem:[#allocation2 + $0x110] sm:$0xff]
        %v376 = vld [vmem:[#allocation2 + $0x118] sm:$0xff]
        %v377 = vld [vmem:[#allocation2 + $0x120] sm:$0xff]
        %v378 = vld [vmem:[#allocation2 + $0x128] sm:$0xff]
        %v379 = vld [vmem:[#allocation2 + $0x130] sm:$0xff]
        %v380 = vld [vmem:[#allocation2 + $0x138] sm:$0xff]
        %v381 = vld [vmem:[#allocation2 + $0x140] sm:$0xff]
        %v382 = vld [vmem:[#allocation2 + $0x148] sm:$0xff]
        %v383 = vld [vmem:[#allocation2 + $0x150] sm:$0xff]
        %v384 = vld [vmem:[#allocation2 + $0x158] sm:$0xff]
        %v385 = vld [vmem:[#allocation2 + $0x160] sm:$0xff]
        %v386 = vld [vmem:[#allocation2 + $0x168] sm:$0xff]
        %v387 = vld [vmem:[#allocation2 + $0x170] sm:$0xff]
        %v388 = vld [vmem:[#allocation2 + $0x178] sm:$0xff]
        %v389 = vld [vmem:[#allocation2 + $0x180] sm:$0xff]
        %v390 = vld [vmem:[#allocation2 + $0x188] sm:$0xff]
        %v391 = vld [vmem:[#allocation2 + $0x190] sm:$0xff]
        %v392 = vld [vmem:[#allocation2 + $0x198] sm:$0xff]
        %v393 = vld [vmem:[#allocation2 + $0x1a0] sm:$0xff]
        %v394 = vld [vmem:[#allocation2 + $0x1a8] sm:$0xff]
        %v395 = vld [vmem:[#allocation2 + $0x1b0] sm:$0xff]
        %v396 = vld [vmem:[#allocation2 + $0x1b8] sm:$0xff]
        %v397 = vld [vmem:[#allocation2 + $0x1c0] sm:$0xff]
        %v398 = vld [vmem:[#allocation2 + $0x1c8] sm:$0xff]
        %v399 = vld [vmem:[#allocation2 + $0x1d0] sm:$0xff]
        %v400 = vld [vmem:[#allocation2 + $0x1d8] sm:$0xff]
        %v401 = vld [vmem:[#allocation2 + $0x1e0] sm:$0xff]
        %v402 = vld [vmem:[#allocation2 + $0x1e8] sm:$0xff]
        %v403 = vld [vmem:[#allocation2 + $0x1f0] sm:$0xff]
        %v404 = vld [vmem:[#allocation2 + $0x1f8] sm:$0xff]
        %v405 = vld [vmem:[%s251] sm:$0xff]
        %v406 = vld [vmem:[%s251 + $0x8] sm:$0xff]
        %v407 = vld [vmem:[%s251 + $0x10] sm:$0xff]
        %v408 = vld [vmem:[%s251 + $0x18] sm:$0xff]
        %v409 = vld [vmem:[%s251 + $0x20] sm:$0xff]
        %v410 = vld [vmem:[%s251 + $0x28] sm:$0xff]
        %v411 = vld [vmem:[%s251 + $0x30] sm:$0xff]
        %v412 = vld [vmem:[%s251 + $0x38] sm:$0xff]
        %v413 = vld [vmem:[%s251 + $0x40] sm:$0xff]
        %v414 = vld [vmem:[%s251 + $0x48] sm:$0xff]
        %v415 = vld [vmem:[%s251 + $0x50] sm:$0xff]
        %v416 = vld [vmem:[%s251 + $0x58] sm:$0xff]
        %v417 = vld [vmem:[%s251 + $0x60] sm:$0xff]
        %v418 = vld [vmem:[%s251 + $0x68] sm:$0xff]
        %v419 = vld [vmem:[%s251 + $0x70] sm:$0xff]
        %v420 = vld [vmem:[%s251 + $0x78] sm:$0xff]
        %v421 = vld [vmem:[%s251 + $0x80] sm:$0xff]
        %v422 = vld [vmem:[%s251 + $0x88] sm:$0xff]
        %v423 = vld [vmem:[%s251 + $0x90] sm:$0xff]
        %v424 = vld [vmem:[%s251 + $0x98] sm:$0xff]
        %v425 = vld [vmem:[%s251 + $0xa0] sm:$0xff]
        %v426 = vld [vmem:[%s251 + $0xa8] sm:$0xff]
        %v427 = vld [vmem:[%s251 + $0xb0] sm:$0xff]
        %v428 = vld [vmem:[%s251 + $0xb8] sm:$0xff]
        %v429 = vld [vmem:[%s251 + $0xc0] sm:$0xff]
        %v430 = vld [vmem:[%s251 + $0xc8] sm:$0xff]
        %v431 = vld [vmem:[%s251 + $0xd0] sm:$0xff]
        %v432 = vld [vmem:[%s251 + $0xd8] sm:$0xff]
        %v433 = vld [vmem:[%s251 + $0xe0] sm:$0xff]
        %v434 = vld [vmem:[%s251 + $0xe8] sm:$0xff]
        %v435 = vld [vmem:[%s251 + $0xf0] sm:$0xff]
        %v436 = vld [vmem:[%s251 + $0xf8] sm:$0xff]
        %v437 = vld [vmem:[%s263] sm:$0xff]
        %v438 = vld [vmem:[%s263 + $0x8] sm:$0xff]
        %v439 = vld [vmem:[%s263 + $0x10] sm:$0xff]
        %v440 = vld [vmem:[%s263 + $0x18] sm:$0xff]
        %v441 = vld [vmem:[%s263 + $0x20] sm:$0xff]
        %v442 = vld [vmem:[%s263 + $0x28] sm:$0xff]
        %v443 = vld [vmem:[%s263 + $0x30] sm:$0xff]
        %v444 = vld [vmem:[%s263 + $0x38] sm:$0xff]
        %v445 = vld [vmem:[%s263 + $0x40] sm:$0xff]
        %v446 = vld [vmem:[%s263 + $0x48] sm:$0xff]
        %v447 = vld [vmem:[%s263 + $0x50] sm:$0xff]
        %v448 = vld [vmem:[%s263 + $0x58] sm:$0xff]
        %v449 = vld [vmem:[%s263 + $0x60] sm:$0xff]
        %v450 = vld [vmem:[%s263 + $0x68] sm:$0xff]
        %v451 = vld [vmem:[%s263 + $0x70] sm:$0xff]
        %v452 = vld [vmem:[%s263 + $0x78] sm:$0xff]
        %v453 = vld [vmem:[%s263 + $0x80] sm:$0xff]
        %v454 = vld [vmem:[%s263 + $0x88] sm:$0xff]
        %v455 = vld [vmem:[%s263 + $0x90] sm:$0xff]
        %v456 = vld [vmem:[%s263 + $0x98] sm:$0xff]
        %v457 = vld [vmem:[%s263 + $0xa0] sm:$0xff]
        %v458 = vld [vmem:[%s263 + $0xa8] sm:$0xff]
        %v459 = vld [vmem:[%s263 + $0xb0] sm:$0xff]
        %v460 = vld [vmem:[%s263 + $0xb8] sm:$0xff]
        %v461 = vld [vmem:[%s263 + $0xc0] sm:$0xff]
        %v462 = vld [vmem:[%s263 + $0xc8] sm:$0xff]
        %v463 = vld [vmem:[%s263 + $0xd0] sm:$0xff]
        %v464 = vld [vmem:[%s263 + $0xd8] sm:$0xff]
        %v465 = vld [vmem:[%s263 + $0xe0] sm:$0xff]
        %v466 = vld [vmem:[%s263 + $0xe8] sm:$0xff]
        %v467 = vld [vmem:[%s263 + $0xf0] sm:$0xff]
        %v468 = vld [vmem:[%s263 + $0xf8] sm:$0xff]
        %v501 = vunpack.c.l.b16 %v405
        %v502 = vunpack.c.h.b16 %v405
        %v503 = vunpack.c.l.b16 %v406
        %v504 = vunpack.c.h.b16 %v406
        %v505 = vunpack.c.l.b16 %v407
        %v506 = vunpack.c.h.b16 %v407
        %v507 = vunpack.c.l.b16 %v408
        %v508 = vunpack.c.h.b16 %v408
        %v509 = vunpack.c.l.b16 %v409
        %v510 = vunpack.c.h.b16 %v409
        %v511 = vunpack.c.l.b16 %v410
        %v512 = vunpack.c.h.b16 %v410
        %v513 = vunpack.c.l.b16 %v411
        %v514 = vunpack.c.h.b16 %v411
        %v515 = vunpack.c.l.b16 %v412
        %v516 = vunpack.c.h.b16 %v412
        %v517 = vunpack.c.l.b16 %v413
        %v518 = vunpack.c.h.b16 %v413
        %v519 = vunpack.c.l.b16 %v414
        %v520 = vunpack.c.h.b16 %v414
        %v521 = vunpack.c.l.b16 %v415
        %v522 = vunpack.c.h.b16 %v415
        %v523 = vunpack.c.l.b16 %v416
        %v524 = vunpack.c.h.b16 %v416
        %v525 = vunpack.c.l.b16 %v417
        %v526 = vunpack.c.h.b16 %v417
        %v527 = vunpack.c.l.b16 %v418
        %v528 = vunpack.c.h.b16 %v418
        %v529 = vunpack.c.l.b16 %v419
        %v530 = vunpack.c.h.b16 %v419
        %v531 = vunpack.c.l.b16 %v420
        %v532 = vunpack.c.h.b16 %v420
        %v533 = vunpack.c.l.b16 %v421
        %v534 = vunpack.c.h.b16 %v421
        %v535 = vunpack.c.l.b16 %v422
        %v536 = vunpack.c.h.b16 %v422
        %v537 = vunpack.c.l.b16 %v423
        %v538 = vunpack.c.h.b16 %v423
        %v539 = vunpack.c.l.b16 %v424
        %v540 = vunpack.c.h.b16 %v424
        %v541 = vunpack.c.l.b16 %v425
        %v542 = vunpack.c.h.b16 %v425
        %v543 = vunpack.c.l.b16 %v426
        %v544 = vunpack.c.h.b16 %v426
        %v545 = vunpack.c.l.b16 %v427
        %v546 = vunpack.c.h.b16 %v427
        %v547 = vunpack.c.l.b16 %v428
        %v548 = vunpack.c.h.b16 %v428
        %v549 = vunpack.c.l.b16 %v429
        %v550 = vunpack.c.h.b16 %v429
        %v551 = vunpack.c.l.b16 %v430
        %v552 = vunpack.c.h.b16 %v430
        %v553 = vunpack.c.l.b16 %v431
        %v554 = vunpack.c.h.b16 %v431
        %v555 = vunpack.c.l.b16 %v432
        %v556 = vunpack.c.h.b16 %v432
        %v557 = vunpack.c.l.b16 %v433
        %v558 = vunpack.c.h.b16 %v433
        %v559 = vunpack.c.l.b16 %v434
        %v560 = vunpack.c.h.b16 %v434
        %v561 = vunpack.c.l.b16 %v435
        %v562 = vunpack.c.h.b16 %v435
        %v563 = vunpack.c.l.b16 %v436
        %v564 = vunpack.c.h.b16 %v436
        %v565 = vpack.c.b16 %v503, %v501
        %v566 = vpack.c.b16 %v504, %v502
        %v567 = vpack.c.b16 %v507, %v505
        %v568 = vpack.c.b16 %v508, %v506
        %v569 = vpack.c.b16 %v511, %v509
        %v570 = vpack.c.b16 %v512, %v510
        %v571 = vpack.c.b16 %v515, %v513
        %v572 = vpack.c.b16 %v516, %v514
        %v573 = vpack.c.b16 %v519, %v517
        %v574 = vpack.c.b16 %v520, %v518
        %v575 = vpack.c.b16 %v523, %v521
        %v576 = vpack.c.b16 %v524, %v522
        %v577 = vpack.c.b16 %v527, %v525
        %v578 = vpack.c.b16 %v528, %v526
        %v579 = vpack.c.b16 %v531, %v529
        %v580 = vpack.c.b16 %v532, %v530
        %v581 = vpack.c.b16 %v535, %v533
        %v582 = vpack.c.b16 %v536, %v534
        %v583 = vpack.c.b16 %v539, %v537
        %v584 = vpack.c.b16 %v540, %v538
        %v585 = vpack.c.b16 %v543, %v541
        %v586 = vpack.c.b16 %v544, %v542
        %v587 = vpack.c.b16 %v547, %v545
        %v588 = vpack.c.b16 %v548, %v546
        %v589 = vpack.c.b16 %v551, %v549
        %v590 = vpack.c.b16 %v552, %v550
        %v591 = vpack.c.b16 %v555, %v553
        %v592 = vpack.c.b16 %v556, %v554
        %v593 = vpack.c.b16 %v559, %v557
        %v594 = vpack.c.b16 %v560, %v558
        %v595 = vpack.c.b16 %v563, %v561
        %v596 = vpack.c.b16 %v564, %v562
        %v661 = vunpack.c.l.b16 %v437
        %v662 = vunpack.c.h.b16 %v437
        %v663 = vunpack.c.l.b16 %v438
        %v664 = vunpack.c.h.b16 %v438
        %v665 = vunpack.c.l.b16 %v439
        %v666 = vunpack.c.h.b16 %v439
        %v667 = vunpack.c.l.b16 %v440
        %v668 = vunpack.c.h.b16 %v440
        %v669 = vunpack.c.l.b16 %v441
        %v670 = vunpack.c.h.b16 %v441
        %v671 = vunpack.c.l.b16 %v442
        %v672 = vunpack.c.h.b16 %v442
        %v673 = vunpack.c.l.b16 %v443
        %v674 = vunpack.c.h.b16 %v443
        %v675 = vunpack.c.l.b16 %v444
        %v676 = vunpack.c.h.b16 %v444
        %v677 = vunpack.c.l.b16 %v445
        %v678 = vunpack.c.h.b16 %v445
        %v679 = vunpack.c.l.b16 %v446
        %v680 = vunpack.c.h.b16 %v446
        %v681 = vunpack.c.l.b16 %v447
        %v682 = vunpack.c.h.b16 %v447
        %v683 = vunpack.c.l.b16 %v448
        %v684 = vunpack.c.h.b16 %v448
        %v685 = vunpack.c.l.b16 %v449
        %v686 = vunpack.c.h.b16 %v449
        %v687 = vunpack.c.l.b16 %v450
        %v688 = vunpack.c.h.b16 %v450
        %v689 = vunpack.c.l.b16 %v451
        %v690 = vunpack.c.h.b16 %v451
        %v691 = vunpack.c.l.b16 %v452
        %v692 = vunpack.c.h.b16 %v452
        %v693 = vunpack.c.l.b16 %v453
        %v694 = vunpack.c.h.b16 %v453
        %v695 = vunpack.c.l.b16 %v454
        %v696 = vunpack.c.h.b16 %v454
        %v697 = vunpack.c.l.b16 %v455
        %v698 = vunpack.c.h.b16 %v455
        %v699 = vunpack.c.l.b16 %v456
        %v700 = vunpack.c.h.b16 %v456
        %v701 = vunpack.c.l.b16 %v457
        %v702 = vunpack.c.h.b16 %v457
        %v703 = vunpack.c.l.b16 %v458
        %v704 = vunpack.c.h.b16 %v458
        %v705 = vunpack.c.l.b16 %v459
        %v706 = vunpack.c.h.b16 %v459
        %v707 = vunpack.c.l.b16 %v460
        %v708 = vunpack.c.h.b16 %v460
        %v709 = vunpack.c.l.b16 %v461
        %v710 = vunpack.c.h.b16 %v461
        %v711 = vunpack.c.l.b16 %v462
        %v712 = vunpack.c.h.b16 %v462
        %v713 = vunpack.c.l.b16 %v463
        %v714 = vunpack.c.h.b16 %v463
        %v715 = vunpack.c.l.b16 %v464
        %v716 = vunpack.c.h.b16 %v464
        %v717 = vunpack.c.l.b16 %v465
        %v718 = vunpack.c.h.b16 %v465
        %v719 = vunpack.c.l.b16 %v466
        %v720 = vunpack.c.h.b16 %v466
        %v721 = vunpack.c.l.b16 %v467
        %v722 = vunpack.c.h.b16 %v467
        %v723 = vunpack.c.l.b16 %v468
        %v724 = vunpack.c.h.b16 %v468
        %v725 = vpack.c.b16 %v663, %v661
        %v726 = vpack.c.b16 %v664, %v662
        %v727 = vpack.c.b16 %v667, %v665
        %v728 = vpack.c.b16 %v668, %v666
        %v729 = vpack.c.b16 %v671, %v669
        %v730 = vpack.c.b16 %v672, %v670
        %v731 = vpack.c.b16 %v675, %v673
        %v732 = vpack.c.b16 %v676, %v674
        %v733 = vpack.c.b16 %v679, %v677
        %v734 = vpack.c.b16 %v680, %v678
        %v735 = vpack.c.b16 %v683, %v681
        %v736 = vpack.c.b16 %v684, %v682
        %v737 = vpack.c.b16 %v687, %v685
        %v738 = vpack.c.b16 %v688, %v686
        %v739 = vpack.c.b16 %v691, %v689
        %v740 = vpack.c.b16 %v692, %v690
        %v741 = vpack.c.b16 %v695, %v693
        %v742 = vpack.c.b16 %v696, %v694
        %v743 = vpack.c.b16 %v699, %v697
        %v744 = vpack.c.b16 %v700, %v698
        %v745 = vpack.c.b16 %v703, %v701
        %v746 = vpack.c.b16 %v704, %v702
        %v747 = vpack.c.b16 %v707, %v705
        %v748 = vpack.c.b16 %v708, %v706
        %v749 = vpack.c.b16 %v711, %v709
        %v750 = vpack.c.b16 %v712, %v710
        %v751 = vpack.c.b16 %v715, %v713
        %v752 = vpack.c.b16 %v716, %v714
        %v753 = vpack.c.b16 %v719, %v717
        %v754 = vpack.c.b16 %v720, %v718
        %v755 = vpack.c.b16 %v723, %v721
        %v756 = vpack.c.b16 %v724, %v722
        %789 = vmatpush.bf16.msra.mxu0 %v739
        %790 = vmatpush.bf16.msra.mxu0 %v737
        %791 = vmatpush.bf16.msra.mxu0 %v735
        %792 = vmatpush.bf16.msra.mxu0 %v733
        %793 = vmatpush.bf16.msra.mxu0 %v731
        %794 = vmatpush.bf16.msra.mxu0 %v729
        %795 = vmatpush.bf16.msra.mxu0 %v727
        %796 = vmatpush.bf16.msra.mxu0 %v725
        %797 = vmatmul.bf16.gmra.mxu0 %v565
        %v798 = vpop.f32.mrf.mxu0
        %v799 = vadd.f32 0.0, %v798
        %v800 = vpop.f32.mrf.mxu0
        %v801 = vadd.f32 0.0, %v800
        %802 = vmatmul.bf16.gmra.mxu0 %v567
        %v803 = vpop.f32.mrf.mxu0
        %v804 = vadd.f32 0.0, %v803
        %v805 = vpop.f32.mrf.mxu0
        %v806 = vadd.f32 0.0, %v805
        %807 = vmatmul.bf16.gmra.mxu0 %v569
        %v808 = vpop.f32.mrf.mxu0
        %v809 = vadd.f32 0.0, %v808
        %v810 = vpop.f32.mrf.mxu0
        %v811 = vadd.f32 0.0, %v810
        %812 = vmatmul.bf16.gmra.mxu0 %v571
        %v813 = vpop.f32.mrf.mxu0
        %v814 = vadd.f32 0.0, %v813
        %v815 = vpop.f32.mrf.mxu0
        %v816 = vadd.f32 0.0, %v815
        %817 = vmatmul.bf16.gmra.mxu0 %v573
        %v818 = vpop.f32.mrf.mxu0
        %v819 = vadd.f32 0.0, %v818
        %v820 = vpop.f32.mrf.mxu0
        %v821 = vadd.f32 0.0, %v820
        %822 = vmatmul.bf16.gmra.mxu0 %v575
        %v823 = vpop.f32.mrf.mxu0
        %v824 = vadd.f32 0.0, %v823
        %v825 = vpop.f32.mrf.mxu0
        %v826 = vadd.f32 0.0, %v825
        %827 = vmatmul.bf16.gmra.mxu0 %v577
        %v828 = vpop.f32.mrf.mxu0
        %v829 = vadd.f32 0.0, %v828
        %v830 = vpop.f32.mrf.mxu0
        %v831 = vadd.f32 0.0, %v830
        %832 = vmatmul.bf16.gmra.mxu0 %v579
        %v833 = vpop.f32.mrf.mxu0
        %v834 = vadd.f32 0.0, %v833
        %v835 = vpop.f32.mrf.mxu0
        %v836 = vadd.f32 0.0, %v835
        %837 = vmatmul.bf16.gmra.mxu0 %v581
        %v838 = vpop.f32.mrf.mxu0
        %v839 = vadd.f32 0.0, %v838
        %v840 = vpop.f32.mrf.mxu0
        %v841 = vadd.f32 0.0, %v840
        %842 = vmatmul.bf16.gmra.mxu0 %v583
        %v843 = vpop.f32.mrf.mxu0
        %v844 = vadd.f32 0.0, %v843
        %v845 = vpop.f32.mrf.mxu0
        %v846 = vadd.f32 0.0, %v845
        %847 = vmatmul.bf16.gmra.mxu0 %v585
        %v848 = vpop.f32.mrf.mxu0
        %v849 = vadd.f32 0.0, %v848
        %v850 = vpop.f32.mrf.mxu0
        %v851 = vadd.f32 0.0, %v850
        %852 = vmatmul.bf16.gmra.mxu0 %v587
        %v853 = vpop.f32.mrf.mxu0
        %v854 = vadd.f32 0.0, %v853
        %v855 = vpop.f32.mrf.mxu0
        %v856 = vadd.f32 0.0, %v855
        %857 = vmatmul.bf16.gmra.mxu0 %v589
        %v858 = vpop.f32.mrf.mxu0
        %v859 = vadd.f32 0.0, %v858
        %v860 = vpop.f32.mrf.mxu0
        %v861 = vadd.f32 0.0, %v860
        %862 = vmatmul.bf16.gmra.mxu0 %v591
        %v863 = vpop.f32.mrf.mxu0
        %v864 = vadd.f32 0.0, %v863
        %v865 = vpop.f32.mrf.mxu0
        %v866 = vadd.f32 0.0, %v865
        %867 = vmatmul.bf16.gmra.mxu0 %v593
        %v868 = vpop.f32.mrf.mxu0
        %v869 = vadd.f32 0.0, %v868
        %v870 = vpop.f32.mrf.mxu0
        %v871 = vadd.f32 0.0, %v870
        %872 = vmatmul.bf16.gmra.mxu0 %v595
        %v873 = vpop.f32.mrf.mxu0
        %v874 = vadd.f32 0.0, %v873
        %v875 = vpop.f32.mrf.mxu0
        %v876 = vadd.f32 0.0, %v875
        %877 = vdwg.mxu0
        %878 = vmatpush.bf16.msra.mxu0 %v755
        %879 = vmatpush.bf16.msra.mxu0 %v753
        %880 = vmatpush.bf16.msra.mxu0 %v751
        %881 = vmatpush.bf16.msra.mxu0 %v749
        %882 = vmatpush.bf16.msra.mxu0 %v747
        %883 = vmatpush.bf16.msra.mxu0 %v745
        %884 = vmatpush.bf16.msra.mxu0 %v743
        %885 = vmatpush.bf16.msra.mxu0 %v741
        %886 = vmatmul.bf16.gmra.mxu0 %v566
        %v887 = vpop.f32.mrf.mxu0
        %v888 = vadd.f32 %v799, %v887
        %v889 = vpop.f32.mrf.mxu0
        %v890 = vadd.f32 %v801, %v889
        %891 = vmatmul.bf16.gmra.mxu0 %v568
        %v892 = vpop.f32.mrf.mxu0
        %v893 = vadd.f32 %v804, %v892
        %v894 = vpop.f32.mrf.mxu0
        %v895 = vadd.f32 %v806, %v894
        %896 = vmatmul.bf16.gmra.mxu0 %v570
        %v897 = vpop.f32.mrf.mxu0
        %v898 = vadd.f32 %v809, %v897
        %v899 = vpop.f32.mrf.mxu0
        %v900 = vadd.f32 %v811, %v899
        %901 = vmatmul.bf16.gmra.mxu0 %v572
        %v902 = vpop.f32.mrf.mxu0
        %v903 = vadd.f32 %v814, %v902
        %v904 = vpop.f32.mrf.mxu0
        %v905 = vadd.f32 %v816, %v904
        %906 = vmatmul.bf16.gmra.mxu0 %v574
        %v907 = vpop.f32.mrf.mxu0
        %v908 = vadd.f32 %v819, %v907
        %v909 = vpop.f32.mrf.mxu0
        %v910 = vadd.f32 %v821, %v909
        %911 = vmatmul.bf16.gmra.mxu0 %v576
        %v912 = vpop.f32.mrf.mxu0
        %v913 = vadd.f32 %v824, %v912
        %v914 = vpop.f32.mrf.mxu0
        %v915 = vadd.f32 %v826, %v914
        %916 = vmatmul.bf16.gmra.mxu0 %v578
        %v917 = vpop.f32.mrf.mxu0
        %v918 = vadd.f32 %v829, %v917
        %v919 = vpop.f32.mrf.mxu0
        %v920 = vadd.f32 %v831, %v919
        %921 = vmatmul.bf16.gmra.mxu0 %v580
        %v922 = vpop.f32.mrf.mxu0
        %v923 = vadd.f32 %v834, %v922
        %v924 = vpop.f32.mrf.mxu0
        %v925 = vadd.f32 %v836, %v924
        %926 = vmatmul.bf16.gmra.mxu0 %v582
        %v927 = vpop.f32.mrf.mxu0
        %v928 = vadd.f32 %v839, %v927
        %v929 = vpop.f32.mrf.mxu0
        %v930 = vadd.f32 %v841, %v929
        %931 = vmatmul.bf16.gmra.mxu0 %v584
        %v932 = vpop.f32.mrf.mxu0
        %v933 = vadd.f32 %v844, %v932
        %v934 = vpop.f32.mrf.mxu0
        %v935 = vadd.f32 %v846, %v934
        %936 = vmatmul.bf16.gmra.mxu0 %v586
        %v937 = vpop.f32.mrf.mxu0
        %v938 = vadd.f32 %v849, %v937
        %v939 = vpop.f32.mrf.mxu0
        %v940 = vadd.f32 %v851, %v939
        %941 = vmatmul.bf16.gmra.mxu0 %v588
        %v942 = vpop.f32.mrf.mxu0
        %v943 = vadd.f32 %v854, %v942
        %v944 = vpop.f32.mrf.mxu0
        %v945 = vadd.f32 %v856, %v944
        %946 = vmatmul.bf16.gmra.mxu0 %v590
        %v947 = vpop.f32.mrf.mxu0
        %v948 = vadd.f32 %v859, %v947
        %v949 = vpop.f32.mrf.mxu0
        %v950 = vadd.f32 %v861, %v949
        %951 = vmatmul.bf16.gmra.mxu0 %v592
        %v952 = vpop.f32.mrf.mxu0
        %v953 = vadd.f32 %v864, %v952
        %v954 = vpop.f32.mrf.mxu0
        %v955 = vadd.f32 %v866, %v954
        %956 = vmatmul.bf16.gmra.mxu0 %v594
        %v957 = vpop.f32.mrf.mxu0
        %v958 = vadd.f32 %v869, %v957
        %v959 = vpop.f32.mrf.mxu0
        %v960 = vadd.f32 %v871, %v959
        %961 = vmatmul.bf16.gmra.mxu0 %v596
        %v962 = vpop.f32.mrf.mxu0
        %v963 = vadd.f32 %v874, %v962
        %v964 = vpop.f32.mrf.mxu0
        %v965 = vadd.f32 %v876, %v964
        %966 = vdwg.mxu0
        %967 = vmatpush.bf16.msra.mxu0 %v740
        %968 = vmatpush.bf16.msra.mxu0 %v738
        %969 = vmatpush.bf16.msra.mxu0 %v736
        %970 = vmatpush.bf16.msra.mxu0 %v734
        %971 = vmatpush.bf16.msra.mxu0 %v732
        %972 = vmatpush.bf16.msra.mxu0 %v730
        %973 = vmatpush.bf16.msra.mxu0 %v728
        %974 = vmatpush.bf16.msra.mxu0 %v726
        %975 = vmatmul.bf16.gmra.mxu0 %v565
        %v976 = vpop.f32.mrf.mxu0
        %v977 = vadd.f32 0.0, %v976
        %v978 = vpop.f32.mrf.mxu0
        %v979 = vadd.f32 0.0, %v978
        %980 = vmatmul.bf16.gmra.mxu0 %v567
        %v981 = vpop.f32.mrf.mxu0
        %v982 = vadd.f32 0.0, %v981
        %v983 = vpop.f32.mrf.mxu0
        %v984 = vadd.f32 0.0, %v983
        %985 = vmatmul.bf16.gmra.mxu0 %v569
        %v986 = vpop.f32.mrf.mxu0
        %v987 = vadd.f32 0.0, %v986
        %v988 = vpop.f32.mrf.mxu0
        %v989 = vadd.f32 0.0, %v988
        %990 = vmatmul.bf16.gmra.mxu0 %v571
        %v991 = vpop.f32.mrf.mxu0
        %v992 = vadd.f32 0.0, %v991
        %v993 = vpop.f32.mrf.mxu0
        %v994 = vadd.f32 0.0, %v993
        %995 = vmatmul.bf16.gmra.mxu0 %v573
        %v996 = vpop.f32.mrf.mxu0
        %v997 = vadd.f32 0.0, %v996
        %v998 = vpop.f32.mrf.mxu0
        %v999 = vadd.f32 0.0, %v998
        %1000 = vmatmul.bf16.gmra.mxu0 %v575
        %v1001 = vpop.f32.mrf.mxu0
        %v1002 = vadd.f32 0.0, %v1001
        %v1003 = vpop.f32.mrf.mxu0
        %v1004 = vadd.f32 0.0, %v1003
        %1005 = vmatmul.bf16.gmra.mxu0 %v577
        %v1006 = vpop.f32.mrf.mxu0
        %v1007 = vadd.f32 0.0, %v1006
        %v1008 = vpop.f32.mrf.mxu0
        %v1009 = vadd.f32 0.0, %v1008
        %1010 = vmatmul.bf16.gmra.mxu0 %v579
        %v1011 = vpop.f32.mrf.mxu0
        %v1012 = vadd.f32 0.0, %v1011
        %v1013 = vpop.f32.mrf.mxu0
        %v1014 = vadd.f32 0.0, %v1013
        %1015 = vmatmul.bf16.gmra.mxu0 %v581
        %v1016 = vpop.f32.mrf.mxu0
        %v1017 = vadd.f32 0.0, %v1016
        %v1018 = vpop.f32.mrf.mxu0
        %v1019 = vadd.f32 0.0, %v1018
        %1020 = vmatmul.bf16.gmra.mxu0 %v583
        %v1021 = vpop.f32.mrf.mxu0
        %v1022 = vadd.f32 0.0, %v1021
        %v1023 = vpop.f32.mrf.mxu0
        %v1024 = vadd.f32 0.0, %v1023
        %1025 = vmatmul.bf16.gmra.mxu0 %v585
        %v1026 = vpop.f32.mrf.mxu0
        %v1027 = vadd.f32 0.0, %v1026
        %v1028 = vpop.f32.mrf.mxu0
        %v1029 = vadd.f32 0.0, %v1028
        %1030 = vmatmul.bf16.gmra.mxu0 %v587
        %v1031 = vpop.f32.mrf.mxu0
        %v1032 = vadd.f32 0.0, %v1031
        %v1033 = vpop.f32.mrf.mxu0
        %v1034 = vadd.f32 0.0, %v1033
        %1035 = vmatmul.bf16.gmra.mxu0 %v589
        %v1036 = vpop.f32.mrf.mxu0
        %v1037 = vadd.f32 0.0, %v1036
        %v1038 = vpop.f32.mrf.mxu0
        %v1039 = vadd.f32 0.0, %v1038
        %1040 = vmatmul.bf16.gmra.mxu0 %v591
        %v1041 = vpop.f32.mrf.mxu0
        %v1042 = vadd.f32 0.0, %v1041
        %v1043 = vpop.f32.mrf.mxu0
        %v1044 = vadd.f32 0.0, %v1043
        %1045 = vmatmul.bf16.gmra.mxu0 %v593
        %v1046 = vpop.f32.mrf.mxu0
        %v1047 = vadd.f32 0.0, %v1046
        %v1048 = vpop.f32.mrf.mxu0
        %v1049 = vadd.f32 0.0, %v1048
        %1050 = vmatmul.bf16.gmra.mxu0 %v595
        %v1051 = vpop.f32.mrf.mxu0
        %v1052 = vadd.f32 0.0, %v1051
        %v1053 = vpop.f32.mrf.mxu0
        %v1054 = vadd.f32 0.0, %v1053
        %1055 = vdwg.mxu0
        %1056 = vmatpush.bf16.msra.mxu0 %v756
        %1057 = vmatpush.bf16.msra.mxu0 %v754
        %1058 = vmatpush.bf16.msra.mxu0 %v752
        %1059 = vmatpush.bf16.msra.mxu0 %v750
        %1060 = vmatpush.bf16.msra.mxu0 %v748
        %1061 = vmatpush.bf16.msra.mxu0 %v746
        %1062 = vmatpush.bf16.msra.mxu0 %v744
        %1063 = vmatpush.bf16.msra.mxu0 %v742
        %1064 = vmatmul.bf16.gmra.mxu0 %v566
        %v1065 = vpop.f32.mrf.mxu0
        %v1066 = vadd.f32 %v977, %v1065
        %v1067 = vpop.f32.mrf.mxu0
        %v1068 = vadd.f32 %v979, %v1067
        %1069 = vmatmul.bf16.gmra.mxu0 %v568
        %v1070 = vpop.f32.mrf.mxu0
        %v1071 = vadd.f32 %v982, %v1070
        %v1072 = vpop.f32.mrf.mxu0
        %v1073 = vadd.f32 %v984, %v1072
        %1074 = vmatmul.bf16.gmra.mxu0 %v570
        %v1075 = vpop.f32.mrf.mxu0
        %v1076 = vadd.f32 %v987, %v1075
        %v1077 = vpop.f32.mrf.mxu0
        %v1078 = vadd.f32 %v989, %v1077
        %1079 = vmatmul.bf16.gmra.mxu0 %v572
        %v1080 = vpop.f32.mrf.mxu0
        %v1081 = vadd.f32 %v992, %v1080
        %v1082 = vpop.f32.mrf.mxu0
        %v1083 = vadd.f32 %v994, %v1082
        %1084 = vmatmul.bf16.gmra.mxu0 %v574
        %v1085 = vpop.f32.mrf.mxu0
        %v1086 = vadd.f32 %v997, %v1085
        %v1087 = vpop.f32.mrf.mxu0
        %v1088 = vadd.f32 %v999, %v1087
        %1089 = vmatmul.bf16.gmra.mxu0 %v576
        %v1090 = vpop.f32.mrf.mxu0
        %v1091 = vadd.f32 %v1002, %v1090
        %v1092 = vpop.f32.mrf.mxu0
        %v1093 = vadd.f32 %v1004, %v1092
        %1094 = vmatmul.bf16.gmra.mxu0 %v578
        %v1095 = vpop.f32.mrf.mxu0
        %v1096 = vadd.f32 %v1007, %v1095
        %v1097 = vpop.f32.mrf.mxu0
        %v1098 = vadd.f32 %v1009, %v1097
        %1099 = vmatmul.bf16.gmra.mxu0 %v580
        %v1100 = vpop.f32.mrf.mxu0
        %v1101 = vadd.f32 %v1012, %v1100
        %v1102 = vpop.f32.mrf.mxu0
        %v1103 = vadd.f32 %v1014, %v1102
        %1104 = vmatmul.bf16.gmra.mxu0 %v582
        %v1105 = vpop.f32.mrf.mxu0
        %v1106 = vadd.f32 %v1017, %v1105
        %v1107 = vpop.f32.mrf.mxu0
        %v1108 = vadd.f32 %v1019, %v1107
        %1109 = vmatmul.bf16.gmra.mxu0 %v584
        %v1110 = vpop.f32.mrf.mxu0
        %v1111 = vadd.f32 %v1022, %v1110
        %v1112 = vpop.f32.mrf.mxu0
        %v1113 = vadd.f32 %v1024, %v1112
        %1114 = vmatmul.bf16.gmra.mxu0 %v586
        %v1115 = vpop.f32.mrf.mxu0
        %v1116 = vadd.f32 %v1027, %v1115
        %v1117 = vpop.f32.mrf.mxu0
        %v1118 = vadd.f32 %v1029, %v1117
        %1119 = vmatmul.bf16.gmra.mxu0 %v588
        %v1120 = vpop.f32.mrf.mxu0
        %v1121 = vadd.f32 %v1032, %v1120
        %v1122 = vpop.f32.mrf.mxu0
        %v1123 = vadd.f32 %v1034, %v1122
        %1124 = vmatmul.bf16.gmra.mxu0 %v590
        %v1125 = vpop.f32.mrf.mxu0
        %v1126 = vadd.f32 %v1037, %v1125
        %v1127 = vpop.f32.mrf.mxu0
        %v1128 = vadd.f32 %v1039, %v1127
        %1129 = vmatmul.bf16.gmra.mxu0 %v592
        %v1130 = vpop.f32.mrf.mxu0
        %v1131 = vadd.f32 %v1042, %v1130
        %v1132 = vpop.f32.mrf.mxu0
        %v1133 = vadd.f32 %v1044, %v1132
        %1134 = vmatmul.bf16.gmra.mxu0 %v594
        %v1135 = vpop.f32.mrf.mxu0
        %v1136 = vadd.f32 %v1047, %v1135
        %v1137 = vpop.f32.mrf.mxu0
        %v1138 = vadd.f32 %v1049, %v1137
        %1139 = vmatmul.bf16.gmra.mxu0 %v596
        %v1140 = vpop.f32.mrf.mxu0
        %v1141 = vadd.f32 %v1052, %v1140
        %v1142 = vpop.f32.mrf.mxu0
        %v1143 = vadd.f32 %v1054, %v1142
        %1144 = vdwg.mxu0
        %v1145 = vadd.f32 %v341, %v888
        %v1146 = vadd.f32 %v342, %v1066
        %v1147 = vadd.f32 %v343, %v890
        %v1148 = vadd.f32 %v344, %v1068
        %v1149 = vadd.f32 %v345, %v893
        %v1150 = vadd.f32 %v346, %v1071
        %v1151 = vadd.f32 %v347, %v895
        %v1152 = vadd.f32 %v348, %v1073
        %v1153 = vadd.f32 %v349, %v898
        %v1154 = vadd.f32 %v350, %v1076
        %v1155 = vadd.f32 %v351, %v900
        %v1156 = vadd.f32 %v352, %v1078
        %v1157 = vadd.f32 %v353, %v903
        %v1158 = vadd.f32 %v354, %v1081
        %v1159 = vadd.f32 %v355, %v905
        %v1160 = vadd.f32 %v356, %v1083
        %v1161 = vadd.f32 %v357, %v908
        %v1162 = vadd.f32 %v358, %v1086
        %v1163 = vadd.f32 %v359, %v910
        %v1164 = vadd.f32 %v360, %v1088
        %v1165 = vadd.f32 %v361, %v913
        %v1166 = vadd.f32 %v362, %v1091
        %v1167 = vadd.f32 %v363, %v915
        %v1168 = vadd.f32 %v364, %v1093
        %v1169 = vadd.f32 %v365, %v918
        %v1170 = vadd.f32 %v366, %v1096
        %v1171 = vadd.f32 %v367, %v920
        %v1172 = vadd.f32 %v368, %v1098
        %v1173 = vadd.f32 %v369, %v923
        %v1174 = vadd.f32 %v370, %v1101
        %v1175 = vadd.f32 %v371, %v925
        %v1176 = vadd.f32 %v372, %v1103
        %v1177 = vadd.f32 %v373, %v928
        %v1178 = vadd.f32 %v374, %v1106
        %v1179 = vadd.f32 %v375, %v930
        %v1180 = vadd.f32 %v376, %v1108
        %v1181 = vadd.f32 %v377, %v933
        %v1182 = vadd.f32 %v378, %v1111
        %v1183 = vadd.f32 %v379, %v935
        %v1184 = vadd.f32 %v380, %v1113
        %v1185 = vadd.f32 %v381, %v938
        %v1186 = vadd.f32 %v382, %v1116
        %v1187 = vadd.f32 %v383, %v940
        %v1188 = vadd.f32 %v384, %v1118
        %v1189 = vadd.f32 %v385, %v943
        %v1190 = vadd.f32 %v386, %v1121
        %v1191 = vadd.f32 %v387, %v945
        %v1192 = vadd.f32 %v388, %v1123
        %v1193 = vadd.f32 %v389, %v948
        %v1194 = vadd.f32 %v390, %v1126
        %v1195 = vadd.f32 %v391, %v950
        %v1196 = vadd.f32 %v392, %v1128
        %v1197 = vadd.f32 %v393, %v953
        %v1198 = vadd.f32 %v394, %v1131
        %v1199 = vadd.f32 %v395, %v955
        %v1200 = vadd.f32 %v396, %v1133
        %v1201 = vadd.f32 %v397, %v958
        %v1202 = vadd.f32 %v398, %v1136
        %v1203 = vadd.f32 %v399, %v960
        %v1204 = vadd.f32 %v400, %v1138
        %v1205 = vadd.f32 %v401, %v963
        %v1206 = vadd.f32 %v402, %v1141
        %v1207 = vadd.f32 %v403, %v965
        %v1208 = vadd.f32 %v404, %v1143
        %1209 = vst [vmem:[#allocation2] sm:$0xff] %v1145
        %1210 = vst [vmem:[#allocation2 + $0x8] sm:$0xff] %v1146
        %1211 = vst [vmem:[#allocation2 + $0x10] sm:$0xff] %v1147
        %1212 = vst [vmem:[#allocation2 + $0x18] sm:$0xff] %v1148
        %1213 = vst [vmem:[#allocation2 + $0x20] sm:$0xff] %v1149
        %1214 = vst [vmem:[#allocation2 + $0x28] sm:$0xff] %v1150
        %1215 = vst [vmem:[#allocation2 + $0x30] sm:$0xff] %v1151
        %1216 = vst [vmem:[#allocation2 + $0x38] sm:$0xff] %v1152
        %1217 = vst [vmem:[#allocation2 + $0x40] sm:$0xff] %v1153
        %1218 = vst [vmem:[#allocation2 + $0x48] sm:$0xff] %v1154
        %1219 = vst [vmem:[#allocation2 + $0x50] sm:$0xff] %v1155
        %1220 = vst [vmem:[#allocation2 + $0x58] sm:$0xff] %v1156
        %1221 = vst [vmem:[#allocation2 + $0x60] sm:$0xff] %v1157
        %1222 = vst [vmem:[#allocation2 + $0x68] sm:$0xff] %v1158
        %1223 = vst [vmem:[#allocation2 + $0x70] sm:$0xff] %v1159
        %1224 = vst [vmem:[#allocation2 + $0x78] sm:$0xff] %v1160
        %1225 = vst [vmem:[#allocation2 + $0x80] sm:$0xff] %v1161
        %1226 = vst [vmem:[#allocation2 + $0x88] sm:$0xff] %v1162
        %1227 = vst [vmem:[#allocation2 + $0x90] sm:$0xff] %v1163
        %1228 = vst [vmem:[#allocation2 + $0x98] sm:$0xff] %v1164
        %1229 = vst [vmem:[#allocation2 + $0xa0] sm:$0xff] %v1165
        %1230 = vst [vmem:[#allocation2 + $0xa8] sm:$0xff] %v1166
        %1231 = vst [vmem:[#allocation2 + $0xb0] sm:$0xff] %v1167
        %1232 = vst [vmem:[#allocation2 + $0xb8] sm:$0xff] %v1168
        %1233 = vst [vmem:[#allocation2 + $0xc0] sm:$0xff] %v1169
        %1234 = vst [vmem:[#allocation2 + $0xc8] sm:$0xff] %v1170
        %1235 = vst [vmem:[#allocation2 + $0xd0] sm:$0xff] %v1171
        %1236 = vst [vmem:[#allocation2 + $0xd8] sm:$0xff] %v1172
        %1237 = vst [vmem:[#allocation2 + $0xe0] sm:$0xff] %v1173
        %1238 = vst [vmem:[#allocation2 + $0xe8] sm:$0xff] %v1174
        %1239 = vst [vmem:[#allocation2 + $0xf0] sm:$0xff] %v1175
        %1240 = vst [vmem:[#allocation2 + $0xf8] sm:$0xff] %v1176
        %1241 = vst [vmem:[#allocation2 + $0x100] sm:$0xff] %v1177
        %1242 = vst [vmem:[#allocation2 + $0x108] sm:$0xff] %v1178
        %1243 = vst [vmem:[#allocation2 + $0x110] sm:$0xff] %v1179
        %1244 = vst [vmem:[#allocation2 + $0x118] sm:$0xff] %v1180
        %1245 = vst [vmem:[#allocation2 + $0x120] sm:$0xff] %v1181
        %1246 = vst [vmem:[#allocation2 + $0x128] sm:$0xff] %v1182
        %1247 = vst [vmem:[#allocation2 + $0x130] sm:$0xff] %v1183
        %1248 = vst [vmem:[#allocation2 + $0x138] sm:$0xff] %v1184
        %1249 = vst [vmem:[#allocation2 + $0x140] sm:$0xff] %v1185
        %1250 = vst [vmem:[#allocation2 + $0x148] sm:$0xff] %v1186
        %1251 = vst [vmem:[#allocation2 + $0x150] sm:$0xff] %v1187
        %1252 = vst [vmem:[#allocation2 + $0x158] sm:$0xff] %v1188
        %1253 = vst [vmem:[#allocation2 + $0x160] sm:$0xff] %v1189
        %1254 = vst [vmem:[#allocation2 + $0x168] sm:$0xff] %v1190
        %1255 = vst [vmem:[#allocation2 + $0x170] sm:$0xff] %v1191
        %1256 = vst [vmem:[#allocation2 + $0x178] sm:$0xff] %v1192
        %1257 = vst [vmem:[#allocation2 + $0x180] sm:$0xff] %v1193
        %1258 = vst [vmem:[#allocation2 + $0x188] sm:$0xff] %v1194
        %1259 = vst [vmem:[#allocation2 + $0x190] sm:$0xff] %v1195
        %1260 = vst [vmem:[#allocation2 + $0x198] sm:$0xff] %v1196
        %1261 = vst [vmem:[#allocation2 + $0x1a0] sm:$0xff] %v1197
        %1262 = vst [vmem:[#allocation2 + $0x1a8] sm:$0xff] %v1198
        %1263 = vst [vmem:[#allocation2 + $0x1b0] sm:$0xff] %v1199
        %1264 = vst [vmem:[#allocation2 + $0x1b8] sm:$0xff] %v1200
        %1265 = vst [vmem:[#allocation2 + $0x1c0] sm:$0xff] %v1201
        %1266 = vst [vmem:[#allocation2 + $0x1c8] sm:$0xff] %v1202
        %1267 = vst [vmem:[#allocation2 + $0x1d0] sm:$0xff] %v1203
        %1268 = vst [vmem:[#allocation2 + $0x1d8] sm:$0xff] %v1204
        %1269 = vst [vmem:[#allocation2 + $0x1e0] sm:$0xff] %v1205
        %1270 = vst [vmem:[#allocation2 + $0x1e8] sm:$0xff] %v1206
        %1271 = vst [vmem:[#allocation2 + $0x1f0] sm:$0xff] %v1207
        %1272 = vst [vmem:[#allocation2 + $0x1f8] sm:$0xff] %v1208
        // Predicated region
        $region37: #{multi_head_attention.5} parent=31 // pred_check
          %p1273 = pneg %p273
        $region38: #{multi_head_attention.5} parent=31 // pred_check_branch
          %1275 = sbr.rel (%p1273) target = $region40
        $region39: #{multi_head_attention.5} parent=31 // pred_region
          %v1276 = vld [vmem:[#allocation2] sm:$0xff]
          %v1277 = vld [vmem:[#allocation2 + $0x8] sm:$0xff]
          %v1278 = vld [vmem:[#allocation2 + $0x10] sm:$0xff]
          %v1279 = vld [vmem:[#allocation2 + $0x18] sm:$0xff]
          %v1280 = vld [vmem:[#allocation2 + $0x20] sm:$0xff]
          %v1281 = vld [vmem:[#allocation2 + $0x28] sm:$0xff]
          %v1282 = vld [vmem:[#allocation2 + $0x30] sm:$0xff]
          %v1283 = vld [vmem:[#allocation2 + $0x38] sm:$0xff]
          %v1284 = vld [vmem:[#allocation2 + $0x40] sm:$0xff]
          %v1285 = vld [vmem:[#allocation2 + $0x48] sm:$0xff]
          %v1286 = vld [vmem:[#allocation2 + $0x50] sm:$0xff]
          %v1287 = vld [vmem:[#allocation2 + $0x58] sm:$0xff]
          %v1288 = vld [vmem:[#allocation2 + $0x60] sm:$0xff]
          %v1289 = vld [vmem:[#allocation2 + $0x68] sm:$0xff]
          %v1290 = vld [vmem:[#allocation2 + $0x70] sm:$0xff]
          %v1291 = vld [vmem:[#allocation2 + $0x78] sm:$0xff]
          %v1292 = vld [vmem:[#allocation2 + $0x80] sm:$0xff]
          %v1293 = vld [vmem:[#allocation2 + $0x88] sm:$0xff]
          %v1294 = vld [vmem:[#allocation2 + $0x90] sm:$0xff]
          %v1295 = vld [vmem:[#allocation2 + $0x98] sm:$0xff]
          %v1296 = vld [vmem:[#allocation2 + $0xa0] sm:$0xff]
          %v1297 = vld [vmem:[#allocation2 + $0xa8] sm:$0xff]
          %v1298 = vld [vmem:[#allocation2 + $0xb0] sm:$0xff]
          %v1299 = vld [vmem:[#allocation2 + $0xb8] sm:$0xff]
          %v1300 = vld [vmem:[#allocation2 + $0xc0] sm:$0xff]
          %v1301 = vld [vmem:[#allocation2 + $0xc8] sm:$0xff]
          %v1302 = vld [vmem:[#allocation2 + $0xd0] sm:$0xff]
          %v1303 = vld [vmem:[#allocation2 + $0xd8] sm:$0xff]
          %v1304 = vld [vmem:[#allocation2 + $0xe0] sm:$0xff]
          %v1305 = vld [vmem:[#allocation2 + $0xe8] sm:$0xff]
          %v1306 = vld [vmem:[#allocation2 + $0xf0] sm:$0xff]
          %v1307 = vld [vmem:[#allocation2 + $0xf8] sm:$0xff]
          %v1308 = vld [vmem:[#allocation2 + $0x100] sm:$0xff]
          %v1309 = vld [vmem:[#allocation2 + $0x108] sm:$0xff]
          %v1310 = vld [vmem:[#allocation2 + $0x110] sm:$0xff]
          %v1311 = vld [vmem:[#allocation2 + $0x118] sm:$0xff]
          %v1312 = vld [vmem:[#allocation2 + $0x120] sm:$0xff]
          %v1313 = vld [vmem:[#allocation2 + $0x128] sm:$0xff]
          %v1314 = vld [vmem:[#allocation2 + $0x130] sm:$0xff]
          %v1315 = vld [vmem:[#allocation2 + $0x138] sm:$0xff]
          %v1316 = vld [vmem:[#allocation2 + $0x140] sm:$0xff]
          %v1317 = vld [vmem:[#allocation2 + $0x148] sm:$0xff]
          %v1318 = vld [vmem:[#allocation2 + $0x150] sm:$0xff]
          %v1319 = vld [vmem:[#allocation2 + $0x158] sm:$0xff]
          %v1320 = vld [vmem:[#allocation2 + $0x160] sm:$0xff]
          %v1321 = vld [vmem:[#allocation2 + $0x168] sm:$0xff]
          %v1322 = vld [vmem:[#allocation2 + $0x170] sm:$0xff]
          %v1323 = vld [vmem:[#allocation2 + $0x178] sm:$0xff]
          %v1324 = vld [vmem:[#allocation2 + $0x180] sm:$0xff]
          %v1325 = vld [vmem:[#allocation2 + $0x188] sm:$0xff]
          %v1326 = vld [vmem:[#allocation2 + $0x190] sm:$0xff]
          %v1327 = vld [vmem:[#allocation2 + $0x198] sm:$0xff]
          %v1328 = vld [vmem:[#allocation2 + $0x1a0] sm:$0xff]
          %v1329 = vld [vmem:[#allocation2 + $0x1a8] sm:$0xff]
          %v1330 = vld [vmem:[#allocation2 + $0x1b0] sm:$0xff]
          %v1331 = vld [vmem:[#allocation2 + $0x1b8] sm:$0xff]
          %v1332 = vld [vmem:[#allocation2 + $0x1c0] sm:$0xff]
          %v1333 = vld [vmem:[#allocation2 + $0x1c8] sm:$0xff]
          %v1334 = vld [vmem:[#allocation2 + $0x1d0] sm:$0xff]
          %v1335 = vld [vmem:[#allocation2 + $0x1d8] sm:$0xff]
          %v1336 = vld [vmem:[#allocation2 + $0x1e0] sm:$0xff]
          %v1337 = vld [vmem:[#allocation2 + $0x1e8] sm:$0xff]
          %v1338 = vld [vmem:[#allocation2 + $0x1f0] sm:$0xff]
          %v1339 = vld [vmem:[#allocation2 + $0x1f8] sm:$0xff]
          %v1340 = vld [vmem:[%s269] sm:$0x3]
          %v1342 = vperm.slane %v1340, 0
          %v1343 = vperm.slane %v1340, 1
          %v1346 = vadd.f32 %v1276, %v1342
          %v1347 = vadd.f32 %v1277, %v1343
          %v1348 = vadd.f32 %v1278, %v1342
          %v1349 = vadd.f32 %v1279, %v1343
          %v1350 = vadd.f32 %v1280, %v1342
          %v1351 = vadd.f32 %v1281, %v1343
          %v1352 = vadd.f32 %v1282, %v1342
          %v1353 = vadd.f32 %v1283, %v1343
          %v1354 = vadd.f32 %v1284, %v1342
          %v1355 = vadd.f32 %v1285, %v1343
          %v1356 = vadd.f32 %v1286, %v1342
          %v1357 = vadd.f32 %v1287, %v1343
          %v1358 = vadd.f32 %v1288, %v1342
          %v1359 = vadd.f32 %v1289, %v1343
          %v1360 = vadd.f32 %v1290, %v1342
          %v1361 = vadd.f32 %v1291, %v1343
          %v1362 = vadd.f32 %v1292, %v1342
          %v1363 = vadd.f32 %v1293, %v1343
          %v1364 = vadd.f32 %v1294, %v1342
          %v1365 = vadd.f32 %v1295, %v1343
          %v1366 = vadd.f32 %v1296, %v1342
          %v1367 = vadd.f32 %v1297, %v1343
          %v1368 = vadd.f32 %v1298, %v1342
          %v1369 = vadd.f32 %v1299, %v1343
          %v1370 = vadd.f32 %v1300, %v1342
          %v1371 = vadd.f32 %v1301, %v1343
          %v1372 = vadd.f32 %v1302, %v1342
          %v1373 = vadd.f32 %v1303, %v1343
          %v1374 = vadd.f32 %v1304, %v1342
          %v1375 = vadd.f32 %v1305, %v1343
          %v1376 = vadd.f32 %v1306, %v1342
          %v1377 = vadd.f32 %v1307, %v1343
          %v1378 = vadd.f32 %v1308, %v1342
          %v1379 = vadd.f32 %v1309, %v1343
          %v1380 = vadd.f32 %v1310, %v1342
          %v1381 = vadd.f32 %v1311, %v1343
          %v1382 = vadd.f32 %v1312, %v1342
          %v1383 = vadd.f32 %v1313, %v1343
          %v1384 = vadd.f32 %v1314, %v1342
          %v1385 = vadd.f32 %v1315, %v1343
          %v1386 = vadd.f32 %v1316, %v1342
          %v1387 = vadd.f32 %v1317, %v1343
          %v1388 = vadd.f32 %v1318, %v1342
          %v1389 = vadd.f32 %v1319, %v1343
          %v1390 = vadd.f32 %v1320, %v1342
          %v1391 = vadd.f32 %v1321, %v1343
          %v1392 = vadd.f32 %v1322, %v1342
          %v1393 = vadd.f32 %v1323, %v1343
          %v1394 = vadd.f32 %v1324, %v1342
          %v1395 = vadd.f32 %v1325, %v1343
          %v1396 = vadd.f32 %v1326, %v1342
          %v1397 = vadd.f32 %v1327, %v1343
          %v1398 = vadd.f32 %v1328, %v1342
          %v1399 = vadd.f32 %v1329, %v1343
          %v1400 = vadd.f32 %v1330, %v1342
          %v1401 = vadd.f32 %v1331, %v1343
          %v1402 = vadd.f32 %v1332, %v1342
          %v1403 = vadd.f32 %v1333, %v1343
          %v1404 = vadd.f32 %v1334, %v1342
          %v1405 = vadd.f32 %v1335, %v1343
          %v1406 = vadd.f32 %v1336, %v1342
          %v1407 = vadd.f32 %v1337, %v1343
          %v1408 = vadd.f32 %v1338, %v1342
          %v1409 = vadd.f32 %v1339, %v1343
          %1410 = vst [vmem:[%s241] sm:$0xff] %v1346
          %1411 = vst [vmem:[%s241 + $0x8] sm:$0xff] %v1347
          %1412 = vst [vmem:[%s241 + $0x10] sm:$0xff] %v1348
          %1413 = vst [vmem:[%s241 + $0x18] sm:$0xff] %v1349
          %1414 = vst [vmem:[%s241 + $0x20] sm:$0xff] %v1350
          %1415 = vst [vmem:[%s241 + $0x28] sm:$0xff] %v1351
          %1416 = vst [vmem:[%s241 + $0x30] sm:$0xff] %v1352
          %1417 = vst [vmem:[%s241 + $0x38] sm:$0xff] %v1353
          %1418 = vst [vmem:[%s241 + $0x40] sm:$0xff] %v1354
          %1419 = vst [vmem:[%s241 + $0x48] sm:$0xff] %v1355
          %1420 = vst [vmem:[%s241 + $0x50] sm:$0xff] %v1356
          %1421 = vst [vmem:[%s241 + $0x58] sm:$0xff] %v1357
          %1422 = vst [vmem:[%s241 + $0x60] sm:$0xff] %v1358
          %1423 = vst [vmem:[%s241 + $0x68] sm:$0xff] %v1359
          %1424 = vst [vmem:[%s241 + $0x70] sm:$0xff] %v1360
          %1425 = vst [vmem:[%s241 + $0x78] sm:$0xff] %v1361
          %1426 = vst [vmem:[%s241 + $0x80] sm:$0xff] %v1362
          %1427 = vst [vmem:[%s241 + $0x88] sm:$0xff] %v1363
          %1428 = vst [vmem:[%s241 + $0x90] sm:$0xff] %v1364
          %1429 = vst [vmem:[%s241 + $0x98] sm:$0xff] %v1365
          %1430 = vst [vmem:[%s241 + $0xa0] sm:$0xff] %v1366
          %1431 = vst [vmem:[%s241 + $0xa8] sm:$0xff] %v1367
          %1432 = vst [vmem:[%s241 + $0xb0] sm:$0xff] %v1368
          %1433 = vst [vmem:[%s241 + $0xb8] sm:$0xff] %v1369
          %1434 = vst [vmem:[%s241 + $0xc0] sm:$0xff] %v1370
          %1435 = vst [vmem:[%s241 + $0xc8] sm:$0xff] %v1371
          %1436 = vst [vmem:[%s241 + $0xd0] sm:$0xff] %v1372
          %1437 = vst [vmem:[%s241 + $0xd8] sm:$0xff] %v1373
          %1438 = vst [vmem:[%s241 + $0xe0] sm:$0xff] %v1374
          %1439 = vst [vmem:[%s241 + $0xe8] sm:$0xff] %v1375
          %1440 = vst [vmem:[%s241 + $0xf0] sm:$0xff] %v1376
          %1441 = vst [vmem:[%s241 + $0xf8] sm:$0xff] %v1377
          %1442 = vst [vmem:[%s241 + $0x100] sm:$0xff] %v1378
          %1443 = vst [vmem:[%s241 + $0x108] sm:$0xff] %v1379
          %1444 = vst [vmem:[%s241 + $0x110] sm:$0xff] %v1380
          %1445 = vst [vmem:[%s241 + $0x118] sm:$0xff] %v1381
          %1446 = vst [vmem:[%s241 + $0x120] sm:$0xff] %v1382
          %1447 = vst [vmem:[%s241 + $0x128] sm:$0xff] %v1383
          %1448 = vst [vmem:[%s241 + $0x130] sm:$0xff] %v1384
          %1449 = vst [vmem:[%s241 + $0x138] sm:$0xff] %v1385
          %1450 = vst [vmem:[%s241 + $0x140] sm:$0xff] %v1386
          %1451 = vst [vmem:[%s241 + $0x148] sm:$0xff] %v1387
          %1452 = vst [vmem:[%s241 + $0x150] sm:$0xff] %v1388
          %1453 = vst [vmem:[%s241 + $0x158] sm:$0xff] %v1389
          %1454 = vst [vmem:[%s241 + $0x160] sm:$0xff] %v1390
          %1455 = vst [vmem:[%s241 + $0x168] sm:$0xff] %v1391
          %1456 = vst [vmem:[%s241 + $0x170] sm:$0xff] %v1392
          %1457 = vst [vmem:[%s241 + $0x178] sm:$0xff] %v1393
          %1458 = vst [vmem:[%s241 + $0x180] sm:$0xff] %v1394
          %1459 = vst [vmem:[%s241 + $0x188] sm:$0xff] %v1395
          %1460 = vst [vmem:[%s241 + $0x190] sm:$0xff] %v1396
          %1461 = vst [vmem:[%s241 + $0x198] sm:$0xff] %v1397
          %1462 = vst [vmem:[%s241 + $0x1a0] sm:$0xff] %v1398
          %1463 = vst [vmem:[%s241 + $0x1a8] sm:$0xff] %v1399
          %1464 = vst [vmem:[%s241 + $0x1b0] sm:$0xff] %v1400
          %1465 = vst [vmem:[%s241 + $0x1b8] sm:$0xff] %v1401
          %1466 = vst [vmem:[%s241 + $0x1c0] sm:$0xff] %v1402
          %1467 = vst [vmem:[%s241 + $0x1c8] sm:$0xff] %v1403
          %1468 = vst [vmem:[%s241 + $0x1d0] sm:$0xff] %v1404
          %1469 = vst [vmem:[%s241 + $0x1d8] sm:$0xff] %v1405
          %1470 = vst [vmem:[%s241 + $0x1e0] sm:$0xff] %v1406
          %1471 = vst [vmem:[%s241 + $0x1e8] sm:$0xff] %v1407
          %1472 = vst [vmem:[%s241 + $0x1f0] sm:$0xff] %v1408
          %1473 = vst [vmem:[%s241 + $0x1f8] sm:$0xff] %v1409
        $region40: #{multi_head_attention.5} parent=31 // pred_fallthru
          _
        %s1474 = sand.u32 %s128, 1
        %s1475 = scalar_lea.sflag [#allocation4], %s1474
        %s1476 = sand.u32 %s128, 1
        %s1477 = smul.addr %s1476, 512
        %s1478 = scalar_lea.vmem [#allocation3], %s1477
        // Predicated region
        $region41: #{multi_head_attention.5} parent=31 // pred_check
          %p1479 = pneg %p138
        $region42: #{multi_head_attention.5} parent=31 // pred_check_branch
          %1481 = sbr.rel (%p1479) target = $region44
        $region43: #{multi_head_attention.5} parent=31 // pred_region
          %s1482 = smul.u32 32, %s22
          %s1483 = smul.u32 2, %s23
          %1485 = vsyncadd %s1475, 0
          %s1486 = smul.addr %s1482, 2
          %s1487 = sadd.s32 %s1483, %s1486
          %s1488 = smul.addr %s1487, 8
          %s1489 = scalar_lea.hbm %s3, %s1488
          %s1490 = sshll.u32 %s1478, 4
          %s1491 = int_to_ptr.vmem [resolvable:$true] %s1490
          %s1492 = sshll.u32 %s1489, 4
          %s1493 = int_to_ptr.hbm [resolvable:$true] %s1492
          %1498 = dma.vmem_to_hbm [thread:$0]  %s1491, 8192, %s1493, %s1475, 256, 256, 16
        $region44: #{multi_head_attention.5} parent=31 // pred_fallthru
          _
      $region32: #{multi_head_attention.5} parent=5 // pred_fallthru
        _
      %p1499 = scmp.le.s32.totalorder 2, %s12
      // Predicated region
      $region45: #{multi_head_attention.5} parent=5 // pred_check
        %p1500 = pneg %p1499
      $region46: #{multi_head_attention.5} parent=5 // pred_check_branch
        %1502 = sbr.rel (%p1500) target = $region48
      $region47: #{multi_head_attention.5} parent=5 // pred_region
        %s1503 = ssub.s32 %s12, 2
        // Predicated region
        $region49: #{multi_head_attention.5} parent=47 // pred_check
          %p1504 = pneg %p144
        $region50: #{multi_head_attention.5} parent=47 // pred_check_branch
          %1506 = sbr.rel (%p1504) target = $region52
        $region51: #{multi_head_attention.5} parent=47 // pred_region
          %s1507 = sand.u32 %s129, 1
          %s1508 = scalar_lea.sflag [#allocation4], %s1507
          %s1509 = sand.u32 %s129, 1
          %s1510 = smul.addr %s1509, 512
          %s1511 = scalar_lea.vmem [#allocation3], %s1510
          %1513 = dma.done %s1508, 8192
        $region52: #{multi_head_attention.5} parent=47 // pred_fallthru
          _
      $region48: #{multi_head_attention.5} parent=5 // pred_fallthru
        _
    $region6: #{multi_head_attention.5} parent=1 // loop_footer
      %s16 = sadd.s32 1, %s12
    $region7: #{multi_head_attention.5} parent=1 // loop_footer_branch
      %11 = sbr.rel target = $region3
    $region8: #{multi_head_attention.5} parent=1 // loop_exit
      _
    %1514 = vsyncpa [#allocation4], 1
    %s1515 = scalar_lea.sflag [#allocation4], 1
    %1516 = vsyncpa %s1515, 1

</llo_original>
